<compile_context>
chip_gen: v7x
topology: tpu7x:2x2x1
jax: 0.10.0
libtpu: 0.0.40
codegen_flags: <defaults>
</compile_context>

<pallas_src>
import functools

import jax
import jax.numpy as jnp
from jax import lax
from jax.experimental import pallas as pl
from jax.experimental.pallas import tpu as pltpu

OUT_CH = 512            # conv1_da output channels
N_GROUPS = 32           # GroupNorm(32, 512)
GROUP_SIZE = OUT_CH // N_GROUPS
GN_EPS = 1e-5           # nn.GroupNorm default
LEAKY_SLOPE = 0.01      # nn.LeakyReLU default
SMALL_C_MAX = 32        # below this, conv1 is done on the VPU instead of the MXU


def _haa_kernel(H, W,
                x_ref, w1_ref, b1_ref, gamma_ref, beta_ref, w2_ref,
                gred_ref, gexp_ref, maskl_ref, maskr_ref,
                b2_ref, watt_ref, batt_ref, out_ref):
    """Per-image HAAHead forward (channels on sublanes, spatial on lanes).

    x_ref    : (1, C, HW)        VMEM   (NCHW image with spatial flattened)
    w1_ref   : (512, C)          VMEM   conv1_da 1x1 weight
    b1/gamma/beta : (512, 1)     VMEM   per-channel params (broadcast along lanes)
    w2_ref   : (1, 512)          VMEM   conv2_da 1x1 weight (lane-dense)
    gred_ref : (32, 512)         VMEM   one-hot group-reduce matrix
    gexp_ref : (512, 32)         VMEM   one-hot group-expand matrix
    maskl/maskr : (1, HW)        VMEM   column-validity masks for the 3x3 conv taps
    b2/watt/batt : (1,)/(18,)/(1,)  SMEM scalars (conv2 bias, 3x3 weights, 3x3 bias)
    out_ref  : (1, 1, HW)        VMEM   lane-dense output
    """
    HW = H * W
    C = x_ref.shape[1]
    x = x_ref[0]                                                  # (C, HW) f32

    # ---- conv1_da: 1x1 conv, t[o, s] = b1[o] + sum_c w1[o, c] * x[c, s] ------
    if C <= SMALL_C_MAX:
        # Tiny contraction dim: VPU rank-1 broadcasts beat a <3%-utilized MXU.
        t = b1_ref[...] + w1_ref[:, 0:1] * x[0:1, :]              # (512, HW)
        for c in range(1, C):
            t = t + w1_ref[:, c:c + 1] * x[c:c + 1, :]
    else:
        # MXU path: bf16 operands, f32 accumulation (GN stats stay in f32 below).
        t = jnp.dot(w1_ref[...].astype(jnp.bfloat16), x.astype(jnp.bfloat16),
                    preferred_element_type=jnp.float32) + b1_ref[...]

    # ---- GroupNorm(32, 512): two-pass, group reductions on the MXU -----------
    inv_cnt = 1.0 / float(GROUP_SIZE * HW)
    g_sum = jnp.sum(jnp.dot(gred_ref[...], t, preferred_element_type=jnp.float32),
                    axis=1, keepdims=True)                        # (32, 1)
    mean_g = g_sum * inv_cnt
    mean_c = jnp.dot(gexp_ref[...], mean_g,
                     preferred_element_type=jnp.float32)          # (512, 1)
    d = t - mean_c                                                # centered (pass 2)
    g_ss = jnp.sum(jnp.dot(gred_ref[...], d * d, preferred_element_type=jnp.float32),
                   axis=1, keepdims=True)                         # (32, 1)
    rstd_g = lax.rsqrt(g_ss * inv_cnt + GN_EPS)                   # biased var (PyTorch GN)
    rstd_c = jnp.dot(gexp_ref[...], rstd_g,
                     preferred_element_type=jnp.float32)          # (512, 1)
    t = d * (rstd_c * gamma_ref[...]) + beta_ref[...]

    # ---- LeakyReLU ------------------------------------------------------------
    t = jnp.where(t > 0, t, LEAKY_SLOPE * t)

    # ---- channel-wise avg (MXU) / max (XLU) -> (1, HW) spatial maps -----------
    inv_oc = jnp.full((1, OUT_CH), 1.0 / OUT_CH, dtype=jnp.float32)
    avg_sp = jnp.dot(inv_oc, t, preferred_element_type=jnp.float32)   # (1, HW)
    max_sp = jnp.max(t, axis=0, keepdims=True)                        # (1, HW)

    # ---- conv_attmap: 3x3 conv (2 -> 1 ch, pad=1), done in flattened layout ---
    # For s = h*W + w, tap (ky, kx) reads a[h+ky-1, w+kx-1] = pad_flat[s + ky*W + kx]
    # where pad_flat has W+1 leading/trailing zeros (handles the vertical padding);
    # horizontal out-of-range taps are zeroed by the precomputed column masks.
    zrow = jnp.zeros((1, W + 1), jnp.float32)
    pads = [jnp.concatenate([zrow, m, zrow], axis=1) for m in (avg_sp, max_sp)]
    sp = jnp.zeros((1, HW), jnp.float32) + batt_ref[0]
    for ci in range(2):                       # channel 0 = avg, 1 = max (cat order)
        p = pads[ci]
        for ky in range(3):
            for kx in range(3):
                off = ky * W + kx
                tap = p[:, off:off + HW]
                if kx == 0:
                    tap = tap * maskl_ref[...]
                elif kx == 2:
                    tap = tap * maskr_ref[...]
                sp = sp + watt_ref[ci * 9 + ky * 3 + kx] * tap

    # ---- sigmoid gate, ReLU, conv2_da (1x1, 512 -> 1) --------------------------
    att = jax.nn.sigmoid(sp)                                       # (1, HW)
    t = jnp.maximum(t * att, 0.0)
    out = jnp.dot(w2_ref[...], t, preferred_element_type=jnp.float32) + b2_ref[0]
    out_ref[0] = out.astype(out_ref.dtype)                         # dense (1, HW) store


def init_params(in_channels, key, std=0.001):
    """Synthetic params in the kernel's layout.

    std=0.001 mirrors the PyTorch init (weights ~N(0, 0.001), biases 0, GN affine
    defaults); larger std gives numerically meaningful values for testing.
    """
    ks = jax.random.split(key, 7)
    return dict(
        w1=jax.random.normal(ks[0], (OUT_CH, in_channels), jnp.float32) * std,
        b1=jax.random.normal(ks[1], (OUT_CH, 1), jnp.float32) * std,
        gamma=1.0 + jax.random.normal(ks[2], (OUT_CH, 1), jnp.float32) * std,
        beta=jax.random.normal(ks[3], (OUT_CH, 1), jnp.float32) * std,
        w2=jax.random.normal(ks[4], (1, OUT_CH), jnp.float32) * std,
        b2=jnp.zeros((1,), jnp.float32),
        watt=jax.random.normal(ks[5], (18,), jnp.float32) * std,   # (2,3,3) flattened
        batt=jax.random.normal(ks[6], (1,), jnp.float32) * std,
    )


def haa_head_single(feature, params):
    """One feature level. feature: (N, C, H, W) NCHW; returns (N, 1, H, W)."""
    N, C, H, W = feature.shape
    HW = H * W
    x_flat = feature.reshape(N, C, HW)        # pure reshape: channels->sublanes, HW->lanes

    # Constant helpers (folded under jit; tiny otherwise).
    ch_group = jnp.arange(OUT_CH, dtype=jnp.int32) // GROUP_SIZE
    gred = (jnp.arange(N_GROUPS, dtype=jnp.int32)[:, None] == ch_group[None, :]
            ).astype(jnp.float32)                                   # (32, 512)
    gexp = gred.T                                                   # (512, 32)
    col = jnp.arange(HW, dtype=jnp.int32) % W
    mask_l = (col >= 1).astype(jnp.float32).reshape(1, HW)          # left tap valid
    mask_r = (col <= W - 2).astype(jnp.float32).reshape(1, HW)      # right tap valid

    # Raise scoped VMEM for medium images (v6e); huge HW needs the tiled variant.
    est = 6 * OUT_CH * HW * 4 + 2 * C * HW * 4 + (2 << 20)
    vmem_limit = int(min(max(est, 32 << 20), 96 << 20))

    kernel = functools.partial(_haa_kernel, H, W)
    out = pl.pallas_call(
        kernel,
        out_shape=jax.ShapeDtypeStruct((N, 1, HW), jnp.float32),
        grid=(N,),
        in_specs=[
            pl.BlockSpec((1, C, HW), lambda n: (n, 0, 0)),          # x (per image)
            # Constant-index params: the pipeline re-uses the same VMEM copy
            # across grid steps (block index never changes), so no per-step DMA.
            pl.BlockSpec((OUT_CH, C), lambda n: (0, 0)),            # w1
            pl.BlockSpec((OUT_CH, 1), lambda n: (0, 0)),            # b1
            pl.BlockSpec((OUT_CH, 1), lambda n: (0, 0)),            # gamma
            pl.BlockSpec((OUT_CH, 1), lambda n: (0, 0)),            # beta
            pl.BlockSpec((1, OUT_CH), lambda n: (0, 0)),            # w2
            pl.BlockSpec((N_GROUPS, OUT_CH), lambda n: (0, 0)),     # group-reduce one-hot
            pl.BlockSpec((OUT_CH, N_GROUPS), lambda n: (0, 0)),     # group-expand one-hot
            pl.BlockSpec((1, HW), lambda n: (0, 0)),                # mask_l
            pl.BlockSpec((1, HW), lambda n: (0, 0)),                # mask_r
            pl.BlockSpec(memory_space=pltpu.MemorySpace.SMEM),      # b2 (scalar)
            pl.BlockSpec(memory_space=pltpu.MemorySpace.SMEM),      # watt (scalars)
            pl.BlockSpec(memory_space=pltpu.MemorySpace.SMEM),      # batt (scalar)
        ],
        out_specs=pl.BlockSpec((1, 1, HW), lambda n: (n, 0, 0)),    # lane-dense output
        compiler_params=pltpu.CompilerParams(
            dimension_semantics=("parallel",),
            vmem_limit_bytes=vmem_limit),
    )(x_flat, params["w1"], params["b1"], params["gamma"], params["beta"],
      params["w2"], gred, gexp, mask_l, mask_r,
      params["b2"], params["watt"], params["batt"])
    return out.reshape(N, 1, H, W)


def haa_head(features, params):
    """Matches HAAHead.forward: list of NCHW features -> list of (N, 1, H, W) logits."""
    return [haa_head_single(f, params) for f in features]


# ----------------------------- pure-JAX reference -----------------------------
def haa_head_ref(features, params):
    outs = []
    hp = jax.lax.Precision.HIGHEST
    for f in features:
        N, C, H, W = f.shape
        t = jnp.einsum("oc,nchw->nohw", params["w1"], f, precision=hp)
        t = t + params["b1"].reshape(1, OUT_CH, 1, 1)
        tg = t.reshape(N, N_GROUPS, GROUP_SIZE, H, W)
        mean = jnp.mean(tg, axis=(2, 3, 4), keepdims=True)
        var = jnp.mean((tg - mean) ** 2, axis=(2, 3, 4), keepdims=True)
        t = ((tg - mean) / jnp.sqrt(var + GN_EPS)).reshape(N, OUT_CH, H, W)
        t = t * params["gamma"].reshape(1, OUT_CH, 1, 1) + params["beta"].reshape(1, OUT_CH, 1, 1)
        t = jnp.where(t > 0, t, LEAKY_SLOPE * t)
        avg = jnp.mean(t, axis=1, keepdims=True)
        mx = jnp.max(t, axis=1, keepdims=True)
        scale = jnp.concatenate([avg, mx], axis=1)                 # (N, 2, H, W)
        pad = jnp.pad(scale, ((0, 0), (0, 0), (1, 1), (1, 1)))
        watt = params["watt"].reshape(2, 3, 3)
        sp = jnp.zeros((N, 1, H, W), jnp.float32) + params["batt"][0]
        for c in range(2):
            for ky in range(3):
                for kx in range(3):
                    sp = sp + watt[c, ky, kx] * pad[:, c:c + 1, ky:ky + H, kx:kx + W]
        t = jnp.maximum(t * jax.nn.sigmoid(sp), 0.0)
        out = jnp.einsum("oc,nchw->nohw", params["w2"], t, precision=hp) + params["b2"][0]
        outs.append(out)
    return outs


if __name__ == "__main__":
    key = jax.random.PRNGKey(0)
    pkey, xkey1, xkey2 = jax.random.split(key, 3)

    in_channels = 4
    # Larger std than the PyTorch init (0.001) so the correctness check is sensitive
    # to every stage (attention conv, gating, GN affine); the forward math is identical.
    params = init_params(in_channels, pkey, std=0.5)

    # Two FPN-like levels (small shapes), NCHW like PyTorch.
    x = [
        jax.random.normal(xkey1, (2, in_channels, 16, 16), jnp.float32),
        jax.random.normal(xkey2, (2, in_channels, 8, 8), jnp.float32),
    ]

    outs = haa_head(x, params)
    for o in outs:
        jax.block_until_ready(o)

    refs = haa_head_ref(x, params)

    assert outs[0].shape == (2, 1, 16, 16)
    assert outs[1].shape == (2, 1, 8, 8)
    for o, r in zip(outs, refs):
        assert o.shape == r.shape
        assert bool(jnp.all(jnp.isfinite(o)))
        max_err = float(jnp.max(jnp.abs(o - r)))
        assert bool(jnp.allclose(o, r, rtol=2e-2, atol=1e-3)), f"max abs err {max_err}"
    print("KERNEL_OK")
</pallas_src>

<mosaic_0001>
module attributes {stable_mosaic.version = 11 : i64} {
  func.func @_haa_kernel(%arg0: i32, %arg1: memref<1x4x256xf32, #tpu.memory_space<vmem>>, %arg2: memref<512x4xf32, #tpu.memory_space<vmem>>, %arg3: memref<512x1xf32, #tpu.memory_space<vmem>>, %arg4: memref<512x1xf32, #tpu.memory_space<vmem>>, %arg5: memref<512x1xf32, #tpu.memory_space<vmem>>, %arg6: memref<1x512xf32, #tpu.memory_space<vmem>>, %arg7: memref<32x512xf32, #tpu.memory_space<vmem>>, %arg8: memref<512x32xf32, #tpu.memory_space<vmem>>, %arg9: memref<1x256xf32, #tpu.memory_space<vmem>>, %arg10: memref<1x256xf32, #tpu.memory_space<vmem>>, %arg11: memref<1xf32, #tpu.memory_space<smem>>, %arg12: memref<18xf32, #tpu.memory_space<smem>>, %arg13: memref<1xf32, #tpu.memory_space<smem>>, %arg14: memref<1x1x256xf32, #tpu.memory_space<vmem>>) attributes {dimension_semantics = [#tpu.dimension_semantics<parallel>], iteration_bounds = array<i64: 2>, scalar_prefetch = 0 : i64, scratch_operands = 0 : i64, tpu.core_type = #tpu.core_type<tc>, window_params = [{transform_indices = @transform_0, window_bounds = array<i64: 1, 4, 256>}, {pipeline_mode = #tpu.pipeline_mode<synchronous>, transform_indices = @transform_1, window_bounds = array<i64: 512, 4>}, {pipeline_mode = #tpu.pipeline_mode<synchronous>, transform_indices = @transform_2, window_bounds = array<i64: 512, 1>}, {pipeline_mode = #tpu.pipeline_mode<synchronous>, transform_indices = @transform_3, window_bounds = array<i64: 512, 1>}, {pipeline_mode = #tpu.pipeline_mode<synchronous>, transform_indices = @transform_4, window_bounds = array<i64: 512, 1>}, {pipeline_mode = #tpu.pipeline_mode<synchronous>, transform_indices = @transform_5, window_bounds = array<i64: 1, 512>}, {pipeline_mode = #tpu.pipeline_mode<synchronous>, transform_indices = @transform_6, window_bounds = array<i64: 32, 512>}, {pipeline_mode = #tpu.pipeline_mode<synchronous>, transform_indices = @transform_7, window_bounds = array<i64: 512, 32>}, {pipeline_mode = #tpu.pipeline_mode<synchronous>, transform_indices = @transform_8, window_bounds = array<i64: 1, 256>}, {pipeline_mode = #tpu.pipeline_mode<synchronous>, transform_indices = @transform_9, window_bounds = array<i64: 1, 256>}, {transform_indices = @transform_10, window_bounds = array<i64: 1>}, {transform_indices = @transform_11, window_bounds = array<i64: 18>}, {transform_indices = @transform_12, window_bounds = array<i64: 1>}, {transform_indices = @transform_13, window_bounds = array<i64: 1, 1, 256>}]} {
    %c0 = arith.constant 0 : index
    %c0_0 = arith.constant 0 : index
    %c0_1 = arith.constant 0 : index
    %0 = vector.load %arg1[%c0, %c0_0, %c0_1] : memref<1x4x256xf32, #tpu.memory_space<vmem>>, vector<1x4x256xf32>
    %1 = vector.shape_cast %0 : vector<1x4x256xf32> to vector<4x256xf32>
    %c0_2 = arith.constant 0 : index
    %c0_3 = arith.constant 0 : index
    %2 = vector.load %arg3[%c0_2, %c0_3] : memref<512x1xf32, #tpu.memory_space<vmem>>, vector<512x1xf32>
    %c0_4 = arith.constant 0 : index
    %c0_5 = arith.constant 0 : index
    %3 = vector.load %arg2[%c0_4, %c0_5] : memref<512x4xf32, #tpu.memory_space<vmem>>, vector<512x1xf32>
    %4 = vector.extract_strided_slice %1 {offsets = [0, 0], sizes = [1, 256], strides = [1, 1]} : vector<4x256xf32> to vector<1x256xf32>
    %5 = vector.broadcast %3 : vector<512x1xf32> to vector<512x256xf32>
    %6 = vector.broadcast %4 : vector<1x256xf32> to vector<512x256xf32>
    %7 = arith.mulf %5, %6 : vector<512x256xf32>
    %8 = vector.broadcast %2 : vector<512x1xf32> to vector<512x256xf32>
    %9 = arith.addf %8, %7 : vector<512x256xf32>
    %c0_6 = arith.constant 0 : index
    %c1 = arith.constant 1 : index
    %10 = vector.load %arg2[%c0_6, %c1] : memref<512x4xf32, #tpu.memory_space<vmem>>, vector<512x1xf32>
    %11 = vector.extract_strided_slice %1 {offsets = [1, 0], sizes = [1, 256], strides = [1, 1]} : vector<4x256xf32> to vector<1x256xf32>
    %12 = vector.broadcast %10 : vector<512x1xf32> to vector<512x256xf32>
    %13 = vector.broadcast %11 : vector<1x256xf32> to vector<512x256xf32>
    %14 = arith.mulf %12, %13 : vector<512x256xf32>
    %15 = arith.addf %9, %14 : vector<512x256xf32>
    %c0_7 = arith.constant 0 : index
    %c2 = arith.constant 2 : index
    %16 = vector.load %arg2[%c0_7, %c2] : memref<512x4xf32, #tpu.memory_space<vmem>>, vector<512x1xf32>
    %17 = vector.extract_strided_slice %1 {offsets = [2, 0], sizes = [1, 256], strides = [1, 1]} : vector<4x256xf32> to vector<1x256xf32>
    %18 = vector.broadcast %16 : vector<512x1xf32> to vector<512x256xf32>
    %19 = vector.broadcast %17 : vector<1x256xf32> to vector<512x256xf32>
    %20 = arith.mulf %18, %19 : vector<512x256xf32>
    %21 = arith.addf %15, %20 : vector<512x256xf32>
    %c0_8 = arith.constant 0 : index
    %c3 = arith.constant 3 : index
    %22 = vector.load %arg2[%c0_8, %c3] : memref<512x4xf32, #tpu.memory_space<vmem>>, vector<512x1xf32>
    %23 = vector.extract_strided_slice %1 {offsets = [3, 0], sizes = [1, 256], strides = [1, 1]} : vector<4x256xf32> to vector<1x256xf32>
    %24 = vector.broadcast %22 : vector<512x1xf32> to vector<512x256xf32>
    %25 = vector.broadcast %23 : vector<1x256xf32> to vector<512x256xf32>
    %26 = arith.mulf %24, %25 : vector<512x256xf32>
    %27 = arith.addf %21, %26 : vector<512x256xf32>
    %c0_9 = arith.constant 0 : index
    %c0_10 = arith.constant 0 : index
    %28 = vector.load %arg7[%c0_9, %c0_10] : memref<32x512xf32, #tpu.memory_space<vmem>>, vector<32x512xf32>
    %cst = arith.constant dense<0.000000e+00> : vector<32x256xf32>
    %29 = tpu.matmul %28, %27, %cst {dimension_numbers = #tpu.dot_dimension_numbers<[1], [0], [0], [1], [0, 0, 1, 1], [], []>} : vector<32x512xf32>, vector<512x256xf32>, vector<32x256xf32> -> vector<32x256xf32>
    %cst_11 = arith.constant dense<0.000000e+00> : vector<32xf32>
    %30 = vector.multi_reduction <add>, %29, %cst_11 [1] : vector<32x256xf32> to vector<32xf32>
    %31 = vector.shape_cast %30 : vector<32xf32> to vector<32x1xf32>
    %cst_12 = arith.constant 2.44140625E-4 : f32
    %32 = vector.broadcast %cst_12 : f32 to vector<32x1xf32>
    %33 = arith.mulf %31, %32 : vector<32x1xf32>
    %c0_13 = arith.constant 0 : index
    %c0_14 = arith.constant 0 : index
    %34 = vector.load %arg8[%c0_13, %c0_14] : memref<512x32xf32, #tpu.memory_space<vmem>>, vector<512x32xf32>
    %cst_15 = arith.constant dense<0.000000e+00> : vector<512x1xf32>
    %35 = tpu.matmul %34, %33, %cst_15 {dimension_numbers = #tpu.dot_dimension_numbers<[1], [0], [0], [1], [0, 0, 1, 1], [], []>} : vector<512x32xf32>, vector<32x1xf32>, vector<512x1xf32> -> vector<512x1xf32>
    %36 = vector.broadcast %35 : vector<512x1xf32> to vector<512x256xf32>
    %37 = arith.subf %27, %36 : vector<512x256xf32>
    %c0_16 = arith.constant 0 : index
    %c0_17 = arith.constant 0 : index
    %38 = vector.load %arg7[%c0_16, %c0_17] : memref<32x512xf32, #tpu.memory_space<vmem>>, vector<32x512xf32>
    %39 = arith.mulf %37, %37 : vector<512x256xf32>
    %cst_18 = arith.constant dense<0.000000e+00> : vector<32x256xf32>
    %40 = tpu.matmul %38, %39, %cst_18 {dimension_numbers = #tpu.dot_dimension_numbers<[1], [0], [0], [1], [0, 0, 1, 1], [], []>} : vector<32x512xf32>, vector<512x256xf32>, vector<32x256xf32> -> vector<32x256xf32>
    %cst_19 = arith.constant dense<0.000000e+00> : vector<32xf32>
    %41 = vector.multi_reduction <add>, %40, %cst_19 [1] : vector<32x256xf32> to vector<32xf32>
    %42 = vector.shape_cast %41 : vector<32xf32> to vector<32x1xf32>
    %cst_20 = arith.constant 2.44140625E-4 : f32
    %43 = vector.broadcast %cst_20 : f32 to vector<32x1xf32>
    %44 = arith.mulf %42, %43 : vector<32x1xf32>
    %cst_21 = arith.constant 9.99999974E-6 : f32
    %45 = vector.broadcast %cst_21 : f32 to vector<32x1xf32>
    %46 = arith.addf %44, %45 : vector<32x1xf32>
    %47 = math.rsqrt %46 : vector<32x1xf32>
    %c0_22 = arith.constant 0 : index
    %c0_23 = arith.constant 0 : index
    %48 = vector.load %arg8[%c0_22, %c0_23] : memref<512x32xf32, #tpu.memory_space<vmem>>, vector<512x32xf32>
    %cst_24 = arith.constant dense<0.000000e+00> : vector<512x1xf32>
    %49 = tpu.matmul %48, %47, %cst_24 {dimension_numbers = #tpu.dot_dimension_numbers<[1], [0], [0], [1], [0, 0, 1, 1], [], []>} : vector<512x32xf32>, vector<32x1xf32>, vector<512x1xf32> -> vector<512x1xf32>
    %c0_25 = arith.constant 0 : index
    %c0_26 = arith.constant 0 : index
    %50 = vector.load %arg4[%c0_25, %c0_26] : memref<512x1xf32, #tpu.memory_space<vmem>>, vector<512x1xf32>
    %51 = arith.mulf %49, %50 : vector<512x1xf32>
    %52 = vector.broadcast %51 : vector<512x1xf32> to vector<512x256xf32>
    %53 = arith.mulf %37, %52 : vector<512x256xf32>
    %c0_27 = arith.constant 0 : index
    %c0_28 = arith.constant 0 : index
    %54 = vector.load %arg5[%c0_27, %c0_28] : memref<512x1xf32, #tpu.memory_space<vmem>>, vector<512x1xf32>
    %55 = vector.broadcast %54 : vector<512x1xf32> to vector<512x256xf32>
    %56 = arith.addf %53, %55 : vector<512x256xf32>
    %cst_29 = arith.constant 0.000000e+00 : f32
    %57 = vector.broadcast %cst_29 : f32 to vector<512x256xf32>
    %58 = arith.cmpf ogt, %56, %57 : vector<512x256xf32>
    %cst_30 = arith.constant 0.00999999977 : f32
    %59 = vector.broadcast %cst_30 : f32 to vector<512x256xf32>
    %60 = arith.mulf %59, %56 : vector<512x256xf32>
    %61 = arith.select %58, %56, %60 : vector<512x256xi1>, vector<512x256xf32>
    %cst_31 = arith.constant 0.001953125 : f32
    %62 = vector.broadcast %cst_31 : f32 to vector<1x512xf32>
    %cst_32 = arith.constant dense<0.000000e+00> : vector<1x256xf32>
    %63 = tpu.matmul %62, %61, %cst_32 {dimension_numbers = #tpu.dot_dimension_numbers<[1], [0], [0], [1], [0, 0, 1, 1], [], []>} : vector<1x512xf32>, vector<512x256xf32>, vector<1x256xf32> -> vector<1x256xf32>
    %cst_33 = arith.constant dense<0xFF800000> : vector<256xf32>
    %64 = vector.multi_reduction <maximumf>, %61, %cst_33 [0] : vector<512x256xf32> to vector<256xf32>
    %65 = vector.shape_cast %64 : vector<256xf32> to vector<1x256xf32>
    %cst_34 = arith.constant 0.000000e+00 : f32
    %66 = vector.broadcast %cst_34 : f32 to vector<1x17xf32>
    %67 = tpu.concatenate %66, %63, %66 in 1 : vector<1x17xf32>, vector<1x256xf32>, vector<1x17xf32> -> vector<1x290xf32>
    %68 = tpu.concatenate %66, %65, %66 in 1 : vector<1x17xf32>, vector<1x256xf32>, vector<1x17xf32> -> vector<1x290xf32>
    %cst_35 = arith.constant 0.000000e+00 : f32
    %69 = vector.broadcast %cst_35 : f32 to vector<1x256xf32>
    %c0_36 = arith.constant 0 : index
    %70 = memref.load %arg13[%c0_36] : memref<1xf32, #tpu.memory_space<smem>>
    %71 = vector.broadcast %70 : f32 to vector<1x256xf32>
    %72 = arith.addf %69, %71 : vector<1x256xf32>
    %73 = vector.extract_strided_slice %67 {offsets = [0, 0], sizes = [1, 256], strides = [1, 1]} : vector<1x290xf32> to vector<1x256xf32>
    %c0_37 = arith.constant 0 : index
    %c0_38 = arith.constant 0 : index
    %74 = vector.load %arg9[%c0_37, %c0_38] : memref<1x256xf32, #tpu.memory_space<vmem>>, vector<1x256xf32>
    %75 = arith.mulf %73, %74 : vector<1x256xf32>
    %c0_39 = arith.constant 0 : index
    %76 = memref.load %arg12[%c0_39] : memref<18xf32, #tpu.memory_space<smem>>
    %77 = vector.broadcast %76 : f32 to vector<1x256xf32>
    %78 = arith.mulf %77, %75 : vector<1x256xf32>
    %79 = arith.addf %72, %78 : vector<1x256xf32>
    %80 = vector.extract_strided_slice %67 {offsets = [0, 1], sizes = [1, 256], strides = [1, 1]} : vector<1x290xf32> to vector<1x256xf32>
    %c1_40 = arith.constant 1 : index
    %81 = memref.load %arg12[%c1_40] : memref<18xf32, #tpu.memory_space<smem>>
    %82 = vector.broadcast %81 : f32 to vector<1x256xf32>
    %83 = arith.mulf %82, %80 : vector<1x256xf32>
    %84 = arith.addf %79, %83 : vector<1x256xf32>
    %85 = vector.extract_strided_slice %67 {offsets = [0, 2], sizes = [1, 256], strides = [1, 1]} : vector<1x290xf32> to vector<1x256xf32>
    %c0_41 = arith.constant 0 : index
    %c0_42 = arith.constant 0 : index
    %86 = vector.load %arg10[%c0_41, %c0_42] : memref<1x256xf32, #tpu.memory_space<vmem>>, vector<1x256xf32>
    %87 = arith.mulf %85, %86 : vector<1x256xf32>
    %c2_43 = arith.constant 2 : index
    %88 = memref.load %arg12[%c2_43] : memref<18xf32, #tpu.memory_space<smem>>
    %89 = vector.broadcast %88 : f32 to vector<1x256xf32>
    %90 = arith.mulf %89, %87 : vector<1x256xf32>
    %91 = arith.addf %84, %90 : vector<1x256xf32>
    %92 = vector.extract_strided_slice %67 {offsets = [0, 16], sizes = [1, 256], strides = [1, 1]} : vector<1x290xf32> to vector<1x256xf32>
    %c0_44 = arith.constant 0 : index
    %c0_45 = arith.constant 0 : index
    %93 = vector.load %arg9[%c0_44, %c0_45] : memref<1x256xf32, #tpu.memory_space<vmem>>, vector<1x256xf32>
    %94 = arith.mulf %92, %93 : vector<1x256xf32>
    %c3_46 = arith.constant 3 : index
    %95 = memref.load %arg12[%c3_46] : memref<18xf32, #tpu.memory_space<smem>>
    %96 = vector.broadcast %95 : f32 to vector<1x256xf32>
    %97 = arith.mulf %96, %94 : vector<1x256xf32>
    %98 = arith.addf %91, %97 : vector<1x256xf32>
    %99 = vector.extract_strided_slice %67 {offsets = [0, 17], sizes = [1, 256], strides = [1, 1]} : vector<1x290xf32> to vector<1x256xf32>
    %c4 = arith.constant 4 : index
    %100 = memref.load %arg12[%c4] : memref<18xf32, #tpu.memory_space<smem>>
    %101 = vector.broadcast %100 : f32 to vector<1x256xf32>
    %102 = arith.mulf %101, %99 : vector<1x256xf32>
    %103 = arith.addf %98, %102 : vector<1x256xf32>
    %104 = vector.extract_strided_slice %67 {offsets = [0, 18], sizes = [1, 256], strides = [1, 1]} : vector<1x290xf32> to vector<1x256xf32>
    %c0_47 = arith.constant 0 : index
    %c0_48 = arith.constant 0 : index
    %105 = vector.load %arg10[%c0_47, %c0_48] : memref<1x256xf32, #tpu.memory_space<vmem>>, vector<1x256xf32>
    %106 = arith.mulf %104, %105 : vector<1x256xf32>
    %c5 = arith.constant 5 : index
    %107 = memref.load %arg12[%c5] : memref<18xf32, #tpu.memory_space<smem>>
    %108 = vector.broadcast %107 : f32 to vector<1x256xf32>
    %109 = arith.mulf %108, %106 : vector<1x256xf32>
    %110 = arith.addf %103, %109 : vector<1x256xf32>
    %111 = vector.extract_strided_slice %67 {offsets = [0, 32], sizes = [1, 256], strides = [1, 1]} : vector<1x290xf32> to vector<1x256xf32>
    %c0_49 = arith.constant 0 : index
    %c0_50 = arith.constant 0 : index
    %112 = vector.load %arg9[%c0_49, %c0_50] : memref<1x256xf32, #tpu.memory_space<vmem>>, vector<1x256xf32>
    %113 = arith.mulf %111, %112 : vector<1x256xf32>
    %c6 = arith.constant 6 : index
    %114 = memref.load %arg12[%c6] : memref<18xf32, #tpu.memory_space<smem>>
    %115 = vector.broadcast %114 : f32 to vector<1x256xf32>
    %116 = arith.mulf %115, %113 : vector<1x256xf32>
    %117 = arith.addf %110, %116 : vector<1x256xf32>
    %118 = vector.extract_strided_slice %67 {offsets = [0, 33], sizes = [1, 256], strides = [1, 1]} : vector<1x290xf32> to vector<1x256xf32>
    %c7 = arith.constant 7 : index
    %119 = memref.load %arg12[%c7] : memref<18xf32, #tpu.memory_space<smem>>
    %120 = vector.broadcast %119 : f32 to vector<1x256xf32>
    %121 = arith.mulf %120, %118 : vector<1x256xf32>
    %122 = arith.addf %117, %121 : vector<1x256xf32>
    %123 = vector.extract_strided_slice %67 {offsets = [0, 34], sizes = [1, 256], strides = [1, 1]} : vector<1x290xf32> to vector<1x256xf32>
    %c0_51 = arith.constant 0 : index
    %c0_52 = arith.constant 0 : index
    %124 = vector.load %arg10[%c0_51, %c0_52] : memref<1x256xf32, #tpu.memory_space<vmem>>, vector<1x256xf32>
    %125 = arith.mulf %123, %124 : vector<1x256xf32>
    %c8 = arith.constant 8 : index
    %126 = memref.load %arg12[%c8] : memref<18xf32, #tpu.memory_space<smem>>
    %127 = vector.broadcast %126 : f32 to vector<1x256xf32>
    %128 = arith.mulf %127, %125 : vector<1x256xf32>
    %129 = arith.addf %122, %128 : vector<1x256xf32>
    %130 = vector.extract_strided_slice %68 {offsets = [0, 0], sizes = [1, 256], strides = [1, 1]} : vector<1x290xf32> to vector<1x256xf32>
    %c0_53 = arith.constant 0 : index
    %c0_54 = arith.constant 0 : index
    %131 = vector.load %arg9[%c0_53, %c0_54] : memref<1x256xf32, #tpu.memory_space<vmem>>, vector<1x256xf32>
    %132 = arith.mulf %130, %131 : vector<1x256xf32>
    %c9 = arith.constant 9 : index
    %133 = memref.load %arg12[%c9] : memref<18xf32, #tpu.memory_space<smem>>
    %134 = vector.broadcast %133 : f32 to vector<1x256xf32>
    %135 = arith.mulf %134, %132 : vector<1x256xf32>
    %136 = arith.addf %129, %135 : vector<1x256xf32>
    %137 = vector.extract_strided_slice %68 {offsets = [0, 1], sizes = [1, 256], strides = [1, 1]} : vector<1x290xf32> to vector<1x256xf32>
    %c10 = arith.constant 10 : index
    %138 = memref.load %arg12[%c10] : memref<18xf32, #tpu.memory_space<smem>>
    %139 = vector.broadcast %138 : f32 to vector<1x256xf32>
    %140 = arith.mulf %139, %137 : vector<1x256xf32>
    %141 = arith.addf %136, %140 : vector<1x256xf32>
    %142 = vector.extract_strided_slice %68 {offsets = [0, 2], sizes = [1, 256], strides = [1, 1]} : vector<1x290xf32> to vector<1x256xf32>
    %c0_55 = arith.constant 0 : index
    %c0_56 = arith.constant 0 : index
    %143 = vector.load %arg10[%c0_55, %c0_56] : memref<1x256xf32, #tpu.memory_space<vmem>>, vector<1x256xf32>
    %144 = arith.mulf %142, %143 : vector<1x256xf32>
    %c11 = arith.constant 11 : index
    %145 = memref.load %arg12[%c11] : memref<18xf32, #tpu.memory_space<smem>>
    %146 = vector.broadcast %145 : f32 to vector<1x256xf32>
    %147 = arith.mulf %146, %144 : vector<1x256xf32>
    %148 = arith.addf %141, %147 : vector<1x256xf32>
    %149 = vector.extract_strided_slice %68 {offsets = [0, 16], sizes = [1, 256], strides = [1, 1]} : vector<1x290xf32> to vector<1x256xf32>
    %c0_57 = arith.constant 0 : index
    %c0_58 = arith.constant 0 : index
    %150 = vector.load %arg9[%c0_57, %c0_58] : memref<1x256xf32, #tpu.memory_space<vmem>>, vector<1x256xf32>
    %151 = arith.mulf %149, %150 : vector<1x256xf32>
    %c12 = arith.constant 12 : index
    %152 = memref.load %arg12[%c12] : memref<18xf32, #tpu.memory_space<smem>>
    %153 = vector.broadcast %152 : f32 to vector<1x256xf32>
    %154 = arith.mulf %153, %151 : vector<1x256xf32>
    %155 = arith.addf %148, %154 : vector<1x256xf32>
    %156 = vector.extract_strided_slice %68 {offsets = [0, 17], sizes = [1, 256], strides = [1, 1]} : vector<1x290xf32> to vector<1x256xf32>
    %c13 = arith.constant 13 : index
    %157 = memref.load %arg12[%c13] : memref<18xf32, #tpu.memory_space<smem>>
    %158 = vector.broadcast %157 : f32 to vector<1x256xf32>
    %159 = arith.mulf %158, %156 : vector<1x256xf32>
    %160 = arith.addf %155, %159 : vector<1x256xf32>
    %161 = vector.extract_strided_slice %68 {offsets = [0, 18], sizes = [1, 256], strides = [1, 1]} : vector<1x290xf32> to vector<1x256xf32>
    %c0_59 = arith.constant 0 : index
    %c0_60 = arith.constant 0 : index
    %162 = vector.load %arg10[%c0_59, %c0_60] : memref<1x256xf32, #tpu.memory_space<vmem>>, vector<1x256xf32>
    %163 = arith.mulf %161, %162 : vector<1x256xf32>
    %c14 = arith.constant 14 : index
    %164 = memref.load %arg12[%c14] : memref<18xf32, #tpu.memory_space<smem>>
    %165 = vector.broadcast %164 : f32 to vector<1x256xf32>
    %166 = arith.mulf %165, %163 : vector<1x256xf32>
    %167 = arith.addf %160, %166 : vector<1x256xf32>
    %168 = vector.extract_strided_slice %68 {offsets = [0, 32], sizes = [1, 256], strides = [1, 1]} : vector<1x290xf32> to vector<1x256xf32>
    %c0_61 = arith.constant 0 : index
    %c0_62 = arith.constant 0 : index
    %169 = vector.load %arg9[%c0_61, %c0_62] : memref<1x256xf32, #tpu.memory_space<vmem>>, vector<1x256xf32>
    %170 = arith.mulf %168, %169 : vector<1x256xf32>
    %c15 = arith.constant 15 : index
    %171 = memref.load %arg12[%c15] : memref<18xf32, #tpu.memory_space<smem>>
    %172 = vector.broadcast %171 : f32 to vector<1x256xf32>
    %173 = arith.mulf %172, %170 : vector<1x256xf32>
    %174 = arith.addf %167, %173 : vector<1x256xf32>
    %175 = vector.extract_strided_slice %68 {offsets = [0, 33], sizes = [1, 256], strides = [1, 1]} : vector<1x290xf32> to vector<1x256xf32>
    %c16 = arith.constant 16 : index
    %176 = memref.load %arg12[%c16] : memref<18xf32, #tpu.memory_space<smem>>
    %177 = vector.broadcast %176 : f32 to vector<1x256xf32>
    %178 = arith.mulf %177, %175 : vector<1x256xf32>
    %179 = arith.addf %174, %178 : vector<1x256xf32>
    %180 = vector.extract_strided_slice %68 {offsets = [0, 34], sizes = [1, 256], strides = [1, 1]} : vector<1x290xf32> to vector<1x256xf32>
    %c0_63 = arith.constant 0 : index
    %c0_64 = arith.constant 0 : index
    %181 = vector.load %arg10[%c0_63, %c0_64] : memref<1x256xf32, #tpu.memory_space<vmem>>, vector<1x256xf32>
    %182 = arith.mulf %180, %181 : vector<1x256xf32>
    %c17 = arith.constant 17 : index
    %183 = memref.load %arg12[%c17] : memref<18xf32, #tpu.memory_space<smem>>
    %184 = vector.broadcast %183 : f32 to vector<1x256xf32>
    %185 = arith.mulf %184, %182 : vector<1x256xf32>
    %186 = arith.addf %179, %185 : vector<1x256xf32>
    %187 = arith.negf %186 : vector<1x256xf32>
    %188 = math.exp %187 : vector<1x256xf32>
    %cst_65 = arith.constant 1.000000e+00 : f32
    %189 = vector.broadcast %cst_65 : f32 to vector<1x256xf32>
    %190 = arith.addf %189, %188 : vector<1x256xf32>
    %191 = arith.divf %189, %190 : vector<1x256xf32>
    %192 = vector.broadcast %191 : vector<1x256xf32> to vector<512x256xf32>
    %193 = arith.mulf %61, %192 : vector<512x256xf32>
    %cst_66 = arith.constant 0.000000e+00 : f32
    %194 = vector.broadcast %cst_66 : f32 to vector<512x256xf32>
    %195 = arith.maximumf %193, %194 : vector<512x256xf32>
    %c0_67 = arith.constant 0 : index
    %c0_68 = arith.constant 0 : index
    %196 = vector.load %arg6[%c0_67, %c0_68] : memref<1x512xf32, #tpu.memory_space<vmem>>, vector<1x512xf32>
    %cst_69 = arith.constant dense<0.000000e+00> : vector<1x256xf32>
    %197 = tpu.matmul %196, %195, %cst_69 {dimension_numbers = #tpu.dot_dimension_numbers<[1], [0], [0], [1], [0, 0, 1, 1], [], []>} : vector<1x512xf32>, vector<512x256xf32>, vector<1x256xf32> -> vector<1x256xf32>
    %c0_70 = arith.constant 0 : index
    %198 = memref.load %arg11[%c0_70] : memref<1xf32, #tpu.memory_space<smem>>
    %199 = vector.broadcast %198 : f32 to vector<1x256xf32>
    %200 = arith.addf %197, %199 : vector<1x256xf32>
    %c0_71 = arith.constant 0 : index
    %c0_72 = arith.constant 0 : index
    %c0_73 = arith.constant 0 : index
    %201 = vector.load %arg14[%c0_71, %c0_72, %c0_73] : memref<1x1x256xf32, #tpu.memory_space<vmem>>, vector<1x1x256xf32>
    %202 = vector.shape_cast %201 : vector<1x1x256xf32> to vector<1x256xf32>
    %203 = vector.shape_cast %200 : vector<1x256xf32> to vector<1x1x256xf32>
    tpu.vector_store %arg14[%c0_71, %c0_72, %c0_73], %203 {strides = array<i32>} : memref<1x1x256xf32, #tpu.memory_space<vmem>>, vector<1x1x256xf32>,
    return
  }
  func.func @transform_0(%arg0: i32) -> (i32, i32, i32) {
    %c0_i32 = arith.constant 0 : i32
    %c0_i32_0 = arith.constant 0 : i32
    %c0_i32_1 = arith.constant 0 : i32
    return %arg0, %c0_i32, %c0_i32_0 : i32, i32, i32
  }
  func.func @transform_1(%arg0: i32) -> (i32, i32) {
    %c0_i32 = arith.constant 0 : i32
    %c0_i32_0 = arith.constant 0 : i32
    %c0_i32_1 = arith.constant 0 : i32
    return %c0_i32, %c0_i32_0 : i32, i32
  }
  func.func @transform_2(%arg0: i32) -> (i32, i32) {
    %c0_i32 = arith.constant 0 : i32
    %c0_i32_0 = arith.constant 0 : i32
    %c0_i32_1 = arith.constant 0 : i32
    return %c0_i32, %c0_i32_0 : i32, i32
  }
  func.func @transform_3(%arg0: i32) -> (i32, i32) {
    %c0_i32 = arith.constant 0 : i32
    %c0_i32_0 = arith.constant 0 : i32
    %c0_i32_1 = arith.constant 0 : i32
    return %c0_i32, %c0_i32_0 : i32, i32
  }
  func.func @transform_4(%arg0: i32) -> (i32, i32) {
    %c0_i32 = arith.constant 0 : i32
    %c0_i32_0 = arith.constant 0 : i32
    %c0_i32_1 = arith.constant 0 : i32
    return %c0_i32, %c0_i32_0 : i32, i32
  }
  func.func @transform_5(%arg0: i32) -> (i32, i32) {
    %c0_i32 = arith.constant 0 : i32
    %c0_i32_0 = arith.constant 0 : i32
    %c0_i32_1 = arith.constant 0 : i32
    return %c0_i32, %c0_i32_0 : i32, i32
  }
  func.func @transform_6(%arg0: i32) -> (i32, i32) {
    %c0_i32 = arith.constant 0 : i32
    %c0_i32_0 = arith.constant 0 : i32
    %c0_i32_1 = arith.constant 0 : i32
    return %c0_i32, %c0_i32_0 : i32, i32
  }
  func.func @transform_7(%arg0: i32) -> (i32, i32) {
    %c0_i32 = arith.constant 0 : i32
    %c0_i32_0 = arith.constant 0 : i32
    %c0_i32_1 = arith.constant 0 : i32
    return %c0_i32, %c0_i32_0 : i32, i32
  }
  func.func @transform_8(%arg0: i32) -> (i32, i32) {
    %c0_i32 = arith.constant 0 : i32
    %c0_i32_0 = arith.constant 0 : i32
    %c0_i32_1 = arith.constant 0 : i32
    return %c0_i32, %c0_i32_0 : i32, i32
  }
  func.func @transform_9(%arg0: i32) -> (i32, i32) {
    %c0_i32 = arith.constant 0 : i32
    %c0_i32_0 = arith.constant 0 : i32
    %c0_i32_1 = arith.constant 0 : i32
    return %c0_i32, %c0_i32_0 : i32, i32
  }
  func.func @transform_10(%arg0: i32) -> i32 {
    %c0_i32 = arith.constant 0 : i32
    %c0_i32_0 = arith.constant 0 : i32
    return %c0_i32 : i32
  }
  func.func @transform_11(%arg0: i32) -> i32 {
    %c0_i32 = arith.constant 0 : i32
    %c0_i32_0 = arith.constant 0 : i32
    return %c0_i32 : i32
  }
  func.func @transform_12(%arg0: i32) -> i32 {
    %c0_i32 = arith.constant 0 : i32
    %c0_i32_0 = arith.constant 0 : i32
    return %c0_i32 : i32
  }
  func.func @transform_13(%arg0: i32) -> (i32, i32, i32) {
    %c0_i32 = arith.constant 0 : i32
    %c0_i32_0 = arith.constant 0 : i32
    %c0_i32_1 = arith.constant 0 : i32
    return %arg0, %c0_i32, %c0_i32_0 : i32, i32, i32
  }
}

</mosaic_0001>

<llo_original>
// kernel: tpu_custom_call.1
$region0: #{tpu_custom_call.1}
  #allocation0 [shape = 'u32[]', space=smem, size = 0x4, offset = 0x4, fixed_abs, tag = 'smem constant byte address 0x4 - core index']
  #allocation1 [shape = 'u32[144,128]{1,0:T(1,128)}', space=vmem, size = 0x12000, scoped, tag = 'internal scratch']
  #allocation2 [shape = 'f32[1]{0:T(128)S(6)}', space=smem, size = 0x200, scoped, tag = 'scoped memory for tpu_custom_call.1']
  #allocation3 [shape = 'f32[1]{0:T(128)S(6)}', space=smem, size = 0x200, scoped, tag = 'scoped memory for tpu_custom_call.1']
  %s0 = inlined_call_operand.vmem [shape: f32[2,4,256], index: 0, kind: input, shape index: {}]
  %s1 = inlined_call_operand.vmem [shape: f32[512,4], index: 1, kind: input, shape index: {}]
  %s2 = inlined_call_operand.vmem [shape: f32[512,1], index: 2, kind: input, shape index: {}]
  %s3 = inlined_call_operand.vmem [shape: f32[512,1], index: 3, kind: input, shape index: {}]
  %s4 = inlined_call_operand.vmem [shape: f32[512,1], index: 4, kind: input, shape index: {}]
  %s5 = inlined_call_operand.vmem [shape: f32[1,512], index: 5, kind: input, shape index: {}]
  %s6 = inlined_call_operand.vmem [shape: f32[32,512], index: 6, kind: input, shape index: {}]
  %s7 = inlined_call_operand.vmem [shape: f32[512,32], index: 7, kind: input, shape index: {}]
  %s8 = inlined_call_operand.vmem [shape: f32[1,256], index: 8, kind: input, shape index: {}]
  %s9 = inlined_call_operand.vmem [shape: f32[1,256], index: 9, kind: input, shape index: {}]
  %s10 = inlined_call_operand.<no memory space> [shape: f32[1], index: 10, kind: input, shape index: {}]
  %s11 = inlined_call_operand.vmem [shape: f32[18], index: 11, kind: input, shape index: {}]
  %s12 = inlined_call_operand.<no memory space> [shape: f32[1], index: 12, kind: input, shape index: {}]
  %s13 = inlined_call_operand.hbm [shape: f32[2,1,256], index: 13, kind: output, shape index: {}]
  %s14 = sld [smem:[#allocation0]]
  $region89: #{tpu_custom_call.1} parent=0
    _
  %s16 = ssub.s32 1, %s14
  %s17 = scalar_select 0, %s16, %s14
  %18 = sst [smem:[#allocation2]] %s10
  %19 = sst [smem:[#allocation3]] %s12
  $region1: #{tpu_custom_call.1} parent=0
    #allocation4 [shape = 'u8[512]{0}', space=smem, size = 0x200, scoped, tag = 'input window, operand 11, single buffered']
    #allocation5 [shape = 's32[2]{0}', space=sflag, size = 0x8, scoped, tag = 'scoped memory for tpu_custom_call.1']
    #allocation6 [shape = 's32[2]{0}', space=sflag, size = 0x8, scoped, tag = 'scoped memory for tpu_custom_call.1']
    #allocation7 [shape = 'u8[2048]{0}', space=vmem, size = 0x800, scoped, tag = 'output window, operand 0']
    %20 = vsyncpa [#allocation6], 0
    %21 = vsyncpa [#allocation5], 0
    %s22 = scalar_lea.sflag [#allocation5], 1
    %23 = vsyncpa %s22, 0
    loop: start=0, step=1, limit=4
    $region2: #{tpu_custom_call.1} parent=1 // loop_pre_header
      _
    $region3: #{tpu_custom_call.1} parent=1 // loop_header
      %s25 = sphi 0, %s29
      %p26 = scmp.ge.s32.totalorder %s25, 4
      %s35 = sphi 0, %s37
      %s38 = sphi 0, %s35
      %s39 = sphi 0, %s38
      %s55 = sphi 0, %s39
      %s59 = sphi 0, %s59
      %s61 = sphi 0, %s59
      %s62 = sphi 0, %s61
      %s76 = sphi 0, %s62
      %s80 = sphi 0, %s80
      %s82 = sphi 0, %s80
      %s83 = sphi 0, %s82
      %s97 = sphi 0, %s83
      %s101 = sphi 0, %s101
      %s103 = sphi 0, %s101
      %s104 = sphi 0, %s103
      %s118 = sphi 0, %s104
      %s122 = sphi 0, %s122
      %s124 = sphi 0, %s122
      %s125 = sphi 0, %s124
      %s139 = sphi 0, %s125
      %s143 = sphi 0, %s143
      %s145 = sphi 0, %s143
      %s146 = sphi 0, %s145
      %s160 = sphi 0, %s146
      %s164 = sphi 0, %s164
      %s166 = sphi 0, %s164
      %s167 = sphi 0, %s166
      %s181 = sphi 0, %s167
      %s185 = sphi 0, %s185
      %s187 = sphi 0, %s185
      %s188 = sphi 0, %s187
      %s202 = sphi 0, %s188
      %s206 = sphi 0, %s206
      %s208 = sphi 0, %s206
      %s209 = sphi 0, %s208
      %s223 = sphi 0, %s209
      %s227 = sphi 0, %s227
      %s229 = sphi 0, %s227
      %s230 = sphi 0, %s229
      %s244 = sphi 0, %s230
      %s248 = sphi 0, %s248
      %s250 = sphi 0, %s248
      %s251 = sphi 0, %s250
      %s265 = sphi 0, %s251
      %s269 = sphi 0, %s269
      %s271 = sphi 0, %s269
      %s272 = sphi 0, %s271
      %s286 = sphi 0, %s272
      %s290 = sphi 0, %s290
      %s292 = sphi 0, %s290
      %s293 = sphi 0, %s292
      %s307 = sphi 0, %s293
      %s313 = sphi 0, %s315
      %s316 = sphi 0, %s313
      %s317 = sphi 0, %s316
      %s333 = sphi 0, %s317
    $region4: #{tpu_custom_call.1} parent=1 // loop_header_branch
      %28 = sbr.rel (%p26) target = $region8
    $region5: #{tpu_custom_call.1} parent=1 // loop_body
      %s30 = ssub.s32 %s25, 1
      %s31 = ssub.s32 %s25, 2
      %s32 = sadd.s32 %s25, 1
      %s33 = ssub.s32 %s25, %s32
      %p34 = scmp.eq.s32.totalorder %s33, 0
      %s36 = sadd.s32 %s35, 1
      %s37 = scalar_select %p34, %s35, %s36
      %p40 = pneg %p34
      %p41 = scmp.eq.s32.totalorder %s25, 1
      %p42 = por %p40, %p41
      %p43 = scmp.ne.s32.totalorder %s35, %s38
      %p44 = scmp.eq.s32.totalorder %s25, 0
      %p45 = por %p43, %p44
      %p46 = scmp.ne.s32.totalorder %s35, %s38
      %p47 = scmp.eq.s32.totalorder %s30, 1
      %p48 = por %p46, %p47
      %p49 = scmp.ne.s32.totalorder %s38, %s39
      %p50 = scmp.eq.s32.totalorder %s30, 0
      %p51 = por %p49, %p50
      %p52 = scmp.ne.s32.totalorder %s38, %s39
      %p53 = scmp.eq.s32.totalorder %s31, 1
      %p54 = por %p52, %p53
      %p56 = scmp.ne.s32.totalorder %s39, %s55
      %p57 = scmp.eq.s32.totalorder %s31, 0
      %p58 = por %p56, %p57
      %s60 = sadd.s32 %s59, 1
      %p63 = scmp.eq.s32.totalorder %s25, 1
      %p64 = scmp.ne.s32.totalorder %s59, %s61
      %p65 = scmp.eq.s32.totalorder %s25, 0
      %p66 = por %p64, %p65
      %p67 = scmp.ne.s32.totalorder %s59, %s61
      %p68 = scmp.eq.s32.totalorder %s30, 1
      %p69 = por %p67, %p68
      %p70 = scmp.ne.s32.totalorder %s61, %s62
      %p71 = scmp.eq.s32.totalorder %s30, 0
      %p72 = por %p70, %p71
      %p73 = scmp.ne.s32.totalorder %s61, %s62
      %p74 = scmp.eq.s32.totalorder %s31, 1
      %p75 = por %p73, %p74
      %p77 = scmp.ne.s32.totalorder %s62, %s76
      %p78 = scmp.eq.s32.totalorder %s31, 0
      %p79 = por %p77, %p78
      %s81 = sadd.s32 %s80, 1
      %p84 = scmp.eq.s32.totalorder %s25, 1
      %p85 = scmp.ne.s32.totalorder %s80, %s82
      %p86 = scmp.eq.s32.totalorder %s25, 0
      %p87 = por %p85, %p86
      %p88 = scmp.ne.s32.totalorder %s80, %s82
      %p89 = scmp.eq.s32.totalorder %s30, 1
      %p90 = por %p88, %p89
      %p91 = scmp.ne.s32.totalorder %s82, %s83
      %p92 = scmp.eq.s32.totalorder %s30, 0
      %p93 = por %p91, %p92
      %p94 = scmp.ne.s32.totalorder %s82, %s83
      %p95 = scmp.eq.s32.totalorder %s31, 1
      %p96 = por %p94, %p95
      %p98 = scmp.ne.s32.totalorder %s83, %s97
      %p99 = scmp.eq.s32.totalorder %s31, 0
      %p100 = por %p98, %p99
      %s102 = sadd.s32 %s101, 1
      %p105 = scmp.eq.s32.totalorder %s25, 1
      %p106 = scmp.ne.s32.totalorder %s101, %s103
      %p107 = scmp.eq.s32.totalorder %s25, 0
      %p108 = por %p106, %p107
      %p109 = scmp.ne.s32.totalorder %s101, %s103
      %p110 = scmp.eq.s32.totalorder %s30, 1
      %p111 = por %p109, %p110
      %p112 = scmp.ne.s32.totalorder %s103, %s104
      %p113 = scmp.eq.s32.totalorder %s30, 0
      %p114 = por %p112, %p113
      %p115 = scmp.ne.s32.totalorder %s103, %s104
      %p116 = scmp.eq.s32.totalorder %s31, 1
      %p117 = por %p115, %p116
      %p119 = scmp.ne.s32.totalorder %s104, %s118
      %p120 = scmp.eq.s32.totalorder %s31, 0
      %p121 = por %p119, %p120
      %s123 = sadd.s32 %s122, 1
      %p126 = scmp.eq.s32.totalorder %s25, 1
      %p127 = scmp.ne.s32.totalorder %s122, %s124
      %p128 = scmp.eq.s32.totalorder %s25, 0
      %p129 = por %p127, %p128
      %p130 = scmp.ne.s32.totalorder %s122, %s124
      %p131 = scmp.eq.s32.totalorder %s30, 1
      %p132 = por %p130, %p131
      %p133 = scmp.ne.s32.totalorder %s124, %s125
      %p134 = scmp.eq.s32.totalorder %s30, 0
      %p135 = por %p133, %p134
      %p136 = scmp.ne.s32.totalorder %s124, %s125
      %p137 = scmp.eq.s32.totalorder %s31, 1
      %p138 = por %p136, %p137
      %p140 = scmp.ne.s32.totalorder %s125, %s139
      %p141 = scmp.eq.s32.totalorder %s31, 0
      %p142 = por %p140, %p141
      %s144 = sadd.s32 %s143, 1
      %p147 = scmp.eq.s32.totalorder %s25, 1
      %p148 = scmp.ne.s32.totalorder %s143, %s145
      %p149 = scmp.eq.s32.totalorder %s25, 0
      %p150 = por %p148, %p149
      %p151 = scmp.ne.s32.totalorder %s143, %s145
      %p152 = scmp.eq.s32.totalorder %s30, 1
      %p153 = por %p151, %p152
      %p154 = scmp.ne.s32.totalorder %s145, %s146
      %p155 = scmp.eq.s32.totalorder %s30, 0
      %p156 = por %p154, %p155
      %p157 = scmp.ne.s32.totalorder %s145, %s146
      %p158 = scmp.eq.s32.totalorder %s31, 1
      %p159 = por %p157, %p158
      %p161 = scmp.ne.s32.totalorder %s146, %s160
      %p162 = scmp.eq.s32.totalorder %s31, 0
      %p163 = por %p161, %p162
      %s165 = sadd.s32 %s164, 1
      %p168 = scmp.eq.s32.totalorder %s25, 1
      %p169 = scmp.ne.s32.totalorder %s164, %s166
      %p170 = scmp.eq.s32.totalorder %s25, 0
      %p171 = por %p169, %p170
      %p172 = scmp.ne.s32.totalorder %s164, %s166
      %p173 = scmp.eq.s32.totalorder %s30, 1
      %p174 = por %p172, %p173
      %p175 = scmp.ne.s32.totalorder %s166, %s167
      %p176 = scmp.eq.s32.totalorder %s30, 0
      %p177 = por %p175, %p176
      %p178 = scmp.ne.s32.totalorder %s166, %s167
      %p179 = scmp.eq.s32.totalorder %s31, 1
      %p180 = por %p178, %p179
      %p182 = scmp.ne.s32.totalorder %s167, %s181
      %p183 = scmp.eq.s32.totalorder %s31, 0
      %p184 = por %p182, %p183
      %s186 = sadd.s32 %s185, 1
      %p189 = scmp.eq.s32.totalorder %s25, 1
      %p190 = scmp.ne.s32.totalorder %s185, %s187
      %p191 = scmp.eq.s32.totalorder %s25, 0
      %p192 = por %p190, %p191
      %p193 = scmp.ne.s32.totalorder %s185, %s187
      %p194 = scmp.eq.s32.totalorder %s30, 1
      %p195 = por %p193, %p194
      %p196 = scmp.ne.s32.totalorder %s187, %s188
      %p197 = scmp.eq.s32.totalorder %s30, 0
      %p198 = por %p196, %p197
      %p199 = scmp.ne.s32.totalorder %s187, %s188
      %p200 = scmp.eq.s32.totalorder %s31, 1
      %p201 = por %p199, %p200
      %p203 = scmp.ne.s32.totalorder %s188, %s202
      %p204 = scmp.eq.s32.totalorder %s31, 0
      %p205 = por %p203, %p204
      %s207 = sadd.s32 %s206, 1
      %p210 = scmp.eq.s32.totalorder %s25, 1
      %p211 = scmp.ne.s32.totalorder %s206, %s208
      %p212 = scmp.eq.s32.totalorder %s25, 0
      %p213 = por %p211, %p212
      %p214 = scmp.ne.s32.totalorder %s206, %s208
      %p215 = scmp.eq.s32.totalorder %s30, 1
      %p216 = por %p214, %p215
      %p217 = scmp.ne.s32.totalorder %s208, %s209
      %p218 = scmp.eq.s32.totalorder %s30, 0
      %p219 = por %p217, %p218
      %p220 = scmp.ne.s32.totalorder %s208, %s209
      %p221 = scmp.eq.s32.totalorder %s31, 1
      %p222 = por %p220, %p221
      %p224 = scmp.ne.s32.totalorder %s209, %s223
      %p225 = scmp.eq.s32.totalorder %s31, 0
      %p226 = por %p224, %p225
      %s228 = sadd.s32 %s227, 1
      %p231 = scmp.eq.s32.totalorder %s25, 1
      %p232 = scmp.ne.s32.totalorder %s227, %s229
      %p233 = scmp.eq.s32.totalorder %s25, 0
      %p234 = por %p232, %p233
      %p235 = scmp.ne.s32.totalorder %s227, %s229
      %p236 = scmp.eq.s32.totalorder %s30, 1
      %p237 = por %p235, %p236
      %p238 = scmp.ne.s32.totalorder %s229, %s230
      %p239 = scmp.eq.s32.totalorder %s30, 0
      %p240 = por %p238, %p239
      %p241 = scmp.ne.s32.totalorder %s229, %s230
      %p242 = scmp.eq.s32.totalorder %s31, 1
      %p243 = por %p241, %p242
      %p245 = scmp.ne.s32.totalorder %s230, %s244
      %p246 = scmp.eq.s32.totalorder %s31, 0
      %p247 = por %p245, %p246
      %s249 = sadd.s32 %s248, 1
      %p252 = scmp.eq.s32.totalorder %s25, 1
      %p253 = scmp.ne.s32.totalorder %s248, %s250
      %p254 = scmp.eq.s32.totalorder %s25, 0
      %p255 = por %p253, %p254
      %p256 = scmp.ne.s32.totalorder %s248, %s250
      %p257 = scmp.eq.s32.totalorder %s30, 1
      %p258 = por %p256, %p257
      %p259 = scmp.ne.s32.totalorder %s250, %s251
      %p260 = scmp.eq.s32.totalorder %s30, 0
      %p261 = por %p259, %p260
      %p262 = scmp.ne.s32.totalorder %s250, %s251
      %p263 = scmp.eq.s32.totalorder %s31, 1
      %p264 = por %p262, %p263
      %p266 = scmp.ne.s32.totalorder %s251, %s265
      %p267 = scmp.eq.s32.totalorder %s31, 0
      %p268 = por %p266, %p267
      %s270 = sadd.s32 %s269, 1
      %p273 = scmp.eq.s32.totalorder %s25, 1
      %p274 = scmp.ne.s32.totalorder %s269, %s271
      %p275 = scmp.eq.s32.totalorder %s25, 0
      %p276 = por %p274, %p275
      %p277 = scmp.ne.s32.totalorder %s269, %s271
      %p278 = scmp.eq.s32.totalorder %s30, 1
      %p279 = por %p277, %p278
      %p280 = scmp.ne.s32.totalorder %s271, %s272
      %p281 = scmp.eq.s32.totalorder %s30, 0
      %p282 = por %p280, %p281
      %p283 = scmp.ne.s32.totalorder %s271, %s272
      %p284 = scmp.eq.s32.totalorder %s31, 1
      %p285 = por %p283, %p284
      %p287 = scmp.ne.s32.totalorder %s272, %s286
      %p288 = scmp.eq.s32.totalorder %s31, 0
      %p289 = por %p287, %p288
      %s291 = sadd.s32 %s290, 1
      %p294 = scmp.eq.s32.totalorder %s25, 1
      %p295 = scmp.ne.s32.totalorder %s290, %s292
      %p296 = scmp.eq.s32.totalorder %s25, 0
      %p297 = por %p295, %p296
      %p298 = scmp.ne.s32.totalorder %s290, %s292
      %p299 = scmp.eq.s32.totalorder %s30, 1
      %p300 = por %p298, %p299
      %p301 = scmp.ne.s32.totalorder %s292, %s293
      %p302 = scmp.eq.s32.totalorder %s30, 0
      %p303 = por %p301, %p302
      %p304 = scmp.ne.s32.totalorder %s292, %s293
      %p305 = scmp.eq.s32.totalorder %s31, 1
      %p306 = por %p304, %p305
      %p308 = scmp.ne.s32.totalorder %s293, %s307
      %p309 = scmp.eq.s32.totalorder %s31, 0
      %p310 = por %p308, %p309
      %s311 = ssub.s32 %s25, %s32
      %p312 = scmp.eq.s32.totalorder %s311, 0
      %s314 = sadd.s32 %s313, 1
      %s315 = scalar_select %p312, %s313, %s314
      %p318 = pneg %p312
      %p319 = scmp.eq.s32.totalorder %s25, 1
      %p320 = por %p318, %p319
      %p321 = scmp.ne.s32.totalorder %s313, %s316
      %p322 = scmp.eq.s32.totalorder %s25, 0
      %p323 = por %p321, %p322
      %p324 = scmp.ne.s32.totalorder %s313, %s316
      %p325 = scmp.eq.s32.totalorder %s30, 1
      %p326 = por %p324, %p325
      %p327 = scmp.ne.s32.totalorder %s316, %s317
      %p328 = scmp.eq.s32.totalorder %s30, 0
      %p329 = por %p327, %p328
      %p330 = scmp.ne.s32.totalorder %s316, %s317
      %p331 = scmp.eq.s32.totalorder %s31, 1
      %p332 = por %p330, %p331
      %p334 = scmp.ne.s32.totalorder %s317, %s333
      %p335 = scmp.eq.s32.totalorder %s31, 0
      %p336 = por %p334, %p335
      %p337 = scmp.le.s32.totalorder 1, %s25
      %p338 = scmp.lt.s32.totalorder %s25, 3
      %p339 = pnand %p337, %p338
      %p340 = pneg %p339
      // Predicated region
      $region9: #{tpu_custom_call.1} parent=5 // pred_check
        _
      $region10: #{tpu_custom_call.1} parent=5 // pred_check_branch
        %342 = sbr.rel (%p339) target = $region12
      $region11: #{tpu_custom_call.1} parent=5 // pred_region
        %s343 = ssub.s32 %s25, 1
        // Predicated region
        $region13: #{tpu_custom_call.1} parent=11 // pred_check
          %p344 = pneg %p72
        $region14: #{tpu_custom_call.1} parent=11 // pred_check_branch
          %346 = sbr.rel (%p344) target = $region16
        $region15: #{tpu_custom_call.1} parent=11 // pred_region
          _
        $region16: #{tpu_custom_call.1} parent=11 // pred_fallthru
          _
        // Predicated region
        $region17: #{tpu_custom_call.1} parent=11 // pred_check
          %p347 = pneg %p93
        $region18: #{tpu_custom_call.1} parent=11 // pred_check_branch
          %349 = sbr.rel (%p347) target = $region20
        $region19: #{tpu_custom_call.1} parent=11 // pred_region
          _
        $region20: #{tpu_custom_call.1} parent=11 // pred_fallthru
          _
        // Predicated region
        $region21: #{tpu_custom_call.1} parent=11 // pred_check
          %p350 = pneg %p114
        $region22: #{tpu_custom_call.1} parent=11 // pred_check_branch
          %352 = sbr.rel (%p350) target = $region24
        $region23: #{tpu_custom_call.1} parent=11 // pred_region
          _
        $region24: #{tpu_custom_call.1} parent=11 // pred_fallthru
          _
        // Predicated region
        $region25: #{tpu_custom_call.1} parent=11 // pred_check
          %p353 = pneg %p135
        $region26: #{tpu_custom_call.1} parent=11 // pred_check_branch
          %355 = sbr.rel (%p353) target = $region28
        $region27: #{tpu_custom_call.1} parent=11 // pred_region
          _
        $region28: #{tpu_custom_call.1} parent=11 // pred_fallthru
          _
        // Predicated region
        $region29: #{tpu_custom_call.1} parent=11 // pred_check
          %p356 = pneg %p156
        $region30: #{tpu_custom_call.1} parent=11 // pred_check_branch
          %358 = sbr.rel (%p356) target = $region32
        $region31: #{tpu_custom_call.1} parent=11 // pred_region
          _
        $region32: #{tpu_custom_call.1} parent=11 // pred_fallthru
          _
        // Predicated region
        $region33: #{tpu_custom_call.1} parent=11 // pred_check
          %p359 = pneg %p177
        $region34: #{tpu_custom_call.1} parent=11 // pred_check_branch
          %361 = sbr.rel (%p359) target = $region36
        $region35: #{tpu_custom_call.1} parent=11 // pred_region
          _
        $region36: #{tpu_custom_call.1} parent=11 // pred_fallthru
          _
        // Predicated region
        $region37: #{tpu_custom_call.1} parent=11 // pred_check
          %p362 = pneg %p198
        $region38: #{tpu_custom_call.1} parent=11 // pred_check_branch
          %364 = sbr.rel (%p362) target = $region40
        $region39: #{tpu_custom_call.1} parent=11 // pred_region
          _
        $region40: #{tpu_custom_call.1} parent=11 // pred_fallthru
          _
        // Predicated region
        $region41: #{tpu_custom_call.1} parent=11 // pred_check
          %p365 = pneg %p219
        $region42: #{tpu_custom_call.1} parent=11 // pred_check_branch
          %367 = sbr.rel (%p365) target = $region44
        $region43: #{tpu_custom_call.1} parent=11 // pred_region
          _
        $region44: #{tpu_custom_call.1} parent=11 // pred_fallthru
          _
        // Predicated region
        $region45: #{tpu_custom_call.1} parent=11 // pred_check
          %p368 = pneg %p240
        $region46: #{tpu_custom_call.1} parent=11 // pred_check_branch
          %370 = sbr.rel (%p368) target = $region48
        $region47: #{tpu_custom_call.1} parent=11 // pred_region
          _
        $region48: #{tpu_custom_call.1} parent=11 // pred_fallthru
          _
        // Predicated region
        $region49: #{tpu_custom_call.1} parent=11 // pred_check
          %p371 = pneg %p261
        $region50: #{tpu_custom_call.1} parent=11 // pred_check_branch
          %373 = sbr.rel (%p371) target = $region52
        $region51: #{tpu_custom_call.1} parent=11 // pred_region
          _
        $region52: #{tpu_custom_call.1} parent=11 // pred_fallthru
          _
        // Predicated region
        $region53: #{tpu_custom_call.1} parent=11 // pred_check
          %p374 = pneg %p282
        $region54: #{tpu_custom_call.1} parent=11 // pred_check_branch
          %376 = sbr.rel (%p374) target = $region56
        $region55: #{tpu_custom_call.1} parent=11 // pred_region
          %s378 = ssub.s32 16, 16
          %379 = vsyncadd [#allocation6], %s378
          %s381 = sshll.u32 %s11, 4
          %s382 = int_to_ptr.vmem [resolvable:$true] %s381
          %384 = dma.vmem_to_smem %s382, 16, [#allocation4], [#allocation6]
        $region56: #{tpu_custom_call.1} parent=11 // pred_fallthru
          _
        // Predicated region
        $region57: #{tpu_custom_call.1} parent=11 // pred_check
          %p385 = pneg %p303
        $region58: #{tpu_custom_call.1} parent=11 // pred_check_branch
          %387 = sbr.rel (%p385) target = $region60
        $region59: #{tpu_custom_call.1} parent=11 // pred_region
          _
        $region60: #{tpu_custom_call.1} parent=11 // pred_fallthru
          _
      $region12: #{tpu_custom_call.1} parent=5 // pred_fallthru
        _
      %p388 = scmp.lt.s32.totalorder %s25, 2
      // Predicated region
      $region61: #{tpu_custom_call.1} parent=5 // pred_check
        %p389 = pneg %p388
      $region62: #{tpu_custom_call.1} parent=5 // pred_check_branch
        %391 = sbr.rel (%p389) target = $region64
      $region63: #{tpu_custom_call.1} parent=5 // pred_region
        // Predicated region
        $region65: #{tpu_custom_call.1} parent=63 // pred_check
          %p392 = pneg %p45
        $region66: #{tpu_custom_call.1} parent=63 // pred_check_branch
          %394 = sbr.rel (%p392) target = $region68
        $region67: #{tpu_custom_call.1} parent=63 // pred_region
          %p395 = scmp.lt.s32.totalorder %s25, 1
          %s396 = scalar_select %p395, %s25, 1
          %s397 = smul.addr %s396, 2
          %s398 = smul.addr %s397, 4
          %s399 = scalar_lea.vmem %s0, %s398
        $region68: #{tpu_custom_call.1} parent=63 // pred_fallthru
          _
      $region64: #{tpu_custom_call.1} parent=5 // pred_fallthru
        _
      %p400 = scmp.le.s32.totalorder 1, %s25
      %p401 = scmp.lt.s32.totalorder %s25, 3
      %p402 = pnand %p400, %p401
      %p403 = pneg %p402
      // Predicated region
      $region69: #{tpu_custom_call.1} parent=5 // pred_check
        _
      $region70: #{tpu_custom_call.1} parent=5 // pred_check_branch
        %405 = sbr.rel (%p402) target = $region72
      $region71: #{tpu_custom_call.1} parent=5 // pred_region
        %s406 = ssub.s32 %s25, 1
        // Predicated region
        $region73: #{tpu_custom_call.1} parent=71 // pred_check
          %p407 = pneg %p282
        $region74: #{tpu_custom_call.1} parent=71 // pred_check_branch
          %409 = sbr.rel (%p407) target = $region76
        $region75: #{tpu_custom_call.1} parent=71 // pred_region
          %410 = dma.done [#allocation6], 16
        $region76: #{tpu_custom_call.1} parent=71 // pred_fallthru
          _
        %411 = sfence
        %p412 = scmp.lt.s32.totalorder %s30, 1
        %s413 = scalar_select %p412, %s30, 1
        %s414 = smul.addr %s413, 2
        %s415 = smul.addr %s414, 4
        %s416 = scalar_lea.vmem %s0, %s415
        %p417 = pneg %p51
        %p418 = pneg %p48
        %p419 = pneg %p72
        %p420 = pneg %p69
        %p421 = pneg %p93
        %p422 = pneg %p90
        %p423 = pneg %p114
        %p424 = pneg %p111
        %p425 = pneg %p135
        %p426 = pneg %p132
        %p427 = pneg %p156
        %p428 = pneg %p153
        %p429 = pneg %p177
        %p430 = pneg %p174
        %p431 = pneg %p198
        %p432 = pneg %p195
        %p433 = pneg %p219
        %p434 = pneg %p216
        %p435 = pneg %p240
        %p436 = pneg %p237
        %p437 = pneg %p261
        %p438 = pneg %p258
        %p439 = pneg %p282
        %p440 = pneg %p279
        %p441 = pneg %p303
        %p442 = pneg %p300
        %p443 = pneg %p329
        %p444 = pneg %p326
        %s445 = sand.u32 %s316, 1
        %s446 = scalar_lea.sflag [#allocation5], %s445
        %s447 = sand.u32 %s316, 1
        %s448 = smul.addr %s447, 2
        %s449 = scalar_lea.vmem [#allocation7], %s448
        %p450 = scmp.lt.s32.totalorder %s30, 1
        %s451 = scalar_select %p450, %s30, 1
        %s452 = smul.addr %s451, 2
        %s453 = smul.addr %s452, 4
        %s454 = scalar_lea.vmem %s0, %s453
        %v455 = vld [vmem:[%s454] sm:$0xff]
        %v456 = vld [vmem:[%s2] sm:$0xff]
        %v457 = vld [vmem:[%s2 + $0x8] sm:$0xff]
        %v458 = vld [vmem:[%s2 + $0x10] sm:$0xff]
        %v459 = vld [vmem:[%s2 + $0x18] sm:$0xff]
        %v460 = vld [vmem:[%s2 + $0x20] sm:$0xff]
        %v461 = vld [vmem:[%s2 + $0x28] sm:$0xff]
        %v462 = vld [vmem:[%s2 + $0x30] sm:$0xff]
        %v463 = vld [vmem:[%s2 + $0x38] sm:$0xff]
        %v464 = vld [vmem:[%s2 + $0x40] sm:$0xff]
        %v465 = vld [vmem:[%s2 + $0x48] sm:$0xff]
        %v466 = vld [vmem:[%s2 + $0x50] sm:$0xff]
        %v467 = vld [vmem:[%s2 + $0x58] sm:$0xff]
        %v468 = vld [vmem:[%s2 + $0x60] sm:$0xff]
        %v469 = vld [vmem:[%s2 + $0x68] sm:$0xff]
        %v470 = vld [vmem:[%s2 + $0x70] sm:$0xff]
        %v471 = vld [vmem:[%s2 + $0x78] sm:$0xff]
        %v472 = vld [vmem:[%s2 + $0x80] sm:$0xff]
        %v473 = vld [vmem:[%s2 + $0x88] sm:$0xff]
        %v474 = vld [vmem:[%s2 + $0x90] sm:$0xff]
        %v475 = vld [vmem:[%s2 + $0x98] sm:$0xff]
        %v476 = vld [vmem:[%s2 + $0xa0] sm:$0xff]
        %v477 = vld [vmem:[%s2 + $0xa8] sm:$0xff]
        %v478 = vld [vmem:[%s2 + $0xb0] sm:$0xff]
        %v479 = vld [vmem:[%s2 + $0xb8] sm:$0xff]
        %v480 = vld [vmem:[%s2 + $0xc0] sm:$0xff]
        %v481 = vld [vmem:[%s2 + $0xc8] sm:$0xff]
        %v482 = vld [vmem:[%s2 + $0xd0] sm:$0xff]
        %v483 = vld [vmem:[%s2 + $0xd8] sm:$0xff]
        %v484 = vld [vmem:[%s2 + $0xe0] sm:$0xff]
        %v485 = vld [vmem:[%s2 + $0xe8] sm:$0xff]
        %v486 = vld [vmem:[%s2 + $0xf0] sm:$0xff]
        %v487 = vld [vmem:[%s2 + $0xf8] sm:$0xff]
        %v488 = vld [vmem:[%s2 + $0x100] sm:$0xff]
        %v489 = vld [vmem:[%s2 + $0x108] sm:$0xff]
        %v490 = vld [vmem:[%s2 + $0x110] sm:$0xff]
        %v491 = vld [vmem:[%s2 + $0x118] sm:$0xff]
        %v492 = vld [vmem:[%s2 + $0x120] sm:$0xff]
        %v493 = vld [vmem:[%s2 + $0x128] sm:$0xff]
        %v494 = vld [vmem:[%s2 + $0x130] sm:$0xff]
        %v495 = vld [vmem:[%s2 + $0x138] sm:$0xff]
        %v496 = vld [vmem:[%s2 + $0x140] sm:$0xff]
        %v497 = vld [vmem:[%s2 + $0x148] sm:$0xff]
        %v498 = vld [vmem:[%s2 + $0x150] sm:$0xff]
        %v499 = vld [vmem:[%s2 + $0x158] sm:$0xff]
        %v500 = vld [vmem:[%s2 + $0x160] sm:$0xff]
        %v501 = vld [vmem:[%s2 + $0x168] sm:$0xff]
        %v502 = vld [vmem:[%s2 + $0x170] sm:$0xff]
        %v503 = vld [vmem:[%s2 + $0x178] sm:$0xff]
        %v504 = vld [vmem:[%s2 + $0x180] sm:$0xff]
        %v505 = vld [vmem:[%s2 + $0x188] sm:$0xff]
        %v506 = vld [vmem:[%s2 + $0x190] sm:$0xff]
        %v507 = vld [vmem:[%s2 + $0x198] sm:$0xff]
        %v508 = vld [vmem:[%s2 + $0x1a0] sm:$0xff]
        %v509 = vld [vmem:[%s2 + $0x1a8] sm:$0xff]
        %v510 = vld [vmem:[%s2 + $0x1b0] sm:$0xff]
        %v511 = vld [vmem:[%s2 + $0x1b8] sm:$0xff]
        %v512 = vld [vmem:[%s2 + $0x1c0] sm:$0xff]
        %v513 = vld [vmem:[%s2 + $0x1c8] sm:$0xff]
        %v514 = vld [vmem:[%s2 + $0x1d0] sm:$0xff]
        %v515 = vld [vmem:[%s2 + $0x1d8] sm:$0xff]
        %v516 = vld [vmem:[%s2 + $0x1e0] sm:$0xff]
        %v517 = vld [vmem:[%s2 + $0x1e8] sm:$0xff]
        %v518 = vld [vmem:[%s2 + $0x1f0] sm:$0xff]
        %v519 = vld [vmem:[%s2 + $0x1f8] sm:$0xff]
        %v520 = vld [vmem:[%s1] sm:$0xff]
        %v521 = vld [vmem:[%s1 + $0x8] sm:$0xff]
        %v522 = vld [vmem:[%s1 + $0x10] sm:$0xff]
        %v523 = vld [vmem:[%s1 + $0x18] sm:$0xff]
        %v524 = vld [vmem:[%s1 + $0x20] sm:$0xff]
        %v525 = vld [vmem:[%s1 + $0x28] sm:$0xff]
        %v526 = vld [vmem:[%s1 + $0x30] sm:$0xff]
        %v527 = vld [vmem:[%s1 + $0x38] sm:$0xff]
        %v528 = vld [vmem:[%s1 + $0x40] sm:$0xff]
        %v529 = vld [vmem:[%s1 + $0x48] sm:$0xff]
        %v530 = vld [vmem:[%s1 + $0x50] sm:$0xff]
        %v531 = vld [vmem:[%s1 + $0x58] sm:$0xff]
        %v532 = vld [vmem:[%s1 + $0x60] sm:$0xff]
        %v533 = vld [vmem:[%s1 + $0x68] sm:$0xff]
        %v534 = vld [vmem:[%s1 + $0x70] sm:$0xff]
        %v535 = vld [vmem:[%s1 + $0x78] sm:$0xff]
        %v536 = vld [vmem:[%s1 + $0x80] sm:$0xff]
        %v537 = vld [vmem:[%s1 + $0x88] sm:$0xff]
        %v538 = vld [vmem:[%s1 + $0x90] sm:$0xff]
        %v539 = vld [vmem:[%s1 + $0x98] sm:$0xff]
        %v540 = vld [vmem:[%s1 + $0xa0] sm:$0xff]
        %v541 = vld [vmem:[%s1 + $0xa8] sm:$0xff]
        %v542 = vld [vmem:[%s1 + $0xb0] sm:$0xff]
        %v543 = vld [vmem:[%s1 + $0xb8] sm:$0xff]
        %v544 = vld [vmem:[%s1 + $0xc0] sm:$0xff]
        %v545 = vld [vmem:[%s1 + $0xc8] sm:$0xff]
        %v546 = vld [vmem:[%s1 + $0xd0] sm:$0xff]
        %v547 = vld [vmem:[%s1 + $0xd8] sm:$0xff]
        %v548 = vld [vmem:[%s1 + $0xe0] sm:$0xff]
        %v549 = vld [vmem:[%s1 + $0xe8] sm:$0xff]
        %v550 = vld [vmem:[%s1 + $0xf0] sm:$0xff]
        %v551 = vld [vmem:[%s1 + $0xf8] sm:$0xff]
        %v552 = vld [vmem:[%s1 + $0x100] sm:$0xff]
        %v553 = vld [vmem:[%s1 + $0x108] sm:$0xff]
        %v554 = vld [vmem:[%s1 + $0x110] sm:$0xff]
        %v555 = vld [vmem:[%s1 + $0x118] sm:$0xff]
        %v556 = vld [vmem:[%s1 + $0x120] sm:$0xff]
        %v557 = vld [vmem:[%s1 + $0x128] sm:$0xff]
        %v558 = vld [vmem:[%s1 + $0x130] sm:$0xff]
        %v559 = vld [vmem:[%s1 + $0x138] sm:$0xff]
        %v560 = vld [vmem:[%s1 + $0x140] sm:$0xff]
        %v561 = vld [vmem:[%s1 + $0x148] sm:$0xff]
        %v562 = vld [vmem:[%s1 + $0x150] sm:$0xff]
        %v563 = vld [vmem:[%s1 + $0x158] sm:$0xff]
        %v564 = vld [vmem:[%s1 + $0x160] sm:$0xff]
        %v565 = vld [vmem:[%s1 + $0x168] sm:$0xff]
        %v566 = vld [vmem:[%s1 + $0x170] sm:$0xff]
        %v567 = vld [vmem:[%s1 + $0x178] sm:$0xff]
        %v568 = vld [vmem:[%s1 + $0x180] sm:$0xff]
        %v569 = vld [vmem:[%s1 + $0x188] sm:$0xff]
        %v570 = vld [vmem:[%s1 + $0x190] sm:$0xff]
        %v571 = vld [vmem:[%s1 + $0x198] sm:$0xff]
        %v572 = vld [vmem:[%s1 + $0x1a0] sm:$0xff]
        %v573 = vld [vmem:[%s1 + $0x1a8] sm:$0xff]
        %v574 = vld [vmem:[%s1 + $0x1b0] sm:$0xff]
        %v575 = vld [vmem:[%s1 + $0x1b8] sm:$0xff]
        %v576 = vld [vmem:[%s1 + $0x1c0] sm:$0xff]
        %v577 = vld [vmem:[%s1 + $0x1c8] sm:$0xff]
        %v578 = vld [vmem:[%s1 + $0x1d0] sm:$0xff]
        %v579 = vld [vmem:[%s1 + $0x1d8] sm:$0xff]
        %v580 = vld [vmem:[%s1 + $0x1e0] sm:$0xff]
        %v581 = vld [vmem:[%s1 + $0x1e8] sm:$0xff]
        %v582 = vld [vmem:[%s1 + $0x1f0] sm:$0xff]
        %v583 = vld [vmem:[%s1 + $0x1f8] sm:$0xff]
        %585 = vset.pattern.permute.xlu0 0
        %586 = vperm.xlu0 %585, %v520
        %v587 = vpop.permute.xlu0 %586
        %590 = vset.pattern.permute.xlu0 0
        %591 = vperm.xlu0 %590, %v521
        %v592 = vpop.permute.xlu0 %591
        %595 = vset.pattern.permute.xlu0 0
        %596 = vperm.xlu0 %595, %v522
        %v597 = vpop.permute.xlu0 %596
        %600 = vset.pattern.permute.xlu0 0
        %601 = vperm.xlu0 %600, %v523
        %v602 = vpop.permute.xlu0 %601
        %605 = vset.pattern.permute.xlu0 0
        %606 = vperm.xlu0 %605, %v524
        %v607 = vpop.permute.xlu0 %606
        %610 = vset.pattern.permute.xlu0 0
        %611 = vperm.xlu0 %610, %v525
        %v612 = vpop.permute.xlu0 %611
        %615 = vset.pattern.permute.xlu0 0
        %616 = vperm.xlu0 %615, %v526
        %v617 = vpop.permute.xlu0 %616
        %620 = vset.pattern.permute.xlu0 0
        %621 = vperm.xlu0 %620, %v527
        %v622 = vpop.permute.xlu0 %621
        %625 = vset.pattern.permute.xlu0 0
        %626 = vperm.xlu0 %625, %v528
        %v627 = vpop.permute.xlu0 %626
        %630 = vset.pattern.permute.xlu0 0
        %631 = vperm.xlu0 %630, %v529
        %v632 = vpop.permute.xlu0 %631
        %635 = vset.pattern.permute.xlu0 0
        %636 = vperm.xlu0 %635, %v530
        %v637 = vpop.permute.xlu0 %636
        %640 = vset.pattern.permute.xlu0 0
        %641 = vperm.xlu0 %640, %v531
        %v642 = vpop.permute.xlu0 %641
        %645 = vset.pattern.permute.xlu0 0
        %646 = vperm.xlu0 %645, %v532
        %v647 = vpop.permute.xlu0 %646
        %650 = vset.pattern.permute.xlu0 0
        %651 = vperm.xlu0 %650, %v533
        %v652 = vpop.permute.xlu0 %651
        %655 = vset.pattern.permute.xlu0 0
        %656 = vperm.xlu0 %655, %v534
        %v657 = vpop.permute.xlu0 %656
        %660 = vset.pattern.permute.xlu0 0
        %661 = vperm.xlu0 %660, %v535
        %v662 = vpop.permute.xlu0 %661
        %665 = vset.pattern.permute.xlu0 0
        %666 = vperm.xlu0 %665, %v536
        %v667 = vpop.permute.xlu0 %666
        %670 = vset.pattern.permute.xlu0 0
        %671 = vperm.xlu0 %670, %v537
        %v672 = vpop.permute.xlu0 %671
        %675 = vset.pattern.permute.xlu0 0
        %676 = vperm.xlu0 %675, %v538
        %v677 = vpop.permute.xlu0 %676
        %680 = vset.pattern.permute.xlu0 0
        %681 = vperm.xlu0 %680, %v539
        %v682 = vpop.permute.xlu0 %681
        %685 = vset.pattern.permute.xlu0 0
        %686 = vperm.xlu0 %685, %v540
        %v687 = vpop.permute.xlu0 %686
        %690 = vset.pattern.permute.xlu0 0
        %691 = vperm.xlu0 %690, %v541
        %v692 = vpop.permute.xlu0 %691
        %695 = vset.pattern.permute.xlu0 0
        %696 = vperm.xlu0 %695, %v542
        %v697 = vpop.permute.xlu0 %696
        %700 = vset.pattern.permute.xlu0 0
        %701 = vperm.xlu0 %700, %v543
        %v702 = vpop.permute.xlu0 %701
        %705 = vset.pattern.permute.xlu0 0
        %706 = vperm.xlu0 %705, %v544
        %v707 = vpop.permute.xlu0 %706
        %710 = vset.pattern.permute.xlu0 0
        %711 = vperm.xlu0 %710, %v545
        %v712 = vpop.permute.xlu0 %711
        %715 = vset.pattern.permute.xlu0 0
        %716 = vperm.xlu0 %715, %v546
        %v717 = vpop.permute.xlu0 %716
        %720 = vset.pattern.permute.xlu0 0
        %721 = vperm.xlu0 %720, %v547
        %v722 = vpop.permute.xlu0 %721
        %725 = vset.pattern.permute.xlu0 0
        %726 = vperm.xlu0 %725, %v548
        %v727 = vpop.permute.xlu0 %726
        %730 = vset.pattern.permute.xlu0 0
        %731 = vperm.xlu0 %730, %v549
        %v732 = vpop.permute.xlu0 %731
        %735 = vset.pattern.permute.xlu0 0
        %736 = vperm.xlu0 %735, %v550
        %v737 = vpop.permute.xlu0 %736
        %740 = vset.pattern.permute.xlu0 0
        %741 = vperm.xlu0 %740, %v551
        %v742 = vpop.permute.xlu0 %741
        %745 = vset.pattern.permute.xlu0 0
        %746 = vperm.xlu0 %745, %v552
        %v747 = vpop.permute.xlu0 %746
        %750 = vset.pattern.permute.xlu0 0
        %751 = vperm.xlu0 %750, %v553
        %v752 = vpop.permute.xlu0 %751
        %755 = vset.pattern.permute.xlu0 0
        %756 = vperm.xlu0 %755, %v554
        %v757 = vpop.permute.xlu0 %756
        %760 = vset.pattern.permute.xlu0 0
        %761 = vperm.xlu0 %760, %v555
        %v762 = vpop.permute.xlu0 %761
        %765 = vset.pattern.permute.xlu0 0
        %766 = vperm.xlu0 %765, %v556
        %v767 = vpop.permute.xlu0 %766
        %770 = vset.pattern.permute.xlu0 0
        %771 = vperm.xlu0 %770, %v557
        %v772 = vpop.permute.xlu0 %771
        %775 = vset.pattern.permute.xlu0 0
        %776 = vperm.xlu0 %775, %v558
        %v777 = vpop.permute.xlu0 %776
        %780 = vset.pattern.permute.xlu0 0
        %781 = vperm.xlu0 %780, %v559
        %v782 = vpop.permute.xlu0 %781
        %785 = vset.pattern.permute.xlu0 0
        %786 = vperm.xlu0 %785, %v560
        %v787 = vpop.permute.xlu0 %786
        %790 = vset.pattern.permute.xlu0 0
        %791 = vperm.xlu0 %790, %v561
        %v792 = vpop.permute.xlu0 %791
        %795 = vset.pattern.permute.xlu0 0
        %796 = vperm.xlu0 %795, %v562
        %v797 = vpop.permute.xlu0 %796
        %800 = vset.pattern.permute.xlu0 0
        %801 = vperm.xlu0 %800, %v563
        %v802 = vpop.permute.xlu0 %801
        %805 = vset.pattern.permute.xlu0 0
        %806 = vperm.xlu0 %805, %v564
        %v807 = vpop.permute.xlu0 %806
        %810 = vset.pattern.permute.xlu0 0
        %811 = vperm.xlu0 %810, %v565
        %v812 = vpop.permute.xlu0 %811
        %815 = vset.pattern.permute.xlu0 0
        %816 = vperm.xlu0 %815, %v566
        %v817 = vpop.permute.xlu0 %816
        %820 = vset.pattern.permute.xlu0 0
        %821 = vperm.xlu0 %820, %v567
        %v822 = vpop.permute.xlu0 %821
        %825 = vset.pattern.permute.xlu0 0
        %826 = vperm.xlu0 %825, %v568
        %v827 = vpop.permute.xlu0 %826
        %830 = vset.pattern.permute.xlu0 0
        %831 = vperm.xlu0 %830, %v569
        %v832 = vpop.permute.xlu0 %831
        %835 = vset.pattern.permute.xlu0 0
        %836 = vperm.xlu0 %835, %v570
        %v837 = vpop.permute.xlu0 %836
        %840 = vset.pattern.permute.xlu0 0
        %841 = vperm.xlu0 %840, %v571
        %v842 = vpop.permute.xlu0 %841
        %845 = vset.pattern.permute.xlu0 0
        %846 = vperm.xlu0 %845, %v572
        %v847 = vpop.permute.xlu0 %846
        %850 = vset.pattern.permute.xlu0 0
        %851 = vperm.xlu0 %850, %v573
        %v852 = vpop.permute.xlu0 %851
        %855 = vset.pattern.permute.xlu0 0
        %856 = vperm.xlu0 %855, %v574
        %v857 = vpop.permute.xlu0 %856
        %860 = vset.pattern.permute.xlu0 0
        %861 = vperm.xlu0 %860, %v575
        %v862 = vpop.permute.xlu0 %861
        %865 = vset.pattern.permute.xlu0 0
        %866 = vperm.xlu0 %865, %v576
        %v867 = vpop.permute.xlu0 %866
        %870 = vset.pattern.permute.xlu0 0
        %871 = vperm.xlu0 %870, %v577
        %v872 = vpop.permute.xlu0 %871
        %875 = vset.pattern.permute.xlu0 0
        %876 = vperm.xlu0 %875, %v578
        %v877 = vpop.permute.xlu0 %876
        %880 = vset.pattern.permute.xlu0 0
        %881 = vperm.xlu0 %880, %v579
        %v882 = vpop.permute.xlu0 %881
        %885 = vset.pattern.permute.xlu0 0
        %886 = vperm.xlu0 %885, %v580
        %v887 = vpop.permute.xlu0 %886
        %890 = vset.pattern.permute.xlu0 0
        %891 = vperm.xlu0 %890, %v581
        %v892 = vpop.permute.xlu0 %891
        %895 = vset.pattern.permute.xlu0 0
        %896 = vperm.xlu0 %895, %v582
        %v897 = vpop.permute.xlu0 %896
        %900 = vset.pattern.permute.xlu0 0
        %901 = vperm.xlu0 %900, %v583
        %v902 = vpop.permute.xlu0 %901
        %v905 = vlaneseq
        %v906 = vshrl.u32 %v905, 7
        %v907 = vsub.s32 0, %v906
        %v908 = vrot.slane %v455, %v907
        %v909 = vlaneseq
        %v910 = vshrl.u32 %v909, 7
        %v911 = vsub.s32 4, %v910
        %v912 = vrot.slane %v455, %v911
        %v915 = vlaneseq
        %v916 = vshrl.u32 %v915, 7
        %v917 = vsub.s32 0, %v916
        %v918 = vrot.slane %v908, %v917
        %v919 = vlaneseq
        %v920 = vshrl.u32 %v919, 7
        %v921 = vsub.s32 0, %v920
        %v922 = vrot.slane %v912, %v921
        %v923 = vmul.f32 %v587, %v918
        %v924 = vmul.f32 %v587, %v922
        %v925 = vmul.f32 %v592, %v918
        %v926 = vmul.f32 %v592, %v922
        %v927 = vmul.f32 %v597, %v918
        %v928 = vmul.f32 %v597, %v922
        %v929 = vmul.f32 %v602, %v918
        %v930 = vmul.f32 %v602, %v922
        %v931 = vmul.f32 %v607, %v918
        %v932 = vmul.f32 %v607, %v922
        %v933 = vmul.f32 %v612, %v918
        %v934 = vmul.f32 %v612, %v922
        %v935 = vmul.f32 %v617, %v918
        %v936 = vmul.f32 %v617, %v922
        %v937 = vmul.f32 %v622, %v918
        %v938 = vmul.f32 %v622, %v922
        %v939 = vmul.f32 %v627, %v918
        %v940 = vmul.f32 %v627, %v922
        %v941 = vmul.f32 %v632, %v918
        %v942 = vmul.f32 %v632, %v922
        %v943 = vmul.f32 %v637, %v918
        %v944 = vmul.f32 %v637, %v922
        %v945 = vmul.f32 %v642, %v918
        %v946 = vmul.f32 %v642, %v922
        %v947 = vmul.f32 %v647, %v918
        %v948 = vmul.f32 %v647, %v922
        %v949 = vmul.f32 %v652, %v918
        %v950 = vmul.f32 %v652, %v922
        %v951 = vmul.f32 %v657, %v918
        %v952 = vmul.f32 %v657, %v922
        %v953 = vmul.f32 %v662, %v918
        %v954 = vmul.f32 %v662, %v922
        %v955 = vmul.f32 %v667, %v918
        %v956 = vmul.f32 %v667, %v922
        %v957 = vmul.f32 %v672, %v918
        %v958 = vmul.f32 %v672, %v922
        %v959 = vmul.f32 %v677, %v918
        %v960 = vmul.f32 %v677, %v922
        %v961 = vmul.f32 %v682, %v918
        %v962 = vmul.f32 %v682, %v922
        %v963 = vmul.f32 %v687, %v918
        %v964 = vmul.f32 %v687, %v922
        %v965 = vmul.f32 %v692, %v918
        %v966 = vmul.f32 %v692, %v922
        %v967 = vmul.f32 %v697, %v918
        %v968 = vmul.f32 %v697, %v922
        %v969 = vmul.f32 %v702, %v918
        %v970 = vmul.f32 %v702, %v922
        %v971 = vmul.f32 %v707, %v918
        %v972 = vmul.f32 %v707, %v922
        %v973 = vmul.f32 %v712, %v918
        %v974 = vmul.f32 %v712, %v922
        %v975 = vmul.f32 %v717, %v918
        %v976 = vmul.f32 %v717, %v922
        %v977 = vmul.f32 %v722, %v918
        %v978 = vmul.f32 %v722, %v922
        %v979 = vmul.f32 %v727, %v918
        %v980 = vmul.f32 %v727, %v922
        %v981 = vmul.f32 %v732, %v918
        %v982 = vmul.f32 %v732, %v922
        %v983 = vmul.f32 %v737, %v918
        %v984 = vmul.f32 %v737, %v922
        %v985 = vmul.f32 %v742, %v918
        %v986 = vmul.f32 %v742, %v922
        %v987 = vmul.f32 %v747, %v918
        %v988 = vmul.f32 %v747, %v922
        %v989 = vmul.f32 %v752, %v918
        %v990 = vmul.f32 %v752, %v922
        %v991 = vmul.f32 %v757, %v918
        %v992 = vmul.f32 %v757, %v922
        %v993 = vmul.f32 %v762, %v918
        %v994 = vmul.f32 %v762, %v922
        %v995 = vmul.f32 %v767, %v918
        %v996 = vmul.f32 %v767, %v922
        %v997 = vmul.f32 %v772, %v918
        %v998 = vmul.f32 %v772, %v922
        %v999 = vmul.f32 %v777, %v918
        %v1000 = vmul.f32 %v777, %v922
        %v1001 = vmul.f32 %v782, %v918
        %v1002 = vmul.f32 %v782, %v922
        %v1003 = vmul.f32 %v787, %v918
        %v1004 = vmul.f32 %v787, %v922
        %v1005 = vmul.f32 %v792, %v918
        %v1006 = vmul.f32 %v792, %v922
        %v1007 = vmul.f32 %v797, %v918
        %v1008 = vmul.f32 %v797, %v922
        %v1009 = vmul.f32 %v802, %v918
        %v1010 = vmul.f32 %v802, %v922
        %v1011 = vmul.f32 %v807, %v918
        %v1012 = vmul.f32 %v807, %v922
        %v1013 = vmul.f32 %v812, %v918
        %v1014 = vmul.f32 %v812, %v922
        %v1015 = vmul.f32 %v817, %v918
        %v1016 = vmul.f32 %v817, %v922
        %v1017 = vmul.f32 %v822, %v918
        %v1018 = vmul.f32 %v822, %v922
        %v1019 = vmul.f32 %v827, %v918
        %v1020 = vmul.f32 %v827, %v922
        %v1021 = vmul.f32 %v832, %v918
        %v1022 = vmul.f32 %v832, %v922
        %v1023 = vmul.f32 %v837, %v918
        %v1024 = vmul.f32 %v837, %v922
        %v1025 = vmul.f32 %v842, %v918
        %v1026 = vmul.f32 %v842, %v922
        %v1027 = vmul.f32 %v847, %v918
        %v1028 = vmul.f32 %v847, %v922
        %v1029 = vmul.f32 %v852, %v918
        %v1030 = vmul.f32 %v852, %v922
        %v1031 = vmul.f32 %v857, %v918
        %v1032 = vmul.f32 %v857, %v922
        %v1033 = vmul.f32 %v862, %v918
        %v1034 = vmul.f32 %v862, %v922
        %v1035 = vmul.f32 %v867, %v918
        %v1036 = vmul.f32 %v867, %v922
        %v1037 = vmul.f32 %v872, %v918
        %v1038 = vmul.f32 %v872, %v922
        %v1039 = vmul.f32 %v877, %v918
        %v1040 = vmul.f32 %v877, %v922
        %v1041 = vmul.f32 %v882, %v918
        %v1042 = vmul.f32 %v882, %v922
        %v1043 = vmul.f32 %v887, %v918
        %v1044 = vmul.f32 %v887, %v922
        %v1045 = vmul.f32 %v892, %v918
        %v1046 = vmul.f32 %v892, %v922
        %v1047 = vmul.f32 %v897, %v918
        %v1048 = vmul.f32 %v897, %v922
        %v1049 = vmul.f32 %v902, %v918
        %v1050 = vmul.f32 %v902, %v922
        %1052 = vset.pattern.permute.xlu0 0
        %1053 = vperm.xlu0 %1052, %v456
        %v1054 = vpop.permute.xlu0 %1053
        %1057 = vset.pattern.permute.xlu0 0
        %1058 = vperm.xlu0 %1057, %v457
        %v1059 = vpop.permute.xlu0 %1058
        %1062 = vset.pattern.permute.xlu0 0
        %1063 = vperm.xlu0 %1062, %v458
        %v1064 = vpop.permute.xlu0 %1063
        %1067 = vset.pattern.permute.xlu0 0
        %1068 = vperm.xlu0 %1067, %v459
        %v1069 = vpop.permute.xlu0 %1068
        %1072 = vset.pattern.permute.xlu0 0
        %1073 = vperm.xlu0 %1072, %v460
        %v1074 = vpop.permute.xlu0 %1073
        %1077 = vset.pattern.permute.xlu0 0
        %1078 = vperm.xlu0 %1077, %v461
        %v1079 = vpop.permute.xlu0 %1078
        %1082 = vset.pattern.permute.xlu0 0
        %1083 = vperm.xlu0 %1082, %v462
        %v1084 = vpop.permute.xlu0 %1083
        %1087 = vset.pattern.permute.xlu0 0
        %1088 = vperm.xlu0 %1087, %v463
        %v1089 = vpop.permute.xlu0 %1088
        %1092 = vset.pattern.permute.xlu0 0
        %1093 = vperm.xlu0 %1092, %v464
        %v1094 = vpop.permute.xlu0 %1093
        %1097 = vset.pattern.permute.xlu0 0
        %1098 = vperm.xlu0 %1097, %v465
        %v1099 = vpop.permute.xlu0 %1098
        %1102 = vset.pattern.permute.xlu0 0
        %1103 = vperm.xlu0 %1102, %v466
        %v1104 = vpop.permute.xlu0 %1103
        %1107 = vset.pattern.permute.xlu0 0
        %1108 = vperm.xlu0 %1107, %v467
        %v1109 = vpop.permute.xlu0 %1108
        %1112 = vset.pattern.permute.xlu0 0
        %1113 = vperm.xlu0 %1112, %v468
        %v1114 = vpop.permute.xlu0 %1113
        %1117 = vset.pattern.permute.xlu0 0
        %1118 = vperm.xlu0 %1117, %v469
        %v1119 = vpop.permute.xlu0 %1118
        %1122 = vset.pattern.permute.xlu0 0
        %1123 = vperm.xlu0 %1122, %v470
        %v1124 = vpop.permute.xlu0 %1123
        %1127 = vset.pattern.permute.xlu0 0
        %1128 = vperm.xlu0 %1127, %v471
        %v1129 = vpop.permute.xlu0 %1128
        %1132 = vset.pattern.permute.xlu0 0
        %1133 = vperm.xlu0 %1132, %v472
        %v1134 = vpop.permute.xlu0 %1133
        %1137 = vset.pattern.permute.xlu0 0
        %1138 = vperm.xlu0 %1137, %v473
        %v1139 = vpop.permute.xlu0 %1138
        %1142 = vset.pattern.permute.xlu0 0
        %1143 = vperm.xlu0 %1142, %v474
        %v1144 = vpop.permute.xlu0 %1143
        %1147 = vset.pattern.permute.xlu0 0
        %1148 = vperm.xlu0 %1147, %v475
        %v1149 = vpop.permute.xlu0 %1148
        %1152 = vset.pattern.permute.xlu0 0
        %1153 = vperm.xlu0 %1152, %v476
        %v1154 = vpop.permute.xlu0 %1153
        %1157 = vset.pattern.permute.xlu0 0
        %1158 = vperm.xlu0 %1157, %v477
        %v1159 = vpop.permute.xlu0 %1158
        %1162 = vset.pattern.permute.xlu0 0
        %1163 = vperm.xlu0 %1162, %v478
        %v1164 = vpop.permute.xlu0 %1163
        %1167 = vset.pattern.permute.xlu0 0
        %1168 = vperm.xlu0 %1167, %v479
        %v1169 = vpop.permute.xlu0 %1168
        %1172 = vset.pattern.permute.xlu0 0
        %1173 = vperm.xlu0 %1172, %v480
        %v1174 = vpop.permute.xlu0 %1173
        %1177 = vset.pattern.permute.xlu0 0
        %1178 = vperm.xlu0 %1177, %v481
        %v1179 = vpop.permute.xlu0 %1178
        %1182 = vset.pattern.permute.xlu0 0
        %1183 = vperm.xlu0 %1182, %v482
        %v1184 = vpop.permute.xlu0 %1183
        %1187 = vset.pattern.permute.xlu0 0
        %1188 = vperm.xlu0 %1187, %v483
        %v1189 = vpop.permute.xlu0 %1188
        %1192 = vset.pattern.permute.xlu0 0
        %1193 = vperm.xlu0 %1192, %v484
        %v1194 = vpop.permute.xlu0 %1193
        %1197 = vset.pattern.permute.xlu0 0
        %1198 = vperm.xlu0 %1197, %v485
        %v1199 = vpop.permute.xlu0 %1198
        %1202 = vset.pattern.permute.xlu0 0
        %1203 = vperm.xlu0 %1202, %v486
        %v1204 = vpop.permute.xlu0 %1203
        %1207 = vset.pattern.permute.xlu0 0
        %1208 = vperm.xlu0 %1207, %v487
        %v1209 = vpop.permute.xlu0 %1208
        %1212 = vset.pattern.permute.xlu0 0
        %1213 = vperm.xlu0 %1212, %v488
        %v1214 = vpop.permute.xlu0 %1213
        %1217 = vset.pattern.permute.xlu0 0
        %1218 = vperm.xlu0 %1217, %v489
        %v1219 = vpop.permute.xlu0 %1218
        %1222 = vset.pattern.permute.xlu0 0
        %1223 = vperm.xlu0 %1222, %v490
        %v1224 = vpop.permute.xlu0 %1223
        %1227 = vset.pattern.permute.xlu0 0
        %1228 = vperm.xlu0 %1227, %v491
        %v1229 = vpop.permute.xlu0 %1228
        %1232 = vset.pattern.permute.xlu0 0
        %1233 = vperm.xlu0 %1232, %v492
        %v1234 = vpop.permute.xlu0 %1233
        %1237 = vset.pattern.permute.xlu0 0
        %1238 = vperm.xlu0 %1237, %v493
        %v1239 = vpop.permute.xlu0 %1238
        %1242 = vset.pattern.permute.xlu0 0
        %1243 = vperm.xlu0 %1242, %v494
        %v1244 = vpop.permute.xlu0 %1243
        %1247 = vset.pattern.permute.xlu0 0
        %1248 = vperm.xlu0 %1247, %v495
        %v1249 = vpop.permute.xlu0 %1248
        %1252 = vset.pattern.permute.xlu0 0
        %1253 = vperm.xlu0 %1252, %v496
        %v1254 = vpop.permute.xlu0 %1253
        %1257 = vset.pattern.permute.xlu0 0
        %1258 = vperm.xlu0 %1257, %v497
        %v1259 = vpop.permute.xlu0 %1258
        %1262 = vset.pattern.permute.xlu0 0
        %1263 = vperm.xlu0 %1262, %v498
        %v1264 = vpop.permute.xlu0 %1263
        %1267 = vset.pattern.permute.xlu0 0
        %1268 = vperm.xlu0 %1267, %v499
        %v1269 = vpop.permute.xlu0 %1268
        %1272 = vset.pattern.permute.xlu0 0
        %1273 = vperm.xlu0 %1272, %v500
        %v1274 = vpop.permute.xlu0 %1273
        %1277 = vset.pattern.permute.xlu0 0
        %1278 = vperm.xlu0 %1277, %v501
        %v1279 = vpop.permute.xlu0 %1278
        %1282 = vset.pattern.permute.xlu0 0
        %1283 = vperm.xlu0 %1282, %v502
        %v1284 = vpop.permute.xlu0 %1283
        %1287 = vset.pattern.permute.xlu0 0
        %1288 = vperm.xlu0 %1287, %v503
        %v1289 = vpop.permute.xlu0 %1288
        %1292 = vset.pattern.permute.xlu0 0
        %1293 = vperm.xlu0 %1292, %v504
        %v1294 = vpop.permute.xlu0 %1293
        %1297 = vset.pattern.permute.xlu0 0
        %1298 = vperm.xlu0 %1297, %v505
        %v1299 = vpop.permute.xlu0 %1298
        %1302 = vset.pattern.permute.xlu0 0
        %1303 = vperm.xlu0 %1302, %v506
        %v1304 = vpop.permute.xlu0 %1303
        %1307 = vset.pattern.permute.xlu0 0
        %1308 = vperm.xlu0 %1307, %v507
        %v1309 = vpop.permute.xlu0 %1308
        %1312 = vset.pattern.permute.xlu0 0
        %1313 = vperm.xlu0 %1312, %v508
        %v1314 = vpop.permute.xlu0 %1313
        %1317 = vset.pattern.permute.xlu0 0
        %1318 = vperm.xlu0 %1317, %v509
        %v1319 = vpop.permute.xlu0 %1318
        %1322 = vset.pattern.permute.xlu0 0
        %1323 = vperm.xlu0 %1322, %v510
        %v1324 = vpop.permute.xlu0 %1323
        %1327 = vset.pattern.permute.xlu0 0
        %1328 = vperm.xlu0 %1327, %v511
        %v1329 = vpop.permute.xlu0 %1328
        %1332 = vset.pattern.permute.xlu0 0
        %1333 = vperm.xlu0 %1332, %v512
        %v1334 = vpop.permute.xlu0 %1333
        %1337 = vset.pattern.permute.xlu0 0
        %1338 = vperm.xlu0 %1337, %v513
        %v1339 = vpop.permute.xlu0 %1338
        %1342 = vset.pattern.permute.xlu0 0
        %1343 = vperm.xlu0 %1342, %v514
        %v1344 = vpop.permute.xlu0 %1343
        %1347 = vset.pattern.permute.xlu0 0
        %1348 = vperm.xlu0 %1347, %v515
        %v1349 = vpop.permute.xlu0 %1348
        %1352 = vset.pattern.permute.xlu0 0
        %1353 = vperm.xlu0 %1352, %v516
        %v1354 = vpop.permute.xlu0 %1353
        %1357 = vset.pattern.permute.xlu0 0
        %1358 = vperm.xlu0 %1357, %v517
        %v1359 = vpop.permute.xlu0 %1358
        %1362 = vset.pattern.permute.xlu0 0
        %1363 = vperm.xlu0 %1362, %v518
        %v1364 = vpop.permute.xlu0 %1363
        %1367 = vset.pattern.permute.xlu0 0
        %1368 = vperm.xlu0 %1367, %v519
        %v1369 = vpop.permute.xlu0 %1368
        %v1371 = vadd.f32 %v1054, %v923
        %v1372 = vadd.f32 %v1054, %v924
        %v1373 = vadd.f32 %v1059, %v925
        %v1374 = vadd.f32 %v1059, %v926
        %v1375 = vadd.f32 %v1064, %v927
        %v1376 = vadd.f32 %v1064, %v928
        %v1377 = vadd.f32 %v1069, %v929
        %v1378 = vadd.f32 %v1069, %v930
        %v1379 = vadd.f32 %v1074, %v931
        %v1380 = vadd.f32 %v1074, %v932
        %v1381 = vadd.f32 %v1079, %v933
        %v1382 = vadd.f32 %v1079, %v934
        %v1383 = vadd.f32 %v1084, %v935
        %v1384 = vadd.f32 %v1084, %v936
        %v1385 = vadd.f32 %v1089, %v937
        %v1386 = vadd.f32 %v1089, %v938
        %v1387 = vadd.f32 %v1094, %v939
        %v1388 = vadd.f32 %v1094, %v940
        %v1389 = vadd.f32 %v1099, %v941
        %v1390 = vadd.f32 %v1099, %v942
        %v1391 = vadd.f32 %v1104, %v943
        %v1392 = vadd.f32 %v1104, %v944
        %v1393 = vadd.f32 %v1109, %v945
        %v1394 = vadd.f32 %v1109, %v946
        %v1395 = vadd.f32 %v1114, %v947
        %v1396 = vadd.f32 %v1114, %v948
        %v1397 = vadd.f32 %v1119, %v949
        %v1398 = vadd.f32 %v1119, %v950
        %v1399 = vadd.f32 %v1124, %v951
        %v1400 = vadd.f32 %v1124, %v952
        %v1401 = vadd.f32 %v1129, %v953
        %v1402 = vadd.f32 %v1129, %v954
        %v1403 = vadd.f32 %v1134, %v955
        %v1404 = vadd.f32 %v1134, %v956
        %v1405 = vadd.f32 %v1139, %v957
        %v1406 = vadd.f32 %v1139, %v958
        %v1407 = vadd.f32 %v1144, %v959
        %v1408 = vadd.f32 %v1144, %v960
        %v1409 = vadd.f32 %v1149, %v961
        %v1410 = vadd.f32 %v1149, %v962
        %v1411 = vadd.f32 %v1154, %v963
        %v1412 = vadd.f32 %v1154, %v964
        %v1413 = vadd.f32 %v1159, %v965
        %v1414 = vadd.f32 %v1159, %v966
        %v1415 = vadd.f32 %v1164, %v967
        %v1416 = vadd.f32 %v1164, %v968
        %v1417 = vadd.f32 %v1169, %v969
        %v1418 = vadd.f32 %v1169, %v970
        %v1419 = vadd.f32 %v1174, %v971
        %v1420 = vadd.f32 %v1174, %v972
        %v1421 = vadd.f32 %v1179, %v973
        %v1422 = vadd.f32 %v1179, %v974
        %v1423 = vadd.f32 %v1184, %v975
        %v1424 = vadd.f32 %v1184, %v976
        %v1425 = vadd.f32 %v1189, %v977
        %v1426 = vadd.f32 %v1189, %v978
        %v1427 = vadd.f32 %v1194, %v979
        %v1428 = vadd.f32 %v1194, %v980
        %v1429 = vadd.f32 %v1199, %v981
        %v1430 = vadd.f32 %v1199, %v982
        %v1431 = vadd.f32 %v1204, %v983
        %v1432 = vadd.f32 %v1204, %v984
        %v1433 = vadd.f32 %v1209, %v985
        %v1434 = vadd.f32 %v1209, %v986
        %v1435 = vadd.f32 %v1214, %v987
        %v1436 = vadd.f32 %v1214, %v988
        %v1437 = vadd.f32 %v1219, %v989
        %v1438 = vadd.f32 %v1219, %v990
        %v1439 = vadd.f32 %v1224, %v991
        %v1440 = vadd.f32 %v1224, %v992
        %v1441 = vadd.f32 %v1229, %v993
        %v1442 = vadd.f32 %v1229, %v994
        %v1443 = vadd.f32 %v1234, %v995
        %v1444 = vadd.f32 %v1234, %v996
        %v1445 = vadd.f32 %v1239, %v997
        %v1446 = vadd.f32 %v1239, %v998
        %v1447 = vadd.f32 %v1244, %v999
        %v1448 = vadd.f32 %v1244, %v1000
        %v1449 = vadd.f32 %v1249, %v1001
        %v1450 = vadd.f32 %v1249, %v1002
        %v1451 = vadd.f32 %v1254, %v1003
        %v1452 = vadd.f32 %v1254, %v1004
        %v1453 = vadd.f32 %v1259, %v1005
        %v1454 = vadd.f32 %v1259, %v1006
        %v1455 = vadd.f32 %v1264, %v1007
        %v1456 = vadd.f32 %v1264, %v1008
        %v1457 = vadd.f32 %v1269, %v1009
        %v1458 = vadd.f32 %v1269, %v1010
        %v1459 = vadd.f32 %v1274, %v1011
        %v1460 = vadd.f32 %v1274, %v1012
        %v1461 = vadd.f32 %v1279, %v1013
        %v1462 = vadd.f32 %v1279, %v1014
        %v1463 = vadd.f32 %v1284, %v1015
        %v1464 = vadd.f32 %v1284, %v1016
        %v1465 = vadd.f32 %v1289, %v1017
        %v1466 = vadd.f32 %v1289, %v1018
        %v1467 = vadd.f32 %v1294, %v1019
        %v1468 = vadd.f32 %v1294, %v1020
        %v1469 = vadd.f32 %v1299, %v1021
        %v1470 = vadd.f32 %v1299, %v1022
        %v1471 = vadd.f32 %v1304, %v1023
        %v1472 = vadd.f32 %v1304, %v1024
        %v1473 = vadd.f32 %v1309, %v1025
        %v1474 = vadd.f32 %v1309, %v1026
        %v1475 = vadd.f32 %v1314, %v1027
        %v1476 = vadd.f32 %v1314, %v1028
        %v1477 = vadd.f32 %v1319, %v1029
        %v1478 = vadd.f32 %v1319, %v1030
        %v1479 = vadd.f32 %v1324, %v1031
        %v1480 = vadd.f32 %v1324, %v1032
        %v1481 = vadd.f32 %v1329, %v1033
        %v1482 = vadd.f32 %v1329, %v1034
        %v1483 = vadd.f32 %v1334, %v1035
        %v1484 = vadd.f32 %v1334, %v1036
        %v1485 = vadd.f32 %v1339, %v1037
        %v1486 = vadd.f32 %v1339, %v1038
        %v1487 = vadd.f32 %v1344, %v1039
        %v1488 = vadd.f32 %v1344, %v1040
        %v1489 = vadd.f32 %v1349, %v1041
        %v1490 = vadd.f32 %v1349, %v1042
        %v1491 = vadd.f32 %v1354, %v1043
        %v1492 = vadd.f32 %v1354, %v1044
        %v1493 = vadd.f32 %v1359, %v1045
        %v1494 = vadd.f32 %v1359, %v1046
        %v1495 = vadd.f32 %v1364, %v1047
        %v1496 = vadd.f32 %v1364, %v1048
        %v1497 = vadd.f32 %v1369, %v1049
        %v1498 = vadd.f32 %v1369, %v1050
        %1499 = vset.pattern.permute.xlu0 1
        %1500 = vperm.xlu0 %1499, %v520
        %v1501 = vpop.permute.xlu0 %1500
        %1503 = vset.pattern.permute.xlu0 1
        %1504 = vperm.xlu0 %1503, %v521
        %v1505 = vpop.permute.xlu0 %1504
        %1507 = vset.pattern.permute.xlu0 1
        %1508 = vperm.xlu0 %1507, %v522
        %v1509 = vpop.permute.xlu0 %1508
        %1511 = vset.pattern.permute.xlu0 1
        %1512 = vperm.xlu0 %1511, %v523
        %v1513 = vpop.permute.xlu0 %1512
        %1515 = vset.pattern.permute.xlu0 1
        %1516 = vperm.xlu0 %1515, %v524
        %v1517 = vpop.permute.xlu0 %1516
        %1519 = vset.pattern.permute.xlu0 1
        %1520 = vperm.xlu0 %1519, %v525
        %v1521 = vpop.permute.xlu0 %1520
        %1523 = vset.pattern.permute.xlu0 1
        %1524 = vperm.xlu0 %1523, %v526
        %v1525 = vpop.permute.xlu0 %1524
        %1527 = vset.pattern.permute.xlu0 1
        %1528 = vperm.xlu0 %1527, %v527
        %v1529 = vpop.permute.xlu0 %1528
        %1531 = vset.pattern.permute.xlu0 1
        %1532 = vperm.xlu0 %1531, %v528
        %v1533 = vpop.permute.xlu0 %1532
        %1535 = vset.pattern.permute.xlu0 1
        %1536 = vperm.xlu0 %1535, %v529
        %v1537 = vpop.permute.xlu0 %1536
        %1539 = vset.pattern.permute.xlu0 1
        %1540 = vperm.xlu0 %1539, %v530
        %v1541 = vpop.permute.xlu0 %1540
        %1543 = vset.pattern.permute.xlu0 1
        %1544 = vperm.xlu0 %1543, %v531
        %v1545 = vpop.permute.xlu0 %1544
        %1547 = vset.pattern.permute.xlu0 1
        %1548 = vperm.xlu0 %1547, %v532
        %v1549 = vpop.permute.xlu0 %1548
        %1551 = vset.pattern.permute.xlu0 1
        %1552 = vperm.xlu0 %1551, %v533
        %v1553 = vpop.permute.xlu0 %1552
        %1555 = vset.pattern.permute.xlu0 1
        %1556 = vperm.xlu0 %1555, %v534
        %v1557 = vpop.permute.xlu0 %1556
        %1559 = vset.pattern.permute.xlu0 1
        %1560 = vperm.xlu0 %1559, %v535
        %v1561 = vpop.permute.xlu0 %1560
        %1563 = vset.pattern.permute.xlu0 1
        %1564 = vperm.xlu0 %1563, %v536
        %v1565 = vpop.permute.xlu0 %1564
        %1567 = vset.pattern.permute.xlu0 1
        %1568 = vperm.xlu0 %1567, %v537
        %v1569 = vpop.permute.xlu0 %1568
        %1571 = vset.pattern.permute.xlu0 1
        %1572 = vperm.xlu0 %1571, %v538
        %v1573 = vpop.permute.xlu0 %1572
        %1575 = vset.pattern.permute.xlu0 1
        %1576 = vperm.xlu0 %1575, %v539
        %v1577 = vpop.permute.xlu0 %1576
        %1579 = vset.pattern.permute.xlu0 1
        %1580 = vperm.xlu0 %1579, %v540
        %v1581 = vpop.permute.xlu0 %1580
        %1583 = vset.pattern.permute.xlu0 1
        %1584 = vperm.xlu0 %1583, %v541
        %v1585 = vpop.permute.xlu0 %1584
        %1587 = vset.pattern.permute.xlu0 1
        %1588 = vperm.xlu0 %1587, %v542
        %v1589 = vpop.permute.xlu0 %1588
        %1591 = vset.pattern.permute.xlu0 1
        %1592 = vperm.xlu0 %1591, %v543
        %v1593 = vpop.permute.xlu0 %1592
        %1595 = vset.pattern.permute.xlu0 1
        %1596 = vperm.xlu0 %1595, %v544
        %v1597 = vpop.permute.xlu0 %1596
        %1599 = vset.pattern.permute.xlu0 1
        %1600 = vperm.xlu0 %1599, %v545
        %v1601 = vpop.permute.xlu0 %1600
        %1603 = vset.pattern.permute.xlu0 1
        %1604 = vperm.xlu0 %1603, %v546
        %v1605 = vpop.permute.xlu0 %1604
        %1607 = vset.pattern.permute.xlu0 1
        %1608 = vperm.xlu0 %1607, %v547
        %v1609 = vpop.permute.xlu0 %1608
        %1611 = vset.pattern.permute.xlu0 1
        %1612 = vperm.xlu0 %1611, %v548
        %v1613 = vpop.permute.xlu0 %1612
        %1615 = vset.pattern.permute.xlu0 1
        %1616 = vperm.xlu0 %1615, %v549
        %v1617 = vpop.permute.xlu0 %1616
        %1619 = vset.pattern.permute.xlu0 1
        %1620 = vperm.xlu0 %1619, %v550
        %v1621 = vpop.permute.xlu0 %1620
        %1623 = vset.pattern.permute.xlu0 1
        %1624 = vperm.xlu0 %1623, %v551
        %v1625 = vpop.permute.xlu0 %1624
        %1627 = vset.pattern.permute.xlu0 1
        %1628 = vperm.xlu0 %1627, %v552
        %v1629 = vpop.permute.xlu0 %1628
        %1631 = vset.pattern.permute.xlu0 1
        %1632 = vperm.xlu0 %1631, %v553
        %v1633 = vpop.permute.xlu0 %1632
        %1635 = vset.pattern.permute.xlu0 1
        %1636 = vperm.xlu0 %1635, %v554
        %v1637 = vpop.permute.xlu0 %1636
        %1639 = vset.pattern.permute.xlu0 1
        %1640 = vperm.xlu0 %1639, %v555
        %v1641 = vpop.permute.xlu0 %1640
        %1643 = vset.pattern.permute.xlu0 1
        %1644 = vperm.xlu0 %1643, %v556
        %v1645 = vpop.permute.xlu0 %1644
        %1647 = vset.pattern.permute.xlu0 1
        %1648 = vperm.xlu0 %1647, %v557
        %v1649 = vpop.permute.xlu0 %1648
        %1651 = vset.pattern.permute.xlu0 1
        %1652 = vperm.xlu0 %1651, %v558
        %v1653 = vpop.permute.xlu0 %1652
        %1655 = vset.pattern.permute.xlu0 1
        %1656 = vperm.xlu0 %1655, %v559
        %v1657 = vpop.permute.xlu0 %1656
        %1659 = vset.pattern.permute.xlu0 1
        %1660 = vperm.xlu0 %1659, %v560
        %v1661 = vpop.permute.xlu0 %1660
        %1663 = vset.pattern.permute.xlu0 1
        %1664 = vperm.xlu0 %1663, %v561
        %v1665 = vpop.permute.xlu0 %1664
        %1667 = vset.pattern.permute.xlu0 1
        %1668 = vperm.xlu0 %1667, %v562
        %v1669 = vpop.permute.xlu0 %1668
        %1671 = vset.pattern.permute.xlu0 1
        %1672 = vperm.xlu0 %1671, %v563
        %v1673 = vpop.permute.xlu0 %1672
        %1675 = vset.pattern.permute.xlu0 1
        %1676 = vperm.xlu0 %1675, %v564
        %v1677 = vpop.permute.xlu0 %1676
        %1679 = vset.pattern.permute.xlu0 1
        %1680 = vperm.xlu0 %1679, %v565
        %v1681 = vpop.permute.xlu0 %1680
        %1683 = vset.pattern.permute.xlu0 1
        %1684 = vperm.xlu0 %1683, %v566
        %v1685 = vpop.permute.xlu0 %1684
        %1687 = vset.pattern.permute.xlu0 1
        %1688 = vperm.xlu0 %1687, %v567
        %v1689 = vpop.permute.xlu0 %1688
        %1691 = vset.pattern.permute.xlu0 1
        %1692 = vperm.xlu0 %1691, %v568
        %v1693 = vpop.permute.xlu0 %1692
        %1695 = vset.pattern.permute.xlu0 1
        %1696 = vperm.xlu0 %1695, %v569
        %v1697 = vpop.permute.xlu0 %1696
        %1699 = vset.pattern.permute.xlu0 1
        %1700 = vperm.xlu0 %1699, %v570
        %v1701 = vpop.permute.xlu0 %1700
        %1703 = vset.pattern.permute.xlu0 1
        %1704 = vperm.xlu0 %1703, %v571
        %v1705 = vpop.permute.xlu0 %1704
        %1707 = vset.pattern.permute.xlu0 1
        %1708 = vperm.xlu0 %1707, %v572
        %v1709 = vpop.permute.xlu0 %1708
        %1711 = vset.pattern.permute.xlu0 1
        %1712 = vperm.xlu0 %1711, %v573
        %v1713 = vpop.permute.xlu0 %1712
        %1715 = vset.pattern.permute.xlu0 1
        %1716 = vperm.xlu0 %1715, %v574
        %v1717 = vpop.permute.xlu0 %1716
        %1719 = vset.pattern.permute.xlu0 1
        %1720 = vperm.xlu0 %1719, %v575
        %v1721 = vpop.permute.xlu0 %1720
        %1723 = vset.pattern.permute.xlu0 1
        %1724 = vperm.xlu0 %1723, %v576
        %v1725 = vpop.permute.xlu0 %1724
        %1727 = vset.pattern.permute.xlu0 1
        %1728 = vperm.xlu0 %1727, %v577
        %v1729 = vpop.permute.xlu0 %1728
        %1731 = vset.pattern.permute.xlu0 1
        %1732 = vperm.xlu0 %1731, %v578
        %v1733 = vpop.permute.xlu0 %1732
        %1735 = vset.pattern.permute.xlu0 1
        %1736 = vperm.xlu0 %1735, %v579
        %v1737 = vpop.permute.xlu0 %1736
        %1739 = vset.pattern.permute.xlu0 1
        %1740 = vperm.xlu0 %1739, %v580
        %v1741 = vpop.permute.xlu0 %1740
        %1743 = vset.pattern.permute.xlu0 1
        %1744 = vperm.xlu0 %1743, %v581
        %v1745 = vpop.permute.xlu0 %1744
        %1747 = vset.pattern.permute.xlu0 1
        %1748 = vperm.xlu0 %1747, %v582
        %v1749 = vpop.permute.xlu0 %1748
        %1751 = vset.pattern.permute.xlu0 1
        %1752 = vperm.xlu0 %1751, %v583
        %v1753 = vpop.permute.xlu0 %1752
        %v1755 = vlaneseq
        %v1756 = vshrl.u32 %v1755, 7
        %v1757 = vsub.s32 1, %v1756
        %v1758 = vrot.slane %v455, %v1757
        %v1759 = vlaneseq
        %v1760 = vshrl.u32 %v1759, 7
        %v1761 = vsub.s32 5, %v1760
        %v1762 = vrot.slane %v455, %v1761
        %v1765 = vlaneseq
        %v1766 = vshrl.u32 %v1765, 7
        %v1767 = vsub.s32 1, %v1766
        %v1768 = vrot.slane %v1758, %v1767
        %v1769 = vlaneseq
        %v1770 = vshrl.u32 %v1769, 7
        %v1771 = vsub.s32 1, %v1770
        %v1772 = vrot.slane %v1762, %v1771
        %v1773 = vmul.f32 %v1501, %v1768
        %v1774 = vmul.f32 %v1501, %v1772
        %v1775 = vmul.f32 %v1505, %v1768
        %v1776 = vmul.f32 %v1505, %v1772
        %v1777 = vmul.f32 %v1509, %v1768
        %v1778 = vmul.f32 %v1509, %v1772
        %v1779 = vmul.f32 %v1513, %v1768
        %v1780 = vmul.f32 %v1513, %v1772
        %v1781 = vmul.f32 %v1517, %v1768
        %v1782 = vmul.f32 %v1517, %v1772
        %v1783 = vmul.f32 %v1521, %v1768
        %v1784 = vmul.f32 %v1521, %v1772
        %v1785 = vmul.f32 %v1525, %v1768
        %v1786 = vmul.f32 %v1525, %v1772
        %v1787 = vmul.f32 %v1529, %v1768
        %v1788 = vmul.f32 %v1529, %v1772
        %v1789 = vmul.f32 %v1533, %v1768
        %v1790 = vmul.f32 %v1533, %v1772
        %v1791 = vmul.f32 %v1537, %v1768
        %v1792 = vmul.f32 %v1537, %v1772
        %v1793 = vmul.f32 %v1541, %v1768
        %v1794 = vmul.f32 %v1541, %v1772
        %v1795 = vmul.f32 %v1545, %v1768
        %v1796 = vmul.f32 %v1545, %v1772
        %v1797 = vmul.f32 %v1549, %v1768
        %v1798 = vmul.f32 %v1549, %v1772
        %v1799 = vmul.f32 %v1553, %v1768
        %v1800 = vmul.f32 %v1553, %v1772
        %v1801 = vmul.f32 %v1557, %v1768
        %v1802 = vmul.f32 %v1557, %v1772
        %v1803 = vmul.f32 %v1561, %v1768
        %v1804 = vmul.f32 %v1561, %v1772
        %v1805 = vmul.f32 %v1565, %v1768
        %v1806 = vmul.f32 %v1565, %v1772
        %v1807 = vmul.f32 %v1569, %v1768
        %v1808 = vmul.f32 %v1569, %v1772
        %v1809 = vmul.f32 %v1573, %v1768
        %v1810 = vmul.f32 %v1573, %v1772
        %v1811 = vmul.f32 %v1577, %v1768
        %v1812 = vmul.f32 %v1577, %v1772
        %v1813 = vmul.f32 %v1581, %v1768
        %v1814 = vmul.f32 %v1581, %v1772
        %v1815 = vmul.f32 %v1585, %v1768
        %v1816 = vmul.f32 %v1585, %v1772
        %v1817 = vmul.f32 %v1589, %v1768
        %v1818 = vmul.f32 %v1589, %v1772
        %v1819 = vmul.f32 %v1593, %v1768
        %v1820 = vmul.f32 %v1593, %v1772
        %v1821 = vmul.f32 %v1597, %v1768
        %v1822 = vmul.f32 %v1597, %v1772
        %v1823 = vmul.f32 %v1601, %v1768
        %v1824 = vmul.f32 %v1601, %v1772
        %v1825 = vmul.f32 %v1605, %v1768
        %v1826 = vmul.f32 %v1605, %v1772
        %v1827 = vmul.f32 %v1609, %v1768
        %v1828 = vmul.f32 %v1609, %v1772
        %v1829 = vmul.f32 %v1613, %v1768
        %v1830 = vmul.f32 %v1613, %v1772
        %v1831 = vmul.f32 %v1617, %v1768
        %v1832 = vmul.f32 %v1617, %v1772
        %v1833 = vmul.f32 %v1621, %v1768
        %v1834 = vmul.f32 %v1621, %v1772
        %v1835 = vmul.f32 %v1625, %v1768
        %v1836 = vmul.f32 %v1625, %v1772
        %v1837 = vmul.f32 %v1629, %v1768
        %v1838 = vmul.f32 %v1629, %v1772
        %v1839 = vmul.f32 %v1633, %v1768
        %v1840 = vmul.f32 %v1633, %v1772
        %v1841 = vmul.f32 %v1637, %v1768
        %v1842 = vmul.f32 %v1637, %v1772
        %v1843 = vmul.f32 %v1641, %v1768
        %v1844 = vmul.f32 %v1641, %v1772
        %v1845 = vmul.f32 %v1645, %v1768
        %v1846 = vmul.f32 %v1645, %v1772
        %v1847 = vmul.f32 %v1649, %v1768
        %v1848 = vmul.f32 %v1649, %v1772
        %v1849 = vmul.f32 %v1653, %v1768
        %v1850 = vmul.f32 %v1653, %v1772
        %v1851 = vmul.f32 %v1657, %v1768
        %v1852 = vmul.f32 %v1657, %v1772
        %v1853 = vmul.f32 %v1661, %v1768
        %v1854 = vmul.f32 %v1661, %v1772
        %v1855 = vmul.f32 %v1665, %v1768
        %v1856 = vmul.f32 %v1665, %v1772
        %v1857 = vmul.f32 %v1669, %v1768
        %v1858 = vmul.f32 %v1669, %v1772
        %v1859 = vmul.f32 %v1673, %v1768
        %v1860 = vmul.f32 %v1673, %v1772
        %v1861 = vmul.f32 %v1677, %v1768
        %v1862 = vmul.f32 %v1677, %v1772
        %v1863 = vmul.f32 %v1681, %v1768
        %v1864 = vmul.f32 %v1681, %v1772
        %v1865 = vmul.f32 %v1685, %v1768
        %v1866 = vmul.f32 %v1685, %v1772
        %v1867 = vmul.f32 %v1689, %v1768
        %v1868 = vmul.f32 %v1689, %v1772
        %v1869 = vmul.f32 %v1693, %v1768
        %v1870 = vmul.f32 %v1693, %v1772
        %v1871 = vmul.f32 %v1697, %v1768
        %v1872 = vmul.f32 %v1697, %v1772
        %v1873 = vmul.f32 %v1701, %v1768
        %v1874 = vmul.f32 %v1701, %v1772
        %v1875 = vmul.f32 %v1705, %v1768
        %v1876 = vmul.f32 %v1705, %v1772
        %v1877 = vmul.f32 %v1709, %v1768
        %v1878 = vmul.f32 %v1709, %v1772
        %v1879 = vmul.f32 %v1713, %v1768
        %v1880 = vmul.f32 %v1713, %v1772
        %v1881 = vmul.f32 %v1717, %v1768
        %v1882 = vmul.f32 %v1717, %v1772
        %v1883 = vmul.f32 %v1721, %v1768
        %v1884 = vmul.f32 %v1721, %v1772
        %v1885 = vmul.f32 %v1725, %v1768
        %v1886 = vmul.f32 %v1725, %v1772
        %v1887 = vmul.f32 %v1729, %v1768
        %v1888 = vmul.f32 %v1729, %v1772
        %v1889 = vmul.f32 %v1733, %v1768
        %v1890 = vmul.f32 %v1733, %v1772
        %v1891 = vmul.f32 %v1737, %v1768
        %v1892 = vmul.f32 %v1737, %v1772
        %v1893 = vmul.f32 %v1741, %v1768
        %v1894 = vmul.f32 %v1741, %v1772
        %v1895 = vmul.f32 %v1745, %v1768
        %v1896 = vmul.f32 %v1745, %v1772
        %v1897 = vmul.f32 %v1749, %v1768
        %v1898 = vmul.f32 %v1749, %v1772
        %v1899 = vmul.f32 %v1753, %v1768
        %v1900 = vmul.f32 %v1753, %v1772
        %v1901 = vadd.f32 %v1371, %v1773
        %v1902 = vadd.f32 %v1372, %v1774
        %v1903 = vadd.f32 %v1373, %v1775
        %v1904 = vadd.f32 %v1374, %v1776
        %v1905 = vadd.f32 %v1375, %v1777
        %v1906 = vadd.f32 %v1376, %v1778
        %v1907 = vadd.f32 %v1377, %v1779
        %v1908 = vadd.f32 %v1378, %v1780
        %v1909 = vadd.f32 %v1379, %v1781
        %v1910 = vadd.f32 %v1380, %v1782
        %v1911 = vadd.f32 %v1381, %v1783
        %v1912 = vadd.f32 %v1382, %v1784
        %v1913 = vadd.f32 %v1383, %v1785
        %v1914 = vadd.f32 %v1384, %v1786
        %v1915 = vadd.f32 %v1385, %v1787
        %v1916 = vadd.f32 %v1386, %v1788
        %v1917 = vadd.f32 %v1387, %v1789
        %v1918 = vadd.f32 %v1388, %v1790
        %v1919 = vadd.f32 %v1389, %v1791
        %v1920 = vadd.f32 %v1390, %v1792
        %v1921 = vadd.f32 %v1391, %v1793
        %v1922 = vadd.f32 %v1392, %v1794
        %v1923 = vadd.f32 %v1393, %v1795
        %v1924 = vadd.f32 %v1394, %v1796
        %v1925 = vadd.f32 %v1395, %v1797
        %v1926 = vadd.f32 %v1396, %v1798
        %v1927 = vadd.f32 %v1397, %v1799
        %v1928 = vadd.f32 %v1398, %v1800
        %v1929 = vadd.f32 %v1399, %v1801
        %v1930 = vadd.f32 %v1400, %v1802
        %v1931 = vadd.f32 %v1401, %v1803
        %v1932 = vadd.f32 %v1402, %v1804
        %v1933 = vadd.f32 %v1403, %v1805
        %v1934 = vadd.f32 %v1404, %v1806
        %v1935 = vadd.f32 %v1405, %v1807
        %v1936 = vadd.f32 %v1406, %v1808
        %v1937 = vadd.f32 %v1407, %v1809
        %v1938 = vadd.f32 %v1408, %v1810
        %v1939 = vadd.f32 %v1409, %v1811
        %v1940 = vadd.f32 %v1410, %v1812
        %v1941 = vadd.f32 %v1411, %v1813
        %v1942 = vadd.f32 %v1412, %v1814
        %v1943 = vadd.f32 %v1413, %v1815
        %v1944 = vadd.f32 %v1414, %v1816
        %v1945 = vadd.f32 %v1415, %v1817
        %v1946 = vadd.f32 %v1416, %v1818
        %v1947 = vadd.f32 %v1417, %v1819
        %v1948 = vadd.f32 %v1418, %v1820
        %v1949 = vadd.f32 %v1419, %v1821
        %v1950 = vadd.f32 %v1420, %v1822
        %v1951 = vadd.f32 %v1421, %v1823
        %v1952 = vadd.f32 %v1422, %v1824
        %v1953 = vadd.f32 %v1423, %v1825
        %v1954 = vadd.f32 %v1424, %v1826
        %v1955 = vadd.f32 %v1425, %v1827
        %v1956 = vadd.f32 %v1426, %v1828
        %v1957 = vadd.f32 %v1427, %v1829
        %v1958 = vadd.f32 %v1428, %v1830
        %v1959 = vadd.f32 %v1429, %v1831
        %v1960 = vadd.f32 %v1430, %v1832
        %v1961 = vadd.f32 %v1431, %v1833
        %v1962 = vadd.f32 %v1432, %v1834
        %v1963 = vadd.f32 %v1433, %v1835
        %v1964 = vadd.f32 %v1434, %v1836
        %v1965 = vadd.f32 %v1435, %v1837
        %v1966 = vadd.f32 %v1436, %v1838
        %v1967 = vadd.f32 %v1437, %v1839
        %v1968 = vadd.f32 %v1438, %v1840
        %v1969 = vadd.f32 %v1439, %v1841
        %v1970 = vadd.f32 %v1440, %v1842
        %v1971 = vadd.f32 %v1441, %v1843
        %v1972 = vadd.f32 %v1442, %v1844
        %v1973 = vadd.f32 %v1443, %v1845
        %v1974 = vadd.f32 %v1444, %v1846
        %v1975 = vadd.f32 %v1445, %v1847
        %v1976 = vadd.f32 %v1446, %v1848
        %v1977 = vadd.f32 %v1447, %v1849
        %v1978 = vadd.f32 %v1448, %v1850
        %v1979 = vadd.f32 %v1449, %v1851
        %v1980 = vadd.f32 %v1450, %v1852
        %v1981 = vadd.f32 %v1451, %v1853
        %v1982 = vadd.f32 %v1452, %v1854
        %v1983 = vadd.f32 %v1453, %v1855
        %v1984 = vadd.f32 %v1454, %v1856
        %v1985 = vadd.f32 %v1455, %v1857
        %v1986 = vadd.f32 %v1456, %v1858
        %v1987 = vadd.f32 %v1457, %v1859
        %v1988 = vadd.f32 %v1458, %v1860
        %v1989 = vadd.f32 %v1459, %v1861
        %v1990 = vadd.f32 %v1460, %v1862
        %v1991 = vadd.f32 %v1461, %v1863
        %v1992 = vadd.f32 %v1462, %v1864
        %v1993 = vadd.f32 %v1463, %v1865
        %v1994 = vadd.f32 %v1464, %v1866
        %v1995 = vadd.f32 %v1465, %v1867
        %v1996 = vadd.f32 %v1466, %v1868
        %v1997 = vadd.f32 %v1467, %v1869
        %v1998 = vadd.f32 %v1468, %v1870
        %v1999 = vadd.f32 %v1469, %v1871
        %v2000 = vadd.f32 %v1470, %v1872
        %v2001 = vadd.f32 %v1471, %v1873
        %v2002 = vadd.f32 %v1472, %v1874
        %v2003 = vadd.f32 %v1473, %v1875
        %v2004 = vadd.f32 %v1474, %v1876
        %v2005 = vadd.f32 %v1475, %v1877
        %v2006 = vadd.f32 %v1476, %v1878
        %v2007 = vadd.f32 %v1477, %v1879
        %v2008 = vadd.f32 %v1478, %v1880
        %v2009 = vadd.f32 %v1479, %v1881
        %v2010 = vadd.f32 %v1480, %v1882
        %v2011 = vadd.f32 %v1481, %v1883
        %v2012 = vadd.f32 %v1482, %v1884
        %v2013 = vadd.f32 %v1483, %v1885
        %v2014 = vadd.f32 %v1484, %v1886
        %v2015 = vadd.f32 %v1485, %v1887
        %v2016 = vadd.f32 %v1486, %v1888
        %v2017 = vadd.f32 %v1487, %v1889
        %v2018 = vadd.f32 %v1488, %v1890
        %v2019 = vadd.f32 %v1489, %v1891
        %v2020 = vadd.f32 %v1490, %v1892
        %v2021 = vadd.f32 %v1491, %v1893
        %v2022 = vadd.f32 %v1492, %v1894
        %v2023 = vadd.f32 %v1493, %v1895
        %v2024 = vadd.f32 %v1494, %v1896
        %v2025 = vadd.f32 %v1495, %v1897
        %v2026 = vadd.f32 %v1496, %v1898
        %v2027 = vadd.f32 %v1497, %v1899
        %v2028 = vadd.f32 %v1498, %v1900
        %2029 = vset.pattern.permute.xlu0 2
        %2030 = vperm.xlu0 %2029, %v520
        %v2031 = vpop.permute.xlu0 %2030
        %2033 = vset.pattern.permute.xlu0 2
        %2034 = vperm.xlu0 %2033, %v521
        %v2035 = vpop.permute.xlu0 %2034
        %2037 = vset.pattern.permute.xlu0 2
        %2038 = vperm.xlu0 %2037, %v522
        %v2039 = vpop.permute.xlu0 %2038
        %2041 = vset.pattern.permute.xlu0 2
        %2042 = vperm.xlu0 %2041, %v523
        %v2043 = vpop.permute.xlu0 %2042
        %2045 = vset.pattern.permute.xlu0 2
        %2046 = vperm.xlu0 %2045, %v524
        %v2047 = vpop.permute.xlu0 %2046
        %2049 = vset.pattern.permute.xlu0 2
        %2050 = vperm.xlu0 %2049, %v525
        %v2051 = vpop.permute.xlu0 %2050
        %2053 = vset.pattern.permute.xlu0 2
        %2054 = vperm.xlu0 %2053, %v526
        %v2055 = vpop.permute.xlu0 %2054
        %2057 = vset.pattern.permute.xlu0 2
        %2058 = vperm.xlu0 %2057, %v527
        %v2059 = vpop.permute.xlu0 %2058
        %2061 = vset.pattern.permute.xlu0 2
        %2062 = vperm.xlu0 %2061, %v528
        %v2063 = vpop.permute.xlu0 %2062
        %2065 = vset.pattern.permute.xlu0 2
        %2066 = vperm.xlu0 %2065, %v529
        %v2067 = vpop.permute.xlu0 %2066
        %2069 = vset.pattern.permute.xlu0 2
        %2070 = vperm.xlu0 %2069, %v530
        %v2071 = vpop.permute.xlu0 %2070
        %2073 = vset.pattern.permute.xlu0 2
        %2074 = vperm.xlu0 %2073, %v531
        %v2075 = vpop.permute.xlu0 %2074
        %2077 = vset.pattern.permute.xlu0 2
        %2078 = vperm.xlu0 %2077, %v532
        %v2079 = vpop.permute.xlu0 %2078
        %2081 = vset.pattern.permute.xlu0 2
        %2082 = vperm.xlu0 %2081, %v533
        %v2083 = vpop.permute.xlu0 %2082
        %2085 = vset.pattern.permute.xlu0 2
        %2086 = vperm.xlu0 %2085, %v534
        %v2087 = vpop.permute.xlu0 %2086
        %2089 = vset.pattern.permute.xlu0 2
        %2090 = vperm.xlu0 %2089, %v535
        %v2091 = vpop.permute.xlu0 %2090
        %2093 = vset.pattern.permute.xlu0 2
        %2094 = vperm.xlu0 %2093, %v536
        %v2095 = vpop.permute.xlu0 %2094
        %2097 = vset.pattern.permute.xlu0 2
        %2098 = vperm.xlu0 %2097, %v537
        %v2099 = vpop.permute.xlu0 %2098
        %2101 = vset.pattern.permute.xlu0 2
        %2102 = vperm.xlu0 %2101, %v538
        %v2103 = vpop.permute.xlu0 %2102
        %2105 = vset.pattern.permute.xlu0 2
        %2106 = vperm.xlu0 %2105, %v539
        %v2107 = vpop.permute.xlu0 %2106
        %2109 = vset.pattern.permute.xlu0 2
        %2110 = vperm.xlu0 %2109, %v540
        %v2111 = vpop.permute.xlu0 %2110
        %2113 = vset.pattern.permute.xlu0 2
        %2114 = vperm.xlu0 %2113, %v541
        %v2115 = vpop.permute.xlu0 %2114
        %2117 = vset.pattern.permute.xlu0 2
        %2118 = vperm.xlu0 %2117, %v542
        %v2119 = vpop.permute.xlu0 %2118
        %2121 = vset.pattern.permute.xlu0 2
        %2122 = vperm.xlu0 %2121, %v543
        %v2123 = vpop.permute.xlu0 %2122
        %2125 = vset.pattern.permute.xlu0 2
        %2126 = vperm.xlu0 %2125, %v544
        %v2127 = vpop.permute.xlu0 %2126
        %2129 = vset.pattern.permute.xlu0 2
        %2130 = vperm.xlu0 %2129, %v545
        %v2131 = vpop.permute.xlu0 %2130
        %2133 = vset.pattern.permute.xlu0 2
        %2134 = vperm.xlu0 %2133, %v546
        %v2135 = vpop.permute.xlu0 %2134
        %2137 = vset.pattern.permute.xlu0 2
        %2138 = vperm.xlu0 %2137, %v547
        %v2139 = vpop.permute.xlu0 %2138
        %2141 = vset.pattern.permute.xlu0 2
        %2142 = vperm.xlu0 %2141, %v548
        %v2143 = vpop.permute.xlu0 %2142
        %2145 = vset.pattern.permute.xlu0 2
        %2146 = vperm.xlu0 %2145, %v549
        %v2147 = vpop.permute.xlu0 %2146
        %2149 = vset.pattern.permute.xlu0 2
        %2150 = vperm.xlu0 %2149, %v550
        %v2151 = vpop.permute.xlu0 %2150
        %2153 = vset.pattern.permute.xlu0 2
        %2154 = vperm.xlu0 %2153, %v551
        %v2155 = vpop.permute.xlu0 %2154
        %2157 = vset.pattern.permute.xlu0 2
        %2158 = vperm.xlu0 %2157, %v552
        %v2159 = vpop.permute.xlu0 %2158
        %2161 = vset.pattern.permute.xlu0 2
        %2162 = vperm.xlu0 %2161, %v553
        %v2163 = vpop.permute.xlu0 %2162
        %2165 = vset.pattern.permute.xlu0 2
        %2166 = vperm.xlu0 %2165, %v554
        %v2167 = vpop.permute.xlu0 %2166
        %2169 = vset.pattern.permute.xlu0 2
        %2170 = vperm.xlu0 %2169, %v555
        %v2171 = vpop.permute.xlu0 %2170
        %2173 = vset.pattern.permute.xlu0 2
        %2174 = vperm.xlu0 %2173, %v556
        %v2175 = vpop.permute.xlu0 %2174
        %2177 = vset.pattern.permute.xlu0 2
        %2178 = vperm.xlu0 %2177, %v557
        %v2179 = vpop.permute.xlu0 %2178
        %2181 = vset.pattern.permute.xlu0 2
        %2182 = vperm.xlu0 %2181, %v558
        %v2183 = vpop.permute.xlu0 %2182
        %2185 = vset.pattern.permute.xlu0 2
        %2186 = vperm.xlu0 %2185, %v559
        %v2187 = vpop.permute.xlu0 %2186
        %2189 = vset.pattern.permute.xlu0 2
        %2190 = vperm.xlu0 %2189, %v560
        %v2191 = vpop.permute.xlu0 %2190
        %2193 = vset.pattern.permute.xlu0 2
        %2194 = vperm.xlu0 %2193, %v561
        %v2195 = vpop.permute.xlu0 %2194
        %2197 = vset.pattern.permute.xlu0 2
        %2198 = vperm.xlu0 %2197, %v562
        %v2199 = vpop.permute.xlu0 %2198
        %2201 = vset.pattern.permute.xlu0 2
        %2202 = vperm.xlu0 %2201, %v563
        %v2203 = vpop.permute.xlu0 %2202
        %2205 = vset.pattern.permute.xlu0 2
        %2206 = vperm.xlu0 %2205, %v564
        %v2207 = vpop.permute.xlu0 %2206
        %2209 = vset.pattern.permute.xlu0 2
        %2210 = vperm.xlu0 %2209, %v565
        %v2211 = vpop.permute.xlu0 %2210
        %2213 = vset.pattern.permute.xlu0 2
        %2214 = vperm.xlu0 %2213, %v566
        %v2215 = vpop.permute.xlu0 %2214
        %2217 = vset.pattern.permute.xlu0 2
        %2218 = vperm.xlu0 %2217, %v567
        %v2219 = vpop.permute.xlu0 %2218
        %2221 = vset.pattern.permute.xlu0 2
        %2222 = vperm.xlu0 %2221, %v568
        %v2223 = vpop.permute.xlu0 %2222
        %2225 = vset.pattern.permute.xlu0 2
        %2226 = vperm.xlu0 %2225, %v569
        %v2227 = vpop.permute.xlu0 %2226
        %2229 = vset.pattern.permute.xlu0 2
        %2230 = vperm.xlu0 %2229, %v570
        %v2231 = vpop.permute.xlu0 %2230
        %2233 = vset.pattern.permute.xlu0 2
        %2234 = vperm.xlu0 %2233, %v571
        %v2235 = vpop.permute.xlu0 %2234
        %2237 = vset.pattern.permute.xlu0 2
        %2238 = vperm.xlu0 %2237, %v572
        %v2239 = vpop.permute.xlu0 %2238
        %2241 = vset.pattern.permute.xlu0 2
        %2242 = vperm.xlu0 %2241, %v573
        %v2243 = vpop.permute.xlu0 %2242
        %2245 = vset.pattern.permute.xlu0 2
        %2246 = vperm.xlu0 %2245, %v574
        %v2247 = vpop.permute.xlu0 %2246
        %2249 = vset.pattern.permute.xlu0 2
        %2250 = vperm.xlu0 %2249, %v575
        %v2251 = vpop.permute.xlu0 %2250
        %2253 = vset.pattern.permute.xlu0 2
        %2254 = vperm.xlu0 %2253, %v576
        %v2255 = vpop.permute.xlu0 %2254
        %2257 = vset.pattern.permute.xlu0 2
        %2258 = vperm.xlu0 %2257, %v577
        %v2259 = vpop.permute.xlu0 %2258
        %2261 = vset.pattern.permute.xlu0 2
        %2262 = vperm.xlu0 %2261, %v578
        %v2263 = vpop.permute.xlu0 %2262
        %2265 = vset.pattern.permute.xlu0 2
        %2266 = vperm.xlu0 %2265, %v579
        %v2267 = vpop.permute.xlu0 %2266
        %2269 = vset.pattern.permute.xlu0 2
        %2270 = vperm.xlu0 %2269, %v580
        %v2271 = vpop.permute.xlu0 %2270
        %2273 = vset.pattern.permute.xlu0 2
        %2274 = vperm.xlu0 %2273, %v581
        %v2275 = vpop.permute.xlu0 %2274
        %2277 = vset.pattern.permute.xlu0 2
        %2278 = vperm.xlu0 %2277, %v582
        %v2279 = vpop.permute.xlu0 %2278
        %2281 = vset.pattern.permute.xlu0 2
        %2282 = vperm.xlu0 %2281, %v583
        %v2283 = vpop.permute.xlu0 %2282
        %v2285 = vlaneseq
        %v2286 = vshrl.u32 %v2285, 7
        %v2287 = vsub.s32 2, %v2286
        %v2288 = vrot.slane %v455, %v2287
        %v2289 = vlaneseq
        %v2290 = vshrl.u32 %v2289, 7
        %v2291 = vsub.s32 6, %v2290
        %v2292 = vrot.slane %v455, %v2291
        %v2295 = vlaneseq
        %v2296 = vshrl.u32 %v2295, 7
        %v2297 = vsub.s32 2, %v2296
        %v2298 = vrot.slane %v2288, %v2297
        %v2299 = vlaneseq
        %v2300 = vshrl.u32 %v2299, 7
        %v2301 = vsub.s32 2, %v2300
        %v2302 = vrot.slane %v2292, %v2301
        %v2303 = vmul.f32 %v2031, %v2298
        %v2304 = vmul.f32 %v2031, %v2302
        %v2305 = vmul.f32 %v2035, %v2298
        %v2306 = vmul.f32 %v2035, %v2302
        %v2307 = vmul.f32 %v2039, %v2298
        %v2308 = vmul.f32 %v2039, %v2302
        %v2309 = vmul.f32 %v2043, %v2298
        %v2310 = vmul.f32 %v2043, %v2302
        %v2311 = vmul.f32 %v2047, %v2298
        %v2312 = vmul.f32 %v2047, %v2302
        %v2313 = vmul.f32 %v2051, %v2298
        %v2314 = vmul.f32 %v2051, %v2302
        %v2315 = vmul.f32 %v2055, %v2298
        %v2316 = vmul.f32 %v2055, %v2302
        %v2317 = vmul.f32 %v2059, %v2298
        %v2318 = vmul.f32 %v2059, %v2302
        %v2319 = vmul.f32 %v2063, %v2298
        %v2320 = vmul.f32 %v2063, %v2302
        %v2321 = vmul.f32 %v2067, %v2298
        %v2322 = vmul.f32 %v2067, %v2302
        %v2323 = vmul.f32 %v2071, %v2298
        %v2324 = vmul.f32 %v2071, %v2302
        %v2325 = vmul.f32 %v2075, %v2298
        %v2326 = vmul.f32 %v2075, %v2302
        %v2327 = vmul.f32 %v2079, %v2298
        %v2328 = vmul.f32 %v2079, %v2302
        %v2329 = vmul.f32 %v2083, %v2298
        %v2330 = vmul.f32 %v2083, %v2302
        %v2331 = vmul.f32 %v2087, %v2298
        %v2332 = vmul.f32 %v2087, %v2302
        %v2333 = vmul.f32 %v2091, %v2298
        %v2334 = vmul.f32 %v2091, %v2302
        %v2335 = vmul.f32 %v2095, %v2298
        %v2336 = vmul.f32 %v2095, %v2302
        %v2337 = vmul.f32 %v2099, %v2298
        %v2338 = vmul.f32 %v2099, %v2302
        %v2339 = vmul.f32 %v2103, %v2298
        %v2340 = vmul.f32 %v2103, %v2302
        %v2341 = vmul.f32 %v2107, %v2298
        %v2342 = vmul.f32 %v2107, %v2302
        %v2343 = vmul.f32 %v2111, %v2298
        %v2344 = vmul.f32 %v2111, %v2302
        %v2345 = vmul.f32 %v2115, %v2298
        %v2346 = vmul.f32 %v2115, %v2302
        %v2347 = vmul.f32 %v2119, %v2298
        %v2348 = vmul.f32 %v2119, %v2302
        %v2349 = vmul.f32 %v2123, %v2298
        %v2350 = vmul.f32 %v2123, %v2302
        %v2351 = vmul.f32 %v2127, %v2298
        %v2352 = vmul.f32 %v2127, %v2302
        %v2353 = vmul.f32 %v2131, %v2298
        %v2354 = vmul.f32 %v2131, %v2302
        %v2355 = vmul.f32 %v2135, %v2298
        %v2356 = vmul.f32 %v2135, %v2302
        %v2357 = vmul.f32 %v2139, %v2298
        %v2358 = vmul.f32 %v2139, %v2302
        %v2359 = vmul.f32 %v2143, %v2298
        %v2360 = vmul.f32 %v2143, %v2302
        %v2361 = vmul.f32 %v2147, %v2298
        %v2362 = vmul.f32 %v2147, %v2302
        %v2363 = vmul.f32 %v2151, %v2298
        %v2364 = vmul.f32 %v2151, %v2302
        %v2365 = vmul.f32 %v2155, %v2298
        %v2366 = vmul.f32 %v2155, %v2302
        %v2367 = vmul.f32 %v2159, %v2298
        %v2368 = vmul.f32 %v2159, %v2302
        %v2369 = vmul.f32 %v2163, %v2298
        %v2370 = vmul.f32 %v2163, %v2302
        %v2371 = vmul.f32 %v2167, %v2298
        %v2372 = vmul.f32 %v2167, %v2302
        %v2373 = vmul.f32 %v2171, %v2298
        %v2374 = vmul.f32 %v2171, %v2302
        %v2375 = vmul.f32 %v2175, %v2298
        %v2376 = vmul.f32 %v2175, %v2302
        %v2377 = vmul.f32 %v2179, %v2298
        %v2378 = vmul.f32 %v2179, %v2302
        %v2379 = vmul.f32 %v2183, %v2298
        %v2380 = vmul.f32 %v2183, %v2302
        %v2381 = vmul.f32 %v2187, %v2298
        %v2382 = vmul.f32 %v2187, %v2302
        %v2383 = vmul.f32 %v2191, %v2298
        %v2384 = vmul.f32 %v2191, %v2302
        %v2385 = vmul.f32 %v2195, %v2298
        %v2386 = vmul.f32 %v2195, %v2302
        %v2387 = vmul.f32 %v2199, %v2298
        %v2388 = vmul.f32 %v2199, %v2302
        %v2389 = vmul.f32 %v2203, %v2298
        %v2390 = vmul.f32 %v2203, %v2302
        %v2391 = vmul.f32 %v2207, %v2298
        %v2392 = vmul.f32 %v2207, %v2302
        %v2393 = vmul.f32 %v2211, %v2298
        %v2394 = vmul.f32 %v2211, %v2302
        %v2395 = vmul.f32 %v2215, %v2298
        %v2396 = vmul.f32 %v2215, %v2302
        %v2397 = vmul.f32 %v2219, %v2298
        %v2398 = vmul.f32 %v2219, %v2302
        %v2399 = vmul.f32 %v2223, %v2298
        %v2400 = vmul.f32 %v2223, %v2302
        %v2401 = vmul.f32 %v2227, %v2298
        %v2402 = vmul.f32 %v2227, %v2302
        %v2403 = vmul.f32 %v2231, %v2298
        %v2404 = vmul.f32 %v2231, %v2302
        %v2405 = vmul.f32 %v2235, %v2298
        %v2406 = vmul.f32 %v2235, %v2302
        %v2407 = vmul.f32 %v2239, %v2298
        %v2408 = vmul.f32 %v2239, %v2302
        %v2409 = vmul.f32 %v2243, %v2298
        %v2410 = vmul.f32 %v2243, %v2302
        %v2411 = vmul.f32 %v2247, %v2298
        %v2412 = vmul.f32 %v2247, %v2302
        %v2413 = vmul.f32 %v2251, %v2298
        %v2414 = vmul.f32 %v2251, %v2302
        %v2415 = vmul.f32 %v2255, %v2298
        %v2416 = vmul.f32 %v2255, %v2302
        %v2417 = vmul.f32 %v2259, %v2298
        %v2418 = vmul.f32 %v2259, %v2302
        %v2419 = vmul.f32 %v2263, %v2298
        %v2420 = vmul.f32 %v2263, %v2302
        %v2421 = vmul.f32 %v2267, %v2298
        %v2422 = vmul.f32 %v2267, %v2302
        %v2423 = vmul.f32 %v2271, %v2298
        %v2424 = vmul.f32 %v2271, %v2302
        %v2425 = vmul.f32 %v2275, %v2298
        %v2426 = vmul.f32 %v2275, %v2302
        %v2427 = vmul.f32 %v2279, %v2298
        %v2428 = vmul.f32 %v2279, %v2302
        %v2429 = vmul.f32 %v2283, %v2298
        %v2430 = vmul.f32 %v2283, %v2302
        %v2431 = vadd.f32 %v1901, %v2303
        %v2432 = vadd.f32 %v1902, %v2304
        %v2433 = vadd.f32 %v1903, %v2305
        %v2434 = vadd.f32 %v1904, %v2306
        %v2435 = vadd.f32 %v1905, %v2307
        %v2436 = vadd.f32 %v1906, %v2308
        %v2437 = vadd.f32 %v1907, %v2309
        %v2438 = vadd.f32 %v1908, %v2310
        %v2439 = vadd.f32 %v1909, %v2311
        %v2440 = vadd.f32 %v1910, %v2312
        %v2441 = vadd.f32 %v1911, %v2313
        %v2442 = vadd.f32 %v1912, %v2314
        %v2443 = vadd.f32 %v1913, %v2315
        %v2444 = vadd.f32 %v1914, %v2316
        %v2445 = vadd.f32 %v1915, %v2317
        %v2446 = vadd.f32 %v1916, %v2318
        %v2447 = vadd.f32 %v1917, %v2319
        %v2448 = vadd.f32 %v1918, %v2320
        %v2449 = vadd.f32 %v1919, %v2321
        %v2450 = vadd.f32 %v1920, %v2322
        %v2451 = vadd.f32 %v1921, %v2323
        %v2452 = vadd.f32 %v1922, %v2324
        %v2453 = vadd.f32 %v1923, %v2325
        %v2454 = vadd.f32 %v1924, %v2326
        %v2455 = vadd.f32 %v1925, %v2327
        %v2456 = vadd.f32 %v1926, %v2328
        %v2457 = vadd.f32 %v1927, %v2329
        %v2458 = vadd.f32 %v1928, %v2330
        %v2459 = vadd.f32 %v1929, %v2331
        %v2460 = vadd.f32 %v1930, %v2332
        %v2461 = vadd.f32 %v1931, %v2333
        %v2462 = vadd.f32 %v1932, %v2334
        %v2463 = vadd.f32 %v1933, %v2335
        %v2464 = vadd.f32 %v1934, %v2336
        %v2465 = vadd.f32 %v1935, %v2337
        %v2466 = vadd.f32 %v1936, %v2338
        %v2467 = vadd.f32 %v1937, %v2339
        %v2468 = vadd.f32 %v1938, %v2340
        %v2469 = vadd.f32 %v1939, %v2341
        %v2470 = vadd.f32 %v1940, %v2342
        %v2471 = vadd.f32 %v1941, %v2343
        %v2472 = vadd.f32 %v1942, %v2344
        %v2473 = vadd.f32 %v1943, %v2345
        %v2474 = vadd.f32 %v1944, %v2346
        %v2475 = vadd.f32 %v1945, %v2347
        %v2476 = vadd.f32 %v1946, %v2348
        %v2477 = vadd.f32 %v1947, %v2349
        %v2478 = vadd.f32 %v1948, %v2350
        %v2479 = vadd.f32 %v1949, %v2351
        %v2480 = vadd.f32 %v1950, %v2352
        %v2481 = vadd.f32 %v1951, %v2353
        %v2482 = vadd.f32 %v1952, %v2354
        %v2483 = vadd.f32 %v1953, %v2355
        %v2484 = vadd.f32 %v1954, %v2356
        %v2485 = vadd.f32 %v1955, %v2357
        %v2486 = vadd.f32 %v1956, %v2358
        %v2487 = vadd.f32 %v1957, %v2359
        %v2488 = vadd.f32 %v1958, %v2360
        %v2489 = vadd.f32 %v1959, %v2361
        %v2490 = vadd.f32 %v1960, %v2362
        %v2491 = vadd.f32 %v1961, %v2363
        %v2492 = vadd.f32 %v1962, %v2364
        %v2493 = vadd.f32 %v1963, %v2365
        %v2494 = vadd.f32 %v1964, %v2366
        %v2495 = vadd.f32 %v1965, %v2367
        %v2496 = vadd.f32 %v1966, %v2368
        %v2497 = vadd.f32 %v1967, %v2369
        %v2498 = vadd.f32 %v1968, %v2370
        %v2499 = vadd.f32 %v1969, %v2371
        %v2500 = vadd.f32 %v1970, %v2372
        %v2501 = vadd.f32 %v1971, %v2373
        %v2502 = vadd.f32 %v1972, %v2374
        %v2503 = vadd.f32 %v1973, %v2375
        %v2504 = vadd.f32 %v1974, %v2376
        %v2505 = vadd.f32 %v1975, %v2377
        %v2506 = vadd.f32 %v1976, %v2378
        %v2507 = vadd.f32 %v1977, %v2379
        %v2508 = vadd.f32 %v1978, %v2380
        %v2509 = vadd.f32 %v1979, %v2381
        %v2510 = vadd.f32 %v1980, %v2382
        %v2511 = vadd.f32 %v1981, %v2383
        %v2512 = vadd.f32 %v1982, %v2384
        %v2513 = vadd.f32 %v1983, %v2385
        %v2514 = vadd.f32 %v1984, %v2386
        %v2515 = vadd.f32 %v1985, %v2387
        %v2516 = vadd.f32 %v1986, %v2388
        %v2517 = vadd.f32 %v1987, %v2389
        %v2518 = vadd.f32 %v1988, %v2390
        %v2519 = vadd.f32 %v1989, %v2391
        %v2520 = vadd.f32 %v1990, %v2392
        %v2521 = vadd.f32 %v1991, %v2393
        %v2522 = vadd.f32 %v1992, %v2394
        %v2523 = vadd.f32 %v1993, %v2395
        %v2524 = vadd.f32 %v1994, %v2396
        %v2525 = vadd.f32 %v1995, %v2397
        %v2526 = vadd.f32 %v1996, %v2398
        %v2527 = vadd.f32 %v1997, %v2399
        %v2528 = vadd.f32 %v1998, %v2400
        %v2529 = vadd.f32 %v1999, %v2401
        %v2530 = vadd.f32 %v2000, %v2402
        %v2531 = vadd.f32 %v2001, %v2403
        %v2532 = vadd.f32 %v2002, %v2404
        %v2533 = vadd.f32 %v2003, %v2405
        %v2534 = vadd.f32 %v2004, %v2406
        %v2535 = vadd.f32 %v2005, %v2407
        %v2536 = vadd.f32 %v2006, %v2408
        %v2537 = vadd.f32 %v2007, %v2409
        %v2538 = vadd.f32 %v2008, %v2410
        %v2539 = vadd.f32 %v2009, %v2411
        %v2540 = vadd.f32 %v2010, %v2412
        %v2541 = vadd.f32 %v2011, %v2413
        %v2542 = vadd.f32 %v2012, %v2414
        %v2543 = vadd.f32 %v2013, %v2415
        %v2544 = vadd.f32 %v2014, %v2416
        %v2545 = vadd.f32 %v2015, %v2417
        %v2546 = vadd.f32 %v2016, %v2418
        %v2547 = vadd.f32 %v2017, %v2419
        %v2548 = vadd.f32 %v2018, %v2420
        %v2549 = vadd.f32 %v2019, %v2421
        %v2550 = vadd.f32 %v2020, %v2422
        %v2551 = vadd.f32 %v2021, %v2423
        %v2552 = vadd.f32 %v2022, %v2424
        %v2553 = vadd.f32 %v2023, %v2425
        %v2554 = vadd.f32 %v2024, %v2426
        %v2555 = vadd.f32 %v2025, %v2427
        %v2556 = vadd.f32 %v2026, %v2428
        %v2557 = vadd.f32 %v2027, %v2429
        %v2558 = vadd.f32 %v2028, %v2430
        %2559 = vset.pattern.permute.xlu0 3
        %2560 = vperm.xlu0 %2559, %v520
        %v2561 = vpop.permute.xlu0 %2560
        %2563 = vset.pattern.permute.xlu0 3
        %2564 = vperm.xlu0 %2563, %v521
        %v2565 = vpop.permute.xlu0 %2564
        %2567 = vset.pattern.permute.xlu0 3
        %2568 = vperm.xlu0 %2567, %v522
        %v2569 = vpop.permute.xlu0 %2568
        %2571 = vset.pattern.permute.xlu0 3
        %2572 = vperm.xlu0 %2571, %v523
        %v2573 = vpop.permute.xlu0 %2572
        %2575 = vset.pattern.permute.xlu0 3
        %2576 = vperm.xlu0 %2575, %v524
        %v2577 = vpop.permute.xlu0 %2576
        %2579 = vset.pattern.permute.xlu0 3
        %2580 = vperm.xlu0 %2579, %v525
        %v2581 = vpop.permute.xlu0 %2580
        %2583 = vset.pattern.permute.xlu0 3
        %2584 = vperm.xlu0 %2583, %v526
        %v2585 = vpop.permute.xlu0 %2584
        %2587 = vset.pattern.permute.xlu0 3
        %2588 = vperm.xlu0 %2587, %v527
        %v2589 = vpop.permute.xlu0 %2588
        %2591 = vset.pattern.permute.xlu0 3
        %2592 = vperm.xlu0 %2591, %v528
        %v2593 = vpop.permute.xlu0 %2592
        %2595 = vset.pattern.permute.xlu0 3
        %2596 = vperm.xlu0 %2595, %v529
        %v2597 = vpop.permute.xlu0 %2596
        %2599 = vset.pattern.permute.xlu0 3
        %2600 = vperm.xlu0 %2599, %v530
        %v2601 = vpop.permute.xlu0 %2600
        %2603 = vset.pattern.permute.xlu0 3
        %2604 = vperm.xlu0 %2603, %v531
        %v2605 = vpop.permute.xlu0 %2604
        %2607 = vset.pattern.permute.xlu0 3
        %2608 = vperm.xlu0 %2607, %v532
        %v2609 = vpop.permute.xlu0 %2608
        %2611 = vset.pattern.permute.xlu0 3
        %2612 = vperm.xlu0 %2611, %v533
        %v2613 = vpop.permute.xlu0 %2612
        %2615 = vset.pattern.permute.xlu0 3
        %2616 = vperm.xlu0 %2615, %v534
        %v2617 = vpop.permute.xlu0 %2616
        %2619 = vset.pattern.permute.xlu0 3
        %2620 = vperm.xlu0 %2619, %v535
        %v2621 = vpop.permute.xlu0 %2620
        %2623 = vset.pattern.permute.xlu0 3
        %2624 = vperm.xlu0 %2623, %v536
        %v2625 = vpop.permute.xlu0 %2624
        %2627 = vset.pattern.permute.xlu0 3
        %2628 = vperm.xlu0 %2627, %v537
        %v2629 = vpop.permute.xlu0 %2628
        %2631 = vset.pattern.permute.xlu0 3
        %2632 = vperm.xlu0 %2631, %v538
        %v2633 = vpop.permute.xlu0 %2632
        %2635 = vset.pattern.permute.xlu0 3
        %2636 = vperm.xlu0 %2635, %v539
        %v2637 = vpop.permute.xlu0 %2636
        %2639 = vset.pattern.permute.xlu0 3
        %2640 = vperm.xlu0 %2639, %v540
        %v2641 = vpop.permute.xlu0 %2640
        %2643 = vset.pattern.permute.xlu0 3
        %2644 = vperm.xlu0 %2643, %v541
        %v2645 = vpop.permute.xlu0 %2644
        %2647 = vset.pattern.permute.xlu0 3
        %2648 = vperm.xlu0 %2647, %v542
        %v2649 = vpop.permute.xlu0 %2648
        %2651 = vset.pattern.permute.xlu0 3
        %2652 = vperm.xlu0 %2651, %v543
        %v2653 = vpop.permute.xlu0 %2652
        %2655 = vset.pattern.permute.xlu0 3
        %2656 = vperm.xlu0 %2655, %v544
        %v2657 = vpop.permute.xlu0 %2656
        %2659 = vset.pattern.permute.xlu0 3
        %2660 = vperm.xlu0 %2659, %v545
        %v2661 = vpop.permute.xlu0 %2660
        %2663 = vset.pattern.permute.xlu0 3
        %2664 = vperm.xlu0 %2663, %v546
        %v2665 = vpop.permute.xlu0 %2664
        %2667 = vset.pattern.permute.xlu0 3
        %2668 = vperm.xlu0 %2667, %v547
        %v2669 = vpop.permute.xlu0 %2668
        %2671 = vset.pattern.permute.xlu0 3
        %2672 = vperm.xlu0 %2671, %v548
        %v2673 = vpop.permute.xlu0 %2672
        %2675 = vset.pattern.permute.xlu0 3
        %2676 = vperm.xlu0 %2675, %v549
        %v2677 = vpop.permute.xlu0 %2676
        %2679 = vset.pattern.permute.xlu0 3
        %2680 = vperm.xlu0 %2679, %v550
        %v2681 = vpop.permute.xlu0 %2680
        %2683 = vset.pattern.permute.xlu0 3
        %2684 = vperm.xlu0 %2683, %v551
        %v2685 = vpop.permute.xlu0 %2684
        %2687 = vset.pattern.permute.xlu0 3
        %2688 = vperm.xlu0 %2687, %v552
        %v2689 = vpop.permute.xlu0 %2688
        %2691 = vset.pattern.permute.xlu0 3
        %2692 = vperm.xlu0 %2691, %v553
        %v2693 = vpop.permute.xlu0 %2692
        %2695 = vset.pattern.permute.xlu0 3
        %2696 = vperm.xlu0 %2695, %v554
        %v2697 = vpop.permute.xlu0 %2696
        %2699 = vset.pattern.permute.xlu0 3
        %2700 = vperm.xlu0 %2699, %v555
        %v2701 = vpop.permute.xlu0 %2700
        %2703 = vset.pattern.permute.xlu0 3
        %2704 = vperm.xlu0 %2703, %v556
        %v2705 = vpop.permute.xlu0 %2704
        %2707 = vset.pattern.permute.xlu0 3
        %2708 = vperm.xlu0 %2707, %v557
        %v2709 = vpop.permute.xlu0 %2708
        %2711 = vset.pattern.permute.xlu0 3
        %2712 = vperm.xlu0 %2711, %v558
        %v2713 = vpop.permute.xlu0 %2712
        %2715 = vset.pattern.permute.xlu0 3
        %2716 = vperm.xlu0 %2715, %v559
        %v2717 = vpop.permute.xlu0 %2716
        %2719 = vset.pattern.permute.xlu0 3
        %2720 = vperm.xlu0 %2719, %v560
        %v2721 = vpop.permute.xlu0 %2720
        %2723 = vset.pattern.permute.xlu0 3
        %2724 = vperm.xlu0 %2723, %v561
        %v2725 = vpop.permute.xlu0 %2724
        %2727 = vset.pattern.permute.xlu0 3
        %2728 = vperm.xlu0 %2727, %v562
        %v2729 = vpop.permute.xlu0 %2728
        %2731 = vset.pattern.permute.xlu0 3
        %2732 = vperm.xlu0 %2731, %v563
        %v2733 = vpop.permute.xlu0 %2732
        %2735 = vset.pattern.permute.xlu0 3
        %2736 = vperm.xlu0 %2735, %v564
        %v2737 = vpop.permute.xlu0 %2736
        %2739 = vset.pattern.permute.xlu0 3
        %2740 = vperm.xlu0 %2739, %v565
        %v2741 = vpop.permute.xlu0 %2740
        %2743 = vset.pattern.permute.xlu0 3
        %2744 = vperm.xlu0 %2743, %v566
        %v2745 = vpop.permute.xlu0 %2744
        %2747 = vset.pattern.permute.xlu0 3
        %2748 = vperm.xlu0 %2747, %v567
        %v2749 = vpop.permute.xlu0 %2748
        %2751 = vset.pattern.permute.xlu0 3
        %2752 = vperm.xlu0 %2751, %v568
        %v2753 = vpop.permute.xlu0 %2752
        %2755 = vset.pattern.permute.xlu0 3
        %2756 = vperm.xlu0 %2755, %v569
        %v2757 = vpop.permute.xlu0 %2756
        %2759 = vset.pattern.permute.xlu0 3
        %2760 = vperm.xlu0 %2759, %v570
        %v2761 = vpop.permute.xlu0 %2760
        %2763 = vset.pattern.permute.xlu0 3
        %2764 = vperm.xlu0 %2763, %v571
        %v2765 = vpop.permute.xlu0 %2764
        %2767 = vset.pattern.permute.xlu0 3
        %2768 = vperm.xlu0 %2767, %v572
        %v2769 = vpop.permute.xlu0 %2768
        %2771 = vset.pattern.permute.xlu0 3
        %2772 = vperm.xlu0 %2771, %v573
        %v2773 = vpop.permute.xlu0 %2772
        %2775 = vset.pattern.permute.xlu0 3
        %2776 = vperm.xlu0 %2775, %v574
        %v2777 = vpop.permute.xlu0 %2776
        %2779 = vset.pattern.permute.xlu0 3
        %2780 = vperm.xlu0 %2779, %v575
        %v2781 = vpop.permute.xlu0 %2780
        %2783 = vset.pattern.permute.xlu0 3
        %2784 = vperm.xlu0 %2783, %v576
        %v2785 = vpop.permute.xlu0 %2784
        %2787 = vset.pattern.permute.xlu0 3
        %2788 = vperm.xlu0 %2787, %v577
        %v2789 = vpop.permute.xlu0 %2788
        %2791 = vset.pattern.permute.xlu0 3
        %2792 = vperm.xlu0 %2791, %v578
        %v2793 = vpop.permute.xlu0 %2792
        %2795 = vset.pattern.permute.xlu0 3
        %2796 = vperm.xlu0 %2795, %v579
        %v2797 = vpop.permute.xlu0 %2796
        %2799 = vset.pattern.permute.xlu0 3
        %2800 = vperm.xlu0 %2799, %v580
        %v2801 = vpop.permute.xlu0 %2800
        %2803 = vset.pattern.permute.xlu0 3
        %2804 = vperm.xlu0 %2803, %v581
        %v2805 = vpop.permute.xlu0 %2804
        %2807 = vset.pattern.permute.xlu0 3
        %2808 = vperm.xlu0 %2807, %v582
        %v2809 = vpop.permute.xlu0 %2808
        %2811 = vset.pattern.permute.xlu0 3
        %2812 = vperm.xlu0 %2811, %v583
        %v2813 = vpop.permute.xlu0 %2812
        %v2815 = vlaneseq
        %v2816 = vshrl.u32 %v2815, 7
        %v2817 = vsub.s32 3, %v2816
        %v2818 = vrot.slane %v455, %v2817
        %v2819 = vlaneseq
        %v2820 = vshrl.u32 %v2819, 7
        %v2821 = vsub.s32 7, %v2820
        %v2822 = vrot.slane %v455, %v2821
        %v2825 = vlaneseq
        %v2826 = vshrl.u32 %v2825, 7
        %v2827 = vsub.s32 3, %v2826
        %v2828 = vrot.slane %v2818, %v2827
        %v2829 = vlaneseq
        %v2830 = vshrl.u32 %v2829, 7
        %v2831 = vsub.s32 3, %v2830
        %v2832 = vrot.slane %v2822, %v2831
        %v2833 = vmul.f32 %v2561, %v2828
        %v2834 = vmul.f32 %v2561, %v2832
        %v2835 = vmul.f32 %v2565, %v2828
        %v2836 = vmul.f32 %v2565, %v2832
        %v2837 = vmul.f32 %v2569, %v2828
        %v2838 = vmul.f32 %v2569, %v2832
        %v2839 = vmul.f32 %v2573, %v2828
        %v2840 = vmul.f32 %v2573, %v2832
        %v2841 = vmul.f32 %v2577, %v2828
        %v2842 = vmul.f32 %v2577, %v2832
        %v2843 = vmul.f32 %v2581, %v2828
        %v2844 = vmul.f32 %v2581, %v2832
        %v2845 = vmul.f32 %v2585, %v2828
        %v2846 = vmul.f32 %v2585, %v2832
        %v2847 = vmul.f32 %v2589, %v2828
        %v2848 = vmul.f32 %v2589, %v2832
        %v2849 = vmul.f32 %v2593, %v2828
        %v2850 = vmul.f32 %v2593, %v2832
        %v2851 = vmul.f32 %v2597, %v2828
        %v2852 = vmul.f32 %v2597, %v2832
        %v2853 = vmul.f32 %v2601, %v2828
        %v2854 = vmul.f32 %v2601, %v2832
        %v2855 = vmul.f32 %v2605, %v2828
        %v2856 = vmul.f32 %v2605, %v2832
        %v2857 = vmul.f32 %v2609, %v2828
        %v2858 = vmul.f32 %v2609, %v2832
        %v2859 = vmul.f32 %v2613, %v2828
        %v2860 = vmul.f32 %v2613, %v2832
        %v2861 = vmul.f32 %v2617, %v2828
        %v2862 = vmul.f32 %v2617, %v2832
        %v2863 = vmul.f32 %v2621, %v2828
        %v2864 = vmul.f32 %v2621, %v2832
        %v2865 = vmul.f32 %v2625, %v2828
        %v2866 = vmul.f32 %v2625, %v2832
        %v2867 = vmul.f32 %v2629, %v2828
        %v2868 = vmul.f32 %v2629, %v2832
        %v2869 = vmul.f32 %v2633, %v2828
        %v2870 = vmul.f32 %v2633, %v2832
        %v2871 = vmul.f32 %v2637, %v2828
        %v2872 = vmul.f32 %v2637, %v2832
        %v2873 = vmul.f32 %v2641, %v2828
        %v2874 = vmul.f32 %v2641, %v2832
        %v2875 = vmul.f32 %v2645, %v2828
        %v2876 = vmul.f32 %v2645, %v2832
        %v2877 = vmul.f32 %v2649, %v2828
        %v2878 = vmul.f32 %v2649, %v2832
        %v2879 = vmul.f32 %v2653, %v2828
        %v2880 = vmul.f32 %v2653, %v2832
        %v2881 = vmul.f32 %v2657, %v2828
        %v2882 = vmul.f32 %v2657, %v2832
        %v2883 = vmul.f32 %v2661, %v2828
        %v2884 = vmul.f32 %v2661, %v2832
        %v2885 = vmul.f32 %v2665, %v2828
        %v2886 = vmul.f32 %v2665, %v2832
        %v2887 = vmul.f32 %v2669, %v2828
        %v2888 = vmul.f32 %v2669, %v2832
        %v2889 = vmul.f32 %v2673, %v2828
        %v2890 = vmul.f32 %v2673, %v2832
        %v2891 = vmul.f32 %v2677, %v2828
        %v2892 = vmul.f32 %v2677, %v2832
        %v2893 = vmul.f32 %v2681, %v2828
        %v2894 = vmul.f32 %v2681, %v2832
        %v2895 = vmul.f32 %v2685, %v2828
        %v2896 = vmul.f32 %v2685, %v2832
        %v2897 = vmul.f32 %v2689, %v2828
        %v2898 = vmul.f32 %v2689, %v2832
        %v2899 = vmul.f32 %v2693, %v2828
        %v2900 = vmul.f32 %v2693, %v2832
        %v2901 = vmul.f32 %v2697, %v2828
        %v2902 = vmul.f32 %v2697, %v2832
        %v2903 = vmul.f32 %v2701, %v2828
        %v2904 = vmul.f32 %v2701, %v2832
        %v2905 = vmul.f32 %v2705, %v2828
        %v2906 = vmul.f32 %v2705, %v2832
        %v2907 = vmul.f32 %v2709, %v2828
        %v2908 = vmul.f32 %v2709, %v2832
        %v2909 = vmul.f32 %v2713, %v2828
        %v2910 = vmul.f32 %v2713, %v2832
        %v2911 = vmul.f32 %v2717, %v2828
        %v2912 = vmul.f32 %v2717, %v2832
        %v2913 = vmul.f32 %v2721, %v2828
        %v2914 = vmul.f32 %v2721, %v2832
        %v2915 = vmul.f32 %v2725, %v2828
        %v2916 = vmul.f32 %v2725, %v2832
        %v2917 = vmul.f32 %v2729, %v2828
        %v2918 = vmul.f32 %v2729, %v2832
        %v2919 = vmul.f32 %v2733, %v2828
        %v2920 = vmul.f32 %v2733, %v2832
        %v2921 = vmul.f32 %v2737, %v2828
        %v2922 = vmul.f32 %v2737, %v2832
        %v2923 = vmul.f32 %v2741, %v2828
        %v2924 = vmul.f32 %v2741, %v2832
        %v2925 = vmul.f32 %v2745, %v2828
        %v2926 = vmul.f32 %v2745, %v2832
        %v2927 = vmul.f32 %v2749, %v2828
        %v2928 = vmul.f32 %v2749, %v2832
        %v2929 = vmul.f32 %v2753, %v2828
        %v2930 = vmul.f32 %v2753, %v2832
        %v2931 = vmul.f32 %v2757, %v2828
        %v2932 = vmul.f32 %v2757, %v2832
        %v2933 = vmul.f32 %v2761, %v2828
        %v2934 = vmul.f32 %v2761, %v2832
        %v2935 = vmul.f32 %v2765, %v2828
        %v2936 = vmul.f32 %v2765, %v2832
        %v2937 = vmul.f32 %v2769, %v2828
        %v2938 = vmul.f32 %v2769, %v2832
        %v2939 = vmul.f32 %v2773, %v2828
        %v2940 = vmul.f32 %v2773, %v2832
        %v2941 = vmul.f32 %v2777, %v2828
        %v2942 = vmul.f32 %v2777, %v2832
        %v2943 = vmul.f32 %v2781, %v2828
        %v2944 = vmul.f32 %v2781, %v2832
        %v2945 = vmul.f32 %v2785, %v2828
        %v2946 = vmul.f32 %v2785, %v2832
        %v2947 = vmul.f32 %v2789, %v2828
        %v2948 = vmul.f32 %v2789, %v2832
        %v2949 = vmul.f32 %v2793, %v2828
        %v2950 = vmul.f32 %v2793, %v2832
        %v2951 = vmul.f32 %v2797, %v2828
        %v2952 = vmul.f32 %v2797, %v2832
        %v2953 = vmul.f32 %v2801, %v2828
        %v2954 = vmul.f32 %v2801, %v2832
        %v2955 = vmul.f32 %v2805, %v2828
        %v2956 = vmul.f32 %v2805, %v2832
        %v2957 = vmul.f32 %v2809, %v2828
        %v2958 = vmul.f32 %v2809, %v2832
        %v2959 = vmul.f32 %v2813, %v2828
        %v2960 = vmul.f32 %v2813, %v2832
        %v2961 = vadd.f32 %v2431, %v2833
        %v2962 = vadd.f32 %v2432, %v2834
        %v2963 = vadd.f32 %v2433, %v2835
        %v2964 = vadd.f32 %v2434, %v2836
        %v2965 = vadd.f32 %v2435, %v2837
        %v2966 = vadd.f32 %v2436, %v2838
        %v2967 = vadd.f32 %v2437, %v2839
        %v2968 = vadd.f32 %v2438, %v2840
        %v2969 = vadd.f32 %v2439, %v2841
        %v2970 = vadd.f32 %v2440, %v2842
        %v2971 = vadd.f32 %v2441, %v2843
        %v2972 = vadd.f32 %v2442, %v2844
        %v2973 = vadd.f32 %v2443, %v2845
        %v2974 = vadd.f32 %v2444, %v2846
        %v2975 = vadd.f32 %v2445, %v2847
        %v2976 = vadd.f32 %v2446, %v2848
        %v2977 = vadd.f32 %v2447, %v2849
        %v2978 = vadd.f32 %v2448, %v2850
        %v2979 = vadd.f32 %v2449, %v2851
        %v2980 = vadd.f32 %v2450, %v2852
        %v2981 = vadd.f32 %v2451, %v2853
        %v2982 = vadd.f32 %v2452, %v2854
        %v2983 = vadd.f32 %v2453, %v2855
        %v2984 = vadd.f32 %v2454, %v2856
        %v2985 = vadd.f32 %v2455, %v2857
        %v2986 = vadd.f32 %v2456, %v2858
        %v2987 = vadd.f32 %v2457, %v2859
        %v2988 = vadd.f32 %v2458, %v2860
        %v2989 = vadd.f32 %v2459, %v2861
        %v2990 = vadd.f32 %v2460, %v2862
        %v2991 = vadd.f32 %v2461, %v2863
        %v2992 = vadd.f32 %v2462, %v2864
        %v2993 = vadd.f32 %v2463, %v2865
        %v2994 = vadd.f32 %v2464, %v2866
        %v2995 = vadd.f32 %v2465, %v2867
        %v2996 = vadd.f32 %v2466, %v2868
        %v2997 = vadd.f32 %v2467, %v2869
        %v2998 = vadd.f32 %v2468, %v2870
        %v2999 = vadd.f32 %v2469, %v2871
        %v3000 = vadd.f32 %v2470, %v2872
        %v3001 = vadd.f32 %v2471, %v2873
        %v3002 = vadd.f32 %v2472, %v2874
        %v3003 = vadd.f32 %v2473, %v2875
        %v3004 = vadd.f32 %v2474, %v2876
        %v3005 = vadd.f32 %v2475, %v2877
        %v3006 = vadd.f32 %v2476, %v2878
        %v3007 = vadd.f32 %v2477, %v2879
        %v3008 = vadd.f32 %v2478, %v2880
        %v3009 = vadd.f32 %v2479, %v2881
        %v3010 = vadd.f32 %v2480, %v2882
        %v3011 = vadd.f32 %v2481, %v2883
        %v3012 = vadd.f32 %v2482, %v2884
        %v3013 = vadd.f32 %v2483, %v2885
        %v3014 = vadd.f32 %v2484, %v2886
        %v3015 = vadd.f32 %v2485, %v2887
        %v3016 = vadd.f32 %v2486, %v2888
        %v3017 = vadd.f32 %v2487, %v2889
        %v3018 = vadd.f32 %v2488, %v2890
        %v3019 = vadd.f32 %v2489, %v2891
        %v3020 = vadd.f32 %v2490, %v2892
        %v3021 = vadd.f32 %v2491, %v2893
        %v3022 = vadd.f32 %v2492, %v2894
        %v3023 = vadd.f32 %v2493, %v2895
        %v3024 = vadd.f32 %v2494, %v2896
        %v3025 = vadd.f32 %v2495, %v2897
        %v3026 = vadd.f32 %v2496, %v2898
        %v3027 = vadd.f32 %v2497, %v2899
        %v3028 = vadd.f32 %v2498, %v2900
        %v3029 = vadd.f32 %v2499, %v2901
        %v3030 = vadd.f32 %v2500, %v2902
        %v3031 = vadd.f32 %v2501, %v2903
        %v3032 = vadd.f32 %v2502, %v2904
        %v3033 = vadd.f32 %v2503, %v2905
        %v3034 = vadd.f32 %v2504, %v2906
        %v3035 = vadd.f32 %v2505, %v2907
        %v3036 = vadd.f32 %v2506, %v2908
        %v3037 = vadd.f32 %v2507, %v2909
        %v3038 = vadd.f32 %v2508, %v2910
        %v3039 = vadd.f32 %v2509, %v2911
        %v3040 = vadd.f32 %v2510, %v2912
        %v3041 = vadd.f32 %v2511, %v2913
        %v3042 = vadd.f32 %v2512, %v2914
        %v3043 = vadd.f32 %v2513, %v2915
        %v3044 = vadd.f32 %v2514, %v2916
        %v3045 = vadd.f32 %v2515, %v2917
        %v3046 = vadd.f32 %v2516, %v2918
        %v3047 = vadd.f32 %v2517, %v2919
        %v3048 = vadd.f32 %v2518, %v2920
        %v3049 = vadd.f32 %v2519, %v2921
        %v3050 = vadd.f32 %v2520, %v2922
        %v3051 = vadd.f32 %v2521, %v2923
        %v3052 = vadd.f32 %v2522, %v2924
        %v3053 = vadd.f32 %v2523, %v2925
        %v3054 = vadd.f32 %v2524, %v2926
        %v3055 = vadd.f32 %v2525, %v2927
        %v3056 = vadd.f32 %v2526, %v2928
        %v3057 = vadd.f32 %v2527, %v2929
        %v3058 = vadd.f32 %v2528, %v2930
        %v3059 = vadd.f32 %v2529, %v2931
        %v3060 = vadd.f32 %v2530, %v2932
        %v3061 = vadd.f32 %v2531, %v2933
        %v3062 = vadd.f32 %v2532, %v2934
        %v3063 = vadd.f32 %v2533, %v2935
        %v3064 = vadd.f32 %v2534, %v2936
        %v3065 = vadd.f32 %v2535, %v2937
        %v3066 = vadd.f32 %v2536, %v2938
        %v3067 = vadd.f32 %v2537, %v2939
        %v3068 = vadd.f32 %v2538, %v2940
        %v3069 = vadd.f32 %v2539, %v2941
        %v3070 = vadd.f32 %v2540, %v2942
        %v3071 = vadd.f32 %v2541, %v2943
        %v3072 = vadd.f32 %v2542, %v2944
        %v3073 = vadd.f32 %v2543, %v2945
        %v3074 = vadd.f32 %v2544, %v2946
        %v3075 = vadd.f32 %v2545, %v2947
        %v3076 = vadd.f32 %v2546, %v2948
        %v3077 = vadd.f32 %v2547, %v2949
        %v3078 = vadd.f32 %v2548, %v2950
        %v3079 = vadd.f32 %v2549, %v2951
        %v3080 = vadd.f32 %v2550, %v2952
        %v3081 = vadd.f32 %v2551, %v2953
        %v3082 = vadd.f32 %v2552, %v2954
        %v3083 = vadd.f32 %v2553, %v2955
        %v3084 = vadd.f32 %v2554, %v2956
        %v3085 = vadd.f32 %v2555, %v2957
        %v3086 = vadd.f32 %v2556, %v2958
        %v3087 = vadd.f32 %v2557, %v2959
        %v3088 = vadd.f32 %v2558, %v2960
        %v3089 = vld [vmem:[%s6] sm:$0xff]
        %v3090 = vld [vmem:[%s6 + $0x8] sm:$0xff]
        %v3091 = vld [vmem:[%s6 + $0x10] sm:$0xff]
        %v3092 = vld [vmem:[%s6 + $0x18] sm:$0xff]
        %v3093 = vld [vmem:[%s6 + $0x20] sm:$0xff]
        %v3094 = vld [vmem:[%s6 + $0x28] sm:$0xff]
        %v3095 = vld [vmem:[%s6 + $0x30] sm:$0xff]
        %v3096 = vld [vmem:[%s6 + $0x38] sm:$0xff]
        %v3097 = vld [vmem:[%s6 + $0x40] sm:$0xff]
        %v3098 = vld [vmem:[%s6 + $0x48] sm:$0xff]
        %v3099 = vld [vmem:[%s6 + $0x50] sm:$0xff]
        %v3100 = vld [vmem:[%s6 + $0x58] sm:$0xff]
        %v3101 = vld [vmem:[%s6 + $0x60] sm:$0xff]
        %v3102 = vld [vmem:[%s6 + $0x68] sm:$0xff]
        %v3103 = vld [vmem:[%s6 + $0x70] sm:$0xff]
        %v3104 = vld [vmem:[%s6 + $0x78] sm:$0xff]
        %3105 = vmatprep.subr.mxu0 %v2962
        %3106 = vmatpush1.msra.mxu0 %v2961
        %3107 = vmatprep.subr.mxu0 %v2964
        %3108 = vmatpush1.msra.mxu0 %v2963
        %3109 = vmatprep.subr.mxu0 %v2966
        %3110 = vmatpush1.msra.mxu0 %v2965
        %3111 = vmatprep.subr.mxu0 %v2968
        %3112 = vmatpush1.msra.mxu0 %v2967
        %3113 = vmatprep.subr.mxu0 %v2970
        %3114 = vmatpush1.msra.mxu0 %v2969
        %3115 = vmatprep.subr.mxu0 %v2972
        %3116 = vmatpush1.msra.mxu0 %v2971
        %3117 = vmatprep.subr.mxu0 %v2974
        %3118 = vmatpush1.msra.mxu0 %v2973
        %3119 = vmatprep.subr.mxu0 %v2976
        %3120 = vmatpush1.msra.mxu0 %v2975
        %3121 = vmatprep.subr.mxu0 %v2978
        %3122 = vmatpush1.msra.mxu0 %v2977
        %3123 = vmatprep.subr.mxu0 %v2980
        %3124 = vmatpush1.msra.mxu0 %v2979
        %3125 = vmatprep.subr.mxu0 %v2982
        %3126 = vmatpush1.msra.mxu0 %v2981
        %3127 = vmatprep.subr.mxu0 %v2984
        %3128 = vmatpush1.msra.mxu0 %v2983
        %3129 = vmatprep.subr.mxu0 %v2986
        %3130 = vmatpush1.msra.mxu0 %v2985
        %3131 = vmatprep.subr.mxu0 %v2988
        %3132 = vmatpush1.msra.mxu0 %v2987
        %3133 = vmatprep.subr.mxu0 %v2990
        %3134 = vmatpush1.msra.mxu0 %v2989
        %3135 = vmatprep.subr.mxu0 %v2992
        %3136 = vmatpush1.msra.mxu0 %v2991
        %3137 = vmatprep.subr.mxu0 %v2994
        %3138 = vmatpush1.msra.mxu0 %v2993
        %3139 = vmatprep.subr.mxu0 %v2996
        %3140 = vmatpush1.msra.mxu0 %v2995
        %3141 = vmatprep.subr.mxu0 %v2998
        %3142 = vmatpush1.msra.mxu0 %v2997
        %3143 = vmatprep.subr.mxu0 %v3000
        %3144 = vmatpush1.msra.mxu0 %v2999
        %3145 = vmatprep.subr.mxu0 %v3002
        %3146 = vmatpush1.msra.mxu0 %v3001
        %3147 = vmatprep.subr.mxu0 %v3004
        %3148 = vmatpush1.msra.mxu0 %v3003
        %3149 = vmatprep.subr.mxu0 %v3006
        %3150 = vmatpush1.msra.mxu0 %v3005
        %3151 = vmatprep.subr.mxu0 %v3008
        %3152 = vmatpush1.msra.mxu0 %v3007
        %3153 = vmatprep.subr.mxu0 %v3010
        %3154 = vmatpush1.msra.mxu0 %v3009
        %3155 = vmatprep.subr.mxu0 %v3012
        %3156 = vmatpush1.msra.mxu0 %v3011
        %3157 = vmatprep.subr.mxu0 %v3014
        %3158 = vmatpush1.msra.mxu0 %v3013
        %3159 = vmatprep.subr.mxu0 %v3016
        %3160 = vmatpush1.msra.mxu0 %v3015
        %3161 = vmatprep.subr.mxu0 %v3018
        %3162 = vmatpush1.msra.mxu0 %v3017
        %3163 = vmatprep.subr.mxu0 %v3020
        %3164 = vmatpush1.msra.mxu0 %v3019
        %3165 = vmatprep.subr.mxu0 %v3022
        %3166 = vmatpush1.msra.mxu0 %v3021
        %3167 = vmatprep.subr.mxu0 %v3024
        %3168 = vmatpush1.msra.mxu0 %v3023
        %3169 = vmatprep.mubr.f32.mxu0 %v3090
        %3170 = vmatmul.mubr.f32.gmra.mrb[0].mxu0 %v3089
        %v3171 = vpop.f32.mrb[0].mxu0
        %v3172 = vadd.f32 0.0, %v3171
        %v3173 = vpop.f32.mrb[0].mxu0
        %v3174 = vadd.f32 0.0, %v3173
        %3175 = vmatprep.mubr.f32.mxu0 %v3094
        %3176 = vmatmul.mubr.f32.gmra.mrb[0].mxu0 %v3093
        %v3177 = vpop.f32.mrb[0].mxu0
        %v3178 = vadd.f32 0.0, %v3177
        %v3179 = vpop.f32.mrb[0].mxu0
        %v3180 = vadd.f32 0.0, %v3179
        %3181 = vmatprep.mubr.f32.mxu0 %v3098
        %3182 = vmatmul.mubr.f32.gmra.mrb[0].mxu0 %v3097
        %v3183 = vpop.f32.mrb[0].mxu0
        %v3184 = vadd.f32 0.0, %v3183
        %v3185 = vpop.f32.mrb[0].mxu0
        %v3186 = vadd.f32 0.0, %v3185
        %3187 = vmatprep.mubr.f32.mxu0 %v3102
        %3188 = vmatmul.mubr.f32.gmra.mrb[0].mxu0 %v3101
        %v3189 = vpop.f32.mrb[0].mxu0
        %v3190 = vadd.f32 0.0, %v3189
        %v3191 = vpop.f32.mrb[0].mxu0
        %v3192 = vadd.f32 0.0, %v3191
        %3193 = vdwg.mxu0
        %3194 = vmatprep.subr.mxu0 %v3026
        %3195 = vmatpush1.msra.mxu0 %v3025
        %3196 = vmatprep.subr.mxu0 %v3028
        %3197 = vmatpush1.msra.mxu0 %v3027
        %3198 = vmatprep.subr.mxu0 %v3030
        %3199 = vmatpush1.msra.mxu0 %v3029
        %3200 = vmatprep.subr.mxu0 %v3032
        %3201 = vmatpush1.msra.mxu0 %v3031
        %3202 = vmatprep.subr.mxu0 %v3034
        %3203 = vmatpush1.msra.mxu0 %v3033
        %3204 = vmatprep.subr.mxu0 %v3036
        %3205 = vmatpush1.msra.mxu0 %v3035
        %3206 = vmatprep.subr.mxu0 %v3038
        %3207 = vmatpush1.msra.mxu0 %v3037
        %3208 = vmatprep.subr.mxu0 %v3040
        %3209 = vmatpush1.msra.mxu0 %v3039
        %3210 = vmatprep.subr.mxu0 %v3042
        %3211 = vmatpush1.msra.mxu0 %v3041
        %3212 = vmatprep.subr.mxu0 %v3044
        %3213 = vmatpush1.msra.mxu0 %v3043
        %3214 = vmatprep.subr.mxu0 %v3046
        %3215 = vmatpush1.msra.mxu0 %v3045
        %3216 = vmatprep.subr.mxu0 %v3048
        %3217 = vmatpush1.msra.mxu0 %v3047
        %3218 = vmatprep.subr.mxu0 %v3050
        %3219 = vmatpush1.msra.mxu0 %v3049
        %3220 = vmatprep.subr.mxu0 %v3052
        %3221 = vmatpush1.msra.mxu0 %v3051
        %3222 = vmatprep.subr.mxu0 %v3054
        %3223 = vmatpush1.msra.mxu0 %v3053
        %3224 = vmatprep.subr.mxu0 %v3056
        %3225 = vmatpush1.msra.mxu0 %v3055
        %3226 = vmatprep.subr.mxu0 %v3058
        %3227 = vmatpush1.msra.mxu0 %v3057
        %3228 = vmatprep.subr.mxu0 %v3060
        %3229 = vmatpush1.msra.mxu0 %v3059
        %3230 = vmatprep.subr.mxu0 %v3062
        %3231 = vmatpush1.msra.mxu0 %v3061
        %3232 = vmatprep.subr.mxu0 %v3064
        %3233 = vmatpush1.msra.mxu0 %v3063
        %3234 = vmatprep.subr.mxu0 %v3066
        %3235 = vmatpush1.msra.mxu0 %v3065
        %3236 = vmatprep.subr.mxu0 %v3068
        %3237 = vmatpush1.msra.mxu0 %v3067
        %3238 = vmatprep.subr.mxu0 %v3070
        %3239 = vmatpush1.msra.mxu0 %v3069
        %3240 = vmatprep.subr.mxu0 %v3072
        %3241 = vmatpush1.msra.mxu0 %v3071
        %3242 = vmatprep.subr.mxu0 %v3074
        %3243 = vmatpush1.msra.mxu0 %v3073
        %3244 = vmatprep.subr.mxu0 %v3076
        %3245 = vmatpush1.msra.mxu0 %v3075
        %3246 = vmatprep.subr.mxu0 %v3078
        %3247 = vmatpush1.msra.mxu0 %v3077
        %3248 = vmatprep.subr.mxu0 %v3080
        %3249 = vmatpush1.msra.mxu0 %v3079
        %3250 = vmatprep.subr.mxu0 %v3082
        %3251 = vmatpush1.msra.mxu0 %v3081
        %3252 = vmatprep.subr.mxu0 %v3084
        %3253 = vmatpush1.msra.mxu0 %v3083
        %3254 = vmatprep.subr.mxu0 %v3086
        %3255 = vmatpush1.msra.mxu0 %v3085
        %3256 = vmatprep.subr.mxu0 %v3088
        %3257 = vmatpush1.msra.mxu0 %v3087
        %3258 = vmatprep.mubr.f32.mxu0 %v3092
        %3259 = vmatmul.mubr.f32.gmra.mrb[0].mxu0 %v3091
        %v3260 = vpop.f32.mrb[0].mxu0
        %v3261 = vadd.f32 %v3172, %v3260
        %v3262 = vpop.f32.mrb[0].mxu0
        %v3263 = vadd.f32 %v3174, %v3262
        %3264 = vmatprep.mubr.f32.mxu0 %v3096
        %3265 = vmatmul.mubr.f32.gmra.mrb[0].mxu0 %v3095
        %v3266 = vpop.f32.mrb[0].mxu0
        %v3267 = vadd.f32 %v3178, %v3266
        %v3268 = vpop.f32.mrb[0].mxu0
        %v3269 = vadd.f32 %v3180, %v3268
        %3270 = vmatprep.mubr.f32.mxu0 %v3100
        %3271 = vmatmul.mubr.f32.gmra.mrb[0].mxu0 %v3099
        %v3272 = vpop.f32.mrb[0].mxu0
        %v3273 = vadd.f32 %v3184, %v3272
        %v3274 = vpop.f32.mrb[0].mxu0
        %v3275 = vadd.f32 %v3186, %v3274
        %3276 = vmatprep.mubr.f32.mxu0 %v3104
        %3277 = vmatmul.mubr.f32.gmra.mrb[0].mxu0 %v3103
        %v3278 = vpop.f32.mrb[0].mxu0
        %v3279 = vadd.f32 %v3190, %v3278
        %v3280 = vpop.f32.mrb[0].mxu0
        %v3281 = vadd.f32 %v3192, %v3280
        %3282 = vdwg.mxu0
        %v3283 = vadd.f32 %v3261, %v3263
        %3284 = vadd.xlane.f32.xlu0 %v3283
        %v3285 = vpop.xlane.xlu0 %3284
        %v3286 = vadd.f32 %v3267, %v3269
        %3287 = vadd.xlane.f32.xlu0 %v3286
        %v3288 = vpop.xlane.xlu0 %3287
        %v3289 = vadd.f32 %v3273, %v3275
        %3290 = vadd.xlane.f32.xlu0 %v3289
        %v3291 = vpop.xlane.xlu0 %3290
        %v3292 = vadd.f32 %v3279, %v3281
        %3293 = vadd.xlane.f32.xlu0 %v3292
        %v3294 = vpop.xlane.xlu0 %3293
        %v3295 = vmul.f32 %v3285, 0.00024414063
        %v3296 = vmul.f32 %v3288, 0.00024414063
        %v3297 = vmul.f32 %v3291, 0.00024414063
        %v3298 = vmul.f32 %v3294, 0.00024414063
        %v3299 = vld [vmem:[%s7] sm:$0xff]
        %v3300 = vld [vmem:[%s7 + $0x8] sm:$0xff]
        %v3301 = vld [vmem:[%s7 + $0x10] sm:$0xff]
        %v3302 = vld [vmem:[%s7 + $0x18] sm:$0xff]
        %v3303 = vld [vmem:[%s7 + $0x20] sm:$0xff]
        %v3304 = vld [vmem:[%s7 + $0x28] sm:$0xff]
        %v3305 = vld [vmem:[%s7 + $0x30] sm:$0xff]
        %v3306 = vld [vmem:[%s7 + $0x38] sm:$0xff]
        %v3307 = vld [vmem:[%s7 + $0x40] sm:$0xff]
        %v3308 = vld [vmem:[%s7 + $0x48] sm:$0xff]
        %v3309 = vld [vmem:[%s7 + $0x50] sm:$0xff]
        %v3310 = vld [vmem:[%s7 + $0x58] sm:$0xff]
        %v3311 = vld [vmem:[%s7 + $0x60] sm:$0xff]
        %v3312 = vld [vmem:[%s7 + $0x68] sm:$0xff]
        %v3313 = vld [vmem:[%s7 + $0x70] sm:$0xff]
        %v3314 = vld [vmem:[%s7 + $0x78] sm:$0xff]
        %v3315 = vld [vmem:[%s7 + $0x80] sm:$0xff]
        %v3316 = vld [vmem:[%s7 + $0x88] sm:$0xff]
        %v3317 = vld [vmem:[%s7 + $0x90] sm:$0xff]
        %v3318 = vld [vmem:[%s7 + $0x98] sm:$0xff]
        %v3319 = vld [vmem:[%s7 + $0xa0] sm:$0xff]
        %v3320 = vld [vmem:[%s7 + $0xa8] sm:$0xff]
        %v3321 = vld [vmem:[%s7 + $0xb0] sm:$0xff]
        %v3322 = vld [vmem:[%s7 + $0xb8] sm:$0xff]
        %v3323 = vld [vmem:[%s7 + $0xc0] sm:$0xff]
        %v3324 = vld [vmem:[%s7 + $0xc8] sm:$0xff]
        %v3325 = vld [vmem:[%s7 + $0xd0] sm:$0xff]
        %v3326 = vld [vmem:[%s7 + $0xd8] sm:$0xff]
        %v3327 = vld [vmem:[%s7 + $0xe0] sm:$0xff]
        %v3328 = vld [vmem:[%s7 + $0xe8] sm:$0xff]
        %v3329 = vld [vmem:[%s7 + $0xf0] sm:$0xff]
        %v3330 = vld [vmem:[%s7 + $0xf8] sm:$0xff]
        %v3331 = vld [vmem:[%s7 + $0x100] sm:$0xff]
        %v3332 = vld [vmem:[%s7 + $0x108] sm:$0xff]
        %v3333 = vld [vmem:[%s7 + $0x110] sm:$0xff]
        %v3334 = vld [vmem:[%s7 + $0x118] sm:$0xff]
        %v3335 = vld [vmem:[%s7 + $0x120] sm:$0xff]
        %v3336 = vld [vmem:[%s7 + $0x128] sm:$0xff]
        %v3337 = vld [vmem:[%s7 + $0x130] sm:$0xff]
        %v3338 = vld [vmem:[%s7 + $0x138] sm:$0xff]
        %v3339 = vld [vmem:[%s7 + $0x140] sm:$0xff]
        %v3340 = vld [vmem:[%s7 + $0x148] sm:$0xff]
        %v3341 = vld [vmem:[%s7 + $0x150] sm:$0xff]
        %v3342 = vld [vmem:[%s7 + $0x158] sm:$0xff]
        %v3343 = vld [vmem:[%s7 + $0x160] sm:$0xff]
        %v3344 = vld [vmem:[%s7 + $0x168] sm:$0xff]
        %v3345 = vld [vmem:[%s7 + $0x170] sm:$0xff]
        %v3346 = vld [vmem:[%s7 + $0x178] sm:$0xff]
        %v3347 = vld [vmem:[%s7 + $0x180] sm:$0xff]
        %v3348 = vld [vmem:[%s7 + $0x188] sm:$0xff]
        %v3349 = vld [vmem:[%s7 + $0x190] sm:$0xff]
        %v3350 = vld [vmem:[%s7 + $0x198] sm:$0xff]
        %v3351 = vld [vmem:[%s7 + $0x1a0] sm:$0xff]
        %v3352 = vld [vmem:[%s7 + $0x1a8] sm:$0xff]
        %v3353 = vld [vmem:[%s7 + $0x1b0] sm:$0xff]
        %v3354 = vld [vmem:[%s7 + $0x1b8] sm:$0xff]
        %v3355 = vld [vmem:[%s7 + $0x1c0] sm:$0xff]
        %v3356 = vld [vmem:[%s7 + $0x1c8] sm:$0xff]
        %v3357 = vld [vmem:[%s7 + $0x1d0] sm:$0xff]
        %v3358 = vld [vmem:[%s7 + $0x1d8] sm:$0xff]
        %v3359 = vld [vmem:[%s7 + $0x1e0] sm:$0xff]
        %v3360 = vld [vmem:[%s7 + $0x1e8] sm:$0xff]
        %v3361 = vld [vmem:[%s7 + $0x1f0] sm:$0xff]
        %v3362 = vld [vmem:[%s7 + $0x1f8] sm:$0xff]
        %vm3363 = vcmask 261120
        %v3365 = vsel %vm3363, %v3299, 0
        %v3368 = vsel %vm3363, %v3300, 0
        %v3371 = vsel %vm3363, %v3301, 0
        %v3374 = vsel %vm3363, %v3302, 0
        %v3377 = vsel %vm3363, %v3303, 0
        %v3380 = vsel %vm3363, %v3304, 0
        %v3383 = vsel %vm3363, %v3305, 0
        %v3386 = vsel %vm3363, %v3306, 0
        %v3389 = vsel %vm3363, %v3307, 0
        %v3392 = vsel %vm3363, %v3308, 0
        %v3395 = vsel %vm3363, %v3309, 0
        %v3398 = vsel %vm3363, %v3310, 0
        %v3401 = vsel %vm3363, %v3311, 0
        %v3404 = vsel %vm3363, %v3312, 0
        %v3407 = vsel %vm3363, %v3313, 0
        %v3410 = vsel %vm3363, %v3314, 0
        %v3413 = vsel %vm3363, %v3315, 0
        %v3416 = vsel %vm3363, %v3316, 0
        %v3419 = vsel %vm3363, %v3317, 0
        %v3422 = vsel %vm3363, %v3318, 0
        %v3425 = vsel %vm3363, %v3319, 0
        %v3428 = vsel %vm3363, %v3320, 0
        %v3431 = vsel %vm3363, %v3321, 0
        %v3434 = vsel %vm3363, %v3322, 0
        %v3437 = vsel %vm3363, %v3323, 0
        %v3440 = vsel %vm3363, %v3324, 0
        %v3443 = vsel %vm3363, %v3325, 0
        %v3446 = vsel %vm3363, %v3326, 0
        %v3449 = vsel %vm3363, %v3327, 0
        %v3452 = vsel %vm3363, %v3328, 0
        %v3455 = vsel %vm3363, %v3329, 0
        %v3458 = vsel %vm3363, %v3330, 0
        %v3461 = vsel %vm3363, %v3331, 0
        %v3464 = vsel %vm3363, %v3332, 0
        %v3467 = vsel %vm3363, %v3333, 0
        %v3470 = vsel %vm3363, %v3334, 0
        %v3473 = vsel %vm3363, %v3335, 0
        %v3476 = vsel %vm3363, %v3336, 0
        %v3479 = vsel %vm3363, %v3337, 0
        %v3482 = vsel %vm3363, %v3338, 0
        %v3485 = vsel %vm3363, %v3339, 0
        %v3488 = vsel %vm3363, %v3340, 0
        %v3491 = vsel %vm3363, %v3341, 0
        %v3494 = vsel %vm3363, %v3342, 0
        %v3497 = vsel %vm3363, %v3343, 0
        %v3500 = vsel %vm3363, %v3344, 0
        %v3503 = vsel %vm3363, %v3345, 0
        %v3506 = vsel %vm3363, %v3346, 0
        %v3509 = vsel %vm3363, %v3347, 0
        %v3512 = vsel %vm3363, %v3348, 0
        %v3515 = vsel %vm3363, %v3349, 0
        %v3518 = vsel %vm3363, %v3350, 0
        %v3521 = vsel %vm3363, %v3351, 0
        %v3524 = vsel %vm3363, %v3352, 0
        %v3527 = vsel %vm3363, %v3353, 0
        %v3530 = vsel %vm3363, %v3354, 0
        %v3533 = vsel %vm3363, %v3355, 0
        %v3536 = vsel %vm3363, %v3356, 0
        %v3539 = vsel %vm3363, %v3357, 0
        %v3542 = vsel %vm3363, %v3358, 0
        %v3545 = vsel %vm3363, %v3359, 0
        %v3548 = vsel %vm3363, %v3360, 0
        %v3551 = vsel %vm3363, %v3361, 0
        %v3554 = vsel %vm3363, %v3362, 0
        %3556 = vmatprep.subr.mxu0 0.0
        %3557 = vmatpush1.msra.mxu0 %v3295
        %3558 = vmatprep.subr.mxu0 0.0
        %3559 = vmatpush1.msra.mxu0 %v3296
        %3560 = vmatprep.subr.mxu0 0.0
        %3561 = vmatpush1.msra.mxu0 %v3297
        %3562 = vmatprep.subr.mxu0 0.0
        %3563 = vmatpush1.msra.mxu0 %v3298
        %3564 = vmatprep.subr.mxu0 0.0
        %3565 = vmatpush1.msra.mxu0 0.0
        %3566 = vmatprep.subr.mxu0 0.0
        %3567 = vmatpush1.msra.mxu0 0.0
        %3568 = vmatprep.subr.mxu0 0.0
        %3569 = vmatpush1.msra.mxu0 0.0
        %3570 = vmatprep.subr.mxu0 0.0
        %3571 = vmatpush1.msra.mxu0 0.0
        %3572 = vmatprep.subr.mxu0 0.0
        %3573 = vmatpush1.msra.mxu0 0.0
        %3574 = vmatprep.subr.mxu0 0.0
        %3575 = vmatpush1.msra.mxu0 0.0
        %3576 = vmatprep.subr.mxu0 0.0
        %3577 = vmatpush1.msra.mxu0 0.0
        %3578 = vmatprep.subr.mxu0 0.0
        %3579 = vmatpush1.msra.mxu0 0.0
        %3580 = vmatprep.subr.mxu0 0.0
        %3581 = vmatpush1.msra.mxu0 0.0
        %3582 = vmatprep.subr.mxu0 0.0
        %3583 = vmatpush1.msra.mxu0 0.0
        %3584 = vmatprep.subr.mxu0 0.0
        %3585 = vmatpush1.msra.mxu0 0.0
        %3586 = vmatprep.subr.mxu0 0.0
        %3587 = vmatpush1.msra.mxu0 0.0
        %3588 = vmatprep.subr.mxu0 0.0
        %3589 = vmatpush1.msra.mxu0 0.0
        %3590 = vmatprep.subr.mxu0 0.0
        %3591 = vmatpush1.msra.mxu0 0.0
        %3592 = vmatprep.subr.mxu0 0.0
        %3593 = vmatpush1.msra.mxu0 0.0
        %3594 = vmatprep.subr.mxu0 0.0
        %3595 = vmatpush1.msra.mxu0 0.0
        %3596 = vmatprep.subr.mxu0 0.0
        %3597 = vmatpush1.msra.mxu0 0.0
        %3598 = vmatprep.subr.mxu0 0.0
        %3599 = vmatpush1.msra.mxu0 0.0
        %3600 = vmatprep.subr.mxu0 0.0
        %3601 = vmatpush1.msra.mxu0 0.0
        %3602 = vmatprep.subr.mxu0 0.0
        %3603 = vmatpush1.msra.mxu0 0.0
        %3604 = vmatprep.subr.mxu0 0.0
        %3605 = vmatpush1.msra.mxu0 0.0
        %3606 = vmatprep.subr.mxu0 0.0
        %3607 = vmatpush1.msra.mxu0 0.0
        %3608 = vmatprep.subr.mxu0 0.0
        %3609 = vmatpush1.msra.mxu0 0.0
        %3610 = vmatprep.subr.mxu0 0.0
        %3611 = vmatpush1.msra.mxu0 0.0
        %3612 = vmatprep.subr.mxu0 0.0
        %3613 = vmatpush1.msra.mxu0 0.0
        %3614 = vmatprep.subr.mxu0 0.0
        %3615 = vmatpush1.msra.mxu0 0.0
        %3616 = vmatprep.subr.mxu0 0.0
        %3617 = vmatpush1.msra.mxu0 0.0
        %3618 = vmatprep.subr.mxu0 0.0
        %3619 = vmatpush1.msra.mxu0 0.0
        %3620 = vmatprep.mubr.f32.mxu0 0.0
        %3621 = vmatmul.mubr.f32.gmra.mrb[0].mxu0 %v3365
        %v3622 = vpop.f32.mrb[0].mxu0
        %v3623 = vadd.f32 0.0, %v3622
        %v3624 = vpop.f32.mrb[0].mxu0
        %3625 = vmatprep.mubr.f32.mxu0 0.0
        %3626 = vmatmul.mubr.f32.gmra.mrb[0].mxu0 %v3368
        %v3627 = vpop.f32.mrb[0].mxu0
        %v3628 = vadd.f32 0.0, %v3627
        %v3629 = vpop.f32.mrb[0].mxu0
        %3630 = vmatprep.mubr.f32.mxu0 0.0
        %3631 = vmatmul.mubr.f32.gmra.mrb[0].mxu0 %v3371
        %v3632 = vpop.f32.mrb[0].mxu0
        %v3633 = vadd.f32 0.0, %v3632
        %v3634 = vpop.f32.mrb[0].mxu0
        %3635 = vmatprep.mubr.f32.mxu0 0.0
        %3636 = vmatmul.mubr.f32.gmra.mrb[0].mxu0 %v3374
        %v3637 = vpop.f32.mrb[0].mxu0
        %v3638 = vadd.f32 0.0, %v3637
        %v3639 = vpop.f32.mrb[0].mxu0
        %3640 = vmatprep.mubr.f32.mxu0 0.0
        %3641 = vmatmul.mubr.f32.gmra.mrb[0].mxu0 %v3377
        %v3642 = vpop.f32.mrb[0].mxu0
        %v3643 = vadd.f32 0.0, %v3642
        %v3644 = vpop.f32.mrb[0].mxu0
        %3645 = vmatprep.mubr.f32.mxu0 0.0
        %3646 = vmatmul.mubr.f32.gmra.mrb[0].mxu0 %v3380
        %v3647 = vpop.f32.mrb[0].mxu0
        %v3648 = vadd.f32 0.0, %v3647
        %v3649 = vpop.f32.mrb[0].mxu0
        %3650 = vmatprep.mubr.f32.mxu0 0.0
        %3651 = vmatmul.mubr.f32.gmra.mrb[0].mxu0 %v3383
        %v3652 = vpop.f32.mrb[0].mxu0
        %v3653 = vadd.f32 0.0, %v3652
        %v3654 = vpop.f32.mrb[0].mxu0
        %3655 = vmatprep.mubr.f32.mxu0 0.0
        %3656 = vmatmul.mubr.f32.gmra.mrb[0].mxu0 %v3386
        %v3657 = vpop.f32.mrb[0].mxu0
        %v3658 = vadd.f32 0.0, %v3657
        %v3659 = vpop.f32.mrb[0].mxu0
        %3660 = vmatprep.mubr.f32.mxu0 0.0
        %3661 = vmatmul.mubr.f32.gmra.mrb[0].mxu0 %v3389
        %v3662 = vpop.f32.mrb[0].mxu0
        %v3663 = vadd.f32 0.0, %v3662
        %v3664 = vpop.f32.mrb[0].mxu0
        %3665 = vmatprep.mubr.f32.mxu0 0.0
        %3666 = vmatmul.mubr.f32.gmra.mrb[0].mxu0 %v3392
        %v3667 = vpop.f32.mrb[0].mxu0
        %v3668 = vadd.f32 0.0, %v3667
        %v3669 = vpop.f32.mrb[0].mxu0
        %3670 = vmatprep.mubr.f32.mxu0 0.0
        %3671 = vmatmul.mubr.f32.gmra.mrb[0].mxu0 %v3395
        %v3672 = vpop.f32.mrb[0].mxu0
        %v3673 = vadd.f32 0.0, %v3672
        %v3674 = vpop.f32.mrb[0].mxu0
        %3675 = vmatprep.mubr.f32.mxu0 0.0
        %3676 = vmatmul.mubr.f32.gmra.mrb[0].mxu0 %v3398
        %v3677 = vpop.f32.mrb[0].mxu0
        %v3678 = vadd.f32 0.0, %v3677
        %v3679 = vpop.f32.mrb[0].mxu0
        %3680 = vmatprep.mubr.f32.mxu0 0.0
        %3681 = vmatmul.mubr.f32.gmra.mrb[0].mxu0 %v3401
        %v3682 = vpop.f32.mrb[0].mxu0
        %v3683 = vadd.f32 0.0, %v3682
        %v3684 = vpop.f32.mrb[0].mxu0
        %3685 = vmatprep.mubr.f32.mxu0 0.0
        %3686 = vmatmul.mubr.f32.gmra.mrb[0].mxu0 %v3404
        %v3687 = vpop.f32.mrb[0].mxu0
        %v3688 = vadd.f32 0.0, %v3687
        %v3689 = vpop.f32.mrb[0].mxu0
        %3690 = vmatprep.mubr.f32.mxu0 0.0
        %3691 = vmatmul.mubr.f32.gmra.mrb[0].mxu0 %v3407
        %v3692 = vpop.f32.mrb[0].mxu0
        %v3693 = vadd.f32 0.0, %v3692
        %v3694 = vpop.f32.mrb[0].mxu0
        %3695 = vmatprep.mubr.f32.mxu0 0.0
        %3696 = vmatmul.mubr.f32.gmra.mrb[0].mxu0 %v3410
        %v3697 = vpop.f32.mrb[0].mxu0
        %v3698 = vadd.f32 0.0, %v3697
        %v3699 = vpop.f32.mrb[0].mxu0
        %3700 = vmatprep.mubr.f32.mxu0 0.0
        %3701 = vmatmul.mubr.f32.gmra.mrb[0].mxu0 %v3413
        %v3702 = vpop.f32.mrb[0].mxu0
        %v3703 = vadd.f32 0.0, %v3702
        %v3704 = vpop.f32.mrb[0].mxu0
        %3705 = vmatprep.mubr.f32.mxu0 0.0
        %3706 = vmatmul.mubr.f32.gmra.mrb[0].mxu0 %v3416
        %v3707 = vpop.f32.mrb[0].mxu0
        %v3708 = vadd.f32 0.0, %v3707
        %v3709 = vpop.f32.mrb[0].mxu0
        %3710 = vmatprep.mubr.f32.mxu0 0.0
        %3711 = vmatmul.mubr.f32.gmra.mrb[0].mxu0 %v3419
        %v3712 = vpop.f32.mrb[0].mxu0
        %v3713 = vadd.f32 0.0, %v3712
        %v3714 = vpop.f32.mrb[0].mxu0
        %3715 = vmatprep.mubr.f32.mxu0 0.0
        %3716 = vmatmul.mubr.f32.gmra.mrb[0].mxu0 %v3422
        %v3717 = vpop.f32.mrb[0].mxu0
        %v3718 = vadd.f32 0.0, %v3717
        %v3719 = vpop.f32.mrb[0].mxu0
        %3720 = vmatprep.mubr.f32.mxu0 0.0
        %3721 = vmatmul.mubr.f32.gmra.mrb[0].mxu0 %v3425
        %v3722 = vpop.f32.mrb[0].mxu0
        %v3723 = vadd.f32 0.0, %v3722
        %v3724 = vpop.f32.mrb[0].mxu0
        %3725 = vmatprep.mubr.f32.mxu0 0.0
        %3726 = vmatmul.mubr.f32.gmra.mrb[0].mxu0 %v3428
        %v3727 = vpop.f32.mrb[0].mxu0
        %v3728 = vadd.f32 0.0, %v3727
        %v3729 = vpop.f32.mrb[0].mxu0
        %3730 = vmatprep.mubr.f32.mxu0 0.0
        %3731 = vmatmul.mubr.f32.gmra.mrb[0].mxu0 %v3431
        %v3732 = vpop.f32.mrb[0].mxu0
        %v3733 = vadd.f32 0.0, %v3732
        %v3734 = vpop.f32.mrb[0].mxu0
        %3735 = vmatprep.mubr.f32.mxu0 0.0
        %3736 = vmatmul.mubr.f32.gmra.mrb[0].mxu0 %v3434
        %v3737 = vpop.f32.mrb[0].mxu0
        %v3738 = vadd.f32 0.0, %v3737
        %v3739 = vpop.f32.mrb[0].mxu0
        %3740 = vmatprep.mubr.f32.mxu0 0.0
        %3741 = vmatmul.mubr.f32.gmra.mrb[0].mxu0 %v3437
        %v3742 = vpop.f32.mrb[0].mxu0
        %v3743 = vadd.f32 0.0, %v3742
        %v3744 = vpop.f32.mrb[0].mxu0
        %3745 = vmatprep.mubr.f32.mxu0 0.0
        %3746 = vmatmul.mubr.f32.gmra.mrb[0].mxu0 %v3440
        %v3747 = vpop.f32.mrb[0].mxu0
        %v3748 = vadd.f32 0.0, %v3747
        %v3749 = vpop.f32.mrb[0].mxu0
        %3750 = vmatprep.mubr.f32.mxu0 0.0
        %3751 = vmatmul.mubr.f32.gmra.mrb[0].mxu0 %v3443
        %v3752 = vpop.f32.mrb[0].mxu0
        %v3753 = vadd.f32 0.0, %v3752
        %v3754 = vpop.f32.mrb[0].mxu0
        %3755 = vmatprep.mubr.f32.mxu0 0.0
        %3756 = vmatmul.mubr.f32.gmra.mrb[0].mxu0 %v3446
        %v3757 = vpop.f32.mrb[0].mxu0
        %v3758 = vadd.f32 0.0, %v3757
        %v3759 = vpop.f32.mrb[0].mxu0
        %3760 = vmatprep.mubr.f32.mxu0 0.0
        %3761 = vmatmul.mubr.f32.gmra.mrb[0].mxu0 %v3449
        %v3762 = vpop.f32.mrb[0].mxu0
        %v3763 = vadd.f32 0.0, %v3762
        %v3764 = vpop.f32.mrb[0].mxu0
        %3765 = vmatprep.mubr.f32.mxu0 0.0
        %3766 = vmatmul.mubr.f32.gmra.mrb[0].mxu0 %v3452
        %v3767 = vpop.f32.mrb[0].mxu0
        %v3768 = vadd.f32 0.0, %v3767
        %v3769 = vpop.f32.mrb[0].mxu0
        %3770 = vmatprep.mubr.f32.mxu0 0.0
        %3771 = vmatmul.mubr.f32.gmra.mrb[0].mxu0 %v3455
        %v3772 = vpop.f32.mrb[0].mxu0
        %v3773 = vadd.f32 0.0, %v3772
        %v3774 = vpop.f32.mrb[0].mxu0
        %3775 = vmatprep.mubr.f32.mxu0 0.0
        %3776 = vmatmul.mubr.f32.gmra.mrb[0].mxu0 %v3458
        %v3777 = vpop.f32.mrb[0].mxu0
        %v3778 = vadd.f32 0.0, %v3777
        %v3779 = vpop.f32.mrb[0].mxu0
        %3780 = vmatprep.mubr.f32.mxu0 0.0
        %3781 = vmatmul.mubr.f32.gmra.mrb[0].mxu0 %v3461
        %v3782 = vpop.f32.mrb[0].mxu0
        %v3783 = vadd.f32 0.0, %v3782
        %v3784 = vpop.f32.mrb[0].mxu0
        %3785 = vmatprep.mubr.f32.mxu0 0.0
        %3786 = vmatmul.mubr.f32.gmra.mrb[0].mxu0 %v3464
        %v3787 = vpop.f32.mrb[0].mxu0
        %v3788 = vadd.f32 0.0, %v3787
        %v3789 = vpop.f32.mrb[0].mxu0
        %3790 = vmatprep.mubr.f32.mxu0 0.0
        %3791 = vmatmul.mubr.f32.gmra.mrb[0].mxu0 %v3467
        %v3792 = vpop.f32.mrb[0].mxu0
        %v3793 = vadd.f32 0.0, %v3792
        %v3794 = vpop.f32.mrb[0].mxu0
        %3795 = vmatprep.mubr.f32.mxu0 0.0
        %3796 = vmatmul.mubr.f32.gmra.mrb[0].mxu0 %v3470
        %v3797 = vpop.f32.mrb[0].mxu0
        %v3798 = vadd.f32 0.0, %v3797
        %v3799 = vpop.f32.mrb[0].mxu0
        %3800 = vmatprep.mubr.f32.mxu0 0.0
        %3801 = vmatmul.mubr.f32.gmra.mrb[0].mxu0 %v3473
        %v3802 = vpop.f32.mrb[0].mxu0
        %v3803 = vadd.f32 0.0, %v3802
        %v3804 = vpop.f32.mrb[0].mxu0
        %3805 = vmatprep.mubr.f32.mxu0 0.0
        %3806 = vmatmul.mubr.f32.gmra.mrb[0].mxu0 %v3476
        %v3807 = vpop.f32.mrb[0].mxu0
        %v3808 = vadd.f32 0.0, %v3807
        %v3809 = vpop.f32.mrb[0].mxu0
        %3810 = vmatprep.mubr.f32.mxu0 0.0
        %3811 = vmatmul.mubr.f32.gmra.mrb[0].mxu0 %v3479
        %v3812 = vpop.f32.mrb[0].mxu0
        %v3813 = vadd.f32 0.0, %v3812
        %v3814 = vpop.f32.mrb[0].mxu0
        %3815 = vmatprep.mubr.f32.mxu0 0.0
        %3816 = vmatmul.mubr.f32.gmra.mrb[0].mxu0 %v3482
        %v3817 = vpop.f32.mrb[0].mxu0
        %v3818 = vadd.f32 0.0, %v3817
        %v3819 = vpop.f32.mrb[0].mxu0
        %3820 = vmatprep.mubr.f32.mxu0 0.0
        %3821 = vmatmul.mubr.f32.gmra.mrb[0].mxu0 %v3485
        %v3822 = vpop.f32.mrb[0].mxu0
        %v3823 = vadd.f32 0.0, %v3822
        %v3824 = vpop.f32.mrb[0].mxu0
        %3825 = vmatprep.mubr.f32.mxu0 0.0
        %3826 = vmatmul.mubr.f32.gmra.mrb[0].mxu0 %v3488
        %v3827 = vpop.f32.mrb[0].mxu0
        %v3828 = vadd.f32 0.0, %v3827
        %v3829 = vpop.f32.mrb[0].mxu0
        %3830 = vmatprep.mubr.f32.mxu0 0.0
        %3831 = vmatmul.mubr.f32.gmra.mrb[0].mxu0 %v3491
        %v3832 = vpop.f32.mrb[0].mxu0
        %v3833 = vadd.f32 0.0, %v3832
        %v3834 = vpop.f32.mrb[0].mxu0
        %3835 = vmatprep.mubr.f32.mxu0 0.0
        %3836 = vmatmul.mubr.f32.gmra.mrb[0].mxu0 %v3494
        %v3837 = vpop.f32.mrb[0].mxu0
        %v3838 = vadd.f32 0.0, %v3837
        %v3839 = vpop.f32.mrb[0].mxu0
        %3840 = vmatprep.mubr.f32.mxu0 0.0
        %3841 = vmatmul.mubr.f32.gmra.mrb[0].mxu0 %v3497
        %v3842 = vpop.f32.mrb[0].mxu0
        %v3843 = vadd.f32 0.0, %v3842
        %v3844 = vpop.f32.mrb[0].mxu0
        %3845 = vmatprep.mubr.f32.mxu0 0.0
        %3846 = vmatmul.mubr.f32.gmra.mrb[0].mxu0 %v3500
        %v3847 = vpop.f32.mrb[0].mxu0
        %v3848 = vadd.f32 0.0, %v3847
        %v3849 = vpop.f32.mrb[0].mxu0
        %3850 = vmatprep.mubr.f32.mxu0 0.0
        %3851 = vmatmul.mubr.f32.gmra.mrb[0].mxu0 %v3503
        %v3852 = vpop.f32.mrb[0].mxu0
        %v3853 = vadd.f32 0.0, %v3852
        %v3854 = vpop.f32.mrb[0].mxu0
        %3855 = vmatprep.mubr.f32.mxu0 0.0
        %3856 = vmatmul.mubr.f32.gmra.mrb[0].mxu0 %v3506
        %v3857 = vpop.f32.mrb[0].mxu0
        %v3858 = vadd.f32 0.0, %v3857
        %v3859 = vpop.f32.mrb[0].mxu0
        %3860 = vmatprep.mubr.f32.mxu0 0.0
        %3861 = vmatmul.mubr.f32.gmra.mrb[0].mxu0 %v3509
        %v3862 = vpop.f32.mrb[0].mxu0
        %v3863 = vadd.f32 0.0, %v3862
        %v3864 = vpop.f32.mrb[0].mxu0
        %3865 = vmatprep.mubr.f32.mxu0 0.0
        %3866 = vmatmul.mubr.f32.gmra.mrb[0].mxu0 %v3512
        %v3867 = vpop.f32.mrb[0].mxu0
        %v3868 = vadd.f32 0.0, %v3867
        %v3869 = vpop.f32.mrb[0].mxu0
        %3870 = vmatprep.mubr.f32.mxu0 0.0
        %3871 = vmatmul.mubr.f32.gmra.mrb[0].mxu0 %v3515
        %v3872 = vpop.f32.mrb[0].mxu0
        %v3873 = vadd.f32 0.0, %v3872
        %v3874 = vpop.f32.mrb[0].mxu0
        %3875 = vmatprep.mubr.f32.mxu0 0.0
        %3876 = vmatmul.mubr.f32.gmra.mrb[0].mxu0 %v3518
        %v3877 = vpop.f32.mrb[0].mxu0
        %v3878 = vadd.f32 0.0, %v3877
        %v3879 = vpop.f32.mrb[0].mxu0
        %3880 = vmatprep.mubr.f32.mxu0 0.0
        %3881 = vmatmul.mubr.f32.gmra.mrb[0].mxu0 %v3521
        %v3882 = vpop.f32.mrb[0].mxu0
        %v3883 = vadd.f32 0.0, %v3882
        %v3884 = vpop.f32.mrb[0].mxu0
        %3885 = vmatprep.mubr.f32.mxu0 0.0
        %3886 = vmatmul.mubr.f32.gmra.mrb[0].mxu0 %v3524
        %v3887 = vpop.f32.mrb[0].mxu0
        %v3888 = vadd.f32 0.0, %v3887
        %v3889 = vpop.f32.mrb[0].mxu0
        %3890 = vmatprep.mubr.f32.mxu0 0.0
        %3891 = vmatmul.mubr.f32.gmra.mrb[0].mxu0 %v3527
        %v3892 = vpop.f32.mrb[0].mxu0
        %v3893 = vadd.f32 0.0, %v3892
        %v3894 = vpop.f32.mrb[0].mxu0
        %3895 = vmatprep.mubr.f32.mxu0 0.0
        %3896 = vmatmul.mubr.f32.gmra.mrb[0].mxu0 %v3530
        %v3897 = vpop.f32.mrb[0].mxu0
        %v3898 = vadd.f32 0.0, %v3897
        %v3899 = vpop.f32.mrb[0].mxu0
        %3900 = vmatprep.mubr.f32.mxu0 0.0
        %3901 = vmatmul.mubr.f32.gmra.mrb[0].mxu0 %v3533
        %v3902 = vpop.f32.mrb[0].mxu0
        %v3903 = vadd.f32 0.0, %v3902
        %v3904 = vpop.f32.mrb[0].mxu0
        %3905 = vmatprep.mubr.f32.mxu0 0.0
        %3906 = vmatmul.mubr.f32.gmra.mrb[0].mxu0 %v3536
        %v3907 = vpop.f32.mrb[0].mxu0
        %v3908 = vadd.f32 0.0, %v3907
        %v3909 = vpop.f32.mrb[0].mxu0
        %3910 = vmatprep.mubr.f32.mxu0 0.0
        %3911 = vmatmul.mubr.f32.gmra.mrb[0].mxu0 %v3539
        %v3912 = vpop.f32.mrb[0].mxu0
        %v3913 = vadd.f32 0.0, %v3912
        %v3914 = vpop.f32.mrb[0].mxu0
        %3915 = vmatprep.mubr.f32.mxu0 0.0
        %3916 = vmatmul.mubr.f32.gmra.mrb[0].mxu0 %v3542
        %v3917 = vpop.f32.mrb[0].mxu0
        %v3918 = vadd.f32 0.0, %v3917
        %v3919 = vpop.f32.mrb[0].mxu0
        %3920 = vmatprep.mubr.f32.mxu0 0.0
        %3921 = vmatmul.mubr.f32.gmra.mrb[0].mxu0 %v3545
        %v3922 = vpop.f32.mrb[0].mxu0
        %v3923 = vadd.f32 0.0, %v3922
        %v3924 = vpop.f32.mrb[0].mxu0
        %3925 = vmatprep.mubr.f32.mxu0 0.0
        %3926 = vmatmul.mubr.f32.gmra.mrb[0].mxu0 %v3548
        %v3927 = vpop.f32.mrb[0].mxu0
        %v3928 = vadd.f32 0.0, %v3927
        %v3929 = vpop.f32.mrb[0].mxu0
        %3930 = vmatprep.mubr.f32.mxu0 0.0
        %3931 = vmatmul.mubr.f32.gmra.mrb[0].mxu0 %v3551
        %v3932 = vpop.f32.mrb[0].mxu0
        %v3933 = vadd.f32 0.0, %v3932
        %v3934 = vpop.f32.mrb[0].mxu0
        %3935 = vmatprep.mubr.f32.mxu0 0.0
        %3936 = vmatmul.mubr.f32.gmra.mrb[0].mxu0 %v3554
        %v3937 = vpop.f32.mrb[0].mxu0
        %v3938 = vadd.f32 0.0, %v3937
        %v3939 = vpop.f32.mrb[0].mxu0
        %3940 = vdwg.mxu0
        %3942 = vset.pattern.permute.xlu0 0
        %3943 = vperm.xlu0 %3942, %v3623
        %v3944 = vpop.permute.xlu0 %3943
        %3947 = vset.pattern.permute.xlu0 0
        %3948 = vperm.xlu0 %3947, %v3628
        %v3949 = vpop.permute.xlu0 %3948
        %3952 = vset.pattern.permute.xlu0 0
        %3953 = vperm.xlu0 %3952, %v3633
        %v3954 = vpop.permute.xlu0 %3953
        %3957 = vset.pattern.permute.xlu0 0
        %3958 = vperm.xlu0 %3957, %v3638
        %v3959 = vpop.permute.xlu0 %3958
        %3962 = vset.pattern.permute.xlu0 0
        %3963 = vperm.xlu0 %3962, %v3643
        %v3964 = vpop.permute.xlu0 %3963
        %3967 = vset.pattern.permute.xlu0 0
        %3968 = vperm.xlu0 %3967, %v3648
        %v3969 = vpop.permute.xlu0 %3968
        %3972 = vset.pattern.permute.xlu0 0
        %3973 = vperm.xlu0 %3972, %v3653
        %v3974 = vpop.permute.xlu0 %3973
        %3977 = vset.pattern.permute.xlu0 0
        %3978 = vperm.xlu0 %3977, %v3658
        %v3979 = vpop.permute.xlu0 %3978
        %3982 = vset.pattern.permute.xlu0 0
        %3983 = vperm.xlu0 %3982, %v3663
        %v3984 = vpop.permute.xlu0 %3983
        %3987 = vset.pattern.permute.xlu0 0
        %3988 = vperm.xlu0 %3987, %v3668
        %v3989 = vpop.permute.xlu0 %3988
        %3992 = vset.pattern.permute.xlu0 0
        %3993 = vperm.xlu0 %3992, %v3673
        %v3994 = vpop.permute.xlu0 %3993
        %3997 = vset.pattern.permute.xlu0 0
        %3998 = vperm.xlu0 %3997, %v3678
        %v3999 = vpop.permute.xlu0 %3998
        %4002 = vset.pattern.permute.xlu0 0
        %4003 = vperm.xlu0 %4002, %v3683
        %v4004 = vpop.permute.xlu0 %4003
        %4007 = vset.pattern.permute.xlu0 0
        %4008 = vperm.xlu0 %4007, %v3688
        %v4009 = vpop.permute.xlu0 %4008
        %4012 = vset.pattern.permute.xlu0 0
        %4013 = vperm.xlu0 %4012, %v3693
        %v4014 = vpop.permute.xlu0 %4013
        %4017 = vset.pattern.permute.xlu0 0
        %4018 = vperm.xlu0 %4017, %v3698
        %v4019 = vpop.permute.xlu0 %4018
        %4022 = vset.pattern.permute.xlu0 0
        %4023 = vperm.xlu0 %4022, %v3703
        %v4024 = vpop.permute.xlu0 %4023
        %4027 = vset.pattern.permute.xlu0 0
        %4028 = vperm.xlu0 %4027, %v3708
        %v4029 = vpop.permute.xlu0 %4028
        %4032 = vset.pattern.permute.xlu0 0
        %4033 = vperm.xlu0 %4032, %v3713
        %v4034 = vpop.permute.xlu0 %4033
        %4037 = vset.pattern.permute.xlu0 0
        %4038 = vperm.xlu0 %4037, %v3718
        %v4039 = vpop.permute.xlu0 %4038
        %4042 = vset.pattern.permute.xlu0 0
        %4043 = vperm.xlu0 %4042, %v3723
        %v4044 = vpop.permute.xlu0 %4043
        %4047 = vset.pattern.permute.xlu0 0
        %4048 = vperm.xlu0 %4047, %v3728
        %v4049 = vpop.permute.xlu0 %4048
        %4052 = vset.pattern.permute.xlu0 0
        %4053 = vperm.xlu0 %4052, %v3733
        %v4054 = vpop.permute.xlu0 %4053
        %4057 = vset.pattern.permute.xlu0 0
        %4058 = vperm.xlu0 %4057, %v3738
        %v4059 = vpop.permute.xlu0 %4058
        %4062 = vset.pattern.permute.xlu0 0
        %4063 = vperm.xlu0 %4062, %v3743
        %v4064 = vpop.permute.xlu0 %4063
        %4067 = vset.pattern.permute.xlu0 0
        %4068 = vperm.xlu0 %4067, %v3748
        %v4069 = vpop.permute.xlu0 %4068
        %4072 = vset.pattern.permute.xlu0 0
        %4073 = vperm.xlu0 %4072, %v3753
        %v4074 = vpop.permute.xlu0 %4073
        %4077 = vset.pattern.permute.xlu0 0
        %4078 = vperm.xlu0 %4077, %v3758
        %v4079 = vpop.permute.xlu0 %4078
        %4082 = vset.pattern.permute.xlu0 0
        %4083 = vperm.xlu0 %4082, %v3763
        %v4084 = vpop.permute.xlu0 %4083
        %4087 = vset.pattern.permute.xlu0 0
        %4088 = vperm.xlu0 %4087, %v3768
        %v4089 = vpop.permute.xlu0 %4088
        %4092 = vset.pattern.permute.xlu0 0
        %4093 = vperm.xlu0 %4092, %v3773
        %v4094 = vpop.permute.xlu0 %4093
        %4097 = vset.pattern.permute.xlu0 0
        %4098 = vperm.xlu0 %4097, %v3778
        %v4099 = vpop.permute.xlu0 %4098
        %4102 = vset.pattern.permute.xlu0 0
        %4103 = vperm.xlu0 %4102, %v3783
        %v4104 = vpop.permute.xlu0 %4103
        %4107 = vset.pattern.permute.xlu0 0
        %4108 = vperm.xlu0 %4107, %v3788
        %v4109 = vpop.permute.xlu0 %4108
        %4112 = vset.pattern.permute.xlu0 0
        %4113 = vperm.xlu0 %4112, %v3793
        %v4114 = vpop.permute.xlu0 %4113
        %4117 = vset.pattern.permute.xlu0 0
        %4118 = vperm.xlu0 %4117, %v3798
        %v4119 = vpop.permute.xlu0 %4118
        %4122 = vset.pattern.permute.xlu0 0
        %4123 = vperm.xlu0 %4122, %v3803
        %v4124 = vpop.permute.xlu0 %4123
        %4127 = vset.pattern.permute.xlu0 0
        %4128 = vperm.xlu0 %4127, %v3808
        %v4129 = vpop.permute.xlu0 %4128
        %4132 = vset.pattern.permute.xlu0 0
        %4133 = vperm.xlu0 %4132, %v3813
        %v4134 = vpop.permute.xlu0 %4133
        %4137 = vset.pattern.permute.xlu0 0
        %4138 = vperm.xlu0 %4137, %v3818
        %v4139 = vpop.permute.xlu0 %4138
        %4142 = vset.pattern.permute.xlu0 0
        %4143 = vperm.xlu0 %4142, %v3823
        %v4144 = vpop.permute.xlu0 %4143
        %4147 = vset.pattern.permute.xlu0 0
        %4148 = vperm.xlu0 %4147, %v3828
        %v4149 = vpop.permute.xlu0 %4148
        %4152 = vset.pattern.permute.xlu0 0
        %4153 = vperm.xlu0 %4152, %v3833
        %v4154 = vpop.permute.xlu0 %4153
        %4157 = vset.pattern.permute.xlu0 0
        %4158 = vperm.xlu0 %4157, %v3838
        %v4159 = vpop.permute.xlu0 %4158
        %4162 = vset.pattern.permute.xlu0 0
        %4163 = vperm.xlu0 %4162, %v3843
        %v4164 = vpop.permute.xlu0 %4163
        %4167 = vset.pattern.permute.xlu0 0
        %4168 = vperm.xlu0 %4167, %v3848
        %v4169 = vpop.permute.xlu0 %4168
        %4172 = vset.pattern.permute.xlu0 0
        %4173 = vperm.xlu0 %4172, %v3853
        %v4174 = vpop.permute.xlu0 %4173
        %4177 = vset.pattern.permute.xlu0 0
        %4178 = vperm.xlu0 %4177, %v3858
        %v4179 = vpop.permute.xlu0 %4178
        %4182 = vset.pattern.permute.xlu0 0
        %4183 = vperm.xlu0 %4182, %v3863
        %v4184 = vpop.permute.xlu0 %4183
        %4187 = vset.pattern.permute.xlu0 0
        %4188 = vperm.xlu0 %4187, %v3868
        %v4189 = vpop.permute.xlu0 %4188
        %4192 = vset.pattern.permute.xlu0 0
        %4193 = vperm.xlu0 %4192, %v3873
        %v4194 = vpop.permute.xlu0 %4193
        %4197 = vset.pattern.permute.xlu0 0
        %4198 = vperm.xlu0 %4197, %v3878
        %v4199 = vpop.permute.xlu0 %4198
        %4202 = vset.pattern.permute.xlu0 0
        %4203 = vperm.xlu0 %4202, %v3883
        %v4204 = vpop.permute.xlu0 %4203
        %4207 = vset.pattern.permute.xlu0 0
        %4208 = vperm.xlu0 %4207, %v3888
        %v4209 = vpop.permute.xlu0 %4208
        %4212 = vset.pattern.permute.xlu0 0
        %4213 = vperm.xlu0 %4212, %v3893
        %v4214 = vpop.permute.xlu0 %4213
        %4217 = vset.pattern.permute.xlu0 0
        %4218 = vperm.xlu0 %4217, %v3898
        %v4219 = vpop.permute.xlu0 %4218
        %4222 = vset.pattern.permute.xlu0 0
        %4223 = vperm.xlu0 %4222, %v3903
        %v4224 = vpop.permute.xlu0 %4223
        %4227 = vset.pattern.permute.xlu0 0
        %4228 = vperm.xlu0 %4227, %v3908
        %v4229 = vpop.permute.xlu0 %4228
        %4232 = vset.pattern.permute.xlu0 0
        %4233 = vperm.xlu0 %4232, %v3913
        %v4234 = vpop.permute.xlu0 %4233
        %4237 = vset.pattern.permute.xlu0 0
        %4238 = vperm.xlu0 %4237, %v3918
        %v4239 = vpop.permute.xlu0 %4238
        %4242 = vset.pattern.permute.xlu0 0
        %4243 = vperm.xlu0 %4242, %v3923
        %v4244 = vpop.permute.xlu0 %4243
        %4247 = vset.pattern.permute.xlu0 0
        %4248 = vperm.xlu0 %4247, %v3928
        %v4249 = vpop.permute.xlu0 %4248
        %4252 = vset.pattern.permute.xlu0 0
        %4253 = vperm.xlu0 %4252, %v3933
        %v4254 = vpop.permute.xlu0 %4253
        %4257 = vset.pattern.permute.xlu0 0
        %4258 = vperm.xlu0 %4257, %v3938
        %v4259 = vpop.permute.xlu0 %4258
        %v4261 = vsub.f32 %v2961, %v3944
        %v4262 = vsub.f32 %v2962, %v3944
        %v4263 = vsub.f32 %v2963, %v3949
        %v4264 = vsub.f32 %v2964, %v3949
        %v4265 = vsub.f32 %v2965, %v3954
        %v4266 = vsub.f32 %v2966, %v3954
        %v4267 = vsub.f32 %v2967, %v3959
        %v4268 = vsub.f32 %v2968, %v3959
        %v4269 = vsub.f32 %v2969, %v3964
        %v4270 = vsub.f32 %v2970, %v3964
        %v4271 = vsub.f32 %v2971, %v3969
        %v4272 = vsub.f32 %v2972, %v3969
        %v4273 = vsub.f32 %v2973, %v3974
        %v4274 = vsub.f32 %v2974, %v3974
        %v4275 = vsub.f32 %v2975, %v3979
        %v4276 = vsub.f32 %v2976, %v3979
        %v4277 = vsub.f32 %v2977, %v3984
        %v4278 = vsub.f32 %v2978, %v3984
        %v4279 = vsub.f32 %v2979, %v3989
        %v4280 = vsub.f32 %v2980, %v3989
        %v4281 = vsub.f32 %v2981, %v3994
        %v4282 = vsub.f32 %v2982, %v3994
        %v4283 = vsub.f32 %v2983, %v3999
        %v4284 = vsub.f32 %v2984, %v3999
        %v4285 = vsub.f32 %v2985, %v4004
        %v4286 = vsub.f32 %v2986, %v4004
        %v4287 = vsub.f32 %v2987, %v4009
        %v4288 = vsub.f32 %v2988, %v4009
        %v4289 = vsub.f32 %v2989, %v4014
        %v4290 = vsub.f32 %v2990, %v4014
        %v4291 = vsub.f32 %v2991, %v4019
        %v4292 = vsub.f32 %v2992, %v4019
        %v4293 = vsub.f32 %v2993, %v4024
        %v4294 = vsub.f32 %v2994, %v4024
        %v4295 = vsub.f32 %v2995, %v4029
        %v4296 = vsub.f32 %v2996, %v4029
        %v4297 = vsub.f32 %v2997, %v4034
        %v4298 = vsub.f32 %v2998, %v4034
        %v4299 = vsub.f32 %v2999, %v4039
        %v4300 = vsub.f32 %v3000, %v4039
        %v4301 = vsub.f32 %v3001, %v4044
        %v4302 = vsub.f32 %v3002, %v4044
        %v4303 = vsub.f32 %v3003, %v4049
        %v4304 = vsub.f32 %v3004, %v4049
        %v4305 = vsub.f32 %v3005, %v4054
        %v4306 = vsub.f32 %v3006, %v4054
        %v4307 = vsub.f32 %v3007, %v4059
        %v4308 = vsub.f32 %v3008, %v4059
        %v4309 = vsub.f32 %v3009, %v4064
        %v4310 = vsub.f32 %v3010, %v4064
        %v4311 = vsub.f32 %v3011, %v4069
        %v4312 = vsub.f32 %v3012, %v4069
        %v4313 = vsub.f32 %v3013, %v4074
        %v4314 = vsub.f32 %v3014, %v4074
        %v4315 = vsub.f32 %v3015, %v4079
        %v4316 = vsub.f32 %v3016, %v4079
        %v4317 = vsub.f32 %v3017, %v4084
        %v4318 = vsub.f32 %v3018, %v4084
        %v4319 = vsub.f32 %v3019, %v4089
        %v4320 = vsub.f32 %v3020, %v4089
        %v4321 = vsub.f32 %v3021, %v4094
        %v4322 = vsub.f32 %v3022, %v4094
        %v4323 = vsub.f32 %v3023, %v4099
        %v4324 = vsub.f32 %v3024, %v4099
        %v4325 = vsub.f32 %v3025, %v4104
        %v4326 = vsub.f32 %v3026, %v4104
        %v4327 = vsub.f32 %v3027, %v4109
        %v4328 = vsub.f32 %v3028, %v4109
        %v4329 = vsub.f32 %v3029, %v4114
        %v4330 = vsub.f32 %v3030, %v4114
        %v4331 = vsub.f32 %v3031, %v4119
        %v4332 = vsub.f32 %v3032, %v4119
        %v4333 = vsub.f32 %v3033, %v4124
        %v4334 = vsub.f32 %v3034, %v4124
        %v4335 = vsub.f32 %v3035, %v4129
        %v4336 = vsub.f32 %v3036, %v4129
        %v4337 = vsub.f32 %v3037, %v4134
        %v4338 = vsub.f32 %v3038, %v4134
        %v4339 = vsub.f32 %v3039, %v4139
        %v4340 = vsub.f32 %v3040, %v4139
        %v4341 = vsub.f32 %v3041, %v4144
        %v4342 = vsub.f32 %v3042, %v4144
        %v4343 = vsub.f32 %v3043, %v4149
        %v4344 = vsub.f32 %v3044, %v4149
        %v4345 = vsub.f32 %v3045, %v4154
        %v4346 = vsub.f32 %v3046, %v4154
        %v4347 = vsub.f32 %v3047, %v4159
        %v4348 = vsub.f32 %v3048, %v4159
        %v4349 = vsub.f32 %v3049, %v4164
        %v4350 = vsub.f32 %v3050, %v4164
        %v4351 = vsub.f32 %v3051, %v4169
        %v4352 = vsub.f32 %v3052, %v4169
        %v4353 = vsub.f32 %v3053, %v4174
        %v4354 = vsub.f32 %v3054, %v4174
        %v4355 = vsub.f32 %v3055, %v4179
        %v4356 = vsub.f32 %v3056, %v4179
        %v4357 = vsub.f32 %v3057, %v4184
        %v4358 = vsub.f32 %v3058, %v4184
        %v4359 = vsub.f32 %v3059, %v4189
        %v4360 = vsub.f32 %v3060, %v4189
        %v4361 = vsub.f32 %v3061, %v4194
        %v4362 = vsub.f32 %v3062, %v4194
        %v4363 = vsub.f32 %v3063, %v4199
        %v4364 = vsub.f32 %v3064, %v4199
        %v4365 = vsub.f32 %v3065, %v4204
        %v4366 = vsub.f32 %v3066, %v4204
        %v4367 = vsub.f32 %v3067, %v4209
        %v4368 = vsub.f32 %v3068, %v4209
        %v4369 = vsub.f32 %v3069, %v4214
        %v4370 = vsub.f32 %v3070, %v4214
        %v4371 = vsub.f32 %v3071, %v4219
        %v4372 = vsub.f32 %v3072, %v4219
        %v4373 = vsub.f32 %v3073, %v4224
        %v4374 = vsub.f32 %v3074, %v4224
        %v4375 = vsub.f32 %v3075, %v4229
        %v4376 = vsub.f32 %v3076, %v4229
        %v4377 = vsub.f32 %v3077, %v4234
        %v4378 = vsub.f32 %v3078, %v4234
        %v4379 = vsub.f32 %v3079, %v4239
        %v4380 = vsub.f32 %v3080, %v4239
        %v4381 = vsub.f32 %v3081, %v4244
        %v4382 = vsub.f32 %v3082, %v4244
        %v4383 = vsub.f32 %v3083, %v4249
        %v4384 = vsub.f32 %v3084, %v4249
        %v4385 = vsub.f32 %v3085, %v4254
        %v4386 = vsub.f32 %v3086, %v4254
        %v4387 = vsub.f32 %v3087, %v4259
        %v4388 = vsub.f32 %v3088, %v4259
        %v4389 = vmul.f32 %v4261, %v4261
        %v4390 = vmul.f32 %v4262, %v4262
        %v4391 = vmul.f32 %v4263, %v4263
        %v4392 = vmul.f32 %v4264, %v4264
        %v4393 = vmul.f32 %v4265, %v4265
        %v4394 = vmul.f32 %v4266, %v4266
        %v4395 = vmul.f32 %v4267, %v4267
        %v4396 = vmul.f32 %v4268, %v4268
        %v4397 = vmul.f32 %v4269, %v4269
        %v4398 = vmul.f32 %v4270, %v4270
        %v4399 = vmul.f32 %v4271, %v4271
        %v4400 = vmul.f32 %v4272, %v4272
        %v4401 = vmul.f32 %v4273, %v4273
        %v4402 = vmul.f32 %v4274, %v4274
        %v4403 = vmul.f32 %v4275, %v4275
        %v4404 = vmul.f32 %v4276, %v4276
        %v4405 = vmul.f32 %v4277, %v4277
        %v4406 = vmul.f32 %v4278, %v4278
        %v4407 = vmul.f32 %v4279, %v4279
        %v4408 = vmul.f32 %v4280, %v4280
        %v4409 = vmul.f32 %v4281, %v4281
        %v4410 = vmul.f32 %v4282, %v4282
        %v4411 = vmul.f32 %v4283, %v4283
        %v4412 = vmul.f32 %v4284, %v4284
        %v4413 = vmul.f32 %v4285, %v4285
        %v4414 = vmul.f32 %v4286, %v4286
        %v4415 = vmul.f32 %v4287, %v4287
        %v4416 = vmul.f32 %v4288, %v4288
        %v4417 = vmul.f32 %v4289, %v4289
        %v4418 = vmul.f32 %v4290, %v4290
        %v4419 = vmul.f32 %v4291, %v4291
        %v4420 = vmul.f32 %v4292, %v4292
        %v4421 = vmul.f32 %v4293, %v4293
        %v4422 = vmul.f32 %v4294, %v4294
        %v4423 = vmul.f32 %v4295, %v4295
        %v4424 = vmul.f32 %v4296, %v4296
        %v4425 = vmul.f32 %v4297, %v4297
        %v4426 = vmul.f32 %v4298, %v4298
        %v4427 = vmul.f32 %v4299, %v4299
        %v4428 = vmul.f32 %v4300, %v4300
        %v4429 = vmul.f32 %v4301, %v4301
        %v4430 = vmul.f32 %v4302, %v4302
        %v4431 = vmul.f32 %v4303, %v4303
        %v4432 = vmul.f32 %v4304, %v4304
        %v4433 = vmul.f32 %v4305, %v4305
        %v4434 = vmul.f32 %v4306, %v4306
        %v4435 = vmul.f32 %v4307, %v4307
        %v4436 = vmul.f32 %v4308, %v4308
        %v4437 = vmul.f32 %v4309, %v4309
        %v4438 = vmul.f32 %v4310, %v4310
        %v4439 = vmul.f32 %v4311, %v4311
        %v4440 = vmul.f32 %v4312, %v4312
        %v4441 = vmul.f32 %v4313, %v4313
        %v4442 = vmul.f32 %v4314, %v4314
        %v4443 = vmul.f32 %v4315, %v4315
        %v4444 = vmul.f32 %v4316, %v4316
        %v4445 = vmul.f32 %v4317, %v4317
        %v4446 = vmul.f32 %v4318, %v4318
        %v4447 = vmul.f32 %v4319, %v4319
        %v4448 = vmul.f32 %v4320, %v4320
        %v4449 = vmul.f32 %v4321, %v4321
        %v4450 = vmul.f32 %v4322, %v4322
        %v4451 = vmul.f32 %v4323, %v4323
        %v4452 = vmul.f32 %v4324, %v4324
        %v4453 = vmul.f32 %v4325, %v4325
        %v4454 = vmul.f32 %v4326, %v4326
        %v4455 = vmul.f32 %v4327, %v4327
        %v4456 = vmul.f32 %v4328, %v4328
        %v4457 = vmul.f32 %v4329, %v4329
        %v4458 = vmul.f32 %v4330, %v4330
        %v4459 = vmul.f32 %v4331, %v4331
        %v4460 = vmul.f32 %v4332, %v4332
        %v4461 = vmul.f32 %v4333, %v4333
        %v4462 = vmul.f32 %v4334, %v4334
        %v4463 = vmul.f32 %v4335, %v4335
        %v4464 = vmul.f32 %v4336, %v4336
        %v4465 = vmul.f32 %v4337, %v4337
        %v4466 = vmul.f32 %v4338, %v4338
        %v4467 = vmul.f32 %v4339, %v4339
        %v4468 = vmul.f32 %v4340, %v4340
        %v4469 = vmul.f32 %v4341, %v4341
        %v4470 = vmul.f32 %v4342, %v4342
        %v4471 = vmul.f32 %v4343, %v4343
        %v4472 = vmul.f32 %v4344, %v4344
        %v4473 = vmul.f32 %v4345, %v4345
        %v4474 = vmul.f32 %v4346, %v4346
        %v4475 = vmul.f32 %v4347, %v4347
        %v4476 = vmul.f32 %v4348, %v4348
        %v4477 = vmul.f32 %v4349, %v4349
        %v4478 = vmul.f32 %v4350, %v4350
        %v4479 = vmul.f32 %v4351, %v4351
        %v4480 = vmul.f32 %v4352, %v4352
        %v4481 = vmul.f32 %v4353, %v4353
        %v4482 = vmul.f32 %v4354, %v4354
        %v4483 = vmul.f32 %v4355, %v4355
        %v4484 = vmul.f32 %v4356, %v4356
        %v4485 = vmul.f32 %v4357, %v4357
        %v4486 = vmul.f32 %v4358, %v4358
        %v4487 = vmul.f32 %v4359, %v4359
        %v4488 = vmul.f32 %v4360, %v4360
        %v4489 = vmul.f32 %v4361, %v4361
        %v4490 = vmul.f32 %v4362, %v4362
        %v4491 = vmul.f32 %v4363, %v4363
        %v4492 = vmul.f32 %v4364, %v4364
        %v4493 = vmul.f32 %v4365, %v4365
        %v4494 = vmul.f32 %v4366, %v4366
        %v4495 = vmul.f32 %v4367, %v4367
        %v4496 = vmul.f32 %v4368, %v4368
        %v4497 = vmul.f32 %v4369, %v4369
        %v4498 = vmul.f32 %v4370, %v4370
        %v4499 = vmul.f32 %v4371, %v4371
        %v4500 = vmul.f32 %v4372, %v4372
        %v4501 = vmul.f32 %v4373, %v4373
        %v4502 = vmul.f32 %v4374, %v4374
        %v4503 = vmul.f32 %v4375, %v4375
        %v4504 = vmul.f32 %v4376, %v4376
        %v4505 = vmul.f32 %v4377, %v4377
        %v4506 = vmul.f32 %v4378, %v4378
        %v4507 = vmul.f32 %v4379, %v4379
        %v4508 = vmul.f32 %v4380, %v4380
        %v4509 = vmul.f32 %v4381, %v4381
        %v4510 = vmul.f32 %v4382, %v4382
        %v4511 = vmul.f32 %v4383, %v4383
        %v4512 = vmul.f32 %v4384, %v4384
        %v4513 = vmul.f32 %v4385, %v4385
        %v4514 = vmul.f32 %v4386, %v4386
        %v4515 = vmul.f32 %v4387, %v4387
        %v4516 = vmul.f32 %v4388, %v4388
        %4517 = vmatprep.subr.mxu0 %v4390
        %4518 = vmatpush1.msra.mxu0 %v4389
        %4519 = vmatprep.subr.mxu0 %v4392
        %4520 = vmatpush1.msra.mxu0 %v4391
        %4521 = vmatprep.subr.mxu0 %v4394
        %4522 = vmatpush1.msra.mxu0 %v4393
        %4523 = vmatprep.subr.mxu0 %v4396
        %4524 = vmatpush1.msra.mxu0 %v4395
        %4525 = vmatprep.subr.mxu0 %v4398
        %4526 = vmatpush1.msra.mxu0 %v4397
        %4527 = vmatprep.subr.mxu0 %v4400
        %4528 = vmatpush1.msra.mxu0 %v4399
        %4529 = vmatprep.subr.mxu0 %v4402
        %4530 = vmatpush1.msra.mxu0 %v4401
        %4531 = vmatprep.subr.mxu0 %v4404
        %4532 = vmatpush1.msra.mxu0 %v4403
        %4533 = vmatprep.subr.mxu0 %v4406
        %4534 = vmatpush1.msra.mxu0 %v4405
        %4535 = vmatprep.subr.mxu0 %v4408
        %4536 = vmatpush1.msra.mxu0 %v4407
        %4537 = vmatprep.subr.mxu0 %v4410
        %4538 = vmatpush1.msra.mxu0 %v4409
        %4539 = vmatprep.subr.mxu0 %v4412
        %4540 = vmatpush1.msra.mxu0 %v4411
        %4541 = vmatprep.subr.mxu0 %v4414
        %4542 = vmatpush1.msra.mxu0 %v4413
        %4543 = vmatprep.subr.mxu0 %v4416
        %4544 = vmatpush1.msra.mxu0 %v4415
        %4545 = vmatprep.subr.mxu0 %v4418
        %4546 = vmatpush1.msra.mxu0 %v4417
        %4547 = vmatprep.subr.mxu0 %v4420
        %4548 = vmatpush1.msra.mxu0 %v4419
        %4549 = vmatprep.subr.mxu0 %v4422
        %4550 = vmatpush1.msra.mxu0 %v4421
        %4551 = vmatprep.subr.mxu0 %v4424
        %4552 = vmatpush1.msra.mxu0 %v4423
        %4553 = vmatprep.subr.mxu0 %v4426
        %4554 = vmatpush1.msra.mxu0 %v4425
        %4555 = vmatprep.subr.mxu0 %v4428
        %4556 = vmatpush1.msra.mxu0 %v4427
        %4557 = vmatprep.subr.mxu0 %v4430
        %4558 = vmatpush1.msra.mxu0 %v4429
        %4559 = vmatprep.subr.mxu0 %v4432
        %4560 = vmatpush1.msra.mxu0 %v4431
        %4561 = vmatprep.subr.mxu0 %v4434
        %4562 = vmatpush1.msra.mxu0 %v4433
        %4563 = vmatprep.subr.mxu0 %v4436
        %4564 = vmatpush1.msra.mxu0 %v4435
        %4565 = vmatprep.subr.mxu0 %v4438
        %4566 = vmatpush1.msra.mxu0 %v4437
        %4567 = vmatprep.subr.mxu0 %v4440
        %4568 = vmatpush1.msra.mxu0 %v4439
        %4569 = vmatprep.subr.mxu0 %v4442
        %4570 = vmatpush1.msra.mxu0 %v4441
        %4571 = vmatprep.subr.mxu0 %v4444
        %4572 = vmatpush1.msra.mxu0 %v4443
        %4573 = vmatprep.subr.mxu0 %v4446
        %4574 = vmatpush1.msra.mxu0 %v4445
        %4575 = vmatprep.subr.mxu0 %v4448
        %4576 = vmatpush1.msra.mxu0 %v4447
        %4577 = vmatprep.subr.mxu0 %v4450
        %4578 = vmatpush1.msra.mxu0 %v4449
        %4579 = vmatprep.subr.mxu0 %v4452
        %4580 = vmatpush1.msra.mxu0 %v4451
        %4581 = vmatprep.mubr.f32.mxu0 %v3090
        %4582 = vmatmul.mubr.f32.gmra.mrb[0].mxu0 %v3089
        %v4583 = vpop.f32.mrb[0].mxu0
        %v4584 = vadd.f32 0.0, %v4583
        %v4585 = vpop.f32.mrb[0].mxu0
        %v4586 = vadd.f32 0.0, %v4585
        %4587 = vmatprep.mubr.f32.mxu0 %v3094
        %4588 = vmatmul.mubr.f32.gmra.mrb[0].mxu0 %v3093
        %v4589 = vpop.f32.mrb[0].mxu0
        %v4590 = vadd.f32 0.0, %v4589
        %v4591 = vpop.f32.mrb[0].mxu0
        %v4592 = vadd.f32 0.0, %v4591
        %4593 = vmatprep.mubr.f32.mxu0 %v3098
        %4594 = vmatmul.mubr.f32.gmra.mrb[0].mxu0 %v3097
        %v4595 = vpop.f32.mrb[0].mxu0
        %v4596 = vadd.f32 0.0, %v4595
        %v4597 = vpop.f32.mrb[0].mxu0
        %v4598 = vadd.f32 0.0, %v4597
        %4599 = vmatprep.mubr.f32.mxu0 %v3102
        %4600 = vmatmul.mubr.f32.gmra.mrb[0].mxu0 %v3101
        %v4601 = vpop.f32.mrb[0].mxu0
        %v4602 = vadd.f32 0.0, %v4601
        %v4603 = vpop.f32.mrb[0].mxu0
        %v4604 = vadd.f32 0.0, %v4603
        %4605 = vdwg.mxu0
        %4606 = vmatprep.subr.mxu0 %v4454
        %4607 = vmatpush1.msra.mxu0 %v4453
        %4608 = vmatprep.subr.mxu0 %v4456
        %4609 = vmatpush1.msra.mxu0 %v4455
        %4610 = vmatprep.subr.mxu0 %v4458
        %4611 = vmatpush1.msra.mxu0 %v4457
        %4612 = vmatprep.subr.mxu0 %v4460
        %4613 = vmatpush1.msra.mxu0 %v4459
        %4614 = vmatprep.subr.mxu0 %v4462
        %4615 = vmatpush1.msra.mxu0 %v4461
        %4616 = vmatprep.subr.mxu0 %v4464
        %4617 = vmatpush1.msra.mxu0 %v4463
        %4618 = vmatprep.subr.mxu0 %v4466
        %4619 = vmatpush1.msra.mxu0 %v4465
        %4620 = vmatprep.subr.mxu0 %v4468
        %4621 = vmatpush1.msra.mxu0 %v4467
        %4622 = vmatprep.subr.mxu0 %v4470
        %4623 = vmatpush1.msra.mxu0 %v4469
        %4624 = vmatprep.subr.mxu0 %v4472
        %4625 = vmatpush1.msra.mxu0 %v4471
        %4626 = vmatprep.subr.mxu0 %v4474
        %4627 = vmatpush1.msra.mxu0 %v4473
        %4628 = vmatprep.subr.mxu0 %v4476
        %4629 = vmatpush1.msra.mxu0 %v4475
        %4630 = vmatprep.subr.mxu0 %v4478
        %4631 = vmatpush1.msra.mxu0 %v4477
        %4632 = vmatprep.subr.mxu0 %v4480
        %4633 = vmatpush1.msra.mxu0 %v4479
        %4634 = vmatprep.subr.mxu0 %v4482
        %4635 = vmatpush1.msra.mxu0 %v4481
        %4636 = vmatprep.subr.mxu0 %v4484
        %4637 = vmatpush1.msra.mxu0 %v4483
        %4638 = vmatprep.subr.mxu0 %v4486
        %4639 = vmatpush1.msra.mxu0 %v4485
        %4640 = vmatprep.subr.mxu0 %v4488
        %4641 = vmatpush1.msra.mxu0 %v4487
        %4642 = vmatprep.subr.mxu0 %v4490
        %4643 = vmatpush1.msra.mxu0 %v4489
        %4644 = vmatprep.subr.mxu0 %v4492
        %4645 = vmatpush1.msra.mxu0 %v4491
        %4646 = vmatprep.subr.mxu0 %v4494
        %4647 = vmatpush1.msra.mxu0 %v4493
        %4648 = vmatprep.subr.mxu0 %v4496
        %4649 = vmatpush1.msra.mxu0 %v4495
        %4650 = vmatprep.subr.mxu0 %v4498
        %4651 = vmatpush1.msra.mxu0 %v4497
        %4652 = vmatprep.subr.mxu0 %v4500
        %4653 = vmatpush1.msra.mxu0 %v4499
        %4654 = vmatprep.subr.mxu0 %v4502
        %4655 = vmatpush1.msra.mxu0 %v4501
        %4656 = vmatprep.subr.mxu0 %v4504
        %4657 = vmatpush1.msra.mxu0 %v4503
        %4658 = vmatprep.subr.mxu0 %v4506
        %4659 = vmatpush1.msra.mxu0 %v4505
        %4660 = vmatprep.subr.mxu0 %v4508
        %4661 = vmatpush1.msra.mxu0 %v4507
        %4662 = vmatprep.subr.mxu0 %v4510
        %4663 = vmatpush1.msra.mxu0 %v4509
        %4664 = vmatprep.subr.mxu0 %v4512
        %4665 = vmatpush1.msra.mxu0 %v4511
        %4666 = vmatprep.subr.mxu0 %v4514
        %4667 = vmatpush1.msra.mxu0 %v4513
        %4668 = vmatprep.subr.mxu0 %v4516
        %4669 = vmatpush1.msra.mxu0 %v4515
        %4670 = vmatprep.mubr.f32.mxu0 %v3092
        %4671 = vmatmul.mubr.f32.gmra.mrb[0].mxu0 %v3091
        %v4672 = vpop.f32.mrb[0].mxu0
        %v4673 = vadd.f32 %v4584, %v4672
        %v4674 = vpop.f32.mrb[0].mxu0
        %v4675 = vadd.f32 %v4586, %v4674
        %4676 = vmatprep.mubr.f32.mxu0 %v3096
        %4677 = vmatmul.mubr.f32.gmra.mrb[0].mxu0 %v3095
        %v4678 = vpop.f32.mrb[0].mxu0
        %v4679 = vadd.f32 %v4590, %v4678
        %v4680 = vpop.f32.mrb[0].mxu0
        %v4681 = vadd.f32 %v4592, %v4680
        %4682 = vmatprep.mubr.f32.mxu0 %v3100
        %4683 = vmatmul.mubr.f32.gmra.mrb[0].mxu0 %v3099
        %v4684 = vpop.f32.mrb[0].mxu0
        %v4685 = vadd.f32 %v4596, %v4684
        %v4686 = vpop.f32.mrb[0].mxu0
        %v4687 = vadd.f32 %v4598, %v4686
        %4688 = vmatprep.mubr.f32.mxu0 %v3104
        %4689 = vmatmul.mubr.f32.gmra.mrb[0].mxu0 %v3103
        %v4690 = vpop.f32.mrb[0].mxu0
        %v4691 = vadd.f32 %v4602, %v4690
        %v4692 = vpop.f32.mrb[0].mxu0
        %v4693 = vadd.f32 %v4604, %v4692
        %4694 = vdwg.mxu0
        %v4695 = vadd.f32 %v4673, %v4675
        %4696 = vadd.xlane.f32.xlu0 %v4695
        %v4697 = vpop.xlane.xlu0 %4696
        %v4698 = vadd.f32 %v4679, %v4681
        %4699 = vadd.xlane.f32.xlu0 %v4698
        %v4700 = vpop.xlane.xlu0 %4699
        %v4701 = vadd.f32 %v4685, %v4687
        %4702 = vadd.xlane.f32.xlu0 %v4701
        %v4703 = vpop.xlane.xlu0 %4702
        %v4704 = vadd.f32 %v4691, %v4693
        %4705 = vadd.xlane.f32.xlu0 %v4704
        %v4706 = vpop.xlane.xlu0 %4705
        %v4707 = vmul.f32 %v4697, 0.00024414063
        %v4708 = vmul.f32 %v4700, 0.00024414063
        %v4709 = vmul.f32 %v4703, 0.00024414063
        %v4710 = vmul.f32 %v4706, 0.00024414063
        %v4711 = vadd.f32 %v4707, 1e-05
        %v4712 = vadd.f32 %v4708, 1e-05
        %v4713 = vadd.f32 %v4709, 1e-05
        %v4714 = vadd.f32 %v4710, 1e-05
        %v4715 = vrsqrt.pop %v4711
        %v4716 = vrsqrt.pop %v4712
        %v4717 = vrsqrt.pop %v4713
        %v4718 = vrsqrt.pop %v4714
        %4719 = vmatprep.subr.mxu0 0.0
        %4720 = vmatpush1.msra.mxu0 %v4715
        %4721 = vmatprep.subr.mxu0 0.0
        %4722 = vmatpush1.msra.mxu0 %v4716
        %4723 = vmatprep.subr.mxu0 0.0
        %4724 = vmatpush1.msra.mxu0 %v4717
        %4725 = vmatprep.subr.mxu0 0.0
        %4726 = vmatpush1.msra.mxu0 %v4718
        %4727 = vmatprep.subr.mxu0 0.0
        %4728 = vmatpush1.msra.mxu0 0.0
        %4729 = vmatprep.subr.mxu0 0.0
        %4730 = vmatpush1.msra.mxu0 0.0
        %4731 = vmatprep.subr.mxu0 0.0
        %4732 = vmatpush1.msra.mxu0 0.0
        %4733 = vmatprep.subr.mxu0 0.0
        %4734 = vmatpush1.msra.mxu0 0.0
        %4735 = vmatprep.subr.mxu0 0.0
        %4736 = vmatpush1.msra.mxu0 0.0
        %4737 = vmatprep.subr.mxu0 0.0
        %4738 = vmatpush1.msra.mxu0 0.0
        %4739 = vmatprep.subr.mxu0 0.0
        %4740 = vmatpush1.msra.mxu0 0.0
        %4741 = vmatprep.subr.mxu0 0.0
        %4742 = vmatpush1.msra.mxu0 0.0
        %4743 = vmatprep.subr.mxu0 0.0
        %4744 = vmatpush1.msra.mxu0 0.0
        %4745 = vmatprep.subr.mxu0 0.0
        %4746 = vmatpush1.msra.mxu0 0.0
        %4747 = vmatprep.subr.mxu0 0.0
        %4748 = vmatpush1.msra.mxu0 0.0
        %4749 = vmatprep.subr.mxu0 0.0
        %4750 = vmatpush1.msra.mxu0 0.0
        %4751 = vmatprep.subr.mxu0 0.0
        %4752 = vmatpush1.msra.mxu0 0.0
        %4753 = vmatprep.subr.mxu0 0.0
        %4754 = vmatpush1.msra.mxu0 0.0
        %4755 = vmatprep.subr.mxu0 0.0
        %4756 = vmatpush1.msra.mxu0 0.0
        %4757 = vmatprep.subr.mxu0 0.0
        %4758 = vmatpush1.msra.mxu0 0.0
        %4759 = vmatprep.subr.mxu0 0.0
        %4760 = vmatpush1.msra.mxu0 0.0
        %4761 = vmatprep.subr.mxu0 0.0
        %4762 = vmatpush1.msra.mxu0 0.0
        %4763 = vmatprep.subr.mxu0 0.0
        %4764 = vmatpush1.msra.mxu0 0.0
        %4765 = vmatprep.subr.mxu0 0.0
        %4766 = vmatpush1.msra.mxu0 0.0
        %4767 = vmatprep.subr.mxu0 0.0
        %4768 = vmatpush1.msra.mxu0 0.0
        %4769 = vmatprep.subr.mxu0 0.0
        %4770 = vmatpush1.msra.mxu0 0.0
        %4771 = vmatprep.subr.mxu0 0.0
        %4772 = vmatpush1.msra.mxu0 0.0
        %4773 = vmatprep.subr.mxu0 0.0
        %4774 = vmatpush1.msra.mxu0 0.0
        %4775 = vmatprep.subr.mxu0 0.0
        %4776 = vmatpush1.msra.mxu0 0.0
        %4777 = vmatprep.subr.mxu0 0.0
        %4778 = vmatpush1.msra.mxu0 0.0
        %4779 = vmatprep.subr.mxu0 0.0
        %4780 = vmatpush1.msra.mxu0 0.0
        %4781 = vmatprep.subr.mxu0 0.0
        %4782 = vmatpush1.msra.mxu0 0.0
        %4783 = vmatprep.mubr.f32.mxu0 0.0
        %4784 = vmatmul.mubr.f32.gmra.mrb[0].mxu0 %v3365
        %v4785 = vpop.f32.mrb[0].mxu0
        %v4786 = vadd.f32 0.0, %v4785
        %v4787 = vpop.f32.mrb[0].mxu0
        %4788 = vmatprep.mubr.f32.mxu0 0.0
        %4789 = vmatmul.mubr.f32.gmra.mrb[0].mxu0 %v3368
        %v4790 = vpop.f32.mrb[0].mxu0
        %v4791 = vadd.f32 0.0, %v4790
        %v4792 = vpop.f32.mrb[0].mxu0
        %4793 = vmatprep.mubr.f32.mxu0 0.0
        %4794 = vmatmul.mubr.f32.gmra.mrb[0].mxu0 %v3371
        %v4795 = vpop.f32.mrb[0].mxu0
        %v4796 = vadd.f32 0.0, %v4795
        %v4797 = vpop.f32.mrb[0].mxu0
        %4798 = vmatprep.mubr.f32.mxu0 0.0
        %4799 = vmatmul.mubr.f32.gmra.mrb[0].mxu0 %v3374
        %v4800 = vpop.f32.mrb[0].mxu0
        %v4801 = vadd.f32 0.0, %v4800
        %v4802 = vpop.f32.mrb[0].mxu0
        %4803 = vmatprep.mubr.f32.mxu0 0.0
        %4804 = vmatmul.mubr.f32.gmra.mrb[0].mxu0 %v3377
        %v4805 = vpop.f32.mrb[0].mxu0
        %v4806 = vadd.f32 0.0, %v4805
        %v4807 = vpop.f32.mrb[0].mxu0
        %4808 = vmatprep.mubr.f32.mxu0 0.0
        %4809 = vmatmul.mubr.f32.gmra.mrb[0].mxu0 %v3380
        %v4810 = vpop.f32.mrb[0].mxu0
        %v4811 = vadd.f32 0.0, %v4810
        %v4812 = vpop.f32.mrb[0].mxu0
        %4813 = vmatprep.mubr.f32.mxu0 0.0
        %4814 = vmatmul.mubr.f32.gmra.mrb[0].mxu0 %v3383
        %v4815 = vpop.f32.mrb[0].mxu0
        %v4816 = vadd.f32 0.0, %v4815
        %v4817 = vpop.f32.mrb[0].mxu0
        %4818 = vmatprep.mubr.f32.mxu0 0.0
        %4819 = vmatmul.mubr.f32.gmra.mrb[0].mxu0 %v3386
        %v4820 = vpop.f32.mrb[0].mxu0
        %v4821 = vadd.f32 0.0, %v4820
        %v4822 = vpop.f32.mrb[0].mxu0
        %4823 = vmatprep.mubr.f32.mxu0 0.0
        %4824 = vmatmul.mubr.f32.gmra.mrb[0].mxu0 %v3389
        %v4825 = vpop.f32.mrb[0].mxu0
        %v4826 = vadd.f32 0.0, %v4825
        %v4827 = vpop.f32.mrb[0].mxu0
        %4828 = vmatprep.mubr.f32.mxu0 0.0
        %4829 = vmatmul.mubr.f32.gmra.mrb[0].mxu0 %v3392
        %v4830 = vpop.f32.mrb[0].mxu0
        %v4831 = vadd.f32 0.0, %v4830
        %v4832 = vpop.f32.mrb[0].mxu0
        %4833 = vmatprep.mubr.f32.mxu0 0.0
        %4834 = vmatmul.mubr.f32.gmra.mrb[0].mxu0 %v3395
        %v4835 = vpop.f32.mrb[0].mxu0
        %v4836 = vadd.f32 0.0, %v4835
        %v4837 = vpop.f32.mrb[0].mxu0
        %4838 = vmatprep.mubr.f32.mxu0 0.0
        %4839 = vmatmul.mubr.f32.gmra.mrb[0].mxu0 %v3398
        %v4840 = vpop.f32.mrb[0].mxu0
        %v4841 = vadd.f32 0.0, %v4840
        %v4842 = vpop.f32.mrb[0].mxu0
        %4843 = vmatprep.mubr.f32.mxu0 0.0
        %4844 = vmatmul.mubr.f32.gmra.mrb[0].mxu0 %v3401
        %v4845 = vpop.f32.mrb[0].mxu0
        %v4846 = vadd.f32 0.0, %v4845
        %v4847 = vpop.f32.mrb[0].mxu0
        %4848 = vmatprep.mubr.f32.mxu0 0.0
        %4849 = vmatmul.mubr.f32.gmra.mrb[0].mxu0 %v3404
        %v4850 = vpop.f32.mrb[0].mxu0
        %v4851 = vadd.f32 0.0, %v4850
        %v4852 = vpop.f32.mrb[0].mxu0
        %4853 = vmatprep.mubr.f32.mxu0 0.0
        %4854 = vmatmul.mubr.f32.gmra.mrb[0].mxu0 %v3407
        %v4855 = vpop.f32.mrb[0].mxu0
        %v4856 = vadd.f32 0.0, %v4855
        %v4857 = vpop.f32.mrb[0].mxu0
        %4858 = vmatprep.mubr.f32.mxu0 0.0
        %4859 = vmatmul.mubr.f32.gmra.mrb[0].mxu0 %v3410
        %v4860 = vpop.f32.mrb[0].mxu0
        %v4861 = vadd.f32 0.0, %v4860
        %v4862 = vpop.f32.mrb[0].mxu0
        %4863 = vmatprep.mubr.f32.mxu0 0.0
        %4864 = vmatmul.mubr.f32.gmra.mrb[0].mxu0 %v3413
        %v4865 = vpop.f32.mrb[0].mxu0
        %v4866 = vadd.f32 0.0, %v4865
        %v4867 = vpop.f32.mrb[0].mxu0
        %4868 = vmatprep.mubr.f32.mxu0 0.0
        %4869 = vmatmul.mubr.f32.gmra.mrb[0].mxu0 %v3416
        %v4870 = vpop.f32.mrb[0].mxu0
        %v4871 = vadd.f32 0.0, %v4870
        %v4872 = vpop.f32.mrb[0].mxu0
        %4873 = vmatprep.mubr.f32.mxu0 0.0
        %4874 = vmatmul.mubr.f32.gmra.mrb[0].mxu0 %v3419
        %v4875 = vpop.f32.mrb[0].mxu0
        %v4876 = vadd.f32 0.0, %v4875
        %v4877 = vpop.f32.mrb[0].mxu0
        %4878 = vmatprep.mubr.f32.mxu0 0.0
        %4879 = vmatmul.mubr.f32.gmra.mrb[0].mxu0 %v3422
        %v4880 = vpop.f32.mrb[0].mxu0
        %v4881 = vadd.f32 0.0, %v4880
        %v4882 = vpop.f32.mrb[0].mxu0
        %4883 = vmatprep.mubr.f32.mxu0 0.0
        %4884 = vmatmul.mubr.f32.gmra.mrb[0].mxu0 %v3425
        %v4885 = vpop.f32.mrb[0].mxu0
        %v4886 = vadd.f32 0.0, %v4885
        %v4887 = vpop.f32.mrb[0].mxu0
        %4888 = vmatprep.mubr.f32.mxu0 0.0
        %4889 = vmatmul.mubr.f32.gmra.mrb[0].mxu0 %v3428
        %v4890 = vpop.f32.mrb[0].mxu0
        %v4891 = vadd.f32 0.0, %v4890
        %v4892 = vpop.f32.mrb[0].mxu0
        %4893 = vmatprep.mubr.f32.mxu0 0.0
        %4894 = vmatmul.mubr.f32.gmra.mrb[0].mxu0 %v3431
        %v4895 = vpop.f32.mrb[0].mxu0
        %v4896 = vadd.f32 0.0, %v4895
        %v4897 = vpop.f32.mrb[0].mxu0
        %4898 = vmatprep.mubr.f32.mxu0 0.0
        %4899 = vmatmul.mubr.f32.gmra.mrb[0].mxu0 %v3434
        %v4900 = vpop.f32.mrb[0].mxu0
        %v4901 = vadd.f32 0.0, %v4900
        %v4902 = vpop.f32.mrb[0].mxu0
        %4903 = vmatprep.mubr.f32.mxu0 0.0
        %4904 = vmatmul.mubr.f32.gmra.mrb[0].mxu0 %v3437
        %v4905 = vpop.f32.mrb[0].mxu0
        %v4906 = vadd.f32 0.0, %v4905
        %v4907 = vpop.f32.mrb[0].mxu0
        %4908 = vmatprep.mubr.f32.mxu0 0.0
        %4909 = vmatmul.mubr.f32.gmra.mrb[0].mxu0 %v3440
        %v4910 = vpop.f32.mrb[0].mxu0
        %v4911 = vadd.f32 0.0, %v4910
        %v4912 = vpop.f32.mrb[0].mxu0
        %4913 = vmatprep.mubr.f32.mxu0 0.0
        %4914 = vmatmul.mubr.f32.gmra.mrb[0].mxu0 %v3443
        %v4915 = vpop.f32.mrb[0].mxu0
        %v4916 = vadd.f32 0.0, %v4915
        %v4917 = vpop.f32.mrb[0].mxu0
        %4918 = vmatprep.mubr.f32.mxu0 0.0
        %4919 = vmatmul.mubr.f32.gmra.mrb[0].mxu0 %v3446
        %v4920 = vpop.f32.mrb[0].mxu0
        %v4921 = vadd.f32 0.0, %v4920
        %v4922 = vpop.f32.mrb[0].mxu0
        %4923 = vmatprep.mubr.f32.mxu0 0.0
        %4924 = vmatmul.mubr.f32.gmra.mrb[0].mxu0 %v3449
        %v4925 = vpop.f32.mrb[0].mxu0
        %v4926 = vadd.f32 0.0, %v4925
        %v4927 = vpop.f32.mrb[0].mxu0
        %4928 = vmatprep.mubr.f32.mxu0 0.0
        %4929 = vmatmul.mubr.f32.gmra.mrb[0].mxu0 %v3452
        %v4930 = vpop.f32.mrb[0].mxu0
        %v4931 = vadd.f32 0.0, %v4930
        %v4932 = vpop.f32.mrb[0].mxu0
        %4933 = vmatprep.mubr.f32.mxu0 0.0
        %4934 = vmatmul.mubr.f32.gmra.mrb[0].mxu0 %v3455
        %v4935 = vpop.f32.mrb[0].mxu0
        %v4936 = vadd.f32 0.0, %v4935
        %v4937 = vpop.f32.mrb[0].mxu0
        %4938 = vmatprep.mubr.f32.mxu0 0.0
        %4939 = vmatmul.mubr.f32.gmra.mrb[0].mxu0 %v3458
        %v4940 = vpop.f32.mrb[0].mxu0
        %v4941 = vadd.f32 0.0, %v4940
        %v4942 = vpop.f32.mrb[0].mxu0
        %4943 = vmatprep.mubr.f32.mxu0 0.0
        %4944 = vmatmul.mubr.f32.gmra.mrb[0].mxu0 %v3461
        %v4945 = vpop.f32.mrb[0].mxu0
        %v4946 = vadd.f32 0.0, %v4945
        %v4947 = vpop.f32.mrb[0].mxu0
        %4948 = vmatprep.mubr.f32.mxu0 0.0
        %4949 = vmatmul.mubr.f32.gmra.mrb[0].mxu0 %v3464
        %v4950 = vpop.f32.mrb[0].mxu0
        %v4951 = vadd.f32 0.0, %v4950
        %v4952 = vpop.f32.mrb[0].mxu0
        %4953 = vmatprep.mubr.f32.mxu0 0.0
        %4954 = vmatmul.mubr.f32.gmra.mrb[0].mxu0 %v3467
        %v4955 = vpop.f32.mrb[0].mxu0
        %v4956 = vadd.f32 0.0, %v4955
        %v4957 = vpop.f32.mrb[0].mxu0
        %4958 = vmatprep.mubr.f32.mxu0 0.0
        %4959 = vmatmul.mubr.f32.gmra.mrb[0].mxu0 %v3470
        %v4960 = vpop.f32.mrb[0].mxu0
        %v4961 = vadd.f32 0.0, %v4960
        %v4962 = vpop.f32.mrb[0].mxu0
        %4963 = vmatprep.mubr.f32.mxu0 0.0
        %4964 = vmatmul.mubr.f32.gmra.mrb[0].mxu0 %v3473
        %v4965 = vpop.f32.mrb[0].mxu0
        %v4966 = vadd.f32 0.0, %v4965
        %v4967 = vpop.f32.mrb[0].mxu0
        %4968 = vmatprep.mubr.f32.mxu0 0.0
        %4969 = vmatmul.mubr.f32.gmra.mrb[0].mxu0 %v3476
        %v4970 = vpop.f32.mrb[0].mxu0
        %v4971 = vadd.f32 0.0, %v4970
        %v4972 = vpop.f32.mrb[0].mxu0
        %4973 = vmatprep.mubr.f32.mxu0 0.0
        %4974 = vmatmul.mubr.f32.gmra.mrb[0].mxu0 %v3479
        %v4975 = vpop.f32.mrb[0].mxu0
        %v4976 = vadd.f32 0.0, %v4975
        %v4977 = vpop.f32.mrb[0].mxu0
        %4978 = vmatprep.mubr.f32.mxu0 0.0
        %4979 = vmatmul.mubr.f32.gmra.mrb[0].mxu0 %v3482
        %v4980 = vpop.f32.mrb[0].mxu0
        %v4981 = vadd.f32 0.0, %v4980
        %v4982 = vpop.f32.mrb[0].mxu0
        %4983 = vmatprep.mubr.f32.mxu0 0.0
        %4984 = vmatmul.mubr.f32.gmra.mrb[0].mxu0 %v3485
        %v4985 = vpop.f32.mrb[0].mxu0
        %v4986 = vadd.f32 0.0, %v4985
        %v4987 = vpop.f32.mrb[0].mxu0
        %4988 = vmatprep.mubr.f32.mxu0 0.0
        %4989 = vmatmul.mubr.f32.gmra.mrb[0].mxu0 %v3488
        %v4990 = vpop.f32.mrb[0].mxu0
        %v4991 = vadd.f32 0.0, %v4990
        %v4992 = vpop.f32.mrb[0].mxu0
        %4993 = vmatprep.mubr.f32.mxu0 0.0
        %4994 = vmatmul.mubr.f32.gmra.mrb[0].mxu0 %v3491
        %v4995 = vpop.f32.mrb[0].mxu0
        %v4996 = vadd.f32 0.0, %v4995
        %v4997 = vpop.f32.mrb[0].mxu0
        %4998 = vmatprep.mubr.f32.mxu0 0.0
        %4999 = vmatmul.mubr.f32.gmra.mrb[0].mxu0 %v3494
        %v5000 = vpop.f32.mrb[0].mxu0
        %v5001 = vadd.f32 0.0, %v5000
        %v5002 = vpop.f32.mrb[0].mxu0
        %5003 = vmatprep.mubr.f32.mxu0 0.0
        %5004 = vmatmul.mubr.f32.gmra.mrb[0].mxu0 %v3497
        %v5005 = vpop.f32.mrb[0].mxu0
        %v5006 = vadd.f32 0.0, %v5005
        %v5007 = vpop.f32.mrb[0].mxu0
        %5008 = vmatprep.mubr.f32.mxu0 0.0
        %5009 = vmatmul.mubr.f32.gmra.mrb[0].mxu0 %v3500
        %v5010 = vpop.f32.mrb[0].mxu0
        %v5011 = vadd.f32 0.0, %v5010
        %v5012 = vpop.f32.mrb[0].mxu0
        %5013 = vmatprep.mubr.f32.mxu0 0.0
        %5014 = vmatmul.mubr.f32.gmra.mrb[0].mxu0 %v3503
        %v5015 = vpop.f32.mrb[0].mxu0
        %v5016 = vadd.f32 0.0, %v5015
        %v5017 = vpop.f32.mrb[0].mxu0
        %5018 = vmatprep.mubr.f32.mxu0 0.0
        %5019 = vmatmul.mubr.f32.gmra.mrb[0].mxu0 %v3506
        %v5020 = vpop.f32.mrb[0].mxu0
        %v5021 = vadd.f32 0.0, %v5020
        %v5022 = vpop.f32.mrb[0].mxu0
        %5023 = vmatprep.mubr.f32.mxu0 0.0
        %5024 = vmatmul.mubr.f32.gmra.mrb[0].mxu0 %v3509
        %v5025 = vpop.f32.mrb[0].mxu0
        %v5026 = vadd.f32 0.0, %v5025
        %v5027 = vpop.f32.mrb[0].mxu0
        %5028 = vmatprep.mubr.f32.mxu0 0.0
        %5029 = vmatmul.mubr.f32.gmra.mrb[0].mxu0 %v3512
        %v5030 = vpop.f32.mrb[0].mxu0
        %v5031 = vadd.f32 0.0, %v5030
        %v5032 = vpop.f32.mrb[0].mxu0
        %5033 = vmatprep.mubr.f32.mxu0 0.0
        %5034 = vmatmul.mubr.f32.gmra.mrb[0].mxu0 %v3515
        %v5035 = vpop.f32.mrb[0].mxu0
        %v5036 = vadd.f32 0.0, %v5035
        %v5037 = vpop.f32.mrb[0].mxu0
        %5038 = vmatprep.mubr.f32.mxu0 0.0
        %5039 = vmatmul.mubr.f32.gmra.mrb[0].mxu0 %v3518
        %v5040 = vpop.f32.mrb[0].mxu0
        %v5041 = vadd.f32 0.0, %v5040
        %v5042 = vpop.f32.mrb[0].mxu0
        %5043 = vmatprep.mubr.f32.mxu0 0.0
        %5044 = vmatmul.mubr.f32.gmra.mrb[0].mxu0 %v3521
        %v5045 = vpop.f32.mrb[0].mxu0
        %v5046 = vadd.f32 0.0, %v5045
        %v5047 = vpop.f32.mrb[0].mxu0
        %5048 = vmatprep.mubr.f32.mxu0 0.0
        %5049 = vmatmul.mubr.f32.gmra.mrb[0].mxu0 %v3524
        %v5050 = vpop.f32.mrb[0].mxu0
        %v5051 = vadd.f32 0.0, %v5050
        %v5052 = vpop.f32.mrb[0].mxu0
        %5053 = vmatprep.mubr.f32.mxu0 0.0
        %5054 = vmatmul.mubr.f32.gmra.mrb[0].mxu0 %v3527
        %v5055 = vpop.f32.mrb[0].mxu0
        %v5056 = vadd.f32 0.0, %v5055
        %v5057 = vpop.f32.mrb[0].mxu0
        %5058 = vmatprep.mubr.f32.mxu0 0.0
        %5059 = vmatmul.mubr.f32.gmra.mrb[0].mxu0 %v3530
        %v5060 = vpop.f32.mrb[0].mxu0
        %v5061 = vadd.f32 0.0, %v5060
        %v5062 = vpop.f32.mrb[0].mxu0
        %5063 = vmatprep.mubr.f32.mxu0 0.0
        %5064 = vmatmul.mubr.f32.gmra.mrb[0].mxu0 %v3533
        %v5065 = vpop.f32.mrb[0].mxu0
        %v5066 = vadd.f32 0.0, %v5065
        %v5067 = vpop.f32.mrb[0].mxu0
        %5068 = vmatprep.mubr.f32.mxu0 0.0
        %5069 = vmatmul.mubr.f32.gmra.mrb[0].mxu0 %v3536
        %v5070 = vpop.f32.mrb[0].mxu0
        %v5071 = vadd.f32 0.0, %v5070
        %v5072 = vpop.f32.mrb[0].mxu0
        %5073 = vmatprep.mubr.f32.mxu0 0.0
        %5074 = vmatmul.mubr.f32.gmra.mrb[0].mxu0 %v3539
        %v5075 = vpop.f32.mrb[0].mxu0
        %v5076 = vadd.f32 0.0, %v5075
        %v5077 = vpop.f32.mrb[0].mxu0
        %5078 = vmatprep.mubr.f32.mxu0 0.0
        %5079 = vmatmul.mubr.f32.gmra.mrb[0].mxu0 %v3542
        %v5080 = vpop.f32.mrb[0].mxu0
        %v5081 = vadd.f32 0.0, %v5080
        %v5082 = vpop.f32.mrb[0].mxu0
        %5083 = vmatprep.mubr.f32.mxu0 0.0
        %5084 = vmatmul.mubr.f32.gmra.mrb[0].mxu0 %v3545
        %v5085 = vpop.f32.mrb[0].mxu0
        %v5086 = vadd.f32 0.0, %v5085
        %v5087 = vpop.f32.mrb[0].mxu0
        %5088 = vmatprep.mubr.f32.mxu0 0.0
        %5089 = vmatmul.mubr.f32.gmra.mrb[0].mxu0 %v3548
        %v5090 = vpop.f32.mrb[0].mxu0
        %v5091 = vadd.f32 0.0, %v5090
        %v5092 = vpop.f32.mrb[0].mxu0
        %5093 = vmatprep.mubr.f32.mxu0 0.0
        %5094 = vmatmul.mubr.f32.gmra.mrb[0].mxu0 %v3551
        %v5095 = vpop.f32.mrb[0].mxu0
        %v5096 = vadd.f32 0.0, %v5095
        %v5097 = vpop.f32.mrb[0].mxu0
        %5098 = vmatprep.mubr.f32.mxu0 0.0
        %5099 = vmatmul.mubr.f32.gmra.mrb[0].mxu0 %v3554
        %v5100 = vpop.f32.mrb[0].mxu0
        %v5101 = vadd.f32 0.0, %v5100
        %v5102 = vpop.f32.mrb[0].mxu0
        %5103 = vdwg.mxu0
        %v5104 = vld [vmem:[%s3] sm:$0xff]
        %v5105 = vld [vmem:[%s3 + $0x8] sm:$0xff]
        %v5106 = vld [vmem:[%s3 + $0x10] sm:$0xff]
        %v5107 = vld [vmem:[%s3 + $0x18] sm:$0xff]
        %v5108 = vld [vmem:[%s3 + $0x20] sm:$0xff]
        %v5109 = vld [vmem:[%s3 + $0x28] sm:$0xff]
        %v5110 = vld [vmem:[%s3 + $0x30] sm:$0xff]
        %v5111 = vld [vmem:[%s3 + $0x38] sm:$0xff]
        %v5112 = vld [vmem:[%s3 + $0x40] sm:$0xff]
        %v5113 = vld [vmem:[%s3 + $0x48] sm:$0xff]
        %v5114 = vld [vmem:[%s3 + $0x50] sm:$0xff]
        %v5115 = vld [vmem:[%s3 + $0x58] sm:$0xff]
        %v5116 = vld [vmem:[%s3 + $0x60] sm:$0xff]
        %v5117 = vld [vmem:[%s3 + $0x68] sm:$0xff]
        %v5118 = vld [vmem:[%s3 + $0x70] sm:$0xff]
        %v5119 = vld [vmem:[%s3 + $0x78] sm:$0xff]
        %v5120 = vld [vmem:[%s3 + $0x80] sm:$0xff]
        %v5121 = vld [vmem:[%s3 + $0x88] sm:$0xff]
        %v5122 = vld [vmem:[%s3 + $0x90] sm:$0xff]
        %v5123 = vld [vmem:[%s3 + $0x98] sm:$0xff]
        %v5124 = vld [vmem:[%s3 + $0xa0] sm:$0xff]
        %v5125 = vld [vmem:[%s3 + $0xa8] sm:$0xff]
        %v5126 = vld [vmem:[%s3 + $0xb0] sm:$0xff]
        %v5127 = vld [vmem:[%s3 + $0xb8] sm:$0xff]
        %v5128 = vld [vmem:[%s3 + $0xc0] sm:$0xff]
        %v5129 = vld [vmem:[%s3 + $0xc8] sm:$0xff]
        %v5130 = vld [vmem:[%s3 + $0xd0] sm:$0xff]
        %v5131 = vld [vmem:[%s3 + $0xd8] sm:$0xff]
        %v5132 = vld [vmem:[%s3 + $0xe0] sm:$0xff]
        %v5133 = vld [vmem:[%s3 + $0xe8] sm:$0xff]
        %v5134 = vld [vmem:[%s3 + $0xf0] sm:$0xff]
        %v5135 = vld [vmem:[%s3 + $0xf8] sm:$0xff]
        %v5136 = vld [vmem:[%s3 + $0x100] sm:$0xff]
        %v5137 = vld [vmem:[%s3 + $0x108] sm:$0xff]
        %v5138 = vld [vmem:[%s3 + $0x110] sm:$0xff]
        %v5139 = vld [vmem:[%s3 + $0x118] sm:$0xff]
        %v5140 = vld [vmem:[%s3 + $0x120] sm:$0xff]
        %v5141 = vld [vmem:[%s3 + $0x128] sm:$0xff]
        %v5142 = vld [vmem:[%s3 + $0x130] sm:$0xff]
        %v5143 = vld [vmem:[%s3 + $0x138] sm:$0xff]
        %v5144 = vld [vmem:[%s3 + $0x140] sm:$0xff]
        %v5145 = vld [vmem:[%s3 + $0x148] sm:$0xff]
        %v5146 = vld [vmem:[%s3 + $0x150] sm:$0xff]
        %v5147 = vld [vmem:[%s3 + $0x158] sm:$0xff]
        %v5148 = vld [vmem:[%s3 + $0x160] sm:$0xff]
        %v5149 = vld [vmem:[%s3 + $0x168] sm:$0xff]
        %v5150 = vld [vmem:[%s3 + $0x170] sm:$0xff]
        %v5151 = vld [vmem:[%s3 + $0x178] sm:$0xff]
        %v5152 = vld [vmem:[%s3 + $0x180] sm:$0xff]
        %v5153 = vld [vmem:[%s3 + $0x188] sm:$0xff]
        %v5154 = vld [vmem:[%s3 + $0x190] sm:$0xff]
        %v5155 = vld [vmem:[%s3 + $0x198] sm:$0xff]
        %v5156 = vld [vmem:[%s3 + $0x1a0] sm:$0xff]
        %v5157 = vld [vmem:[%s3 + $0x1a8] sm:$0xff]
        %v5158 = vld [vmem:[%s3 + $0x1b0] sm:$0xff]
        %v5159 = vld [vmem:[%s3 + $0x1b8] sm:$0xff]
        %v5160 = vld [vmem:[%s3 + $0x1c0] sm:$0xff]
        %v5161 = vld [vmem:[%s3 + $0x1c8] sm:$0xff]
        %v5162 = vld [vmem:[%s3 + $0x1d0] sm:$0xff]
        %v5163 = vld [vmem:[%s3 + $0x1d8] sm:$0xff]
        %v5164 = vld [vmem:[%s3 + $0x1e0] sm:$0xff]
        %v5165 = vld [vmem:[%s3 + $0x1e8] sm:$0xff]
        %v5166 = vld [vmem:[%s3 + $0x1f0] sm:$0xff]
        %v5167 = vld [vmem:[%s3 + $0x1f8] sm:$0xff]
        %v5168 = vmul.f32 %v4786, %v5104
        %v5169 = vmul.f32 %v4791, %v5105
        %v5170 = vmul.f32 %v4796, %v5106
        %v5171 = vmul.f32 %v4801, %v5107
        %v5172 = vmul.f32 %v4806, %v5108
        %v5173 = vmul.f32 %v4811, %v5109
        %v5174 = vmul.f32 %v4816, %v5110
        %v5175 = vmul.f32 %v4821, %v5111
        %v5176 = vmul.f32 %v4826, %v5112
        %v5177 = vmul.f32 %v4831, %v5113
        %v5178 = vmul.f32 %v4836, %v5114
        %v5179 = vmul.f32 %v4841, %v5115
        %v5180 = vmul.f32 %v4846, %v5116
        %v5181 = vmul.f32 %v4851, %v5117
        %v5182 = vmul.f32 %v4856, %v5118
        %v5183 = vmul.f32 %v4861, %v5119
        %v5184 = vmul.f32 %v4866, %v5120
        %v5185 = vmul.f32 %v4871, %v5121
        %v5186 = vmul.f32 %v4876, %v5122
        %v5187 = vmul.f32 %v4881, %v5123
        %v5188 = vmul.f32 %v4886, %v5124
        %v5189 = vmul.f32 %v4891, %v5125
        %v5190 = vmul.f32 %v4896, %v5126
        %v5191 = vmul.f32 %v4901, %v5127
        %v5192 = vmul.f32 %v4906, %v5128
        %v5193 = vmul.f32 %v4911, %v5129
        %v5194 = vmul.f32 %v4916, %v5130
        %v5195 = vmul.f32 %v4921, %v5131
        %v5196 = vmul.f32 %v4926, %v5132
        %v5197 = vmul.f32 %v4931, %v5133
        %v5198 = vmul.f32 %v4936, %v5134
        %v5199 = vmul.f32 %v4941, %v5135
        %v5200 = vmul.f32 %v4946, %v5136
        %v5201 = vmul.f32 %v4951, %v5137
        %v5202 = vmul.f32 %v4956, %v5138
        %v5203 = vmul.f32 %v4961, %v5139
        %v5204 = vmul.f32 %v4966, %v5140
        %v5205 = vmul.f32 %v4971, %v5141
        %v5206 = vmul.f32 %v4976, %v5142
        %v5207 = vmul.f32 %v4981, %v5143
        %v5208 = vmul.f32 %v4986, %v5144
        %v5209 = vmul.f32 %v4991, %v5145
        %v5210 = vmul.f32 %v4996, %v5146
        %v5211 = vmul.f32 %v5001, %v5147
        %v5212 = vmul.f32 %v5006, %v5148
        %v5213 = vmul.f32 %v5011, %v5149
        %v5214 = vmul.f32 %v5016, %v5150
        %v5215 = vmul.f32 %v5021, %v5151
        %v5216 = vmul.f32 %v5026, %v5152
        %v5217 = vmul.f32 %v5031, %v5153
        %v5218 = vmul.f32 %v5036, %v5154
        %v5219 = vmul.f32 %v5041, %v5155
        %v5220 = vmul.f32 %v5046, %v5156
        %v5221 = vmul.f32 %v5051, %v5157
        %v5222 = vmul.f32 %v5056, %v5158
        %v5223 = vmul.f32 %v5061, %v5159
        %v5224 = vmul.f32 %v5066, %v5160
        %v5225 = vmul.f32 %v5071, %v5161
        %v5226 = vmul.f32 %v5076, %v5162
        %v5227 = vmul.f32 %v5081, %v5163
        %v5228 = vmul.f32 %v5086, %v5164
        %v5229 = vmul.f32 %v5091, %v5165
        %v5230 = vmul.f32 %v5096, %v5166
        %v5231 = vmul.f32 %v5101, %v5167
        %5233 = vset.pattern.permute.xlu0 0
        %5234 = vperm.xlu0 %5233, %v5168
        %v5235 = vpop.permute.xlu0 %5234
        %5238 = vset.pattern.permute.xlu0 0
        %5239 = vperm.xlu0 %5238, %v5169
        %v5240 = vpop.permute.xlu0 %5239
        %5243 = vset.pattern.permute.xlu0 0
        %5244 = vperm.xlu0 %5243, %v5170
        %v5245 = vpop.permute.xlu0 %5244
        %5248 = vset.pattern.permute.xlu0 0
        %5249 = vperm.xlu0 %5248, %v5171
        %v5250 = vpop.permute.xlu0 %5249
        %5253 = vset.pattern.permute.xlu0 0
        %5254 = vperm.xlu0 %5253, %v5172
        %v5255 = vpop.permute.xlu0 %5254
        %5258 = vset.pattern.permute.xlu0 0
        %5259 = vperm.xlu0 %5258, %v5173
        %v5260 = vpop.permute.xlu0 %5259
        %5263 = vset.pattern.permute.xlu0 0
        %5264 = vperm.xlu0 %5263, %v5174
        %v5265 = vpop.permute.xlu0 %5264
        %5268 = vset.pattern.permute.xlu0 0
        %5269 = vperm.xlu0 %5268, %v5175
        %v5270 = vpop.permute.xlu0 %5269
        %5273 = vset.pattern.permute.xlu0 0
        %5274 = vperm.xlu0 %5273, %v5176
        %v5275 = vpop.permute.xlu0 %5274
        %5278 = vset.pattern.permute.xlu0 0
        %5279 = vperm.xlu0 %5278, %v5177
        %v5280 = vpop.permute.xlu0 %5279
        %5283 = vset.pattern.permute.xlu0 0
        %5284 = vperm.xlu0 %5283, %v5178
        %v5285 = vpop.permute.xlu0 %5284
        %5288 = vset.pattern.permute.xlu0 0
        %5289 = vperm.xlu0 %5288, %v5179
        %v5290 = vpop.permute.xlu0 %5289
        %5293 = vset.pattern.permute.xlu0 0
        %5294 = vperm.xlu0 %5293, %v5180
        %v5295 = vpop.permute.xlu0 %5294
        %5298 = vset.pattern.permute.xlu0 0
        %5299 = vperm.xlu0 %5298, %v5181
        %v5300 = vpop.permute.xlu0 %5299
        %5303 = vset.pattern.permute.xlu0 0
        %5304 = vperm.xlu0 %5303, %v5182
        %v5305 = vpop.permute.xlu0 %5304
        %5308 = vset.pattern.permute.xlu0 0
        %5309 = vperm.xlu0 %5308, %v5183
        %v5310 = vpop.permute.xlu0 %5309
        %5313 = vset.pattern.permute.xlu0 0
        %5314 = vperm.xlu0 %5313, %v5184
        %v5315 = vpop.permute.xlu0 %5314
        %5318 = vset.pattern.permute.xlu0 0
        %5319 = vperm.xlu0 %5318, %v5185
        %v5320 = vpop.permute.xlu0 %5319
        %5323 = vset.pattern.permute.xlu0 0
        %5324 = vperm.xlu0 %5323, %v5186
        %v5325 = vpop.permute.xlu0 %5324
        %5328 = vset.pattern.permute.xlu0 0
        %5329 = vperm.xlu0 %5328, %v5187
        %v5330 = vpop.permute.xlu0 %5329
        %5333 = vset.pattern.permute.xlu0 0
        %5334 = vperm.xlu0 %5333, %v5188
        %v5335 = vpop.permute.xlu0 %5334
        %5338 = vset.pattern.permute.xlu0 0
        %5339 = vperm.xlu0 %5338, %v5189
        %v5340 = vpop.permute.xlu0 %5339
        %5343 = vset.pattern.permute.xlu0 0
        %5344 = vperm.xlu0 %5343, %v5190
        %v5345 = vpop.permute.xlu0 %5344
        %5348 = vset.pattern.permute.xlu0 0
        %5349 = vperm.xlu0 %5348, %v5191
        %v5350 = vpop.permute.xlu0 %5349
        %5353 = vset.pattern.permute.xlu0 0
        %5354 = vperm.xlu0 %5353, %v5192
        %v5355 = vpop.permute.xlu0 %5354
        %5358 = vset.pattern.permute.xlu0 0
        %5359 = vperm.xlu0 %5358, %v5193
        %v5360 = vpop.permute.xlu0 %5359
        %5363 = vset.pattern.permute.xlu0 0
        %5364 = vperm.xlu0 %5363, %v5194
        %v5365 = vpop.permute.xlu0 %5364
        %5368 = vset.pattern.permute.xlu0 0
        %5369 = vperm.xlu0 %5368, %v5195
        %v5370 = vpop.permute.xlu0 %5369
        %5373 = vset.pattern.permute.xlu0 0
        %5374 = vperm.xlu0 %5373, %v5196
        %v5375 = vpop.permute.xlu0 %5374
        %5378 = vset.pattern.permute.xlu0 0
        %5379 = vperm.xlu0 %5378, %v5197
        %v5380 = vpop.permute.xlu0 %5379
        %5383 = vset.pattern.permute.xlu0 0
        %5384 = vperm.xlu0 %5383, %v5198
        %v5385 = vpop.permute.xlu0 %5384
        %5388 = vset.pattern.permute.xlu0 0
        %5389 = vperm.xlu0 %5388, %v5199
        %v5390 = vpop.permute.xlu0 %5389
        %5393 = vset.pattern.permute.xlu0 0
        %5394 = vperm.xlu0 %5393, %v5200
        %v5395 = vpop.permute.xlu0 %5394
        %5398 = vset.pattern.permute.xlu0 0
        %5399 = vperm.xlu0 %5398, %v5201
        %v5400 = vpop.permute.xlu0 %5399
        %5403 = vset.pattern.permute.xlu0 0
        %5404 = vperm.xlu0 %5403, %v5202
        %v5405 = vpop.permute.xlu0 %5404
        %5408 = vset.pattern.permute.xlu0 0
        %5409 = vperm.xlu0 %5408, %v5203
        %v5410 = vpop.permute.xlu0 %5409
        %5413 = vset.pattern.permute.xlu0 0
        %5414 = vperm.xlu0 %5413, %v5204
        %v5415 = vpop.permute.xlu0 %5414
        %5418 = vset.pattern.permute.xlu0 0
        %5419 = vperm.xlu0 %5418, %v5205
        %v5420 = vpop.permute.xlu0 %5419
        %5423 = vset.pattern.permute.xlu0 0
        %5424 = vperm.xlu0 %5423, %v5206
        %v5425 = vpop.permute.xlu0 %5424
        %5428 = vset.pattern.permute.xlu0 0
        %5429 = vperm.xlu0 %5428, %v5207
        %v5430 = vpop.permute.xlu0 %5429
        %5433 = vset.pattern.permute.xlu0 0
        %5434 = vperm.xlu0 %5433, %v5208
        %v5435 = vpop.permute.xlu0 %5434
        %5438 = vset.pattern.permute.xlu0 0
        %5439 = vperm.xlu0 %5438, %v5209
        %v5440 = vpop.permute.xlu0 %5439
        %5443 = vset.pattern.permute.xlu0 0
        %5444 = vperm.xlu0 %5443, %v5210
        %v5445 = vpop.permute.xlu0 %5444
        %5448 = vset.pattern.permute.xlu0 0
        %5449 = vperm.xlu0 %5448, %v5211
        %v5450 = vpop.permute.xlu0 %5449
        %5453 = vset.pattern.permute.xlu0 0
        %5454 = vperm.xlu0 %5453, %v5212
        %v5455 = vpop.permute.xlu0 %5454
        %5458 = vset.pattern.permute.xlu0 0
        %5459 = vperm.xlu0 %5458, %v5213
        %v5460 = vpop.permute.xlu0 %5459
        %5463 = vset.pattern.permute.xlu0 0
        %5464 = vperm.xlu0 %5463, %v5214
        %v5465 = vpop.permute.xlu0 %5464
        %5468 = vset.pattern.permute.xlu0 0
        %5469 = vperm.xlu0 %5468, %v5215
        %v5470 = vpop.permute.xlu0 %5469
        %5473 = vset.pattern.permute.xlu0 0
        %5474 = vperm.xlu0 %5473, %v5216
        %v5475 = vpop.permute.xlu0 %5474
        %5478 = vset.pattern.permute.xlu0 0
        %5479 = vperm.xlu0 %5478, %v5217
        %v5480 = vpop.permute.xlu0 %5479
        %5483 = vset.pattern.permute.xlu0 0
        %5484 = vperm.xlu0 %5483, %v5218
        %v5485 = vpop.permute.xlu0 %5484
        %5488 = vset.pattern.permute.xlu0 0
        %5489 = vperm.xlu0 %5488, %v5219
        %v5490 = vpop.permute.xlu0 %5489
        %5493 = vset.pattern.permute.xlu0 0
        %5494 = vperm.xlu0 %5493, %v5220
        %v5495 = vpop.permute.xlu0 %5494
        %5498 = vset.pattern.permute.xlu0 0
        %5499 = vperm.xlu0 %5498, %v5221
        %v5500 = vpop.permute.xlu0 %5499
        %5503 = vset.pattern.permute.xlu0 0
        %5504 = vperm.xlu0 %5503, %v5222
        %v5505 = vpop.permute.xlu0 %5504
        %5508 = vset.pattern.permute.xlu0 0
        %5509 = vperm.xlu0 %5508, %v5223
        %v5510 = vpop.permute.xlu0 %5509
        %5513 = vset.pattern.permute.xlu0 0
        %5514 = vperm.xlu0 %5513, %v5224
        %v5515 = vpop.permute.xlu0 %5514
        %5518 = vset.pattern.permute.xlu0 0
        %5519 = vperm.xlu0 %5518, %v5225
        %v5520 = vpop.permute.xlu0 %5519
        %5523 = vset.pattern.permute.xlu0 0
        %5524 = vperm.xlu0 %5523, %v5226
        %v5525 = vpop.permute.xlu0 %5524
        %5528 = vset.pattern.permute.xlu0 0
        %5529 = vperm.xlu0 %5528, %v5227
        %v5530 = vpop.permute.xlu0 %5529
        %5533 = vset.pattern.permute.xlu0 0
        %5534 = vperm.xlu0 %5533, %v5228
        %v5535 = vpop.permute.xlu0 %5534
        %5538 = vset.pattern.permute.xlu0 0
        %5539 = vperm.xlu0 %5538, %v5229
        %v5540 = vpop.permute.xlu0 %5539
        %5543 = vset.pattern.permute.xlu0 0
        %5544 = vperm.xlu0 %5543, %v5230
        %v5545 = vpop.permute.xlu0 %5544
        %5548 = vset.pattern.permute.xlu0 0
        %5549 = vperm.xlu0 %5548, %v5231
        %v5550 = vpop.permute.xlu0 %5549
        %v5552 = vmul.f32 %v4261, %v5235
        %v5553 = vmul.f32 %v4262, %v5235
        %v5554 = vmul.f32 %v4263, %v5240
        %v5555 = vmul.f32 %v4264, %v5240
        %v5556 = vmul.f32 %v4265, %v5245
        %v5557 = vmul.f32 %v4266, %v5245
        %v5558 = vmul.f32 %v4267, %v5250
        %v5559 = vmul.f32 %v4268, %v5250
        %v5560 = vmul.f32 %v4269, %v5255
        %v5561 = vmul.f32 %v4270, %v5255
        %v5562 = vmul.f32 %v4271, %v5260
        %v5563 = vmul.f32 %v4272, %v5260
        %v5564 = vmul.f32 %v4273, %v5265
        %v5565 = vmul.f32 %v4274, %v5265
        %v5566 = vmul.f32 %v4275, %v5270
        %v5567 = vmul.f32 %v4276, %v5270
        %v5568 = vmul.f32 %v4277, %v5275
        %v5569 = vmul.f32 %v4278, %v5275
        %v5570 = vmul.f32 %v4279, %v5280
        %v5571 = vmul.f32 %v4280, %v5280
        %v5572 = vmul.f32 %v4281, %v5285
        %v5573 = vmul.f32 %v4282, %v5285
        %v5574 = vmul.f32 %v4283, %v5290
        %v5575 = vmul.f32 %v4284, %v5290
        %v5576 = vmul.f32 %v4285, %v5295
        %v5577 = vmul.f32 %v4286, %v5295
        %v5578 = vmul.f32 %v4287, %v5300
        %v5579 = vmul.f32 %v4288, %v5300
        %v5580 = vmul.f32 %v4289, %v5305
        %v5581 = vmul.f32 %v4290, %v5305
        %v5582 = vmul.f32 %v4291, %v5310
        %v5583 = vmul.f32 %v4292, %v5310
        %v5584 = vmul.f32 %v4293, %v5315
        %v5585 = vmul.f32 %v4294, %v5315
        %v5586 = vmul.f32 %v4295, %v5320
        %v5587 = vmul.f32 %v4296, %v5320
        %v5588 = vmul.f32 %v4297, %v5325
        %v5589 = vmul.f32 %v4298, %v5325
        %v5590 = vmul.f32 %v4299, %v5330
        %v5591 = vmul.f32 %v4300, %v5330
        %v5592 = vmul.f32 %v4301, %v5335
        %v5593 = vmul.f32 %v4302, %v5335
        %v5594 = vmul.f32 %v4303, %v5340
        %v5595 = vmul.f32 %v4304, %v5340
        %v5596 = vmul.f32 %v4305, %v5345
        %v5597 = vmul.f32 %v4306, %v5345
        %v5598 = vmul.f32 %v4307, %v5350
        %v5599 = vmul.f32 %v4308, %v5350
        %v5600 = vmul.f32 %v4309, %v5355
        %v5601 = vmul.f32 %v4310, %v5355
        %v5602 = vmul.f32 %v4311, %v5360
        %v5603 = vmul.f32 %v4312, %v5360
        %v5604 = vmul.f32 %v4313, %v5365
        %v5605 = vmul.f32 %v4314, %v5365
        %v5606 = vmul.f32 %v4315, %v5370
        %v5607 = vmul.f32 %v4316, %v5370
        %v5608 = vmul.f32 %v4317, %v5375
        %v5609 = vmul.f32 %v4318, %v5375
        %v5610 = vmul.f32 %v4319, %v5380
        %v5611 = vmul.f32 %v4320, %v5380
        %v5612 = vmul.f32 %v4321, %v5385
        %v5613 = vmul.f32 %v4322, %v5385
        %v5614 = vmul.f32 %v4323, %v5390
        %v5615 = vmul.f32 %v4324, %v5390
        %v5616 = vmul.f32 %v4325, %v5395
        %v5617 = vmul.f32 %v4326, %v5395
        %v5618 = vmul.f32 %v4327, %v5400
        %v5619 = vmul.f32 %v4328, %v5400
        %v5620 = vmul.f32 %v4329, %v5405
        %v5621 = vmul.f32 %v4330, %v5405
        %v5622 = vmul.f32 %v4331, %v5410
        %v5623 = vmul.f32 %v4332, %v5410
        %v5624 = vmul.f32 %v4333, %v5415
        %v5625 = vmul.f32 %v4334, %v5415
        %v5626 = vmul.f32 %v4335, %v5420
        %v5627 = vmul.f32 %v4336, %v5420
        %v5628 = vmul.f32 %v4337, %v5425
        %v5629 = vmul.f32 %v4338, %v5425
        %v5630 = vmul.f32 %v4339, %v5430
        %v5631 = vmul.f32 %v4340, %v5430
        %v5632 = vmul.f32 %v4341, %v5435
        %v5633 = vmul.f32 %v4342, %v5435
        %v5634 = vmul.f32 %v4343, %v5440
        %v5635 = vmul.f32 %v4344, %v5440
        %v5636 = vmul.f32 %v4345, %v5445
        %v5637 = vmul.f32 %v4346, %v5445
        %v5638 = vmul.f32 %v4347, %v5450
        %v5639 = vmul.f32 %v4348, %v5450
        %v5640 = vmul.f32 %v4349, %v5455
        %v5641 = vmul.f32 %v4350, %v5455
        %v5642 = vmul.f32 %v4351, %v5460
        %v5643 = vmul.f32 %v4352, %v5460
        %v5644 = vmul.f32 %v4353, %v5465
        %v5645 = vmul.f32 %v4354, %v5465
        %v5646 = vmul.f32 %v4355, %v5470
        %v5647 = vmul.f32 %v4356, %v5470
        %v5648 = vmul.f32 %v4357, %v5475
        %v5649 = vmul.f32 %v4358, %v5475
        %v5650 = vmul.f32 %v4359, %v5480
        %v5651 = vmul.f32 %v4360, %v5480
        %v5652 = vmul.f32 %v4361, %v5485
        %v5653 = vmul.f32 %v4362, %v5485
        %v5654 = vmul.f32 %v4363, %v5490
        %v5655 = vmul.f32 %v4364, %v5490
        %v5656 = vmul.f32 %v4365, %v5495
        %v5657 = vmul.f32 %v4366, %v5495
        %v5658 = vmul.f32 %v4367, %v5500
        %v5659 = vmul.f32 %v4368, %v5500
        %v5660 = vmul.f32 %v4369, %v5505
        %v5661 = vmul.f32 %v4370, %v5505
        %v5662 = vmul.f32 %v4371, %v5510
        %v5663 = vmul.f32 %v4372, %v5510
        %v5664 = vmul.f32 %v4373, %v5515
        %v5665 = vmul.f32 %v4374, %v5515
        %v5666 = vmul.f32 %v4375, %v5520
        %v5667 = vmul.f32 %v4376, %v5520
        %v5668 = vmul.f32 %v4377, %v5525
        %v5669 = vmul.f32 %v4378, %v5525
        %v5670 = vmul.f32 %v4379, %v5530
        %v5671 = vmul.f32 %v4380, %v5530
        %v5672 = vmul.f32 %v4381, %v5535
        %v5673 = vmul.f32 %v4382, %v5535
        %v5674 = vmul.f32 %v4383, %v5540
        %v5675 = vmul.f32 %v4384, %v5540
        %v5676 = vmul.f32 %v4385, %v5545
        %v5677 = vmul.f32 %v4386, %v5545
        %v5678 = vmul.f32 %v4387, %v5550
        %v5679 = vmul.f32 %v4388, %v5550
        %v5680 = vld [vmem:[%s4] sm:$0xff]
        %v5681 = vld [vmem:[%s4 + $0x8] sm:$0xff]
        %v5682 = vld [vmem:[%s4 + $0x10] sm:$0xff]
        %v5683 = vld [vmem:[%s4 + $0x18] sm:$0xff]
        %v5684 = vld [vmem:[%s4 + $0x20] sm:$0xff]
        %v5685 = vld [vmem:[%s4 + $0x28] sm:$0xff]
        %v5686 = vld [vmem:[%s4 + $0x30] sm:$0xff]
        %v5687 = vld [vmem:[%s4 + $0x38] sm:$0xff]
        %v5688 = vld [vmem:[%s4 + $0x40] sm:$0xff]
        %v5689 = vld [vmem:[%s4 + $0x48] sm:$0xff]
        %v5690 = vld [vmem:[%s4 + $0x50] sm:$0xff]
        %v5691 = vld [vmem:[%s4 + $0x58] sm:$0xff]
        %v5692 = vld [vmem:[%s4 + $0x60] sm:$0xff]
        %v5693 = vld [vmem:[%s4 + $0x68] sm:$0xff]
        %v5694 = vld [vmem:[%s4 + $0x70] sm:$0xff]
        %v5695 = vld [vmem:[%s4 + $0x78] sm:$0xff]
        %v5696 = vld [vmem:[%s4 + $0x80] sm:$0xff]
        %v5697 = vld [vmem:[%s4 + $0x88] sm:$0xff]
        %v5698 = vld [vmem:[%s4 + $0x90] sm:$0xff]
        %v5699 = vld [vmem:[%s4 + $0x98] sm:$0xff]
        %v5700 = vld [vmem:[%s4 + $0xa0] sm:$0xff]
        %v5701 = vld [vmem:[%s4 + $0xa8] sm:$0xff]
        %v5702 = vld [vmem:[%s4 + $0xb0] sm:$0xff]
        %v5703 = vld [vmem:[%s4 + $0xb8] sm:$0xff]
        %v5704 = vld [vmem:[%s4 + $0xc0] sm:$0xff]
        %v5705 = vld [vmem:[%s4 + $0xc8] sm:$0xff]
        %v5706 = vld [vmem:[%s4 + $0xd0] sm:$0xff]
        %v5707 = vld [vmem:[%s4 + $0xd8] sm:$0xff]
        %v5708 = vld [vmem:[%s4 + $0xe0] sm:$0xff]
        %v5709 = vld [vmem:[%s4 + $0xe8] sm:$0xff]
        %v5710 = vld [vmem:[%s4 + $0xf0] sm:$0xff]
        %v5711 = vld [vmem:[%s4 + $0xf8] sm:$0xff]
        %v5712 = vld [vmem:[%s4 + $0x100] sm:$0xff]
        %v5713 = vld [vmem:[%s4 + $0x108] sm:$0xff]
        %v5714 = vld [vmem:[%s4 + $0x110] sm:$0xff]
        %v5715 = vld [vmem:[%s4 + $0x118] sm:$0xff]
        %v5716 = vld [vmem:[%s4 + $0x120] sm:$0xff]
        %v5717 = vld [vmem:[%s4 + $0x128] sm:$0xff]
        %v5718 = vld [vmem:[%s4 + $0x130] sm:$0xff]
        %v5719 = vld [vmem:[%s4 + $0x138] sm:$0xff]
        %v5720 = vld [vmem:[%s4 + $0x140] sm:$0xff]
        %v5721 = vld [vmem:[%s4 + $0x148] sm:$0xff]
        %v5722 = vld [vmem:[%s4 + $0x150] sm:$0xff]
        %v5723 = vld [vmem:[%s4 + $0x158] sm:$0xff]
        %v5724 = vld [vmem:[%s4 + $0x160] sm:$0xff]
        %v5725 = vld [vmem:[%s4 + $0x168] sm:$0xff]
        %v5726 = vld [vmem:[%s4 + $0x170] sm:$0xff]
        %v5727 = vld [vmem:[%s4 + $0x178] sm:$0xff]
        %v5728 = vld [vmem:[%s4 + $0x180] sm:$0xff]
        %v5729 = vld [vmem:[%s4 + $0x188] sm:$0xff]
        %v5730 = vld [vmem:[%s4 + $0x190] sm:$0xff]
        %v5731 = vld [vmem:[%s4 + $0x198] sm:$0xff]
        %v5732 = vld [vmem:[%s4 + $0x1a0] sm:$0xff]
        %v5733 = vld [vmem:[%s4 + $0x1a8] sm:$0xff]
        %v5734 = vld [vmem:[%s4 + $0x1b0] sm:$0xff]
        %v5735 = vld [vmem:[%s4 + $0x1b8] sm:$0xff]
        %v5736 = vld [vmem:[%s4 + $0x1c0] sm:$0xff]
        %v5737 = vld [vmem:[%s4 + $0x1c8] sm:$0xff]
        %v5738 = vld [vmem:[%s4 + $0x1d0] sm:$0xff]
        %v5739 = vld [vmem:[%s4 + $0x1d8] sm:$0xff]
        %v5740 = vld [vmem:[%s4 + $0x1e0] sm:$0xff]
        %v5741 = vld [vmem:[%s4 + $0x1e8] sm:$0xff]
        %v5742 = vld [vmem:[%s4 + $0x1f0] sm:$0xff]
        %v5743 = vld [vmem:[%s4 + $0x1f8] sm:$0xff]
        %5745 = vset.pattern.permute.xlu0 0
        %5746 = vperm.xlu0 %5745, %v5680
        %v5747 = vpop.permute.xlu0 %5746
        %5750 = vset.pattern.permute.xlu0 0
        %5751 = vperm.xlu0 %5750, %v5681
        %v5752 = vpop.permute.xlu0 %5751
        %5755 = vset.pattern.permute.xlu0 0
        %5756 = vperm.xlu0 %5755, %v5682
        %v5757 = vpop.permute.xlu0 %5756
        %5760 = vset.pattern.permute.xlu0 0
        %5761 = vperm.xlu0 %5760, %v5683
        %v5762 = vpop.permute.xlu0 %5761
        %5765 = vset.pattern.permute.xlu0 0
        %5766 = vperm.xlu0 %5765, %v5684
        %v5767 = vpop.permute.xlu0 %5766
        %5770 = vset.pattern.permute.xlu0 0
        %5771 = vperm.xlu0 %5770, %v5685
        %v5772 = vpop.permute.xlu0 %5771
        %5775 = vset.pattern.permute.xlu0 0
        %5776 = vperm.xlu0 %5775, %v5686
        %v5777 = vpop.permute.xlu0 %5776
        %5780 = vset.pattern.permute.xlu0 0
        %5781 = vperm.xlu0 %5780, %v5687
        %v5782 = vpop.permute.xlu0 %5781
        %5785 = vset.pattern.permute.xlu0 0
        %5786 = vperm.xlu0 %5785, %v5688
        %v5787 = vpop.permute.xlu0 %5786
        %5790 = vset.pattern.permute.xlu0 0
        %5791 = vperm.xlu0 %5790, %v5689
        %v5792 = vpop.permute.xlu0 %5791
        %5795 = vset.pattern.permute.xlu0 0
        %5796 = vperm.xlu0 %5795, %v5690
        %v5797 = vpop.permute.xlu0 %5796
        %5800 = vset.pattern.permute.xlu0 0
        %5801 = vperm.xlu0 %5800, %v5691
        %v5802 = vpop.permute.xlu0 %5801
        %5805 = vset.pattern.permute.xlu0 0
        %5806 = vperm.xlu0 %5805, %v5692
        %v5807 = vpop.permute.xlu0 %5806
        %5810 = vset.pattern.permute.xlu0 0
        %5811 = vperm.xlu0 %5810, %v5693
        %v5812 = vpop.permute.xlu0 %5811
        %5815 = vset.pattern.permute.xlu0 0
        %5816 = vperm.xlu0 %5815, %v5694
        %v5817 = vpop.permute.xlu0 %5816
        %5820 = vset.pattern.permute.xlu0 0
        %5821 = vperm.xlu0 %5820, %v5695
        %v5822 = vpop.permute.xlu0 %5821
        %5825 = vset.pattern.permute.xlu0 0
        %5826 = vperm.xlu0 %5825, %v5696
        %v5827 = vpop.permute.xlu0 %5826
        %5830 = vset.pattern.permute.xlu0 0
        %5831 = vperm.xlu0 %5830, %v5697
        %v5832 = vpop.permute.xlu0 %5831
        %5835 = vset.pattern.permute.xlu0 0
        %5836 = vperm.xlu0 %5835, %v5698
        %v5837 = vpop.permute.xlu0 %5836
        %5840 = vset.pattern.permute.xlu0 0
        %5841 = vperm.xlu0 %5840, %v5699
        %v5842 = vpop.permute.xlu0 %5841
        %5845 = vset.pattern.permute.xlu0 0
        %5846 = vperm.xlu0 %5845, %v5700
        %v5847 = vpop.permute.xlu0 %5846
        %5850 = vset.pattern.permute.xlu0 0
        %5851 = vperm.xlu0 %5850, %v5701
        %v5852 = vpop.permute.xlu0 %5851
        %5855 = vset.pattern.permute.xlu0 0
        %5856 = vperm.xlu0 %5855, %v5702
        %v5857 = vpop.permute.xlu0 %5856
        %5860 = vset.pattern.permute.xlu0 0
        %5861 = vperm.xlu0 %5860, %v5703
        %v5862 = vpop.permute.xlu0 %5861
        %5865 = vset.pattern.permute.xlu0 0
        %5866 = vperm.xlu0 %5865, %v5704
        %v5867 = vpop.permute.xlu0 %5866
        %5870 = vset.pattern.permute.xlu0 0
        %5871 = vperm.xlu0 %5870, %v5705
        %v5872 = vpop.permute.xlu0 %5871
        %5875 = vset.pattern.permute.xlu0 0
        %5876 = vperm.xlu0 %5875, %v5706
        %v5877 = vpop.permute.xlu0 %5876
        %5880 = vset.pattern.permute.xlu0 0
        %5881 = vperm.xlu0 %5880, %v5707
        %v5882 = vpop.permute.xlu0 %5881
        %5885 = vset.pattern.permute.xlu0 0
        %5886 = vperm.xlu0 %5885, %v5708
        %v5887 = vpop.permute.xlu0 %5886
        %5890 = vset.pattern.permute.xlu0 0
        %5891 = vperm.xlu0 %5890, %v5709
        %v5892 = vpop.permute.xlu0 %5891
        %5895 = vset.pattern.permute.xlu0 0
        %5896 = vperm.xlu0 %5895, %v5710
        %v5897 = vpop.permute.xlu0 %5896
        %5900 = vset.pattern.permute.xlu0 0
        %5901 = vperm.xlu0 %5900, %v5711
        %v5902 = vpop.permute.xlu0 %5901
        %5905 = vset.pattern.permute.xlu0 0
        %5906 = vperm.xlu0 %5905, %v5712
        %v5907 = vpop.permute.xlu0 %5906
        %5910 = vset.pattern.permute.xlu0 0
        %5911 = vperm.xlu0 %5910, %v5713
        %v5912 = vpop.permute.xlu0 %5911
        %5915 = vset.pattern.permute.xlu0 0
        %5916 = vperm.xlu0 %5915, %v5714
        %v5917 = vpop.permute.xlu0 %5916
        %5920 = vset.pattern.permute.xlu0 0
        %5921 = vperm.xlu0 %5920, %v5715
        %v5922 = vpop.permute.xlu0 %5921
        %5925 = vset.pattern.permute.xlu0 0
        %5926 = vperm.xlu0 %5925, %v5716
        %v5927 = vpop.permute.xlu0 %5926
        %5930 = vset.pattern.permute.xlu0 0
        %5931 = vperm.xlu0 %5930, %v5717
        %v5932 = vpop.permute.xlu0 %5931
        %5935 = vset.pattern.permute.xlu0 0
        %5936 = vperm.xlu0 %5935, %v5718
        %v5937 = vpop.permute.xlu0 %5936
        %5940 = vset.pattern.permute.xlu0 0
        %5941 = vperm.xlu0 %5940, %v5719
        %v5942 = vpop.permute.xlu0 %5941
        %5945 = vset.pattern.permute.xlu0 0
        %5946 = vperm.xlu0 %5945, %v5720
        %v5947 = vpop.permute.xlu0 %5946
        %5950 = vset.pattern.permute.xlu0 0
        %5951 = vperm.xlu0 %5950, %v5721
        %v5952 = vpop.permute.xlu0 %5951
        %5955 = vset.pattern.permute.xlu0 0
        %5956 = vperm.xlu0 %5955, %v5722
        %v5957 = vpop.permute.xlu0 %5956
        %5960 = vset.pattern.permute.xlu0 0
        %5961 = vperm.xlu0 %5960, %v5723
        %v5962 = vpop.permute.xlu0 %5961
        %5965 = vset.pattern.permute.xlu0 0
        %5966 = vperm.xlu0 %5965, %v5724
        %v5967 = vpop.permute.xlu0 %5966
        %5970 = vset.pattern.permute.xlu0 0
        %5971 = vperm.xlu0 %5970, %v5725
        %v5972 = vpop.permute.xlu0 %5971
        %5975 = vset.pattern.permute.xlu0 0
        %5976 = vperm.xlu0 %5975, %v5726
        %v5977 = vpop.permute.xlu0 %5976
        %5980 = vset.pattern.permute.xlu0 0
        %5981 = vperm.xlu0 %5980, %v5727
        %v5982 = vpop.permute.xlu0 %5981
        %5985 = vset.pattern.permute.xlu0 0
        %5986 = vperm.xlu0 %5985, %v5728
        %v5987 = vpop.permute.xlu0 %5986
        %5990 = vset.pattern.permute.xlu0 0
        %5991 = vperm.xlu0 %5990, %v5729
        %v5992 = vpop.permute.xlu0 %5991
        %5995 = vset.pattern.permute.xlu0 0
        %5996 = vperm.xlu0 %5995, %v5730
        %v5997 = vpop.permute.xlu0 %5996
        %6000 = vset.pattern.permute.xlu0 0
        %6001 = vperm.xlu0 %6000, %v5731
        %v6002 = vpop.permute.xlu0 %6001
        %6005 = vset.pattern.permute.xlu0 0
        %6006 = vperm.xlu0 %6005, %v5732
        %v6007 = vpop.permute.xlu0 %6006
        %6010 = vset.pattern.permute.xlu0 0
        %6011 = vperm.xlu0 %6010, %v5733
        %v6012 = vpop.permute.xlu0 %6011
        %6015 = vset.pattern.permute.xlu0 0
        %6016 = vperm.xlu0 %6015, %v5734
        %v6017 = vpop.permute.xlu0 %6016
        %6020 = vset.pattern.permute.xlu0 0
        %6021 = vperm.xlu0 %6020, %v5735
        %v6022 = vpop.permute.xlu0 %6021
        %6025 = vset.pattern.permute.xlu0 0
        %6026 = vperm.xlu0 %6025, %v5736
        %v6027 = vpop.permute.xlu0 %6026
        %6030 = vset.pattern.permute.xlu0 0
        %6031 = vperm.xlu0 %6030, %v5737
        %v6032 = vpop.permute.xlu0 %6031
        %6035 = vset.pattern.permute.xlu0 0
        %6036 = vperm.xlu0 %6035, %v5738
        %v6037 = vpop.permute.xlu0 %6036
        %6040 = vset.pattern.permute.xlu0 0
        %6041 = vperm.xlu0 %6040, %v5739
        %v6042 = vpop.permute.xlu0 %6041
        %6045 = vset.pattern.permute.xlu0 0
        %6046 = vperm.xlu0 %6045, %v5740
        %v6047 = vpop.permute.xlu0 %6046
        %6050 = vset.pattern.permute.xlu0 0
        %6051 = vperm.xlu0 %6050, %v5741
        %v6052 = vpop.permute.xlu0 %6051
        %6055 = vset.pattern.permute.xlu0 0
        %6056 = vperm.xlu0 %6055, %v5742
        %v6057 = vpop.permute.xlu0 %6056
        %6060 = vset.pattern.permute.xlu0 0
        %6061 = vperm.xlu0 %6060, %v5743
        %v6062 = vpop.permute.xlu0 %6061
        %v6064 = vadd.f32 %v5552, %v5747
        %v6065 = vadd.f32 %v5553, %v5747
        %v6066 = vadd.f32 %v5554, %v5752
        %v6067 = vadd.f32 %v5555, %v5752
        %v6068 = vadd.f32 %v5556, %v5757
        %v6069 = vadd.f32 %v5557, %v5757
        %v6070 = vadd.f32 %v5558, %v5762
        %v6071 = vadd.f32 %v5559, %v5762
        %v6072 = vadd.f32 %v5560, %v5767
        %v6073 = vadd.f32 %v5561, %v5767
        %v6074 = vadd.f32 %v5562, %v5772
        %v6075 = vadd.f32 %v5563, %v5772
        %v6076 = vadd.f32 %v5564, %v5777
        %v6077 = vadd.f32 %v5565, %v5777
        %v6078 = vadd.f32 %v5566, %v5782
        %v6079 = vadd.f32 %v5567, %v5782
        %v6080 = vadd.f32 %v5568, %v5787
        %v6081 = vadd.f32 %v5569, %v5787
        %v6082 = vadd.f32 %v5570, %v5792
        %v6083 = vadd.f32 %v5571, %v5792
        %v6084 = vadd.f32 %v5572, %v5797
        %v6085 = vadd.f32 %v5573, %v5797
        %v6086 = vadd.f32 %v5574, %v5802
        %v6087 = vadd.f32 %v5575, %v5802
        %v6088 = vadd.f32 %v5576, %v5807
        %v6089 = vadd.f32 %v5577, %v5807
        %v6090 = vadd.f32 %v5578, %v5812
        %v6091 = vadd.f32 %v5579, %v5812
        %v6092 = vadd.f32 %v5580, %v5817
        %v6093 = vadd.f32 %v5581, %v5817
        %v6094 = vadd.f32 %v5582, %v5822
        %v6095 = vadd.f32 %v5583, %v5822
        %v6096 = vadd.f32 %v5584, %v5827
        %v6097 = vadd.f32 %v5585, %v5827
        %v6098 = vadd.f32 %v5586, %v5832
        %v6099 = vadd.f32 %v5587, %v5832
        %v6100 = vadd.f32 %v5588, %v5837
        %v6101 = vadd.f32 %v5589, %v5837
        %v6102 = vadd.f32 %v5590, %v5842
        %v6103 = vadd.f32 %v5591, %v5842
        %v6104 = vadd.f32 %v5592, %v5847
        %v6105 = vadd.f32 %v5593, %v5847
        %v6106 = vadd.f32 %v5594, %v5852
        %v6107 = vadd.f32 %v5595, %v5852
        %v6108 = vadd.f32 %v5596, %v5857
        %v6109 = vadd.f32 %v5597, %v5857
        %v6110 = vadd.f32 %v5598, %v5862
        %v6111 = vadd.f32 %v5599, %v5862
        %v6112 = vadd.f32 %v5600, %v5867
        %v6113 = vadd.f32 %v5601, %v5867
        %v6114 = vadd.f32 %v5602, %v5872
        %v6115 = vadd.f32 %v5603, %v5872
        %v6116 = vadd.f32 %v5604, %v5877
        %v6117 = vadd.f32 %v5605, %v5877
        %v6118 = vadd.f32 %v5606, %v5882
        %v6119 = vadd.f32 %v5607, %v5882
        %v6120 = vadd.f32 %v5608, %v5887
        %v6121 = vadd.f32 %v5609, %v5887
        %v6122 = vadd.f32 %v5610, %v5892
        %v6123 = vadd.f32 %v5611, %v5892
        %v6124 = vadd.f32 %v5612, %v5897
        %v6125 = vadd.f32 %v5613, %v5897
        %v6126 = vadd.f32 %v5614, %v5902
        %v6127 = vadd.f32 %v5615, %v5902
        %v6128 = vadd.f32 %v5616, %v5907
        %v6129 = vadd.f32 %v5617, %v5907
        %v6130 = vadd.f32 %v5618, %v5912
        %v6131 = vadd.f32 %v5619, %v5912
        %v6132 = vadd.f32 %v5620, %v5917
        %v6133 = vadd.f32 %v5621, %v5917
        %v6134 = vadd.f32 %v5622, %v5922
        %v6135 = vadd.f32 %v5623, %v5922
        %v6136 = vadd.f32 %v5624, %v5927
        %v6137 = vadd.f32 %v5625, %v5927
        %v6138 = vadd.f32 %v5626, %v5932
        %v6139 = vadd.f32 %v5627, %v5932
        %v6140 = vadd.f32 %v5628, %v5937
        %v6141 = vadd.f32 %v5629, %v5937
        %v6142 = vadd.f32 %v5630, %v5942
        %v6143 = vadd.f32 %v5631, %v5942
        %v6144 = vadd.f32 %v5632, %v5947
        %v6145 = vadd.f32 %v5633, %v5947
        %v6146 = vadd.f32 %v5634, %v5952
        %v6147 = vadd.f32 %v5635, %v5952
        %v6148 = vadd.f32 %v5636, %v5957
        %v6149 = vadd.f32 %v5637, %v5957
        %v6150 = vadd.f32 %v5638, %v5962
        %v6151 = vadd.f32 %v5639, %v5962
        %v6152 = vadd.f32 %v5640, %v5967
        %v6153 = vadd.f32 %v5641, %v5967
        %v6154 = vadd.f32 %v5642, %v5972
        %v6155 = vadd.f32 %v5643, %v5972
        %v6156 = vadd.f32 %v5644, %v5977
        %v6157 = vadd.f32 %v5645, %v5977
        %v6158 = vadd.f32 %v5646, %v5982
        %v6159 = vadd.f32 %v5647, %v5982
        %v6160 = vadd.f32 %v5648, %v5987
        %v6161 = vadd.f32 %v5649, %v5987
        %v6162 = vadd.f32 %v5650, %v5992
        %v6163 = vadd.f32 %v5651, %v5992
        %v6164 = vadd.f32 %v5652, %v5997
        %v6165 = vadd.f32 %v5653, %v5997
        %v6166 = vadd.f32 %v5654, %v6002
        %v6167 = vadd.f32 %v5655, %v6002
        %v6168 = vadd.f32 %v5656, %v6007
        %v6169 = vadd.f32 %v5657, %v6007
        %v6170 = vadd.f32 %v5658, %v6012
        %v6171 = vadd.f32 %v5659, %v6012
        %v6172 = vadd.f32 %v5660, %v6017
        %v6173 = vadd.f32 %v5661, %v6017
        %v6174 = vadd.f32 %v5662, %v6022
        %v6175 = vadd.f32 %v5663, %v6022
        %v6176 = vadd.f32 %v5664, %v6027
        %v6177 = vadd.f32 %v5665, %v6027
        %v6178 = vadd.f32 %v5666, %v6032
        %v6179 = vadd.f32 %v5667, %v6032
        %v6180 = vadd.f32 %v5668, %v6037
        %v6181 = vadd.f32 %v5669, %v6037
        %v6182 = vadd.f32 %v5670, %v6042
        %v6183 = vadd.f32 %v5671, %v6042
        %v6184 = vadd.f32 %v5672, %v6047
        %v6185 = vadd.f32 %v5673, %v6047
        %v6186 = vadd.f32 %v5674, %v6052
        %v6187 = vadd.f32 %v5675, %v6052
        %v6188 = vadd.f32 %v5676, %v6057
        %v6189 = vadd.f32 %v5677, %v6057
        %v6190 = vadd.f32 %v5678, %v6062
        %v6191 = vadd.f32 %v5679, %v6062
        %vm6192 = vcmp.gt.f32.partialorder %v6064, 0.0
        %vm6193 = vcmp.gt.f32.partialorder %v6065, 0.0
        %vm6194 = vcmp.gt.f32.partialorder %v6066, 0.0
        %vm6195 = vcmp.gt.f32.partialorder %v6067, 0.0
        %vm6196 = vcmp.gt.f32.partialorder %v6068, 0.0
        %vm6197 = vcmp.gt.f32.partialorder %v6069, 0.0
        %vm6198 = vcmp.gt.f32.partialorder %v6070, 0.0
        %vm6199 = vcmp.gt.f32.partialorder %v6071, 0.0
        %vm6200 = vcmp.gt.f32.partialorder %v6072, 0.0
        %vm6201 = vcmp.gt.f32.partialorder %v6073, 0.0
        %vm6202 = vcmp.gt.f32.partialorder %v6074, 0.0
        %vm6203 = vcmp.gt.f32.partialorder %v6075, 0.0
        %vm6204 = vcmp.gt.f32.partialorder %v6076, 0.0
        %vm6205 = vcmp.gt.f32.partialorder %v6077, 0.0
        %vm6206 = vcmp.gt.f32.partialorder %v6078, 0.0
        %vm6207 = vcmp.gt.f32.partialorder %v6079, 0.0
        %vm6208 = vcmp.gt.f32.partialorder %v6080, 0.0
        %vm6209 = vcmp.gt.f32.partialorder %v6081, 0.0
        %vm6210 = vcmp.gt.f32.partialorder %v6082, 0.0
        %vm6211 = vcmp.gt.f32.partialorder %v6083, 0.0
        %vm6212 = vcmp.gt.f32.partialorder %v6084, 0.0
        %vm6213 = vcmp.gt.f32.partialorder %v6085, 0.0
        %vm6214 = vcmp.gt.f32.partialorder %v6086, 0.0
        %vm6215 = vcmp.gt.f32.partialorder %v6087, 0.0
        %vm6216 = vcmp.gt.f32.partialorder %v6088, 0.0
        %vm6217 = vcmp.gt.f32.partialorder %v6089, 0.0
        %vm6218 = vcmp.gt.f32.partialorder %v6090, 0.0
        %vm6219 = vcmp.gt.f32.partialorder %v6091, 0.0
        %vm6220 = vcmp.gt.f32.partialorder %v6092, 0.0
        %vm6221 = vcmp.gt.f32.partialorder %v6093, 0.0
        %vm6222 = vcmp.gt.f32.partialorder %v6094, 0.0
        %vm6223 = vcmp.gt.f32.partialorder %v6095, 0.0
        %vm6224 = vcmp.gt.f32.partialorder %v6096, 0.0
        %vm6225 = vcmp.gt.f32.partialorder %v6097, 0.0
        %vm6226 = vcmp.gt.f32.partialorder %v6098, 0.0
        %vm6227 = vcmp.gt.f32.partialorder %v6099, 0.0
        %vm6228 = vcmp.gt.f32.partialorder %v6100, 0.0
        %vm6229 = vcmp.gt.f32.partialorder %v6101, 0.0
        %vm6230 = vcmp.gt.f32.partialorder %v6102, 0.0
        %vm6231 = vcmp.gt.f32.partialorder %v6103, 0.0
        %vm6232 = vcmp.gt.f32.partialorder %v6104, 0.0
        %vm6233 = vcmp.gt.f32.partialorder %v6105, 0.0
        %vm6234 = vcmp.gt.f32.partialorder %v6106, 0.0
        %vm6235 = vcmp.gt.f32.partialorder %v6107, 0.0
        %vm6236 = vcmp.gt.f32.partialorder %v6108, 0.0
        %vm6237 = vcmp.gt.f32.partialorder %v6109, 0.0
        %vm6238 = vcmp.gt.f32.partialorder %v6110, 0.0
        %vm6239 = vcmp.gt.f32.partialorder %v6111, 0.0
        %vm6240 = vcmp.gt.f32.partialorder %v6112, 0.0
        %vm6241 = vcmp.gt.f32.partialorder %v6113, 0.0
        %vm6242 = vcmp.gt.f32.partialorder %v6114, 0.0
        %vm6243 = vcmp.gt.f32.partialorder %v6115, 0.0
        %vm6244 = vcmp.gt.f32.partialorder %v6116, 0.0
        %vm6245 = vcmp.gt.f32.partialorder %v6117, 0.0
        %vm6246 = vcmp.gt.f32.partialorder %v6118, 0.0
        %vm6247 = vcmp.gt.f32.partialorder %v6119, 0.0
        %vm6248 = vcmp.gt.f32.partialorder %v6120, 0.0
        %vm6249 = vcmp.gt.f32.partialorder %v6121, 0.0
        %vm6250 = vcmp.gt.f32.partialorder %v6122, 0.0
        %vm6251 = vcmp.gt.f32.partialorder %v6123, 0.0
        %vm6252 = vcmp.gt.f32.partialorder %v6124, 0.0
        %vm6253 = vcmp.gt.f32.partialorder %v6125, 0.0
        %vm6254 = vcmp.gt.f32.partialorder %v6126, 0.0
        %vm6255 = vcmp.gt.f32.partialorder %v6127, 0.0
        %vm6256 = vcmp.gt.f32.partialorder %v6128, 0.0
        %vm6257 = vcmp.gt.f32.partialorder %v6129, 0.0
        %vm6258 = vcmp.gt.f32.partialorder %v6130, 0.0
        %vm6259 = vcmp.gt.f32.partialorder %v6131, 0.0
        %vm6260 = vcmp.gt.f32.partialorder %v6132, 0.0
        %vm6261 = vcmp.gt.f32.partialorder %v6133, 0.0
        %vm6262 = vcmp.gt.f32.partialorder %v6134, 0.0
        %vm6263 = vcmp.gt.f32.partialorder %v6135, 0.0
        %vm6264 = vcmp.gt.f32.partialorder %v6136, 0.0
        %vm6265 = vcmp.gt.f32.partialorder %v6137, 0.0
        %vm6266 = vcmp.gt.f32.partialorder %v6138, 0.0
        %vm6267 = vcmp.gt.f32.partialorder %v6139, 0.0
        %vm6268 = vcmp.gt.f32.partialorder %v6140, 0.0
        %vm6269 = vcmp.gt.f32.partialorder %v6141, 0.0
        %vm6270 = vcmp.gt.f32.partialorder %v6142, 0.0
        %vm6271 = vcmp.gt.f32.partialorder %v6143, 0.0
        %vm6272 = vcmp.gt.f32.partialorder %v6144, 0.0
        %vm6273 = vcmp.gt.f32.partialorder %v6145, 0.0
        %vm6274 = vcmp.gt.f32.partialorder %v6146, 0.0
        %vm6275 = vcmp.gt.f32.partialorder %v6147, 0.0
        %vm6276 = vcmp.gt.f32.partialorder %v6148, 0.0
        %vm6277 = vcmp.gt.f32.partialorder %v6149, 0.0
        %vm6278 = vcmp.gt.f32.partialorder %v6150, 0.0
        %vm6279 = vcmp.gt.f32.partialorder %v6151, 0.0
        %vm6280 = vcmp.gt.f32.partialorder %v6152, 0.0
        %vm6281 = vcmp.gt.f32.partialorder %v6153, 0.0
        %vm6282 = vcmp.gt.f32.partialorder %v6154, 0.0
        %vm6283 = vcmp.gt.f32.partialorder %v6155, 0.0
        %vm6284 = vcmp.gt.f32.partialorder %v6156, 0.0
        %vm6285 = vcmp.gt.f32.partialorder %v6157, 0.0
        %vm6286 = vcmp.gt.f32.partialorder %v6158, 0.0
        %vm6287 = vcmp.gt.f32.partialorder %v6159, 0.0
        %vm6288 = vcmp.gt.f32.partialorder %v6160, 0.0
        %vm6289 = vcmp.gt.f32.partialorder %v6161, 0.0
        %vm6290 = vcmp.gt.f32.partialorder %v6162, 0.0
        %vm6291 = vcmp.gt.f32.partialorder %v6163, 0.0
        %vm6292 = vcmp.gt.f32.partialorder %v6164, 0.0
        %vm6293 = vcmp.gt.f32.partialorder %v6165, 0.0
        %vm6294 = vcmp.gt.f32.partialorder %v6166, 0.0
        %vm6295 = vcmp.gt.f32.partialorder %v6167, 0.0
        %vm6296 = vcmp.gt.f32.partialorder %v6168, 0.0
        %vm6297 = vcmp.gt.f32.partialorder %v6169, 0.0
        %vm6298 = vcmp.gt.f32.partialorder %v6170, 0.0
        %vm6299 = vcmp.gt.f32.partialorder %v6171, 0.0
        %vm6300 = vcmp.gt.f32.partialorder %v6172, 0.0
        %vm6301 = vcmp.gt.f32.partialorder %v6173, 0.0
        %vm6302 = vcmp.gt.f32.partialorder %v6174, 0.0
        %vm6303 = vcmp.gt.f32.partialorder %v6175, 0.0
        %vm6304 = vcmp.gt.f32.partialorder %v6176, 0.0
        %vm6305 = vcmp.gt.f32.partialorder %v6177, 0.0
        %vm6306 = vcmp.gt.f32.partialorder %v6178, 0.0
        %vm6307 = vcmp.gt.f32.partialorder %v6179, 0.0
        %vm6308 = vcmp.gt.f32.partialorder %v6180, 0.0
        %vm6309 = vcmp.gt.f32.partialorder %v6181, 0.0
        %vm6310 = vcmp.gt.f32.partialorder %v6182, 0.0
        %vm6311 = vcmp.gt.f32.partialorder %v6183, 0.0
        %vm6312 = vcmp.gt.f32.partialorder %v6184, 0.0
        %vm6313 = vcmp.gt.f32.partialorder %v6185, 0.0
        %vm6314 = vcmp.gt.f32.partialorder %v6186, 0.0
        %vm6315 = vcmp.gt.f32.partialorder %v6187, 0.0
        %vm6316 = vcmp.gt.f32.partialorder %v6188, 0.0
        %vm6317 = vcmp.gt.f32.partialorder %v6189, 0.0
        %vm6318 = vcmp.gt.f32.partialorder %v6190, 0.0
        %vm6319 = vcmp.gt.f32.partialorder %v6191, 0.0
        %v6320 = vmul.f32 %v6064, 0.01
        %v6321 = vmul.f32 %v6065, 0.01
        %v6322 = vmul.f32 %v6066, 0.01
        %v6323 = vmul.f32 %v6067, 0.01
        %v6324 = vmul.f32 %v6068, 0.01
        %v6325 = vmul.f32 %v6069, 0.01
        %v6326 = vmul.f32 %v6070, 0.01
        %v6327 = vmul.f32 %v6071, 0.01
        %v6328 = vmul.f32 %v6072, 0.01
        %v6329 = vmul.f32 %v6073, 0.01
        %v6330 = vmul.f32 %v6074, 0.01
        %v6331 = vmul.f32 %v6075, 0.01
        %v6332 = vmul.f32 %v6076, 0.01
        %v6333 = vmul.f32 %v6077, 0.01
        %v6334 = vmul.f32 %v6078, 0.01
        %v6335 = vmul.f32 %v6079, 0.01
        %v6336 = vmul.f32 %v6080, 0.01
        %v6337 = vmul.f32 %v6081, 0.01
        %v6338 = vmul.f32 %v6082, 0.01
        %v6339 = vmul.f32 %v6083, 0.01
        %v6340 = vmul.f32 %v6084, 0.01
        %v6341 = vmul.f32 %v6085, 0.01
        %v6342 = vmul.f32 %v6086, 0.01
        %v6343 = vmul.f32 %v6087, 0.01
        %v6344 = vmul.f32 %v6088, 0.01
        %v6345 = vmul.f32 %v6089, 0.01
        %v6346 = vmul.f32 %v6090, 0.01
        %v6347 = vmul.f32 %v6091, 0.01
        %v6348 = vmul.f32 %v6092, 0.01
        %v6349 = vmul.f32 %v6093, 0.01
        %v6350 = vmul.f32 %v6094, 0.01
        %v6351 = vmul.f32 %v6095, 0.01
        %v6352 = vmul.f32 %v6096, 0.01
        %v6353 = vmul.f32 %v6097, 0.01
        %v6354 = vmul.f32 %v6098, 0.01
        %v6355 = vmul.f32 %v6099, 0.01
        %v6356 = vmul.f32 %v6100, 0.01
        %v6357 = vmul.f32 %v6101, 0.01
        %v6358 = vmul.f32 %v6102, 0.01
        %v6359 = vmul.f32 %v6103, 0.01
        %v6360 = vmul.f32 %v6104, 0.01
        %v6361 = vmul.f32 %v6105, 0.01
        %v6362 = vmul.f32 %v6106, 0.01
        %v6363 = vmul.f32 %v6107, 0.01
        %v6364 = vmul.f32 %v6108, 0.01
        %v6365 = vmul.f32 %v6109, 0.01
        %v6366 = vmul.f32 %v6110, 0.01
        %v6367 = vmul.f32 %v6111, 0.01
        %v6368 = vmul.f32 %v6112, 0.01
        %v6369 = vmul.f32 %v6113, 0.01
        %v6370 = vmul.f32 %v6114, 0.01
        %v6371 = vmul.f32 %v6115, 0.01
        %v6372 = vmul.f32 %v6116, 0.01
        %v6373 = vmul.f32 %v6117, 0.01
        %v6374 = vmul.f32 %v6118, 0.01
        %v6375 = vmul.f32 %v6119, 0.01
        %v6376 = vmul.f32 %v6120, 0.01
        %v6377 = vmul.f32 %v6121, 0.01
        %v6378 = vmul.f32 %v6122, 0.01
        %v6379 = vmul.f32 %v6123, 0.01
        %v6380 = vmul.f32 %v6124, 0.01
        %v6381 = vmul.f32 %v6125, 0.01
        %v6382 = vmul.f32 %v6126, 0.01
        %v6383 = vmul.f32 %v6127, 0.01
        %v6384 = vmul.f32 %v6128, 0.01
        %v6385 = vmul.f32 %v6129, 0.01
        %v6386 = vmul.f32 %v6130, 0.01
        %v6387 = vmul.f32 %v6131, 0.01
        %v6388 = vmul.f32 %v6132, 0.01
        %v6389 = vmul.f32 %v6133, 0.01
        %v6390 = vmul.f32 %v6134, 0.01
        %v6391 = vmul.f32 %v6135, 0.01
        %v6392 = vmul.f32 %v6136, 0.01
        %v6393 = vmul.f32 %v6137, 0.01
        %v6394 = vmul.f32 %v6138, 0.01
        %v6395 = vmul.f32 %v6139, 0.01
        %v6396 = vmul.f32 %v6140, 0.01
        %v6397 = vmul.f32 %v6141, 0.01
        %v6398 = vmul.f32 %v6142, 0.01
        %v6399 = vmul.f32 %v6143, 0.01
        %v6400 = vmul.f32 %v6144, 0.01
        %v6401 = vmul.f32 %v6145, 0.01
        %v6402 = vmul.f32 %v6146, 0.01
        %v6403 = vmul.f32 %v6147, 0.01
        %v6404 = vmul.f32 %v6148, 0.01
        %v6405 = vmul.f32 %v6149, 0.01
        %v6406 = vmul.f32 %v6150, 0.01
        %v6407 = vmul.f32 %v6151, 0.01
        %v6408 = vmul.f32 %v6152, 0.01
        %v6409 = vmul.f32 %v6153, 0.01
        %v6410 = vmul.f32 %v6154, 0.01
        %v6411 = vmul.f32 %v6155, 0.01
        %v6412 = vmul.f32 %v6156, 0.01
        %v6413 = vmul.f32 %v6157, 0.01
        %v6414 = vmul.f32 %v6158, 0.01
        %v6415 = vmul.f32 %v6159, 0.01
        %v6416 = vmul.f32 %v6160, 0.01
        %v6417 = vmul.f32 %v6161, 0.01
        %v6418 = vmul.f32 %v6162, 0.01
        %v6419 = vmul.f32 %v6163, 0.01
        %v6420 = vmul.f32 %v6164, 0.01
        %v6421 = vmul.f32 %v6165, 0.01
        %v6422 = vmul.f32 %v6166, 0.01
        %v6423 = vmul.f32 %v6167, 0.01
        %v6424 = vmul.f32 %v6168, 0.01
        %v6425 = vmul.f32 %v6169, 0.01
        %v6426 = vmul.f32 %v6170, 0.01
        %v6427 = vmul.f32 %v6171, 0.01
        %v6428 = vmul.f32 %v6172, 0.01
        %v6429 = vmul.f32 %v6173, 0.01
        %v6430 = vmul.f32 %v6174, 0.01
        %v6431 = vmul.f32 %v6175, 0.01
        %v6432 = vmul.f32 %v6176, 0.01
        %v6433 = vmul.f32 %v6177, 0.01
        %v6434 = vmul.f32 %v6178, 0.01
        %v6435 = vmul.f32 %v6179, 0.01
        %v6436 = vmul.f32 %v6180, 0.01
        %v6437 = vmul.f32 %v6181, 0.01
        %v6438 = vmul.f32 %v6182, 0.01
        %v6439 = vmul.f32 %v6183, 0.01
        %v6440 = vmul.f32 %v6184, 0.01
        %v6441 = vmul.f32 %v6185, 0.01
        %v6442 = vmul.f32 %v6186, 0.01
        %v6443 = vmul.f32 %v6187, 0.01
        %v6444 = vmul.f32 %v6188, 0.01
        %v6445 = vmul.f32 %v6189, 0.01
        %v6446 = vmul.f32 %v6190, 0.01
        %v6447 = vmul.f32 %v6191, 0.01
        %v6448 = vsel %vm6192, %v6064, %v6320
        %v6449 = vsel %vm6193, %v6065, %v6321
        %v6450 = vsel %vm6194, %v6066, %v6322
        %v6451 = vsel %vm6195, %v6067, %v6323
        %v6452 = vsel %vm6196, %v6068, %v6324
        %v6453 = vsel %vm6197, %v6069, %v6325
        %v6454 = vsel %vm6198, %v6070, %v6326
        %v6455 = vsel %vm6199, %v6071, %v6327
        %v6456 = vsel %vm6200, %v6072, %v6328
        %v6457 = vsel %vm6201, %v6073, %v6329
        %v6458 = vsel %vm6202, %v6074, %v6330
        %v6459 = vsel %vm6203, %v6075, %v6331
        %v6460 = vsel %vm6204, %v6076, %v6332
        %v6461 = vsel %vm6205, %v6077, %v6333
        %v6462 = vsel %vm6206, %v6078, %v6334
        %v6463 = vsel %vm6207, %v6079, %v6335
        %v6464 = vsel %vm6208, %v6080, %v6336
        %v6465 = vsel %vm6209, %v6081, %v6337
        %v6466 = vsel %vm6210, %v6082, %v6338
        %v6467 = vsel %vm6211, %v6083, %v6339
        %v6468 = vsel %vm6212, %v6084, %v6340
        %v6469 = vsel %vm6213, %v6085, %v6341
        %v6470 = vsel %vm6214, %v6086, %v6342
        %v6471 = vsel %vm6215, %v6087, %v6343
        %v6472 = vsel %vm6216, %v6088, %v6344
        %v6473 = vsel %vm6217, %v6089, %v6345
        %v6474 = vsel %vm6218, %v6090, %v6346
        %v6475 = vsel %vm6219, %v6091, %v6347
        %v6476 = vsel %vm6220, %v6092, %v6348
        %v6477 = vsel %vm6221, %v6093, %v6349
        %v6478 = vsel %vm6222, %v6094, %v6350
        %v6479 = vsel %vm6223, %v6095, %v6351
        %v6480 = vsel %vm6224, %v6096, %v6352
        %v6481 = vsel %vm6225, %v6097, %v6353
        %v6482 = vsel %vm6226, %v6098, %v6354
        %v6483 = vsel %vm6227, %v6099, %v6355
        %v6484 = vsel %vm6228, %v6100, %v6356
        %v6485 = vsel %vm6229, %v6101, %v6357
        %v6486 = vsel %vm6230, %v6102, %v6358
        %v6487 = vsel %vm6231, %v6103, %v6359
        %v6488 = vsel %vm6232, %v6104, %v6360
        %v6489 = vsel %vm6233, %v6105, %v6361
        %v6490 = vsel %vm6234, %v6106, %v6362
        %v6491 = vsel %vm6235, %v6107, %v6363
        %v6492 = vsel %vm6236, %v6108, %v6364
        %v6493 = vsel %vm6237, %v6109, %v6365
        %v6494 = vsel %vm6238, %v6110, %v6366
        %v6495 = vsel %vm6239, %v6111, %v6367
        %v6496 = vsel %vm6240, %v6112, %v6368
        %v6497 = vsel %vm6241, %v6113, %v6369
        %v6498 = vsel %vm6242, %v6114, %v6370
        %v6499 = vsel %vm6243, %v6115, %v6371
        %v6500 = vsel %vm6244, %v6116, %v6372
        %v6501 = vsel %vm6245, %v6117, %v6373
        %v6502 = vsel %vm6246, %v6118, %v6374
        %v6503 = vsel %vm6247, %v6119, %v6375
        %v6504 = vsel %vm6248, %v6120, %v6376
        %v6505 = vsel %vm6249, %v6121, %v6377
        %v6506 = vsel %vm6250, %v6122, %v6378
        %v6507 = vsel %vm6251, %v6123, %v6379
        %v6508 = vsel %vm6252, %v6124, %v6380
        %v6509 = vsel %vm6253, %v6125, %v6381
        %v6510 = vsel %vm6254, %v6126, %v6382
        %v6511 = vsel %vm6255, %v6127, %v6383
        %v6512 = vsel %vm6256, %v6128, %v6384
        %v6513 = vsel %vm6257, %v6129, %v6385
        %v6514 = vsel %vm6258, %v6130, %v6386
        %v6515 = vsel %vm6259, %v6131, %v6387
        %v6516 = vsel %vm6260, %v6132, %v6388
        %v6517 = vsel %vm6261, %v6133, %v6389
        %v6518 = vsel %vm6262, %v6134, %v6390
        %v6519 = vsel %vm6263, %v6135, %v6391
        %v6520 = vsel %vm6264, %v6136, %v6392
        %v6521 = vsel %vm6265, %v6137, %v6393
        %v6522 = vsel %vm6266, %v6138, %v6394
        %v6523 = vsel %vm6267, %v6139, %v6395
        %v6524 = vsel %vm6268, %v6140, %v6396
        %v6525 = vsel %vm6269, %v6141, %v6397
        %v6526 = vsel %vm6270, %v6142, %v6398
        %v6527 = vsel %vm6271, %v6143, %v6399
        %v6528 = vsel %vm6272, %v6144, %v6400
        %v6529 = vsel %vm6273, %v6145, %v6401
        %v6530 = vsel %vm6274, %v6146, %v6402
        %v6531 = vsel %vm6275, %v6147, %v6403
        %v6532 = vsel %vm6276, %v6148, %v6404
        %v6533 = vsel %vm6277, %v6149, %v6405
        %v6534 = vsel %vm6278, %v6150, %v6406
        %v6535 = vsel %vm6279, %v6151, %v6407
        %v6536 = vsel %vm6280, %v6152, %v6408
        %v6537 = vsel %vm6281, %v6153, %v6409
        %v6538 = vsel %vm6282, %v6154, %v6410
        %v6539 = vsel %vm6283, %v6155, %v6411
        %v6540 = vsel %vm6284, %v6156, %v6412
        %v6541 = vsel %vm6285, %v6157, %v6413
        %v6542 = vsel %vm6286, %v6158, %v6414
        %v6543 = vsel %vm6287, %v6159, %v6415
        %v6544 = vsel %vm6288, %v6160, %v6416
        %v6545 = vsel %vm6289, %v6161, %v6417
        %v6546 = vsel %vm6290, %v6162, %v6418
        %v6547 = vsel %vm6291, %v6163, %v6419
        %v6548 = vsel %vm6292, %v6164, %v6420
        %v6549 = vsel %vm6293, %v6165, %v6421
        %v6550 = vsel %vm6294, %v6166, %v6422
        %v6551 = vsel %vm6295, %v6167, %v6423
        %v6552 = vsel %vm6296, %v6168, %v6424
        %v6553 = vsel %vm6297, %v6169, %v6425
        %v6554 = vsel %vm6298, %v6170, %v6426
        %v6555 = vsel %vm6299, %v6171, %v6427
        %v6556 = vsel %vm6300, %v6172, %v6428
        %v6557 = vsel %vm6301, %v6173, %v6429
        %v6558 = vsel %vm6302, %v6174, %v6430
        %v6559 = vsel %vm6303, %v6175, %v6431
        %v6560 = vsel %vm6304, %v6176, %v6432
        %v6561 = vsel %vm6305, %v6177, %v6433
        %v6562 = vsel %vm6306, %v6178, %v6434
        %v6563 = vsel %vm6307, %v6179, %v6435
        %v6564 = vsel %vm6308, %v6180, %v6436
        %v6565 = vsel %vm6309, %v6181, %v6437
        %v6566 = vsel %vm6310, %v6182, %v6438
        %v6567 = vsel %vm6311, %v6183, %v6439
        %v6568 = vsel %vm6312, %v6184, %v6440
        %v6569 = vsel %vm6313, %v6185, %v6441
        %v6570 = vsel %vm6314, %v6186, %v6442
        %v6571 = vsel %vm6315, %v6187, %v6443
        %v6572 = vsel %vm6316, %v6188, %v6444
        %v6573 = vsel %vm6317, %v6189, %v6445
        %v6574 = vsel %vm6318, %v6190, %v6446
        %v6575 = vsel %vm6319, %v6191, %v6447
        %6576 = vmatprep.subr.mxu0 %v6449
        %6577 = vmatpush1.msra.mxu0 %v6448
        %6578 = vmatprep.subr.mxu0 %v6451
        %6579 = vmatpush1.msra.mxu0 %v6450
        %6580 = vmatprep.subr.mxu0 %v6453
        %6581 = vmatpush1.msra.mxu0 %v6452
        %6582 = vmatprep.subr.mxu0 %v6455
        %6583 = vmatpush1.msra.mxu0 %v6454
        %6584 = vmatprep.subr.mxu0 %v6457
        %6585 = vmatpush1.msra.mxu0 %v6456
        %6586 = vmatprep.subr.mxu0 %v6459
        %6587 = vmatpush1.msra.mxu0 %v6458
        %6588 = vmatprep.subr.mxu0 %v6461
        %6589 = vmatpush1.msra.mxu0 %v6460
        %6590 = vmatprep.subr.mxu0 %v6463
        %6591 = vmatpush1.msra.mxu0 %v6462
        %6592 = vmatprep.subr.mxu0 %v6465
        %6593 = vmatpush1.msra.mxu0 %v6464
        %6594 = vmatprep.subr.mxu0 %v6467
        %6595 = vmatpush1.msra.mxu0 %v6466
        %6596 = vmatprep.subr.mxu0 %v6469
        %6597 = vmatpush1.msra.mxu0 %v6468
        %6598 = vmatprep.subr.mxu0 %v6471
        %6599 = vmatpush1.msra.mxu0 %v6470
        %6600 = vmatprep.subr.mxu0 %v6473
        %6601 = vmatpush1.msra.mxu0 %v6472
        %6602 = vmatprep.subr.mxu0 %v6475
        %6603 = vmatpush1.msra.mxu0 %v6474
        %6604 = vmatprep.subr.mxu0 %v6477
        %6605 = vmatpush1.msra.mxu0 %v6476
        %6606 = vmatprep.subr.mxu0 %v6479
        %6607 = vmatpush1.msra.mxu0 %v6478
        %6608 = vmatprep.subr.mxu0 %v6481
        %6609 = vmatpush1.msra.mxu0 %v6480
        %6610 = vmatprep.subr.mxu0 %v6483
        %6611 = vmatpush1.msra.mxu0 %v6482
        %6612 = vmatprep.subr.mxu0 %v6485
        %6613 = vmatpush1.msra.mxu0 %v6484
        %6614 = vmatprep.subr.mxu0 %v6487
        %6615 = vmatpush1.msra.mxu0 %v6486
        %6616 = vmatprep.subr.mxu0 %v6489
        %6617 = vmatpush1.msra.mxu0 %v6488
        %6618 = vmatprep.subr.mxu0 %v6491
        %6619 = vmatpush1.msra.mxu0 %v6490
        %6620 = vmatprep.subr.mxu0 %v6493
        %6621 = vmatpush1.msra.mxu0 %v6492
        %6622 = vmatprep.subr.mxu0 %v6495
        %6623 = vmatpush1.msra.mxu0 %v6494
        %6624 = vmatprep.subr.mxu0 %v6497
        %6625 = vmatpush1.msra.mxu0 %v6496
        %6626 = vmatprep.subr.mxu0 %v6499
        %6627 = vmatpush1.msra.mxu0 %v6498
        %6628 = vmatprep.subr.mxu0 %v6501
        %6629 = vmatpush1.msra.mxu0 %v6500
        %6630 = vmatprep.subr.mxu0 %v6503
        %6631 = vmatpush1.msra.mxu0 %v6502
        %6632 = vmatprep.subr.mxu0 %v6505
        %6633 = vmatpush1.msra.mxu0 %v6504
        %6634 = vmatprep.subr.mxu0 %v6507
        %6635 = vmatpush1.msra.mxu0 %v6506
        %6636 = vmatprep.subr.mxu0 %v6509
        %6637 = vmatpush1.msra.mxu0 %v6508
        %6638 = vmatprep.subr.mxu0 %v6511
        %6639 = vmatpush1.msra.mxu0 %v6510
        %6640 = vmatprep.mubr.f32.mxu0 0.001953125
        %6641 = vmatmul.mubr.f32.gmra.mrb[0].mxu0 0.001953125
        %v6642 = vpop.f32.mrb[0].mxu0
        %v6643 = vadd.f32 0.0, %v6642
        %v6644 = vpop.f32.mrb[0].mxu0
        %v6645 = vadd.f32 0.0, %v6644
        %6646 = vdwg.mxu0
        %6647 = vmatprep.subr.mxu0 %v6513
        %6648 = vmatpush1.msra.mxu0 %v6512
        %6649 = vmatprep.subr.mxu0 %v6515
        %6650 = vmatpush1.msra.mxu0 %v6514
        %6651 = vmatprep.subr.mxu0 %v6517
        %6652 = vmatpush1.msra.mxu0 %v6516
        %6653 = vmatprep.subr.mxu0 %v6519
        %6654 = vmatpush1.msra.mxu0 %v6518
        %6655 = vmatprep.subr.mxu0 %v6521
        %6656 = vmatpush1.msra.mxu0 %v6520
        %6657 = vmatprep.subr.mxu0 %v6523
        %6658 = vmatpush1.msra.mxu0 %v6522
        %6659 = vmatprep.subr.mxu0 %v6525
        %6660 = vmatpush1.msra.mxu0 %v6524
        %6661 = vmatprep.subr.mxu0 %v6527
        %6662 = vmatpush1.msra.mxu0 %v6526
        %6663 = vmatprep.subr.mxu0 %v6529
        %6664 = vmatpush1.msra.mxu0 %v6528
        %6665 = vmatprep.subr.mxu0 %v6531
        %6666 = vmatpush1.msra.mxu0 %v6530
        %6667 = vmatprep.subr.mxu0 %v6533
        %6668 = vmatpush1.msra.mxu0 %v6532
        %6669 = vmatprep.subr.mxu0 %v6535
        %6670 = vmatpush1.msra.mxu0 %v6534
        %6671 = vmatprep.subr.mxu0 %v6537
        %6672 = vmatpush1.msra.mxu0 %v6536
        %6673 = vmatprep.subr.mxu0 %v6539
        %6674 = vmatpush1.msra.mxu0 %v6538
        %6675 = vmatprep.subr.mxu0 %v6541
        %6676 = vmatpush1.msra.mxu0 %v6540
        %6677 = vmatprep.subr.mxu0 %v6543
        %6678 = vmatpush1.msra.mxu0 %v6542
        %6679 = vmatprep.subr.mxu0 %v6545
        %6680 = vmatpush1.msra.mxu0 %v6544
        %6681 = vmatprep.subr.mxu0 %v6547
        %6682 = vmatpush1.msra.mxu0 %v6546
        %6683 = vmatprep.subr.mxu0 %v6549
        %6684 = vmatpush1.msra.mxu0 %v6548
        %6685 = vmatprep.subr.mxu0 %v6551
        %6686 = vmatpush1.msra.mxu0 %v6550
        %6687 = vmatprep.subr.mxu0 %v6553
        %6688 = vmatpush1.msra.mxu0 %v6552
        %6689 = vmatprep.subr.mxu0 %v6555
        %6690 = vmatpush1.msra.mxu0 %v6554
        %6691 = vmatprep.subr.mxu0 %v6557
        %6692 = vmatpush1.msra.mxu0 %v6556
        %6693 = vmatprep.subr.mxu0 %v6559
        %6694 = vmatpush1.msra.mxu0 %v6558
        %6695 = vmatprep.subr.mxu0 %v6561
        %6696 = vmatpush1.msra.mxu0 %v6560
        %6697 = vmatprep.subr.mxu0 %v6563
        %6698 = vmatpush1.msra.mxu0 %v6562
        %6699 = vmatprep.subr.mxu0 %v6565
        %6700 = vmatpush1.msra.mxu0 %v6564
        %6701 = vmatprep.subr.mxu0 %v6567
        %6702 = vmatpush1.msra.mxu0 %v6566
        %6703 = vmatprep.subr.mxu0 %v6569
        %6704 = vmatpush1.msra.mxu0 %v6568
        %6705 = vmatprep.subr.mxu0 %v6571
        %6706 = vmatpush1.msra.mxu0 %v6570
        %6707 = vmatprep.subr.mxu0 %v6573
        %6708 = vmatpush1.msra.mxu0 %v6572
        %6709 = vmatprep.subr.mxu0 %v6575
        %6710 = vmatpush1.msra.mxu0 %v6574
        %6711 = vmatprep.mubr.f32.mxu0 0.001953125
        %6712 = vmatmul.mubr.f32.gmra.mrb[0].mxu0 0.001953125
        %v6713 = vpop.f32.mrb[0].mxu0
        %v6714 = vadd.f32 %v6643, %v6713
        %v6715 = vpop.f32.mrb[0].mxu0
        %v6716 = vadd.f32 %v6645, %v6715
        %6717 = vdwg.mxu0
        %v6718 = vmax.f32 %v6448, %v6452
        %v6719 = vmax.f32 %v6450, %v6454
        %v6720 = vmax.f32 %v6718, %v6456
        %v6721 = vmax.f32 %v6719, %v6458
        %v6722 = vmax.f32 %v6720, %v6460
        %v6723 = vmax.f32 %v6721, %v6462
        %v6724 = vmax.f32 %v6722, %v6464
        %v6725 = vmax.f32 %v6723, %v6466
        %v6726 = vmax.f32 %v6724, %v6468
        %v6727 = vmax.f32 %v6725, %v6470
        %v6728 = vmax.f32 %v6726, %v6472
        %v6729 = vmax.f32 %v6727, %v6474
        %v6730 = vmax.f32 %v6728, %v6476
        %v6731 = vmax.f32 %v6729, %v6478
        %v6732 = vmax.f32 %v6730, %v6480
        %v6733 = vmax.f32 %v6731, %v6482
        %v6734 = vmax.f32 %v6732, %v6484
        %v6735 = vmax.f32 %v6733, %v6486
        %v6736 = vmax.f32 %v6734, %v6488
        %v6737 = vmax.f32 %v6735, %v6490
        %v6738 = vmax.f32 %v6736, %v6492
        %v6739 = vmax.f32 %v6737, %v6494
        %v6740 = vmax.f32 %v6738, %v6496
        %v6741 = vmax.f32 %v6739, %v6498
        %v6742 = vmax.f32 %v6740, %v6500
        %v6743 = vmax.f32 %v6741, %v6502
        %v6744 = vmax.f32 %v6742, %v6504
        %v6745 = vmax.f32 %v6743, %v6506
        %v6746 = vmax.f32 %v6744, %v6508
        %v6747 = vmax.f32 %v6745, %v6510
        %v6748 = vmax.f32 %v6746, %v6512
        %v6749 = vmax.f32 %v6747, %v6514
        %v6750 = vmax.f32 %v6748, %v6516
        %v6751 = vmax.f32 %v6749, %v6518
        %v6752 = vmax.f32 %v6750, %v6520
        %v6753 = vmax.f32 %v6751, %v6522
        %v6754 = vmax.f32 %v6752, %v6524
        %v6755 = vmax.f32 %v6753, %v6526
        %v6756 = vmax.f32 %v6754, %v6528
        %v6757 = vmax.f32 %v6755, %v6530
        %v6758 = vmax.f32 %v6756, %v6532
        %v6759 = vmax.f32 %v6757, %v6534
        %v6760 = vmax.f32 %v6758, %v6536
        %v6761 = vmax.f32 %v6759, %v6538
        %v6762 = vmax.f32 %v6760, %v6540
        %v6763 = vmax.f32 %v6761, %v6542
        %v6764 = vmax.f32 %v6762, %v6544
        %v6765 = vmax.f32 %v6763, %v6546
        %v6766 = vmax.f32 %v6764, %v6548
        %v6767 = vmax.f32 %v6765, %v6550
        %v6768 = vmax.f32 %v6766, %v6552
        %v6769 = vmax.f32 %v6767, %v6554
        %v6770 = vmax.f32 %v6768, %v6556
        %v6771 = vmax.f32 %v6769, %v6558
        %v6772 = vmax.f32 %v6770, %v6560
        %v6773 = vmax.f32 %v6771, %v6562
        %v6774 = vmax.f32 %v6772, %v6564
        %v6775 = vmax.f32 %v6773, %v6566
        %v6776 = vmax.f32 %v6774, %v6568
        %v6777 = vmax.f32 %v6775, %v6570
        %v6778 = vmax.f32 %v6776, %v6572
        %v6779 = vmax.f32 %v6777, %v6574
        %v6780 = vmax.f32 %v6778, %v6779
        %v6781 = vrot.slane %v6780, 4
        %v6782 = vmax.f32 %v6780, %v6781
        %v6783 = vrot.slane %v6782, 2
        %v6784 = vmax.f32 %v6782, %v6783
        %v6785 = vrot.slane %v6784, 1
        %v6786 = vmax.f32 %v6784, %v6785
        %v6787 = vmax.f32 %v6449, %v6453
        %v6788 = vmax.f32 %v6451, %v6455
        %v6789 = vmax.f32 %v6787, %v6457
        %v6790 = vmax.f32 %v6788, %v6459
        %v6791 = vmax.f32 %v6789, %v6461
        %v6792 = vmax.f32 %v6790, %v6463
        %v6793 = vmax.f32 %v6791, %v6465
        %v6794 = vmax.f32 %v6792, %v6467
        %v6795 = vmax.f32 %v6793, %v6469
        %v6796 = vmax.f32 %v6794, %v6471
        %v6797 = vmax.f32 %v6795, %v6473
        %v6798 = vmax.f32 %v6796, %v6475
        %v6799 = vmax.f32 %v6797, %v6477
        %v6800 = vmax.f32 %v6798, %v6479
        %v6801 = vmax.f32 %v6799, %v6481
        %v6802 = vmax.f32 %v6800, %v6483
        %v6803 = vmax.f32 %v6801, %v6485
        %v6804 = vmax.f32 %v6802, %v6487
        %v6805 = vmax.f32 %v6803, %v6489
        %v6806 = vmax.f32 %v6804, %v6491
        %v6807 = vmax.f32 %v6805, %v6493
        %v6808 = vmax.f32 %v6806, %v6495
        %v6809 = vmax.f32 %v6807, %v6497
        %v6810 = vmax.f32 %v6808, %v6499
        %v6811 = vmax.f32 %v6809, %v6501
        %v6812 = vmax.f32 %v6810, %v6503
        %v6813 = vmax.f32 %v6811, %v6505
        %v6814 = vmax.f32 %v6812, %v6507
        %v6815 = vmax.f32 %v6813, %v6509
        %v6816 = vmax.f32 %v6814, %v6511
        %v6817 = vmax.f32 %v6815, %v6513
        %v6818 = vmax.f32 %v6816, %v6515
        %v6819 = vmax.f32 %v6817, %v6517
        %v6820 = vmax.f32 %v6818, %v6519
        %v6821 = vmax.f32 %v6819, %v6521
        %v6822 = vmax.f32 %v6820, %v6523
        %v6823 = vmax.f32 %v6821, %v6525
        %v6824 = vmax.f32 %v6822, %v6527
        %v6825 = vmax.f32 %v6823, %v6529
        %v6826 = vmax.f32 %v6824, %v6531
        %v6827 = vmax.f32 %v6825, %v6533
        %v6828 = vmax.f32 %v6826, %v6535
        %v6829 = vmax.f32 %v6827, %v6537
        %v6830 = vmax.f32 %v6828, %v6539
        %v6831 = vmax.f32 %v6829, %v6541
        %v6832 = vmax.f32 %v6830, %v6543
        %v6833 = vmax.f32 %v6831, %v6545
        %v6834 = vmax.f32 %v6832, %v6547
        %v6835 = vmax.f32 %v6833, %v6549
        %v6836 = vmax.f32 %v6834, %v6551
        %v6837 = vmax.f32 %v6835, %v6553
        %v6838 = vmax.f32 %v6836, %v6555
        %v6839 = vmax.f32 %v6837, %v6557
        %v6840 = vmax.f32 %v6838, %v6559
        %v6841 = vmax.f32 %v6839, %v6561
        %v6842 = vmax.f32 %v6840, %v6563
        %v6843 = vmax.f32 %v6841, %v6565
        %v6844 = vmax.f32 %v6842, %v6567
        %v6845 = vmax.f32 %v6843, %v6569
        %v6846 = vmax.f32 %v6844, %v6571
        %v6847 = vmax.f32 %v6845, %v6573
        %v6848 = vmax.f32 %v6846, %v6575
        %v6849 = vmax.f32 %v6847, %v6848
        %v6850 = vrot.slane %v6849, 4
        %v6851 = vmax.f32 %v6849, %v6850
        %v6852 = vrot.slane %v6851, 2
        %v6853 = vmax.f32 %v6851, %v6852
        %v6854 = vrot.slane %v6853, 1
        %v6855 = vmax.f32 %v6853, %v6854
        %6858 = vrot.lane.b32.xlu0 %v6714, 17
        %v6859 = vpop.permute.xlu0 %6858
        %6860 = vrot.lane.b32.xlu0 %v6716, 17
        %v6861 = vpop.permute.xlu0 %6860
        %vm6862 = vcmask 138240
        %v6863 = vsel %vm6862, %v6859, %v6861
        %v6867 = vsel %vm6862, 0.0, %v6859
        %v6868 = vsel %vm6862, %v6861, 0.0
        %6871 = vrot.lane.b32.xlu0 %v6786, 17
        %v6872 = vpop.permute.xlu0 %6871
        %6873 = vrot.lane.b32.xlu0 %v6855, 17
        %v6874 = vpop.permute.xlu0 %6873
        %v6875 = vsel %vm6862, %v6872, %v6874
        %v6879 = vsel %vm6862, 0.0, %v6872
        %v6880 = vsel %vm6862, %v6874, 0.0
        %s6881 = sld [smem:[#allocation3]]
        %v6882 = vstv %s6881
        %v6883 = vadd.f32 %v6882, 0.0
        %v6884 = vld [vmem:[%s8] sm:$0x3]
        %v6886 = vlaneseq
        %v6887 = vshrl.u32 %v6886, 7
        %v6888 = vsub.s32 0, %v6887
        %v6889 = vrot.slane %v6884, %v6888
        %v6890 = vlaneseq
        %v6891 = vshrl.u32 %v6890, 7
        %v6892 = vsub.s32 1, %v6891
        %v6893 = vrot.slane %v6884, %v6892
        %v6896 = vmul.f32 %v6867, %v6889
        %v6897 = vmul.f32 %v6863, %v6893
        %s6898 = sld [smem:[#allocation4]]
        %v6899 = vstv %s6898
        %v6900 = vmul.f32 %v6899, %v6896
        %v6901 = vmul.f32 %v6899, %v6897
        %v6902 = vadd.f32 %v6883, %v6900
        %v6903 = vadd.f32 %v6883, %v6901
        %s6904 = sld [smem:[#allocation4 + $0x1]]
        %v6905 = vstv %s6904
        %v6906 = vmul.f32 %v6905, %v6867
        %v6907 = vmul.f32 %v6905, %v6863
        %v6908 = vmul.f32 %v6905, %v6868
        %6912 = vrot.lane.b32.xlu0 %v6906, 127
        %v6913 = vpop.permute.xlu0 %6912
        %6914 = vrot.lane.b32.xlu0 %v6907, 127
        %v6915 = vpop.permute.xlu0 %6914
        %6916 = vrot.lane.b32.xlu0 %v6908, 127
        %v6917 = vpop.permute.xlu0 %6916
        %vm6918 = vcmask 1039360
        %v6919 = vsel %vm6918, %v6913, %v6915
        %v6920 = vsel %vm6918, %v6915, %v6917
        %v6923 = vadd.f32 %v6902, %v6919
        %v6924 = vadd.f32 %v6903, %v6920
        %v6925 = vld [vmem:[%s9] sm:$0x3]
        %v6927 = vlaneseq
        %v6928 = vshrl.u32 %v6927, 7
        %v6929 = vsub.s32 0, %v6928
        %v6930 = vrot.slane %v6925, %v6929
        %v6931 = vlaneseq
        %v6932 = vshrl.u32 %v6931, 7
        %v6933 = vsub.s32 1, %v6932
        %v6934 = vrot.slane %v6925, %v6933
        %6935 = vrot.lane.b32.xlu0 %v6930, 2
        %v6936 = vpop.permute.xlu0 %6935
        %6937 = vrot.lane.b32.xlu0 %v6934, 2
        %v6938 = vpop.permute.xlu0 %6937
        %vm6939 = vcmask 15360
        %v6940 = vsel %vm6939, %v6936, %v6938
        %v6944 = vmul.f32 %v6867, %v6936
        %v6945 = vmul.f32 %v6863, %v6940
        %v6946 = vmul.f32 %v6868, %v6938
        %s6947 = sld [smem:[#allocation4 + $0x2]]
        %v6948 = vstv %s6947
        %v6949 = vmul.f32 %v6948, %v6944
        %v6950 = vmul.f32 %v6948, %v6945
        %v6951 = vmul.f32 %v6948, %v6946
        %6955 = vrot.lane.b32.xlu0 %v6949, 126
        %v6956 = vpop.permute.xlu0 %6955
        %6957 = vrot.lane.b32.xlu0 %v6950, 126
        %v6958 = vpop.permute.xlu0 %6957
        %6959 = vrot.lane.b32.xlu0 %v6951, 126
        %v6960 = vpop.permute.xlu0 %6959
        %vm6961 = vcmask 1031168
        %v6962 = vsel %vm6961, %v6956, %v6958
        %v6963 = vsel %vm6961, %v6958, %v6960
        %v6966 = vadd.f32 %v6923, %v6962
        %v6967 = vadd.f32 %v6924, %v6963
        %6968 = vrot.lane.b32.xlu0 %v6889, 16
        %v6969 = vpop.permute.xlu0 %6968
        %6970 = vrot.lane.b32.xlu0 %v6893, 16
        %v6971 = vpop.permute.xlu0 %6970
        %vm6972 = vcmask 130048
        %v6973 = vsel %vm6972, %v6969, %v6971
        %v6977 = vmul.f32 %v6867, %v6969
        %v6978 = vmul.f32 %v6863, %v6973
        %v6979 = vmul.f32 %v6868, %v6971
        %s6980 = sld [smem:[#allocation4 + $0x3]]
        %v6981 = vstv %s6980
        %v6982 = vmul.f32 %v6981, %v6977
        %v6983 = vmul.f32 %v6981, %v6978
        %v6984 = vmul.f32 %v6981, %v6979
        %6988 = vrot.lane.b32.xlu0 %v6982, 112
        %v6989 = vpop.permute.xlu0 %6988
        %6990 = vrot.lane.b32.xlu0 %v6983, 112
        %v6991 = vpop.permute.xlu0 %6990
        %6992 = vrot.lane.b32.xlu0 %v6984, 112
        %v6993 = vpop.permute.xlu0 %6992
        %vm6994 = vcmask 916480
        %v6995 = vsel %vm6994, %v6989, %v6991
        %v6996 = vsel %vm6994, %v6991, %v6993
        %v6999 = vadd.f32 %v6966, %v6995
        %v7000 = vadd.f32 %v6967, %v6996
        %s7001 = sld [smem:[#allocation4 + $0x4]]
        %v7002 = vstv %s7001
        %v7003 = vmul.f32 %v7002, %v6867
        %v7004 = vmul.f32 %v7002, %v6863
        %v7005 = vmul.f32 %v7002, %v6868
        %7009 = vrot.lane.b32.xlu0 %v7003, 111
        %v7010 = vpop.permute.xlu0 %7009
        %7011 = vrot.lane.b32.xlu0 %v7004, 111
        %v7012 = vpop.permute.xlu0 %7011
        %7013 = vrot.lane.b32.xlu0 %v7005, 111
        %v7014 = vpop.permute.xlu0 %7013
        %vm7015 = vcmask 908288
        %v7016 = vsel %vm7015, %v7010, %v7012
        %v7017 = vsel %vm7015, %v7012, %v7014
        %v7020 = vadd.f32 %v6999, %v7016
        %v7021 = vadd.f32 %v7000, %v7017
        %7022 = vrot.lane.b32.xlu0 %v6930, 18
        %v7023 = vpop.permute.xlu0 %7022
        %7024 = vrot.lane.b32.xlu0 %v6934, 18
        %v7025 = vpop.permute.xlu0 %7024
        %vm7026 = vcmask 146432
        %v7027 = vsel %vm7026, %v7023, %v7025
        %v7031 = vmul.f32 %v6867, %v7023
        %v7032 = vmul.f32 %v6863, %v7027
        %v7033 = vmul.f32 %v6868, %v7025
        %s7034 = sld [smem:[#allocation4 + $0x5]]
        %v7035 = vstv %s7034
        %v7036 = vmul.f32 %v7035, %v7031
        %v7037 = vmul.f32 %v7035, %v7032
        %v7038 = vmul.f32 %v7035, %v7033
        %7042 = vrot.lane.b32.xlu0 %v7036, 110
        %v7043 = vpop.permute.xlu0 %7042
        %7044 = vrot.lane.b32.xlu0 %v7037, 110
        %v7045 = vpop.permute.xlu0 %7044
        %7046 = vrot.lane.b32.xlu0 %v7038, 110
        %v7047 = vpop.permute.xlu0 %7046
        %vm7048 = vcmask 900096
        %v7049 = vsel %vm7048, %v7043, %v7045
        %v7050 = vsel %vm7048, %v7045, %v7047
        %v7053 = vadd.f32 %v7020, %v7049
        %v7054 = vadd.f32 %v7021, %v7050
        %7055 = vrot.lane.b32.xlu0 %v6889, 32
        %v7056 = vpop.permute.xlu0 %7055
        %7057 = vrot.lane.b32.xlu0 %v6893, 32
        %v7058 = vpop.permute.xlu0 %7057
        %v7059 = vsel %vm3363, %v7056, %v7058
        %v7063 = vmul.f32 %v6867, %v7056
        %v7064 = vmul.f32 %v6863, %v7059
        %v7065 = vmul.f32 %v6868, %v7058
        %s7066 = sld [smem:[#allocation4 + $0x6]]
        %v7067 = vstv %s7066
        %v7068 = vmul.f32 %v7067, %v7063
        %v7069 = vmul.f32 %v7067, %v7064
        %v7070 = vmul.f32 %v7067, %v7065
        %7074 = vrot.lane.b32.xlu0 %v7068, 96
        %v7075 = vpop.permute.xlu0 %7074
        %7076 = vrot.lane.b32.xlu0 %v7069, 96
        %v7077 = vpop.permute.xlu0 %7076
        %7078 = vrot.lane.b32.xlu0 %v7070, 96
        %v7079 = vpop.permute.xlu0 %7078
        %vm7080 = vcmask 785408
        %v7081 = vsel %vm7080, %v7075, %v7077
        %v7082 = vsel %vm7080, %v7077, %v7079
        %v7085 = vadd.f32 %v7053, %v7081
        %v7086 = vadd.f32 %v7054, %v7082
        %s7087 = sld [smem:[#allocation4 + $0x7]]
        %v7088 = vstv %s7087
        %v7089 = vmul.f32 %v7088, %v6867
        %v7090 = vmul.f32 %v7088, %v6863
        %v7091 = vmul.f32 %v7088, %v6868
        %7095 = vrot.lane.b32.xlu0 %v7089, 95
        %v7096 = vpop.permute.xlu0 %7095
        %7097 = vrot.lane.b32.xlu0 %v7090, 95
        %v7098 = vpop.permute.xlu0 %7097
        %7099 = vrot.lane.b32.xlu0 %v7091, 95
        %v7100 = vpop.permute.xlu0 %7099
        %vm7101 = vcmask 777216
        %v7102 = vsel %vm7101, %v7096, %v7098
        %v7103 = vsel %vm7101, %v7098, %v7100
        %v7106 = vadd.f32 %v7085, %v7102
        %v7107 = vadd.f32 %v7086, %v7103
        %7108 = vrot.lane.b32.xlu0 %v6930, 34
        %v7109 = vpop.permute.xlu0 %7108
        %7110 = vrot.lane.b32.xlu0 %v6934, 34
        %v7111 = vpop.permute.xlu0 %7110
        %vm7112 = vcmask 277504
        %v7113 = vsel %vm7112, %v7109, %v7111
        %v7117 = vmul.f32 %v6867, %v7109
        %v7118 = vmul.f32 %v6863, %v7113
        %v7119 = vmul.f32 %v6868, %v7111
        %s7120 = sld [smem:[#allocation4 + $0x8]]
        %v7121 = vstv %s7120
        %v7122 = vmul.f32 %v7121, %v7117
        %v7123 = vmul.f32 %v7121, %v7118
        %v7124 = vmul.f32 %v7121, %v7119
        %7128 = vrot.lane.b32.xlu0 %v7122, 94
        %v7129 = vpop.permute.xlu0 %7128
        %7130 = vrot.lane.b32.xlu0 %v7123, 94
        %v7131 = vpop.permute.xlu0 %7130
        %7132 = vrot.lane.b32.xlu0 %v7124, 94
        %v7133 = vpop.permute.xlu0 %7132
        %vm7134 = vcmask 769024
        %v7135 = vsel %vm7134, %v7129, %v7131
        %v7136 = vsel %vm7134, %v7131, %v7133
        %v7139 = vadd.f32 %v7106, %v7135
        %v7140 = vadd.f32 %v7107, %v7136
        %v7141 = vmul.f32 %v6879, %v6889
        %v7142 = vmul.f32 %v6875, %v6893
        %s7143 = sld [smem:[#allocation4 + $0x9]]
        %v7144 = vstv %s7143
        %v7145 = vmul.f32 %v7144, %v7141
        %v7146 = vmul.f32 %v7144, %v7142
        %v7147 = vadd.f32 %v7139, %v7145
        %v7148 = vadd.f32 %v7140, %v7146
        %s7149 = sld [smem:[#allocation4 + $0xa]]
        %v7150 = vstv %s7149
        %v7151 = vmul.f32 %v7150, %v6879
        %v7152 = vmul.f32 %v7150, %v6875
        %v7153 = vmul.f32 %v7150, %v6880
        %7157 = vrot.lane.b32.xlu0 %v7151, 127
        %v7158 = vpop.permute.xlu0 %7157
        %7159 = vrot.lane.b32.xlu0 %v7152, 127
        %v7160 = vpop.permute.xlu0 %7159
        %7161 = vrot.lane.b32.xlu0 %v7153, 127
        %v7162 = vpop.permute.xlu0 %7161
        %v7163 = vsel %vm6918, %v7158, %v7160
        %v7164 = vsel %vm6918, %v7160, %v7162
        %v7167 = vadd.f32 %v7147, %v7163
        %v7168 = vadd.f32 %v7148, %v7164
        %v7169 = vmul.f32 %v6879, %v6936
        %v7170 = vmul.f32 %v6875, %v6940
        %v7171 = vmul.f32 %v6880, %v6938
        %s7172 = sld [smem:[#allocation4 + $0xb]]
        %v7173 = vstv %s7172
        %v7174 = vmul.f32 %v7173, %v7169
        %v7175 = vmul.f32 %v7173, %v7170
        %v7176 = vmul.f32 %v7173, %v7171
        %7180 = vrot.lane.b32.xlu0 %v7174, 126
        %v7181 = vpop.permute.xlu0 %7180
        %7182 = vrot.lane.b32.xlu0 %v7175, 126
        %v7183 = vpop.permute.xlu0 %7182
        %7184 = vrot.lane.b32.xlu0 %v7176, 126
        %v7185 = vpop.permute.xlu0 %7184
        %v7186 = vsel %vm6961, %v7181, %v7183
        %v7187 = vsel %vm6961, %v7183, %v7185
        %v7190 = vadd.f32 %v7167, %v7186
        %v7191 = vadd.f32 %v7168, %v7187
        %v7192 = vmul.f32 %v6879, %v6969
        %v7193 = vmul.f32 %v6875, %v6973
        %v7194 = vmul.f32 %v6880, %v6971
        %s7195 = sld [smem:[#allocation4 + $0xc]]
        %v7196 = vstv %s7195
        %v7197 = vmul.f32 %v7196, %v7192
        %v7198 = vmul.f32 %v7196, %v7193
        %v7199 = vmul.f32 %v7196, %v7194
        %7203 = vrot.lane.b32.xlu0 %v7197, 112
        %v7204 = vpop.permute.xlu0 %7203
        %7205 = vrot.lane.b32.xlu0 %v7198, 112
        %v7206 = vpop.permute.xlu0 %7205
        %7207 = vrot.lane.b32.xlu0 %v7199, 112
        %v7208 = vpop.permute.xlu0 %7207
        %v7209 = vsel %vm6994, %v7204, %v7206
        %v7210 = vsel %vm6994, %v7206, %v7208
        %v7213 = vadd.f32 %v7190, %v7209
        %v7214 = vadd.f32 %v7191, %v7210
        %s7215 = sld [smem:[#allocation4 + $0xd]]
        %v7216 = vstv %s7215
        %v7217 = vmul.f32 %v7216, %v6879
        %v7218 = vmul.f32 %v7216, %v6875
        %v7219 = vmul.f32 %v7216, %v6880
        %7223 = vrot.lane.b32.xlu0 %v7217, 111
        %v7224 = vpop.permute.xlu0 %7223
        %7225 = vrot.lane.b32.xlu0 %v7218, 111
        %v7226 = vpop.permute.xlu0 %7225
        %7227 = vrot.lane.b32.xlu0 %v7219, 111
        %v7228 = vpop.permute.xlu0 %7227
        %v7229 = vsel %vm7015, %v7224, %v7226
        %v7230 = vsel %vm7015, %v7226, %v7228
        %v7233 = vadd.f32 %v7213, %v7229
        %v7234 = vadd.f32 %v7214, %v7230
        %v7235 = vmul.f32 %v6879, %v7023
        %v7236 = vmul.f32 %v6875, %v7027
        %v7237 = vmul.f32 %v6880, %v7025
        %s7238 = sld [smem:[#allocation4 + $0xe]]
        %v7239 = vstv %s7238
        %v7240 = vmul.f32 %v7239, %v7235
        %v7241 = vmul.f32 %v7239, %v7236
        %v7242 = vmul.f32 %v7239, %v7237
        %7246 = vrot.lane.b32.xlu0 %v7240, 110
        %v7247 = vpop.permute.xlu0 %7246
        %7248 = vrot.lane.b32.xlu0 %v7241, 110
        %v7249 = vpop.permute.xlu0 %7248
        %7250 = vrot.lane.b32.xlu0 %v7242, 110
        %v7251 = vpop.permute.xlu0 %7250
        %v7252 = vsel %vm7048, %v7247, %v7249
        %v7253 = vsel %vm7048, %v7249, %v7251
        %v7256 = vadd.f32 %v7233, %v7252
        %v7257 = vadd.f32 %v7234, %v7253
        %v7258 = vmul.f32 %v6879, %v7056
        %v7259 = vmul.f32 %v6875, %v7059
        %v7260 = vmul.f32 %v6880, %v7058
        %s7261 = sld [smem:[#allocation4 + $0xf]]
        %v7262 = vstv %s7261
        %v7263 = vmul.f32 %v7262, %v7258
        %v7264 = vmul.f32 %v7262, %v7259
        %v7265 = vmul.f32 %v7262, %v7260
        %7269 = vrot.lane.b32.xlu0 %v7263, 96
        %v7270 = vpop.permute.xlu0 %7269
        %7271 = vrot.lane.b32.xlu0 %v7264, 96
        %v7272 = vpop.permute.xlu0 %7271
        %7273 = vrot.lane.b32.xlu0 %v7265, 96
        %v7274 = vpop.permute.xlu0 %7273
        %v7275 = vsel %vm7080, %v7270, %v7272
        %v7276 = vsel %vm7080, %v7272, %v7274
        %v7279 = vadd.f32 %v7256, %v7275
        %v7280 = vadd.f32 %v7257, %v7276
        %s7281 = sld [smem:[#allocation4 + $0x10]]
        %v7282 = vstv %s7281
        %v7283 = vmul.f32 %v7282, %v6879
        %v7284 = vmul.f32 %v7282, %v6875
        %v7285 = vmul.f32 %v7282, %v6880
        %7289 = vrot.lane.b32.xlu0 %v7283, 95
        %v7290 = vpop.permute.xlu0 %7289
        %7291 = vrot.lane.b32.xlu0 %v7284, 95
        %v7292 = vpop.permute.xlu0 %7291
        %7293 = vrot.lane.b32.xlu0 %v7285, 95
        %v7294 = vpop.permute.xlu0 %7293
        %v7295 = vsel %vm7101, %v7290, %v7292
        %v7296 = vsel %vm7101, %v7292, %v7294
        %v7299 = vadd.f32 %v7279, %v7295
        %v7300 = vadd.f32 %v7280, %v7296
        %v7301 = vmul.f32 %v6879, %v7109
        %v7302 = vmul.f32 %v6875, %v7113
        %v7303 = vmul.f32 %v6880, %v7111
        %s7304 = sld [smem:[#allocation4 + $0x11]]
        %v7305 = vstv %s7304
        %v7306 = vmul.f32 %v7305, %v7301
        %v7307 = vmul.f32 %v7305, %v7302
        %v7308 = vmul.f32 %v7305, %v7303
        %7312 = vrot.lane.b32.xlu0 %v7306, 94
        %v7313 = vpop.permute.xlu0 %7312
        %7314 = vrot.lane.b32.xlu0 %v7307, 94
        %v7315 = vpop.permute.xlu0 %7314
        %7316 = vrot.lane.b32.xlu0 %v7308, 94
        %v7317 = vpop.permute.xlu0 %7316
        %v7318 = vsel %vm7134, %v7313, %v7315
        %v7319 = vsel %vm7134, %v7315, %v7317
        %v7322 = vadd.f32 %v7299, %v7318
        %v7323 = vadd.f32 %v7300, %v7319
        %v7324 = vxor.u32 %v7322, 2147483648
        %v7325 = vxor.u32 %v7323, 2147483648
        %v7326 = vmul.f32 %v7324, 1.442695
        %v7327 = vpow.pop %v7326
        %v7328 = vmul.f32 %v7325, 1.442695
        %v7329 = vpow.pop %v7328
        %v7330 = vadd.f32 %v7327, 1.0
        %v7331 = vadd.f32 %v7329, 1.0
        %v7332 = vrcp.pop %v7330
        %v7333 = vmul.f32 1.0, %v7332
        %v7334 = vrcp.pop %v7331
        %v7335 = vmul.f32 1.0, %v7334
        %v7336 = vlaneseq
        %v7337 = vshrl.u32 %v7336, 7
        %v7338 = vsub.s32 0, %v7337
        %v7339 = vrot.slane %v7333, %v7338
        %v7340 = vlaneseq
        %v7341 = vshrl.u32 %v7340, 7
        %v7342 = vsub.s32 0, %v7341
        %v7343 = vrot.slane %v7335, %v7342
        %v7344 = vmul.f32 %v6448, %v7339
        %v7345 = vmul.f32 %v6449, %v7343
        %v7346 = vmul.f32 %v6450, %v7339
        %v7347 = vmul.f32 %v6451, %v7343
        %v7348 = vmul.f32 %v6452, %v7339
        %v7349 = vmul.f32 %v6453, %v7343
        %v7350 = vmul.f32 %v6454, %v7339
        %v7351 = vmul.f32 %v6455, %v7343
        %v7352 = vmul.f32 %v6456, %v7339
        %v7353 = vmul.f32 %v6457, %v7343
        %v7354 = vmul.f32 %v6458, %v7339
        %v7355 = vmul.f32 %v6459, %v7343
        %v7356 = vmul.f32 %v6460, %v7339
        %v7357 = vmul.f32 %v6461, %v7343
        %v7358 = vmul.f32 %v6462, %v7339
        %v7359 = vmul.f32 %v6463, %v7343
        %v7360 = vmul.f32 %v6464, %v7339
        %v7361 = vmul.f32 %v6465, %v7343
        %v7362 = vmul.f32 %v6466, %v7339
        %v7363 = vmul.f32 %v6467, %v7343
        %v7364 = vmul.f32 %v6468, %v7339
        %v7365 = vmul.f32 %v6469, %v7343
        %v7366 = vmul.f32 %v6470, %v7339
        %v7367 = vmul.f32 %v6471, %v7343
        %v7368 = vmul.f32 %v6472, %v7339
        %v7369 = vmul.f32 %v6473, %v7343
        %v7370 = vmul.f32 %v6474, %v7339
        %v7371 = vmul.f32 %v6475, %v7343
        %v7372 = vmul.f32 %v6476, %v7339
        %v7373 = vmul.f32 %v6477, %v7343
        %v7374 = vmul.f32 %v6478, %v7339
        %v7375 = vmul.f32 %v6479, %v7343
        %v7376 = vmul.f32 %v6480, %v7339
        %v7377 = vmul.f32 %v6481, %v7343
        %v7378 = vmul.f32 %v6482, %v7339
        %v7379 = vmul.f32 %v6483, %v7343
        %v7380 = vmul.f32 %v6484, %v7339
        %v7381 = vmul.f32 %v6485, %v7343
        %v7382 = vmul.f32 %v6486, %v7339
        %v7383 = vmul.f32 %v6487, %v7343
        %v7384 = vmul.f32 %v6488, %v7339
        %v7385 = vmul.f32 %v6489, %v7343
        %v7386 = vmul.f32 %v6490, %v7339
        %v7387 = vmul.f32 %v6491, %v7343
        %v7388 = vmul.f32 %v6492, %v7339
        %v7389 = vmul.f32 %v6493, %v7343
        %v7390 = vmul.f32 %v6494, %v7339
        %v7391 = vmul.f32 %v6495, %v7343
        %v7392 = vmul.f32 %v6496, %v7339
        %v7393 = vmul.f32 %v6497, %v7343
        %v7394 = vmul.f32 %v6498, %v7339
        %v7395 = vmul.f32 %v6499, %v7343
        %v7396 = vmul.f32 %v6500, %v7339
        %v7397 = vmul.f32 %v6501, %v7343
        %v7398 = vmul.f32 %v6502, %v7339
        %v7399 = vmul.f32 %v6503, %v7343
        %v7400 = vmul.f32 %v6504, %v7339
        %v7401 = vmul.f32 %v6505, %v7343
        %v7402 = vmul.f32 %v6506, %v7339
        %v7403 = vmul.f32 %v6507, %v7343
        %v7404 = vmul.f32 %v6508, %v7339
        %v7405 = vmul.f32 %v6509, %v7343
        %v7406 = vmul.f32 %v6510, %v7339
        %v7407 = vmul.f32 %v6511, %v7343
        %v7408 = vmul.f32 %v6512, %v7339
        %v7409 = vmul.f32 %v6513, %v7343
        %v7410 = vmul.f32 %v6514, %v7339
        %v7411 = vmul.f32 %v6515, %v7343
        %v7412 = vmul.f32 %v6516, %v7339
        %v7413 = vmul.f32 %v6517, %v7343
        %v7414 = vmul.f32 %v6518, %v7339
        %v7415 = vmul.f32 %v6519, %v7343
        %v7416 = vmul.f32 %v6520, %v7339
        %v7417 = vmul.f32 %v6521, %v7343
        %v7418 = vmul.f32 %v6522, %v7339
        %v7419 = vmul.f32 %v6523, %v7343
        %v7420 = vmul.f32 %v6524, %v7339
        %v7421 = vmul.f32 %v6525, %v7343
        %v7422 = vmul.f32 %v6526, %v7339
        %v7423 = vmul.f32 %v6527, %v7343
        %v7424 = vmul.f32 %v6528, %v7339
        %v7425 = vmul.f32 %v6529, %v7343
        %v7426 = vmul.f32 %v6530, %v7339
        %v7427 = vmul.f32 %v6531, %v7343
        %v7428 = vmul.f32 %v6532, %v7339
        %v7429 = vmul.f32 %v6533, %v7343
        %v7430 = vmul.f32 %v6534, %v7339
        %v7431 = vmul.f32 %v6535, %v7343
        %v7432 = vmul.f32 %v6536, %v7339
        %v7433 = vmul.f32 %v6537, %v7343
        %v7434 = vmul.f32 %v6538, %v7339
        %v7435 = vmul.f32 %v6539, %v7343
        %v7436 = vmul.f32 %v6540, %v7339
        %v7437 = vmul.f32 %v6541, %v7343
        %v7438 = vmul.f32 %v6542, %v7339
        %v7439 = vmul.f32 %v6543, %v7343
        %v7440 = vmul.f32 %v6544, %v7339
        %v7441 = vmul.f32 %v6545, %v7343
        %v7442 = vmul.f32 %v6546, %v7339
        %v7443 = vmul.f32 %v6547, %v7343
        %v7444 = vmul.f32 %v6548, %v7339
        %v7445 = vmul.f32 %v6549, %v7343
        %v7446 = vmul.f32 %v6550, %v7339
        %v7447 = vmul.f32 %v6551, %v7343
        %v7448 = vmul.f32 %v6552, %v7339
        %v7449 = vmul.f32 %v6553, %v7343
        %v7450 = vmul.f32 %v6554, %v7339
        %v7451 = vmul.f32 %v6555, %v7343
        %v7452 = vmul.f32 %v6556, %v7339
        %v7453 = vmul.f32 %v6557, %v7343
        %v7454 = vmul.f32 %v6558, %v7339
        %v7455 = vmul.f32 %v6559, %v7343
        %v7456 = vmul.f32 %v6560, %v7339
        %v7457 = vmul.f32 %v6561, %v7343
        %v7458 = vmul.f32 %v6562, %v7339
        %v7459 = vmul.f32 %v6563, %v7343
        %v7460 = vmul.f32 %v6564, %v7339
        %v7461 = vmul.f32 %v6565, %v7343
        %v7462 = vmul.f32 %v6566, %v7339
        %v7463 = vmul.f32 %v6567, %v7343
        %v7464 = vmul.f32 %v6568, %v7339
        %v7465 = vmul.f32 %v6569, %v7343
        %v7466 = vmul.f32 %v6570, %v7339
        %v7467 = vmul.f32 %v6571, %v7343
        %v7468 = vmul.f32 %v6572, %v7339
        %v7469 = vmul.f32 %v6573, %v7343
        %v7470 = vmul.f32 %v6574, %v7339
        %v7471 = vmul.f32 %v6575, %v7343
        %v7472 = vmax.f32 %v7344, 0.0
        %v7473 = vmax.f32 %v7345, 0.0
        %v7474 = vmax.f32 %v7346, 0.0
        %v7475 = vmax.f32 %v7347, 0.0
        %v7476 = vmax.f32 %v7348, 0.0
        %v7477 = vmax.f32 %v7349, 0.0
        %v7478 = vmax.f32 %v7350, 0.0
        %v7479 = vmax.f32 %v7351, 0.0
        %v7480 = vmax.f32 %v7352, 0.0
        %v7481 = vmax.f32 %v7353, 0.0
        %v7482 = vmax.f32 %v7354, 0.0
        %v7483 = vmax.f32 %v7355, 0.0
        %v7484 = vmax.f32 %v7356, 0.0
        %v7485 = vmax.f32 %v7357, 0.0
        %v7486 = vmax.f32 %v7358, 0.0
        %v7487 = vmax.f32 %v7359, 0.0
        %v7488 = vmax.f32 %v7360, 0.0
        %v7489 = vmax.f32 %v7361, 0.0
        %v7490 = vmax.f32 %v7362, 0.0
        %v7491 = vmax.f32 %v7363, 0.0
        %v7492 = vmax.f32 %v7364, 0.0
        %v7493 = vmax.f32 %v7365, 0.0
        %v7494 = vmax.f32 %v7366, 0.0
        %v7495 = vmax.f32 %v7367, 0.0
        %v7496 = vmax.f32 %v7368, 0.0
        %v7497 = vmax.f32 %v7369, 0.0
        %v7498 = vmax.f32 %v7370, 0.0
        %v7499 = vmax.f32 %v7371, 0.0
        %v7500 = vmax.f32 %v7372, 0.0
        %v7501 = vmax.f32 %v7373, 0.0
        %v7502 = vmax.f32 %v7374, 0.0
        %v7503 = vmax.f32 %v7375, 0.0
        %v7504 = vmax.f32 %v7376, 0.0
        %v7505 = vmax.f32 %v7377, 0.0
        %v7506 = vmax.f32 %v7378, 0.0
        %v7507 = vmax.f32 %v7379, 0.0
        %v7508 = vmax.f32 %v7380, 0.0
        %v7509 = vmax.f32 %v7381, 0.0
        %v7510 = vmax.f32 %v7382, 0.0
        %v7511 = vmax.f32 %v7383, 0.0
        %v7512 = vmax.f32 %v7384, 0.0
        %v7513 = vmax.f32 %v7385, 0.0
        %v7514 = vmax.f32 %v7386, 0.0
        %v7515 = vmax.f32 %v7387, 0.0
        %v7516 = vmax.f32 %v7388, 0.0
        %v7517 = vmax.f32 %v7389, 0.0
        %v7518 = vmax.f32 %v7390, 0.0
        %v7519 = vmax.f32 %v7391, 0.0
        %v7520 = vmax.f32 %v7392, 0.0
        %v7521 = vmax.f32 %v7393, 0.0
        %v7522 = vmax.f32 %v7394, 0.0
        %v7523 = vmax.f32 %v7395, 0.0
        %v7524 = vmax.f32 %v7396, 0.0
        %v7525 = vmax.f32 %v7397, 0.0
        %v7526 = vmax.f32 %v7398, 0.0
        %v7527 = vmax.f32 %v7399, 0.0
        %v7528 = vmax.f32 %v7400, 0.0
        %v7529 = vmax.f32 %v7401, 0.0
        %v7530 = vmax.f32 %v7402, 0.0
        %v7531 = vmax.f32 %v7403, 0.0
        %v7532 = vmax.f32 %v7404, 0.0
        %v7533 = vmax.f32 %v7405, 0.0
        %v7534 = vmax.f32 %v7406, 0.0
        %v7535 = vmax.f32 %v7407, 0.0
        %v7536 = vmax.f32 %v7408, 0.0
        %v7537 = vmax.f32 %v7409, 0.0
        %v7538 = vmax.f32 %v7410, 0.0
        %v7539 = vmax.f32 %v7411, 0.0
        %v7540 = vmax.f32 %v7412, 0.0
        %v7541 = vmax.f32 %v7413, 0.0
        %v7542 = vmax.f32 %v7414, 0.0
        %v7543 = vmax.f32 %v7415, 0.0
        %v7544 = vmax.f32 %v7416, 0.0
        %v7545 = vmax.f32 %v7417, 0.0
        %v7546 = vmax.f32 %v7418, 0.0
        %v7547 = vmax.f32 %v7419, 0.0
        %v7548 = vmax.f32 %v7420, 0.0
        %v7549 = vmax.f32 %v7421, 0.0
        %v7550 = vmax.f32 %v7422, 0.0
        %v7551 = vmax.f32 %v7423, 0.0
        %v7552 = vmax.f32 %v7424, 0.0
        %v7553 = vmax.f32 %v7425, 0.0
        %v7554 = vmax.f32 %v7426, 0.0
        %v7555 = vmax.f32 %v7427, 0.0
        %v7556 = vmax.f32 %v7428, 0.0
        %v7557 = vmax.f32 %v7429, 0.0
        %v7558 = vmax.f32 %v7430, 0.0
        %v7559 = vmax.f32 %v7431, 0.0
        %v7560 = vmax.f32 %v7432, 0.0
        %v7561 = vmax.f32 %v7433, 0.0
        %v7562 = vmax.f32 %v7434, 0.0
        %v7563 = vmax.f32 %v7435, 0.0
        %v7564 = vmax.f32 %v7436, 0.0
        %v7565 = vmax.f32 %v7437, 0.0
        %v7566 = vmax.f32 %v7438, 0.0
        %v7567 = vmax.f32 %v7439, 0.0
        %v7568 = vmax.f32 %v7440, 0.0
        %v7569 = vmax.f32 %v7441, 0.0
        %v7570 = vmax.f32 %v7442, 0.0
        %v7571 = vmax.f32 %v7443, 0.0
        %v7572 = vmax.f32 %v7444, 0.0
        %v7573 = vmax.f32 %v7445, 0.0
        %v7574 = vmax.f32 %v7446, 0.0
        %v7575 = vmax.f32 %v7447, 0.0
        %v7576 = vmax.f32 %v7448, 0.0
        %v7577 = vmax.f32 %v7449, 0.0
        %v7578 = vmax.f32 %v7450, 0.0
        %v7579 = vmax.f32 %v7451, 0.0
        %v7580 = vmax.f32 %v7452, 0.0
        %v7581 = vmax.f32 %v7453, 0.0
        %v7582 = vmax.f32 %v7454, 0.0
        %v7583 = vmax.f32 %v7455, 0.0
        %v7584 = vmax.f32 %v7456, 0.0
        %v7585 = vmax.f32 %v7457, 0.0
        %v7586 = vmax.f32 %v7458, 0.0
        %v7587 = vmax.f32 %v7459, 0.0
        %v7588 = vmax.f32 %v7460, 0.0
        %v7589 = vmax.f32 %v7461, 0.0
        %v7590 = vmax.f32 %v7462, 0.0
        %v7591 = vmax.f32 %v7463, 0.0
        %v7592 = vmax.f32 %v7464, 0.0
        %v7593 = vmax.f32 %v7465, 0.0
        %v7594 = vmax.f32 %v7466, 0.0
        %v7595 = vmax.f32 %v7467, 0.0
        %v7596 = vmax.f32 %v7468, 0.0
        %v7597 = vmax.f32 %v7469, 0.0
        %v7598 = vmax.f32 %v7470, 0.0
        %v7599 = vmax.f32 %v7471, 0.0
        %v7600 = vld [vmem:[%s5] sm:$0xf]
        %s7601 = sld [smem:[#allocation2]]
        %v7602 = vstv %s7601
        %v7604 = vlaneseq
        %v7605 = vshrl.u32 %v7604, 7
        %v7606 = vsub.s32 0, %v7605
        %v7607 = vrot.slane %v7600, %v7606
        %v7608 = vlaneseq
        %v7609 = vshrl.u32 %v7608, 7
        %v7610 = vsub.s32 1, %v7609
        %v7611 = vrot.slane %v7600, %v7610
        %v7612 = vlaneseq
        %v7613 = vshrl.u32 %v7612, 7
        %v7614 = vsub.s32 2, %v7613
        %v7615 = vrot.slane %v7600, %v7614
        %v7616 = vlaneseq
        %v7617 = vshrl.u32 %v7616, 7
        %v7618 = vsub.s32 3, %v7617
        %v7619 = vrot.slane %v7600, %v7618
        %7624 = vmatprep.subr.mxu0 %v7473
        %7625 = vmatpush1.msra.mxu0 %v7472
        %7626 = vmatprep.subr.mxu0 %v7475
        %7627 = vmatpush1.msra.mxu0 %v7474
        %7628 = vmatprep.subr.mxu0 %v7477
        %7629 = vmatpush1.msra.mxu0 %v7476
        %7630 = vmatprep.subr.mxu0 %v7479
        %7631 = vmatpush1.msra.mxu0 %v7478
        %7632 = vmatprep.subr.mxu0 %v7481
        %7633 = vmatpush1.msra.mxu0 %v7480
        %7634 = vmatprep.subr.mxu0 %v7483
        %7635 = vmatpush1.msra.mxu0 %v7482
        %7636 = vmatprep.subr.mxu0 %v7485
        %7637 = vmatpush1.msra.mxu0 %v7484
        %7638 = vmatprep.subr.mxu0 %v7487
        %7639 = vmatpush1.msra.mxu0 %v7486
        %7640 = vmatprep.subr.mxu0 %v7489
        %7641 = vmatpush1.msra.mxu0 %v7488
        %7642 = vmatprep.subr.mxu0 %v7491
        %7643 = vmatpush1.msra.mxu0 %v7490
        %7644 = vmatprep.subr.mxu0 %v7493
        %7645 = vmatpush1.msra.mxu0 %v7492
        %7646 = vmatprep.subr.mxu0 %v7495
        %7647 = vmatpush1.msra.mxu0 %v7494
        %7648 = vmatprep.subr.mxu0 %v7497
        %7649 = vmatpush1.msra.mxu0 %v7496
        %7650 = vmatprep.subr.mxu0 %v7499
        %7651 = vmatpush1.msra.mxu0 %v7498
        %7652 = vmatprep.subr.mxu0 %v7501
        %7653 = vmatpush1.msra.mxu0 %v7500
        %7654 = vmatprep.subr.mxu0 %v7503
        %7655 = vmatpush1.msra.mxu0 %v7502
        %7656 = vmatprep.subr.mxu0 %v7505
        %7657 = vmatpush1.msra.mxu0 %v7504
        %7658 = vmatprep.subr.mxu0 %v7507
        %7659 = vmatpush1.msra.mxu0 %v7506
        %7660 = vmatprep.subr.mxu0 %v7509
        %7661 = vmatpush1.msra.mxu0 %v7508
        %7662 = vmatprep.subr.mxu0 %v7511
        %7663 = vmatpush1.msra.mxu0 %v7510
        %7664 = vmatprep.subr.mxu0 %v7513
        %7665 = vmatpush1.msra.mxu0 %v7512
        %7666 = vmatprep.subr.mxu0 %v7515
        %7667 = vmatpush1.msra.mxu0 %v7514
        %7668 = vmatprep.subr.mxu0 %v7517
        %7669 = vmatpush1.msra.mxu0 %v7516
        %7670 = vmatprep.subr.mxu0 %v7519
        %7671 = vmatpush1.msra.mxu0 %v7518
        %7672 = vmatprep.subr.mxu0 %v7521
        %7673 = vmatpush1.msra.mxu0 %v7520
        %7674 = vmatprep.subr.mxu0 %v7523
        %7675 = vmatpush1.msra.mxu0 %v7522
        %7676 = vmatprep.subr.mxu0 %v7525
        %7677 = vmatpush1.msra.mxu0 %v7524
        %7678 = vmatprep.subr.mxu0 %v7527
        %7679 = vmatpush1.msra.mxu0 %v7526
        %7680 = vmatprep.subr.mxu0 %v7529
        %7681 = vmatpush1.msra.mxu0 %v7528
        %7682 = vmatprep.subr.mxu0 %v7531
        %7683 = vmatpush1.msra.mxu0 %v7530
        %7684 = vmatprep.subr.mxu0 %v7533
        %7685 = vmatpush1.msra.mxu0 %v7532
        %7686 = vmatprep.subr.mxu0 %v7535
        %7687 = vmatpush1.msra.mxu0 %v7534
        %7688 = vmatprep.mubr.f32.mxu0 %v7611
        %7689 = vmatmul.mubr.f32.gmra.mrb[0].mxu0 %v7607
        %v7690 = vpop.f32.mrb[0].mxu0
        %v7691 = vadd.f32 %v7602, %v7690
        %v7692 = vpop.f32.mrb[0].mxu0
        %v7693 = vadd.f32 %v7602, %v7692
        %7694 = vdwg.mxu0
        %7695 = vmatprep.subr.mxu0 %v7537
        %7696 = vmatpush1.msra.mxu0 %v7536
        %7697 = vmatprep.subr.mxu0 %v7539
        %7698 = vmatpush1.msra.mxu0 %v7538
        %7699 = vmatprep.subr.mxu0 %v7541
        %7700 = vmatpush1.msra.mxu0 %v7540
        %7701 = vmatprep.subr.mxu0 %v7543
        %7702 = vmatpush1.msra.mxu0 %v7542
        %7703 = vmatprep.subr.mxu0 %v7545
        %7704 = vmatpush1.msra.mxu0 %v7544
        %7705 = vmatprep.subr.mxu0 %v7547
        %7706 = vmatpush1.msra.mxu0 %v7546
        %7707 = vmatprep.subr.mxu0 %v7549
        %7708 = vmatpush1.msra.mxu0 %v7548
        %7709 = vmatprep.subr.mxu0 %v7551
        %7710 = vmatpush1.msra.mxu0 %v7550
        %7711 = vmatprep.subr.mxu0 %v7553
        %7712 = vmatpush1.msra.mxu0 %v7552
        %7713 = vmatprep.subr.mxu0 %v7555
        %7714 = vmatpush1.msra.mxu0 %v7554
        %7715 = vmatprep.subr.mxu0 %v7557
        %7716 = vmatpush1.msra.mxu0 %v7556
        %7717 = vmatprep.subr.mxu0 %v7559
        %7718 = vmatpush1.msra.mxu0 %v7558
        %7719 = vmatprep.subr.mxu0 %v7561
        %7720 = vmatpush1.msra.mxu0 %v7560
        %7721 = vmatprep.subr.mxu0 %v7563
        %7722 = vmatpush1.msra.mxu0 %v7562
        %7723 = vmatprep.subr.mxu0 %v7565
        %7724 = vmatpush1.msra.mxu0 %v7564
        %7725 = vmatprep.subr.mxu0 %v7567
        %7726 = vmatpush1.msra.mxu0 %v7566
        %7727 = vmatprep.subr.mxu0 %v7569
        %7728 = vmatpush1.msra.mxu0 %v7568
        %7729 = vmatprep.subr.mxu0 %v7571
        %7730 = vmatpush1.msra.mxu0 %v7570
        %7731 = vmatprep.subr.mxu0 %v7573
        %7732 = vmatpush1.msra.mxu0 %v7572
        %7733 = vmatprep.subr.mxu0 %v7575
        %7734 = vmatpush1.msra.mxu0 %v7574
        %7735 = vmatprep.subr.mxu0 %v7577
        %7736 = vmatpush1.msra.mxu0 %v7576
        %7737 = vmatprep.subr.mxu0 %v7579
        %7738 = vmatpush1.msra.mxu0 %v7578
        %7739 = vmatprep.subr.mxu0 %v7581
        %7740 = vmatpush1.msra.mxu0 %v7580
        %7741 = vmatprep.subr.mxu0 %v7583
        %7742 = vmatpush1.msra.mxu0 %v7582
        %7743 = vmatprep.subr.mxu0 %v7585
        %7744 = vmatpush1.msra.mxu0 %v7584
        %7745 = vmatprep.subr.mxu0 %v7587
        %7746 = vmatpush1.msra.mxu0 %v7586
        %7747 = vmatprep.subr.mxu0 %v7589
        %7748 = vmatpush1.msra.mxu0 %v7588
        %7749 = vmatprep.subr.mxu0 %v7591
        %7750 = vmatpush1.msra.mxu0 %v7590
        %7751 = vmatprep.subr.mxu0 %v7593
        %7752 = vmatpush1.msra.mxu0 %v7592
        %7753 = vmatprep.subr.mxu0 %v7595
        %7754 = vmatpush1.msra.mxu0 %v7594
        %7755 = vmatprep.subr.mxu0 %v7597
        %7756 = vmatpush1.msra.mxu0 %v7596
        %7757 = vmatprep.subr.mxu0 %v7599
        %7758 = vmatpush1.msra.mxu0 %v7598
        %7759 = vmatprep.mubr.f32.mxu0 %v7619
        %7760 = vmatmul.mubr.f32.gmra.mrb[0].mxu0 %v7615
        %v7761 = vpop.f32.mrb[0].mxu0
        %v7762 = vadd.f32 %v7691, %v7761
        %v7763 = vpop.f32.mrb[0].mxu0
        %v7764 = vadd.f32 %v7693, %v7763
        %7765 = vdwg.mxu0
        %v7768 = vcombine.low %v7762, %v7764
        %v7770 = vunpack.c.l.s4 1966171168
        %v7771 = vunpack.c.0.s8 %v7770
        %v7772 = vlaneseq
        %v7773 = vshrl.u32 %v7772, 7
        %v7774 = vsub.s32 %v7771, %v7773
        %v7775 = vrot.slane %v7768, %v7774
        %v7777 = vunpack.c.l.s4 1966171168
        %v7778 = vunpack.c.0.s8 %v7777
        %v7779 = vlaneseq
        %v7780 = vshrl.u32 %v7779, 7
        %v7781 = vsub.s32 %v7778, %v7780
        %v7782 = vrot.slane %v7775, %v7781
        %v7784 = vlaneseq
        %vm7785 = vcmp.ge.s32.totalorder %v7784, 0
        %vm7786 = vcmp.lt.s32.totalorder %v7784, 256
        %vm7787 = vmand %vm7785, %vm7786
        %7788 = vst.msk [vmem:[%s449] sm:$0x3] %vm7787, %v7782
        %s7789 = sand.u32 %s316, 1
        %s7790 = scalar_lea.sflag [#allocation5], %s7789
        %s7791 = sand.u32 %s316, 1
        %s7792 = smul.addr %s7791, 2
        %s7793 = scalar_lea.vmem [#allocation7], %s7792
        // Predicated region
        $region77: #{tpu_custom_call.1} parent=71 // pred_check
          %p7794 = pneg %p326
        $region78: #{tpu_custom_call.1} parent=71 // pred_check_branch
          %7796 = sbr.rel (%p7794) target = $region80
        $region79: #{tpu_custom_call.1} parent=71 // pred_region
          %s7798 = ssub.s32 32, 32
          %7799 = vsyncadd %s7790, %s7798
          %s7800 = smul.addr %s30, 2
          %s7801 = smul.addr %s7800, 16
          %s7802 = scalar_lea.hbm %s13, %s7801
          %s7804 = sshll.u32 %s7793, 4
          %s7805 = int_to_ptr.vmem [resolvable:$true] %s7804
          %7807 = dma.vmem_to_hbm [thread:$0]  %s7805, 32, %s7802, %s7790
        $region80: #{tpu_custom_call.1} parent=71 // pred_fallthru
          _
      $region72: #{tpu_custom_call.1} parent=5 // pred_fallthru
        _
      %p7808 = scmp.le.s32.totalorder 2, %s25
      // Predicated region
      $region81: #{tpu_custom_call.1} parent=5 // pred_check
        %p7809 = pneg %p7808
      $region82: #{tpu_custom_call.1} parent=5 // pred_check_branch
        %7811 = sbr.rel (%p7809) target = $region84
      $region83: #{tpu_custom_call.1} parent=5 // pred_region
        %s7812 = ssub.s32 %s25, 2
        // Predicated region
        $region85: #{tpu_custom_call.1} parent=83 // pred_check
          %p7813 = pneg %p332
        $region86: #{tpu_custom_call.1} parent=83 // pred_check_branch
          %7815 = sbr.rel (%p7813) target = $region88
        $region87: #{tpu_custom_call.1} parent=83 // pred_region
          %s7816 = sand.u32 %s317, 1
          %s7817 = scalar_lea.sflag [#allocation5], %s7816
          %s7818 = sand.u32 %s317, 1
          %s7819 = smul.addr %s7818, 2
          %s7820 = scalar_lea.vmem [#allocation7], %s7819
          %7821 = dma.done %s7817, 32
        $region88: #{tpu_custom_call.1} parent=83 // pred_fallthru
          _
      $region84: #{tpu_custom_call.1} parent=5 // pred_fallthru
        _
    $region6: #{tpu_custom_call.1} parent=1 // loop_footer
      %s29 = sadd.s32 1, %s25
    $region7: #{tpu_custom_call.1} parent=1 // loop_footer_branch
      %24 = sbr.rel target = $region3
    $region8: #{tpu_custom_call.1} parent=1 // loop_exit
      _
    %7822 = vsyncpa [#allocation5], 1
    %s7823 = scalar_lea.sflag [#allocation5], 1
    %7824 = vsyncpa %s7823, 1
    %7825 = vsyncpa [#allocation6], 1
    %s7826 = scalar_lea.sflag [#allocation6], 1
    %7827 = vsyncpa %s7826, 1

</llo_original>
